<compile_context>
chip_gen: v7x
topology: tpu7x:2x2x1
jax: 0.10.0
libtpu: 0.0.40
codegen_flags: <defaults>
</compile_context>

<pallas_src>
import numpy as np
import jax
import jax.numpy as jnp
from jax.experimental import pallas as pl
from jax.experimental.pallas import tpu as pltpu

# ----------------------------- config (mirrors `args`) ------------------------
SEQ_LEN      = 32
PATCH_SIZE   = 8
STRIDE       = PATCH_SIZE // 2
NUM_CHANNELS = 1                      # Statis branch requires in_chans == 1
EMB_DIM      = 32
DEPTH        = 2
NUM_CLASSES  = 3
MLP_RATIO    = 3.0
NUM_PATCHES  = (SEQ_LEN - PATCH_SIZE) // STRIDE + 1      # 7
NF           = NUM_PATCHES // 2 + 1                      # rfft length = 4
HIDDEN       = int(EMB_DIM * MLP_RATIO)                  # 96
OUT_DIM      = NUM_CLASSES - 1                           # 2
WS           = PATCH_SIZE                                # statis window size
PK           = NUM_PATCHES * NUM_CHANNELS * PATCH_SIZE   # wide patch row width = 56
NC           = NUM_PATCHES * EMB_DIM                     # 224
NFC          = NF * EMB_DIM                              # 128
NH           = NUM_PATCHES * HIDDEN                      # 672
MAX_BT       = 256                                       # batch elements per grid step

_GELU_C = 0.7978845608028654                              # sqrt(2/pi)


def _gelu(x):
    # tanh-approximate GELU (transcendental goes to the EUP slot)
    return 0.5 * x * (1.0 + jnp.tanh(_GELU_C * (x + 0.044715 * x * x * x)))


# ------------------------------ fused kernel ----------------------------------
def _tslanet_kernel(thr_ref, xw_ref, *refs):
    (pe_w, pe_b, mln, frfi, ifri, e2,
     g1, b1n, g2, b2n, swr, swi, swhr, swhi,
     w1, b1i, w2, b2i, w3, b3i,
     aavg, aexp, w1sel, b1c,
     wa, ba, pa_e, pa_o, wb, bb, pb_e, pb_o, wc, bc,
     mwh, wh2, bh, o_ref) = refs

    f32 = jnp.float32
    bf = jnp.bfloat16

    def mxu(a, b):                       # bf16 MXU matmul, f32 accumulation
        return jnp.dot(a.astype(bf), b, preferred_element_type=f32)

    def mxu32(a, b):                     # f32 matmul (precision-critical statistics)
        return jnp.dot(a, b, preferred_element_type=f32)

    xw = xw_ref[...]                                     # (BT, P*ws) f32

    # ------------------------------ Statis branch ------------------------------
    mean = mxu32(xw, aavg[...])                          # per-window mean  (BT, P)
    cent = xw - mxu32(mean, aexp[...])
    std = jnp.sqrt(mxu32(cent * cent, aavg[...]) * (WS / (WS - 1.0)))  # unbiased

    # torch.diff along the window axis then max over each 8-lane window:
    # one wide subtract + a 3-level slice/max tree; window-p max lands on lane p*WS
    # and is picked up by the pre-folded conv1 selection matrix w1sel.
    d = xw[:, WS:] - xw[:, :PK - WS]                     # (BT, 48)
    m = jnp.maximum(d[:, :-1], d[:, 1:])
    m = jnp.maximum(m[:, :-2], m[:, 2:])
    m = jnp.maximum(m[:, :-4], m[:, 4:])                 # lane l = max(d[l:l+8])
    d2 = mxu(m, w1sel[...]) + b1c[...]                   # Conv1d(P-1 -> P, k=1)

    x3 = jnp.concatenate([mean, std, d2], axis=1)        # (BT, 3P), channel-major
    ha = jnp.maximum(mxu(x3, wa[...]) + ba[...], 0.0)    # conv(3->32,k5)+BN+ReLU
    ha_b = ha.astype(bf)
    hp = jnp.maximum(jnp.dot(ha_b, pa_e[...], preferred_element_type=f32),
                     jnp.dot(ha_b, pa_o[...], preferred_element_type=f32))   # MaxPool(2,2)
    hb = jnp.maximum(mxu(hp, wb[...]) + bb[...], 0.0)    # conv(32->64,k3)+BN+ReLU
    hb_b = hb.astype(bf)
    hq = jnp.maximum(jnp.dot(hb_b, pb_e[...], preferred_element_type=f32),
                     jnp.dot(hb_b, pb_o[...], preferred_element_type=f32))   # MaxPool(2,2)
    hc = jnp.maximum(mxu(hq, wc[...]) + bc[...], 0.0)    # conv(64->128,k3)+BN+ReLU
    # AdaptiveAvgPool1d(1)+Flatten is pre-folded into the head matrix wh2.

    # ------------------------------- TSLA branch -------------------------------
    h = mxu(xw, pe_w[...]) + pe_b[...]                   # PatchEmbed + bias + pos_embed

    kth = (NF - 1) // 2                                  # torch lower-median index
    for dpt in range(DEPTH):
        # LayerNorm 1 (stats in f32; fused block-mean matrix mln = mavg @ mexp)
        cz = h - mxu32(h, mln[...])
        var_w = mxu32(cz * cz, mln[...])
        xn = cz * jax.lax.rsqrt(var_w + 1e-5) * g1[dpt] + b1n[dpt]

        # Adaptive Spectral Block: merged rfft (ortho) along patches
        xrxi = mxu(xn, frfi[...])                        # (BT, 2*NF*C)
        xr = xrxi[:, :NFC]
        xi = xrxi[:, NFC:]

        # adaptive high-frequency mask; energy / median / compare kept in f32
        ew = mxu32(xr * xr + xi * xi, e2[...])           # per-freq energy, repl. over C
        cnt = jnp.zeros_like(ew)
        for j in range(NF):
            cnt = cnt + (ew[:, j * EMB_DIM:j * EMB_DIM + 1] <= ew).astype(f32)
        med = jnp.min(jnp.where(cnt >= kth + 1, ew, jnp.inf), axis=-1, keepdims=True)
        mask = (ew > (med + 1e-6) * thr_ref[dpt]).astype(f32)

        # fused complex weighting: x_fft * (weight + mask * weight_high)
        cr = swr[dpt] + mask * swhr[dpt]
        ci = swi[dpt] + mask * swhi[dpt]
        yr = xr * cr - xi * ci
        yi = xr * ci + xi * cr
        y = mxu(jnp.concatenate([yr, yi], axis=1), ifri[...])    # irfft(n=N, ortho)

        # LayerNorm 2
        cz2 = y - mxu32(y, mln[...])
        var2 = mxu32(cz2 * cz2, mln[...])
        yn = cz2 * jax.lax.rsqrt(var2 + 1e-5) * g2[dpt] + b2n[dpt]

        # ICB (1x1 conv, k=3 conv, cross-gating, 1x1 conv) as wide bf16 matmuls
        yn_b = yn.astype(bf)
        h1 = jnp.dot(yn_b, w1[dpt], preferred_element_type=f32) + b1i[dpt]
        h2 = jnp.dot(yn_b, w2[dpt], preferred_element_type=f32) + b2i[dpt]
        a1 = _gelu(h1)
        a2 = _gelu(h2)
        icb = mxu(h1 * a2 + h2 * a1, w3[dpt]) + b3i[dpt]
        h = h + icb                                      # residual (DropPath = identity)

    # mean-over-patches + head folded into mwh; avg-pool + head2 folded into wh2
    o_ref[...] = mxu(h, mwh[...]) + mxu(hc, wh2[...]) + bh[...]


# ------------------------------- parameters -----------------------------------
def init_params(key):
    ks = iter(jax.random.split(key, 64))

    def nrm(shape, std=0.02):
        return jax.random.normal(next(ks), shape, dtype=jnp.float32) * std

    p = {'pe_w': nrm((EMB_DIM, NUM_CHANNELS, PATCH_SIZE), 0.1),
         'pe_b': nrm((EMB_DIM,), 0.02),
         'pos': nrm((NUM_PATCHES, EMB_DIM), 0.02)}

    layers = []
    for _ in range(DEPTH):
        layers.append({
            'ln1_g': jnp.ones((EMB_DIM,), jnp.float32),
            'ln1_b': jnp.zeros((EMB_DIM,), jnp.float32),
            'ln2_g': jnp.ones((EMB_DIM,), jnp.float32),
            'ln2_b': jnp.zeros((EMB_DIM,), jnp.float32),
            'cw': nrm((EMB_DIM, 2), 0.02),
            'cwh': nrm((EMB_DIM, 2), 0.02),
            'thr': jax.random.uniform(next(ks), (), dtype=jnp.float32),
            'icb_w1': nrm((HIDDEN, EMB_DIM, 1), 0.1),
            'icb_b1': nrm((HIDDEN,), 0.02),
            'icb_w2': nrm((HIDDEN, EMB_DIM, 3), 0.1),
            'icb_b2': nrm((HIDDEN,), 0.02),
            'icb_w3': nrm((EMB_DIM, HIDDEN, 1), 0.1),
            'icb_b3': nrm((EMB_DIM,), 0.02),
        })
    p['layers'] = layers

    st = {'w1c': nrm((NUM_PATCHES, NUM_PATCHES - 1, 1), 0.1),
          'b1c': nrm((NUM_PATCHES,), 0.02),
          'wa': nrm((32, 3, 5), 0.1), 'ba': nrm((32,), 0.02),
          'wb': nrm((64, 32, 3), 0.1), 'bb': nrm((64,), 0.02),
          'wc': nrm((128, 64, 3), 0.1), 'bc': nrm((128,), 0.02)}
    for tag, ch in (('a', 32), ('b', 64), ('c', 128)):
        st['bn%s_g' % tag] = jnp.ones((ch,), jnp.float32)
        st['bn%s_b' % tag] = jnp.zeros((ch,), jnp.float32)
        st['bn%s_m' % tag] = jnp.zeros((ch,), jnp.float32)   # running mean (eval)
        st['bn%s_v' % tag] = jnp.ones((ch,), jnp.float32)    # running var  (eval)
    p['statis'] = st

    p['head_w'] = nrm((OUT_DIM, EMB_DIM), 0.02)
    p['head_b'] = jnp.zeros((OUT_DIM,), jnp.float32)
    p['head2_w'] = nrm((OUT_DIM, 128), 0.02)
    p['head2_b'] = jnp.zeros((OUT_DIM,), jnp.float32)
    return p


def pack_constants(p):
    """Fold all parameters into the wide constant matrices consumed by the kernel."""
    g = lambda a: np.asarray(a, dtype=np.float32)
    eyeN = np.eye(NUM_PATCHES, dtype=np.float32)
    eyeC = np.eye(EMB_DIM, dtype=np.float32)
    eyeF = np.eye(NF, dtype=np.float32)

    # PatchEmbed: Conv1d(Cin, D, k=patch, stride=patch//2) + bias + pos_embed
    wpe = g(p['pe_w']).reshape(EMB_DIM, NUM_CHANNELS * PATCH_SIZE)     # (D, Cin*ps)
    pe_w = np.kron(eyeN, wpe.T)                                        # (PK, NC)
    pe_b = (g(p['pos']) + g(p['pe_b'])[None, :]).reshape(1, NC)

    # fused LayerNorm block-mean matrix (mavg @ mexp)
    mln = np.kron(eyeN, np.full((EMB_DIM, EMB_DIM), 1.0 / EMB_DIM, np.float32))

    # merged rfft / irfft (ortho) along the patch axis as wide matmuls
    F = np.fft.rfft(np.eye(NUM_PATCHES), axis=1, norm='ortho')          # (N, NF)
    Ar = np.fft.irfft(np.eye(NF), n=NUM_PATCHES, axis=1, norm='ortho')  # (NF, N)
    Ai = np.fft.irfft(1j * np.eye(NF), n=NUM_PATCHES, axis=1, norm='ortho')
    frfi = np.concatenate([np.kron(F.real.astype(np.float32), eyeC),
                           np.kron(F.imag.astype(np.float32), eyeC)], axis=1)  # (NC, 2NFC)
    ifri = np.concatenate([np.kron(Ar.astype(np.float32), eyeC),
                           np.kron(Ai.astype(np.float32), eyeC)], axis=0)      # (2NFC, NC)
    # per-frequency energy sum broadcast over channels (esum @ eexp)
    e2 = np.kron(eyeF, np.ones((EMB_DIM, EMB_DIM), np.float32))                # (NFC, NFC)

    # per-layer parameters, stacked over DEPTH
    L = p['layers']
    stk = lambda fn: np.stack([fn(l) for l in L], axis=0)
    g1 = stk(lambda l: np.tile(g(l['ln1_g']), NUM_PATCHES)[None, :])
    b1n = stk(lambda l: np.tile(g(l['ln1_b']), NUM_PATCHES)[None, :])
    g2 = stk(lambda l: np.tile(g(l['ln2_g']), NUM_PATCHES)[None, :])
    b2n = stk(lambda l: np.tile(g(l['ln2_b']), NUM_PATCHES)[None, :])
    swr = stk(lambda l: np.tile(g(l['cw'])[:, 0], NF)[None, :])
    swi = stk(lambda l: np.tile(g(l['cw'])[:, 1], NF)[None, :])
    swhr = stk(lambda l: np.tile(g(l['cwh'])[:, 0], NF)[None, :])
    swhi = stk(lambda l: np.tile(g(l['cwh'])[:, 1], NF)[None, :])
    w1 = stk(lambda l: np.kron(eyeN, g(l['icb_w1'])[:, :, 0].T))       # (NC, NH)
    b1i = stk(lambda l: np.tile(g(l['icb_b1']), NUM_PATCHES)[None, :])

    def w2_wide(l):
        wt = g(l['icb_w2'])                                            # (H, C, 3)
        mat = np.zeros((NC, NH), np.float32)
        for t in range(3):
            for n in range(NUM_PATCHES):
                s = n + t - 1                                          # padding = 1
                if 0 <= s < NUM_PATCHES:
                    mat[s * EMB_DIM:(s + 1) * EMB_DIM,
                        n * HIDDEN:(n + 1) * HIDDEN] += wt[:, :, t].T
        return mat

    w2 = stk(w2_wide)
    b2i = stk(lambda l: np.tile(g(l['icb_b2']), NUM_PATCHES)[None, :])
    w3 = stk(lambda l: np.kron(eyeN, g(l['icb_w3'])[:, :, 0].T))       # (NH, NC)
    b3i = stk(lambda l: np.tile(g(l['icb_b3']), NUM_PATCHES)[None, :])
    thr = np.asarray([float(g(l['thr'])) for l in L], np.float32)      # (DEPTH,)

    # ----- Statis branch constants -----
    st = p['statis']
    aavg = np.kron(eyeN, np.ones((WS, 1), np.float32) / WS)            # (P*ws, P)
    aexp = np.kron(eyeN, np.ones((1, WS), np.float32))                 # (P, P*ws)
    w1c_t = g(st['w1c'])[:, :, 0].T                                    # (P-1, P)
    mwidth = (PK - WS) - (WS - 1)                                      # 41
    w1sel = np.zeros((mwidth, NUM_PATCHES), np.float32)                # fold window-max
    for pp in range(NUM_PATCHES - 1):                                  # selection into conv1
        w1sel[pp * WS, :] = w1c_t[pp, :]
    b1c = g(st['b1c'])[None, :]                                        # (1, P)

    def fold_conv_bn(w, b, gam, bet, rm, rv, l_in, l_out, pad):
        # Conv1d(stride=1) + eval-mode BatchNorm1d folded into a channel-major
        # (Cin*Lin, Cout*Lout) matrix and a (1, Cout*Lout) bias row.
        cout, cin, k = w.shape
        scale = gam / np.sqrt(rv + 1e-5)
        shift = bet - rm * scale
        mat = np.zeros((cin * l_in, cout * l_out), np.float32)
        bias = np.zeros((1, cout * l_out), np.float32)
        for co in range(cout):
            for ci in range(cin):
                for t in range(k):
                    for po in range(l_out):
                        pi = po + t - pad
                        if 0 <= pi < l_in:
                            mat[ci * l_in + pi, co * l_out + po] += w[co, ci, t] * scale[co]
            bias[0, co * l_out:(co + 1) * l_out] = b[co] * scale[co] + shift[co]
        return mat, bias

    def pool_sel(ch, l_in):
        # MaxPool1d(kernel=2, stride=2) as two 0/1 selection matmuls + elementwise max
        l_out = (l_in - 2) // 2 + 1
        a = np.zeros((ch * l_in, ch * l_out), np.float32)
        bm = np.zeros((ch * l_in, ch * l_out), np.float32)
        for c in range(ch):
            for q in range(l_out):
                a[c * l_in + 2 * q, c * l_out + q] = 1.0
                bm[c * l_in + 2 * q + 1, c * l_out + q] = 1.0
        return a, bm, l_out

    l0 = NUM_PATCHES
    wa, ba = fold_conv_bn(g(st['wa']), g(st['ba']), g(st['bna_g']), g(st['bna_b']),
                          g(st['bna_m']), g(st['bna_v']), l0, l0, 2)
    pa_e, pa_o, l1 = pool_sel(32, l0)
    wb, bb = fold_conv_bn(g(st['wb']), g(st['bb']), g(st['bnb_g']), g(st['bnb_b']),
                          g(st['bnb_m']), g(st['bnb_v']), l1, l1, 1)
    pb_e, pb_o, l2 = pool_sel(64, l1)
    wc, bc = fold_conv_bn(g(st['wc']), g(st['bc']), g(st['bnc_g']), g(st['bnc_b']),
                          g(st['bnc_m']), g(st['bnc_v']), l2, l2, 1)

    # AdaptiveAvgPool1d(1)+Flatten folded into head2 (identity when l2 == 1)
    avgc = np.zeros((128 * l2, 128), np.float32)
    for c in range(128):
        avgc[c * l2:(c + 1) * l2, c] = 1.0 / l2
    wh2 = np.zeros((128, 128), np.float32)
    wh2[:, :OUT_DIM] = g(p['head2_w']).T
    wh2c = avgc @ wh2                                                  # (128*l2, 128)

    # mean-over-patches folded into head -> lane-dense 128-wide output
    mpm = np.tile(eyeC, (NUM_PATCHES, 1)) / NUM_PATCHES                # (NC, C)
    whp = np.zeros((EMB_DIM, 128), np.float32)
    whp[:, :OUT_DIM] = g(p['head_w']).T
    mwh = mpm @ whp                                                    # (NC, 128)
    bh = np.zeros((1, 128), np.float32)
    bh[0, :OUT_DIM] = g(p['head_b']) + g(p['head2_b'])

    BF, F32 = jnp.bfloat16, jnp.float32
    consts = [
        (pe_w, BF), (pe_b, F32), (mln, F32), (frfi, BF), (ifri, BF), (e2, F32),
        (g1, F32), (b1n, F32), (g2, F32), (b2n, F32),
        (swr, F32), (swi, F32), (swhr, F32), (swhi, F32),
        (w1, BF), (b1i, F32), (w2, BF), (b2i, F32), (w3, BF), (b3i, F32),
        (aavg, F32), (aexp, F32), (w1sel, BF), (b1c, F32),
        (wa, BF), (ba, F32), (pa_e, BF), (pa_o, BF),
        (wb, BF), (bb, F32), (pb_e, BF), (pb_o, BF),
        (wc, BF), (bc, F32),
        (mwh, BF), (wh2c, BF), (bh, F32),
    ]
    consts = [jnp.asarray(a, dtype=dt) for a, dt in consts]
    return {'consts': consts, 'thr': jnp.asarray(thr, dtype=jnp.float32)}


# ------------------------------ forward wrapper --------------------------------
def _round_up(a, m):
    return ((a + m - 1) // m) * m


def _const_spec(a):
    zeros = (0,) * a.ndim
    return pl.BlockSpec(a.shape, lambda i, thr_s, _z=zeros: _z)


# rough per-row cost (advisory only)
_MM_PER_ROW = (PK * NC
               + DEPTH * (NC * (2 * NFC) + (2 * NFC) * NC + 2 * NC * NH + NH * NC
                          + 4 * NC * NC + NFC * NFC)
               + 3 * PK * NUM_PATCHES
               + (3 * NUM_PATCHES) * 224 + 2 * 224 * 96 + 96 * 192 + 2 * 192 * 64 + 64 * 128
               + NC * 128 + 128 * 128)
_FLOPS_PER_ROW = 2 * _MM_PER_ROW
_TRANS_PER_ROW = DEPTH * (2 * NH + 2 * NC) + NUM_PATCHES


def tslanet_forward(x, packed):
    """x: (B, NUM_CHANNELS, SEQ_LEN) float32 -> logits (B, NUM_CLASSES - 1)."""
    consts, thr = packed['consts'], packed['thr']
    B = x.shape[0]

    # sliding windows (window=patch_size, step=patch_size//2) -> wide rows
    idx = np.arange(NUM_PATCHES)[:, None] * STRIDE + np.arange(PATCH_SIZE)[None, :]
    xwin = x[:, :, idx]                                          # (B, Cin, P, ps)
    xw = jnp.transpose(xwin, (0, 2, 1, 3)).reshape(B, PK)        # (B, P*Cin*ps)

    # batch tiling: sublane-aligned; larger batches get >=2 grid steps so the
    # "parallel" grid axis can shard across both v7x TensorCores.
    Bp = _round_up(B, 8)
    if Bp <= 16:
        bt = Bp
    else:
        bt = min(MAX_BT, _round_up((Bp + 1) // 2, 8))
    bpad = _round_up(Bp, bt)
    if bpad != B:
        xw = jnp.concatenate([xw, jnp.zeros((bpad - B, PK), xw.dtype)], axis=0)
    grid = (bpad // bt,)

    out = pl.pallas_call(
        _tslanet_kernel,
        out_shape=jax.ShapeDtypeStruct((bpad, 128), jnp.float32),
        grid_spec=pltpu.PrefetchScalarGridSpec(
            num_scalar_prefetch=1,                                # ASB thresholds -> SMEM
            grid=grid,
            in_specs=([pl.BlockSpec((bt, PK), lambda i, thr_s: (i, 0))]
                      + [_const_spec(a) for a in consts]),
            out_specs=pl.BlockSpec((bt, 128), lambda i, thr_s: (i, 0)),
        ),
        compiler_params=pltpu.CompilerParams(
            dimension_semantics=("parallel",),
            vmem_limit_bytes=32 * 1024 * 1024),
        cost_estimate=pl.CostEstimate(
            flops=int(_FLOPS_PER_ROW) * int(bpad),
            transcendentals=int(_TRANS_PER_ROW) * int(bpad),
            bytes_accessed=int(bpad) * (PK + 128) * 4 + 3 * (1 << 20)),
    )(thr, xw, *consts)
    return out[:B, :OUT_DIM]


if __name__ == "__main__":
    key = jax.random.PRNGKey(0)
    k_param, k_x = jax.random.split(key)
    params = init_params(k_param)
    packed = pack_constants(params)

    B = 2
    x = jax.random.normal(k_x, (B, NUM_CHANNELS, SEQ_LEN), dtype=jnp.float32)

    out = tslanet_forward(x, packed)
    out = jax.block_until_ready(out)
    assert out.shape == (B, OUT_DIM)
    assert bool(jnp.all(jnp.isfinite(out)))
    print("KERNEL_OK")
</pallas_src>

<mosaic_0001>
module attributes {stable_mosaic.version = 11 : i64} {
  func.func @_tslanet_kernel(%arg0: i32, %arg1: memref<2xf32, #tpu.memory_space<smem>>, %arg2: memref<8x56xf32, #tpu.memory_space<vmem>>, %arg3: memref<56x224xbf16, #tpu.memory_space<vmem>>, %arg4: memref<1x224xf32, #tpu.memory_space<vmem>>, %arg5: memref<224x224xf32, #tpu.memory_space<vmem>>, %arg6: memref<224x256xbf16, #tpu.memory_space<vmem>>, %arg7: memref<256x224xbf16, #tpu.memory_space<vmem>>, %arg8: memref<128x128xf32, #tpu.memory_space<vmem>>, %arg9: memref<2x1x224xf32, #tpu.memory_space<vmem>>, %arg10: memref<2x1x224xf32, #tpu.memory_space<vmem>>, %arg11: memref<2x1x224xf32, #tpu.memory_space<vmem>>, %arg12: memref<2x1x224xf32, #tpu.memory_space<vmem>>, %arg13: memref<2x1x128xf32, #tpu.memory_space<vmem>>, %arg14: memref<2x1x128xf32, #tpu.memory_space<vmem>>, %arg15: memref<2x1x128xf32, #tpu.memory_space<vmem>>, %arg16: memref<2x1x128xf32, #tpu.memory_space<vmem>>, %arg17: memref<2x224x672xbf16, #tpu.memory_space<vmem>>, %arg18: memref<2x1x672xf32, #tpu.memory_space<vmem>>, %arg19: memref<2x224x672xbf16, #tpu.memory_space<vmem>>, %arg20: memref<2x1x672xf32, #tpu.memory_space<vmem>>, %arg21: memref<2x672x224xbf16, #tpu.memory_space<vmem>>, %arg22: memref<2x1x224xf32, #tpu.memory_space<vmem>>, %arg23: memref<56x7xf32, #tpu.memory_space<vmem>>, %arg24: memref<7x56xf32, #tpu.memory_space<vmem>>, %arg25: memref<41x7xbf16, #tpu.memory_space<vmem>>, %arg26: memref<1x7xf32, #tpu.memory_space<vmem>>, %arg27: memref<21x224xbf16, #tpu.memory_space<vmem>>, %arg28: memref<1x224xf32, #tpu.memory_space<vmem>>, %arg29: memref<224x96xbf16, #tpu.memory_space<vmem>>, %arg30: memref<224x96xbf16, #tpu.memory_space<vmem>>, %arg31: memref<96x192xbf16, #tpu.memory_space<vmem>>, %arg32: memref<1x192xf32, #tpu.memory_space<vmem>>, %arg33: memref<192x64xbf16, #tpu.memory_space<vmem>>, %arg34: memref<192x64xbf16, #tpu.memory_space<vmem>>, %arg35: memref<64x128xbf16, #tpu.memory_space<vmem>>, %arg36: memref<1x128xf32, #tpu.memory_space<vmem>>, %arg37: memref<224x128xbf16, #tpu.memory_space<vmem>>, %arg38: memref<128x128xbf16, #tpu.memory_space<vmem>>, %arg39: memref<1x128xf32, #tpu.memory_space<vmem>>, %arg40: memref<8x128xf32, #tpu.memory_space<vmem>>) attributes {dimension_semantics = [#tpu.dimension_semantics<parallel>], iteration_bounds = array<i64: 1>, scalar_prefetch = 1 : i64, scratch_operands = 0 : i64, tpu.core_type = #tpu.core_type<tc>, window_params = [{transform_indices = @transform_0, window_bounds = array<i64: 8, 56>}, {pipeline_mode = #tpu.pipeline_mode<synchronous>, transform_indices = @transform_1, window_bounds = array<i64: 56, 224>}, {pipeline_mode = #tpu.pipeline_mode<synchronous>, transform_indices = @transform_2, window_bounds = array<i64: 1, 224>}, {pipeline_mode = #tpu.pipeline_mode<synchronous>, transform_indices = @transform_3, window_bounds = array<i64: 224, 224>}, {pipeline_mode = #tpu.pipeline_mode<synchronous>, transform_indices = @transform_4, window_bounds = array<i64: 224, 256>}, {pipeline_mode = #tpu.pipeline_mode<synchronous>, transform_indices = @transform_5, window_bounds = array<i64: 256, 224>}, {pipeline_mode = #tpu.pipeline_mode<synchronous>, transform_indices = @transform_6, window_bounds = array<i64: 128, 128>}, {pipeline_mode = #tpu.pipeline_mode<synchronous>, transform_indices = @transform_7, window_bounds = array<i64: 2, 1, 224>}, {pipeline_mode = #tpu.pipeline_mode<synchronous>, transform_indices = @transform_8, window_bounds = array<i64: 2, 1, 224>}, {pipeline_mode = #tpu.pipeline_mode<synchronous>, transform_indices = @transform_9, window_bounds = array<i64: 2, 1, 224>}, {pipeline_mode = #tpu.pipeline_mode<synchronous>, transform_indices = @transform_10, window_bounds = array<i64: 2, 1, 224>}, {pipeline_mode = #tpu.pipeline_mode<synchronous>, transform_indices = @transform_11, window_bounds = array<i64: 2, 1, 128>}, {pipeline_mode = #tpu.pipeline_mode<synchronous>, transform_indices = @transform_12, window_bounds = array<i64: 2, 1, 128>}, {pipeline_mode = #tpu.pipeline_mode<synchronous>, transform_indices = @transform_13, window_bounds = array<i64: 2, 1, 128>}, {pipeline_mode = #tpu.pipeline_mode<synchronous>, transform_indices = @transform_14, window_bounds = array<i64: 2, 1, 128>}, {pipeline_mode = #tpu.pipeline_mode<synchronous>, transform_indices = @transform_15, window_bounds = array<i64: 2, 224, 672>}, {pipeline_mode = #tpu.pipeline_mode<synchronous>, transform_indices = @transform_16, window_bounds = array<i64: 2, 1, 672>}, {pipeline_mode = #tpu.pipeline_mode<synchronous>, transform_indices = @transform_17, window_bounds = array<i64: 2, 224, 672>}, {pipeline_mode = #tpu.pipeline_mode<synchronous>, transform_indices = @transform_18, window_bounds = array<i64: 2, 1, 672>}, {pipeline_mode = #tpu.pipeline_mode<synchronous>, transform_indices = @transform_19, window_bounds = array<i64: 2, 672, 224>}, {pipeline_mode = #tpu.pipeline_mode<synchronous>, transform_indices = @transform_20, window_bounds = array<i64: 2, 1, 224>}, {pipeline_mode = #tpu.pipeline_mode<synchronous>, transform_indices = @transform_21, window_bounds = array<i64: 56, 7>}, {pipeline_mode = #tpu.pipeline_mode<synchronous>, transform_indices = @transform_22, window_bounds = array<i64: 7, 56>}, {pipeline_mode = #tpu.pipeline_mode<synchronous>, transform_indices = @transform_23, window_bounds = array<i64: 41, 7>}, {pipeline_mode = #tpu.pipeline_mode<synchronous>, transform_indices = @transform_24, window_bounds = array<i64: 1, 7>}, {pipeline_mode = #tpu.pipeline_mode<synchronous>, transform_indices = @transform_25, window_bounds = array<i64: 21, 224>}, {pipeline_mode = #tpu.pipeline_mode<synchronous>, transform_indices = @transform_26, window_bounds = array<i64: 1, 224>}, {pipeline_mode = #tpu.pipeline_mode<synchronous>, transform_indices = @transform_27, window_bounds = array<i64: 224, 96>}, {pipeline_mode = #tpu.pipeline_mode<synchronous>, transform_indices = @transform_28, window_bounds = array<i64: 224, 96>}, {pipeline_mode = #tpu.pipeline_mode<synchronous>, transform_indices = @transform_29, window_bounds = array<i64: 96, 192>}, {pipeline_mode = #tpu.pipeline_mode<synchronous>, transform_indices = @transform_30, window_bounds = array<i64: 1, 192>}, {pipeline_mode = #tpu.pipeline_mode<synchronous>, transform_indices = @transform_31, window_bounds = array<i64: 192, 64>}, {pipeline_mode = #tpu.pipeline_mode<synchronous>, transform_indices = @transform_32, window_bounds = array<i64: 192, 64>}, {pipeline_mode = #tpu.pipeline_mode<synchronous>, transform_indices = @transform_33, window_bounds = array<i64: 64, 128>}, {pipeline_mode = #tpu.pipeline_mode<synchronous>, transform_indices = @transform_34, window_bounds = array<i64: 1, 128>}, {pipeline_mode = #tpu.pipeline_mode<synchronous>, transform_indices = @transform_35, window_bounds = array<i64: 224, 128>}, {pipeline_mode = #tpu.pipeline_mode<synchronous>, transform_indices = @transform_36, window_bounds = array<i64: 128, 128>}, {pipeline_mode = #tpu.pipeline_mode<synchronous>, transform_indices = @transform_37, window_bounds = array<i64: 1, 128>}, {transform_indices = @transform_38, window_bounds = array<i64: 8, 128>}]} {
    %c0 = arith.constant 0 : index
    %c0_0 = arith.constant 0 : index
    %0 = vector.load %arg2[%c0, %c0_0] : memref<8x56xf32, #tpu.memory_space<vmem>>, vector<8x56xf32>
    %c0_1 = arith.constant 0 : index
    %c0_2 = arith.constant 0 : index
    %1 = vector.load %arg23[%c0_1, %c0_2] : memref<56x7xf32, #tpu.memory_space<vmem>>, vector<56x7xf32>
    %cst = arith.constant dense<0.000000e+00> : vector<8x7xf32>
    %2 = tpu.matmul %0, %1, %cst {dimension_numbers = #tpu.dot_dimension_numbers<[1], [0], [0], [1], [0, 0, 1, 1], [], []>} : vector<8x56xf32>, vector<56x7xf32>, vector<8x7xf32> -> vector<8x7xf32>
    %c0_3 = arith.constant 0 : index
    %c0_4 = arith.constant 0 : index
    %3 = vector.load %arg24[%c0_3, %c0_4] : memref<7x56xf32, #tpu.memory_space<vmem>>, vector<7x56xf32>
    %cst_5 = arith.constant dense<0.000000e+00> : vector<8x56xf32>
    %4 = tpu.matmul %2, %3, %cst_5 {dimension_numbers = #tpu.dot_dimension_numbers<[1], [0], [0], [1], [0, 0, 1, 1], [], []>} : vector<8x7xf32>, vector<7x56xf32>, vector<8x56xf32> -> vector<8x56xf32>
    %5 = arith.subf %0, %4 : vector<8x56xf32>
    %6 = arith.mulf %5, %5 : vector<8x56xf32>
    %c0_6 = arith.constant 0 : index
    %c0_7 = arith.constant 0 : index
    %7 = vector.load %arg23[%c0_6, %c0_7] : memref<56x7xf32, #tpu.memory_space<vmem>>, vector<56x7xf32>
    %cst_8 = arith.constant dense<0.000000e+00> : vector<8x7xf32>
    %8 = tpu.matmul %6, %7, %cst_8 {dimension_numbers = #tpu.dot_dimension_numbers<[1], [0], [0], [1], [0, 0, 1, 1], [], []>} : vector<8x56xf32>, vector<56x7xf32>, vector<8x7xf32> -> vector<8x7xf32>
    %cst_9 = arith.constant 1.14285719 : f32
    %9 = vector.broadcast %cst_9 : f32 to vector<8x7xf32>
    %10 = arith.mulf %8, %9 : vector<8x7xf32>
    %11 = math.sqrt %10 : vector<8x7xf32>
    %12 = vector.extract_strided_slice %0 {offsets = [0, 8], sizes = [8, 48], strides = [1, 1]} : vector<8x56xf32> to vector<8x48xf32>
    %13 = vector.extract_strided_slice %0 {offsets = [0, 0], sizes = [8, 48], strides = [1, 1]} : vector<8x56xf32> to vector<8x48xf32>
    %14 = arith.subf %12, %13 : vector<8x48xf32>
    %15 = vector.extract_strided_slice %14 {offsets = [0, 0], sizes = [8, 47], strides = [1, 1]} : vector<8x48xf32> to vector<8x47xf32>
    %16 = vector.extract_strided_slice %14 {offsets = [0, 1], sizes = [8, 47], strides = [1, 1]} : vector<8x48xf32> to vector<8x47xf32>
    %17 = arith.maximumf %15, %16 : vector<8x47xf32>
    %18 = vector.extract_strided_slice %17 {offsets = [0, 0], sizes = [8, 45], strides = [1, 1]} : vector<8x47xf32> to vector<8x45xf32>
    %19 = vector.extract_strided_slice %17 {offsets = [0, 2], sizes = [8, 45], strides = [1, 1]} : vector<8x47xf32> to vector<8x45xf32>
    %20 = arith.maximumf %18, %19 : vector<8x45xf32>
    %21 = vector.extract_strided_slice %20 {offsets = [0, 0], sizes = [8, 41], strides = [1, 1]} : vector<8x45xf32> to vector<8x41xf32>
    %22 = vector.extract_strided_slice %20 {offsets = [0, 4], sizes = [8, 41], strides = [1, 1]} : vector<8x45xf32> to vector<8x41xf32>
    %23 = arith.maximumf %21, %22 : vector<8x41xf32>
    %c0_10 = arith.constant 0 : index
    %c0_11 = arith.constant 0 : index
    %24 = vector.load %arg25[%c0_10, %c0_11] : memref<41x7xbf16, #tpu.memory_space<vmem>>, vector<41x7xbf16>
    %25 = arith.truncf %23 : vector<8x41xf32> to vector<8x41xbf16>
    %cst_12 = arith.constant dense<0.000000e+00> : vector<8x7xf32>
    %26 = tpu.matmul %25, %24, %cst_12 {dimension_numbers = #tpu.dot_dimension_numbers<[1], [0], [0], [1], [0, 0, 1, 1], [], []>} : vector<8x41xbf16>, vector<41x7xbf16>, vector<8x7xf32> -> vector<8x7xf32>
    %c0_13 = arith.constant 0 : index
    %c0_14 = arith.constant 0 : index
    %27 = vector.load %arg26[%c0_13, %c0_14] : memref<1x7xf32, #tpu.memory_space<vmem>>, vector<1x7xf32>
    %28 = vector.broadcast %27 : vector<1x7xf32> to vector<8x7xf32>
    %29 = arith.addf %26, %28 : vector<8x7xf32>
    %30 = tpu.concatenate %2, %11, %29 in 1 : vector<8x7xf32>, vector<8x7xf32>, vector<8x7xf32> -> vector<8x21xf32>
    %c0_15 = arith.constant 0 : index
    %c0_16 = arith.constant 0 : index
    %31 = vector.load %arg27[%c0_15, %c0_16] : memref<21x224xbf16, #tpu.memory_space<vmem>>, vector<21x224xbf16>
    %32 = arith.truncf %30 : vector<8x21xf32> to vector<8x21xbf16>
    %cst_17 = arith.constant dense<0.000000e+00> : vector<8x224xf32>
    %33 = tpu.matmul %32, %31, %cst_17 {dimension_numbers = #tpu.dot_dimension_numbers<[1], [0], [0], [1], [0, 0, 1, 1], [], []>} : vector<8x21xbf16>, vector<21x224xbf16>, vector<8x224xf32> -> vector<8x224xf32>
    %c0_18 = arith.constant 0 : index
    %c0_19 = arith.constant 0 : index
    %34 = vector.load %arg28[%c0_18, %c0_19] : memref<1x224xf32, #tpu.memory_space<vmem>>, vector<1x224xf32>
    %35 = vector.broadcast %34 : vector<1x224xf32> to vector<8x224xf32>
    %36 = arith.addf %33, %35 : vector<8x224xf32>
    %cst_20 = arith.constant 0.000000e+00 : f32
    %37 = vector.broadcast %cst_20 : f32 to vector<8x224xf32>
    %38 = arith.maximumf %36, %37 : vector<8x224xf32>
    %39 = arith.truncf %38 : vector<8x224xf32> to vector<8x224xbf16>
    %c0_21 = arith.constant 0 : index
    %c0_22 = arith.constant 0 : index
    %40 = vector.load %arg29[%c0_21, %c0_22] : memref<224x96xbf16, #tpu.memory_space<vmem>>, vector<224x96xbf16>
    %cst_23 = arith.constant dense<0.000000e+00> : vector<8x96xf32>
    %41 = tpu.matmul %39, %40, %cst_23 {dimension_numbers = #tpu.dot_dimension_numbers<[1], [0], [0], [1], [0, 0, 1, 1], [], []>} : vector<8x224xbf16>, vector<224x96xbf16>, vector<8x96xf32> -> vector<8x96xf32>
    %c0_24 = arith.constant 0 : index
    %c0_25 = arith.constant 0 : index
    %42 = vector.load %arg30[%c0_24, %c0_25] : memref<224x96xbf16, #tpu.memory_space<vmem>>, vector<224x96xbf16>
    %cst_26 = arith.constant dense<0.000000e+00> : vector<8x96xf32>
    %43 = tpu.matmul %39, %42, %cst_26 {dimension_numbers = #tpu.dot_dimension_numbers<[1], [0], [0], [1], [0, 0, 1, 1], [], []>} : vector<8x224xbf16>, vector<224x96xbf16>, vector<8x96xf32> -> vector<8x96xf32>
    %44 = arith.maximumf %41, %43 : vector<8x96xf32>
    %c0_27 = arith.constant 0 : index
    %c0_28 = arith.constant 0 : index
    %45 = vector.load %arg31[%c0_27, %c0_28] : memref<96x192xbf16, #tpu.memory_space<vmem>>, vector<96x192xbf16>
    %46 = arith.truncf %44 : vector<8x96xf32> to vector<8x96xbf16>
    %cst_29 = arith.constant dense<0.000000e+00> : vector<8x192xf32>
    %47 = tpu.matmul %46, %45, %cst_29 {dimension_numbers = #tpu.dot_dimension_numbers<[1], [0], [0], [1], [0, 0, 1, 1], [], []>} : vector<8x96xbf16>, vector<96x192xbf16>, vector<8x192xf32> -> vector<8x192xf32>
    %c0_30 = arith.constant 0 : index
    %c0_31 = arith.constant 0 : index
    %48 = vector.load %arg32[%c0_30, %c0_31] : memref<1x192xf32, #tpu.memory_space<vmem>>, vector<1x192xf32>
    %49 = vector.broadcast %48 : vector<1x192xf32> to vector<8x192xf32>
    %50 = arith.addf %47, %49 : vector<8x192xf32>
    %cst_32 = arith.constant 0.000000e+00 : f32
    %51 = vector.broadcast %cst_32 : f32 to vector<8x192xf32>
    %52 = arith.maximumf %50, %51 : vector<8x192xf32>
    %53 = arith.truncf %52 : vector<8x192xf32> to vector<8x192xbf16>
    %c0_33 = arith.constant 0 : index
    %c0_34 = arith.constant 0 : index
    %54 = vector.load %arg33[%c0_33, %c0_34] : memref<192x64xbf16, #tpu.memory_space<vmem>>, vector<192x64xbf16>
    %cst_35 = arith.constant dense<0.000000e+00> : vector<8x64xf32>
    %55 = tpu.matmul %53, %54, %cst_35 {dimension_numbers = #tpu.dot_dimension_numbers<[1], [0], [0], [1], [0, 0, 1, 1], [], []>} : vector<8x192xbf16>, vector<192x64xbf16>, vector<8x64xf32> -> vector<8x64xf32>
    %c0_36 = arith.constant 0 : index
    %c0_37 = arith.constant 0 : index
    %56 = vector.load %arg34[%c0_36, %c0_37] : memref<192x64xbf16, #tpu.memory_space<vmem>>, vector<192x64xbf16>
    %cst_38 = arith.constant dense<0.000000e+00> : vector<8x64xf32>
    %57 = tpu.matmul %53, %56, %cst_38 {dimension_numbers = #tpu.dot_dimension_numbers<[1], [0], [0], [1], [0, 0, 1, 1], [], []>} : vector<8x192xbf16>, vector<192x64xbf16>, vector<8x64xf32> -> vector<8x64xf32>
    %58 = arith.maximumf %55, %57 : vector<8x64xf32>
    %c0_39 = arith.constant 0 : index
    %c0_40 = arith.constant 0 : index
    %59 = vector.load %arg35[%c0_39, %c0_40] : memref<64x128xbf16, #tpu.memory_space<vmem>>, vector<64x128xbf16>
    %60 = arith.truncf %58 : vector<8x64xf32> to vector<8x64xbf16>
    %cst_41 = arith.constant dense<0.000000e+00> : vector<8x128xf32>
    %61 = tpu.matmul %60, %59, %cst_41 {dimension_numbers = #tpu.dot_dimension_numbers<[1], [0], [0], [1], [0, 0, 1, 1], [], []>} : vector<8x64xbf16>, vector<64x128xbf16>, vector<8x128xf32> -> vector<8x128xf32>
    %c0_42 = arith.constant 0 : index
    %c0_43 = arith.constant 0 : index
    %62 = vector.load %arg36[%c0_42, %c0_43] : memref<1x128xf32, #tpu.memory_space<vmem>>, vector<1x128xf32>
    %63 = vector.broadcast %62 : vector<1x128xf32> to vector<8x128xf32>
    %64 = arith.addf %61, %63 : vector<8x128xf32>
    %cst_44 = arith.constant 0.000000e+00 : f32
    %65 = vector.broadcast %cst_44 : f32 to vector<8x128xf32>
    %66 = arith.maximumf %64, %65 : vector<8x128xf32>
    %c0_45 = arith.constant 0 : index
    %c0_46 = arith.constant 0 : index
    %67 = vector.load %arg3[%c0_45, %c0_46] : memref<56x224xbf16, #tpu.memory_space<vmem>>, vector<56x224xbf16>
    %68 = arith.truncf %0 : vector<8x56xf32> to vector<8x56xbf16>
    %cst_47 = arith.constant dense<0.000000e+00> : vector<8x224xf32>
    %69 = tpu.matmul %68, %67, %cst_47 {dimension_numbers = #tpu.dot_dimension_numbers<[1], [0], [0], [1], [0, 0, 1, 1], [], []>} : vector<8x56xbf16>, vector<56x224xbf16>, vector<8x224xf32> -> vector<8x224xf32>
    %c0_48 = arith.constant 0 : index
    %c0_49 = arith.constant 0 : index
    %70 = vector.load %arg4[%c0_48, %c0_49] : memref<1x224xf32, #tpu.memory_space<vmem>>, vector<1x224xf32>
    %71 = vector.broadcast %70 : vector<1x224xf32> to vector<8x224xf32>
    %72 = arith.addf %69, %71 : vector<8x224xf32>
    %c0_50 = arith.constant 0 : index
    %c0_51 = arith.constant 0 : index
    %73 = vector.load %arg5[%c0_50, %c0_51] : memref<224x224xf32, #tpu.memory_space<vmem>>, vector<224x224xf32>
    %cst_52 = arith.constant dense<0.000000e+00> : vector<8x224xf32>
    %74 = tpu.matmul %72, %73, %cst_52 {dimension_numbers = #tpu.dot_dimension_numbers<[1], [0], [0], [1], [0, 0, 1, 1], [], []>} : vector<8x224xf32>, vector<224x224xf32>, vector<8x224xf32> -> vector<8x224xf32>
    %75 = arith.subf %72, %74 : vector<8x224xf32>
    %76 = arith.mulf %75, %75 : vector<8x224xf32>
    %c0_53 = arith.constant 0 : index
    %c0_54 = arith.constant 0 : index
    %77 = vector.load %arg5[%c0_53, %c0_54] : memref<224x224xf32, #tpu.memory_space<vmem>>, vector<224x224xf32>
    %cst_55 = arith.constant dense<0.000000e+00> : vector<8x224xf32>
    %78 = tpu.matmul %76, %77, %cst_55 {dimension_numbers = #tpu.dot_dimension_numbers<[1], [0], [0], [1], [0, 0, 1, 1], [], []>} : vector<8x224xf32>, vector<224x224xf32>, vector<8x224xf32> -> vector<8x224xf32>
    %cst_56 = arith.constant 9.99999974E-6 : f32
    %79 = vector.broadcast %cst_56 : f32 to vector<8x224xf32>
    %80 = arith.addf %78, %79 : vector<8x224xf32>
    %81 = math.rsqrt %80 : vector<8x224xf32>
    %82 = arith.mulf %75, %81 : vector<8x224xf32>
    %c0_57 = arith.constant 0 : index
    %c0_58 = arith.constant 0 : index
    %c0_59 = arith.constant 0 : index
    %83 = vector.load %arg9[%c0_57, %c0_58, %c0_59] : memref<2x1x224xf32, #tpu.memory_space<vmem>>, vector<1x1x224xf32>
    %84 = vector.shape_cast %83 : vector<1x1x224xf32> to vector<1x224xf32>
    %85 = vector.broadcast %84 : vector<1x224xf32> to vector<8x224xf32>
    %86 = arith.mulf %82, %85 : vector<8x224xf32>
    %c0_60 = arith.constant 0 : index
    %c0_61 = arith.constant 0 : index
    %c0_62 = arith.constant 0 : index
    %87 = vector.load %arg10[%c0_60, %c0_61, %c0_62] : memref<2x1x224xf32, #tpu.memory_space<vmem>>, vector<1x1x224xf32>
    %88 = vector.shape_cast %87 : vector<1x1x224xf32> to vector<1x224xf32>
    %89 = vector.broadcast %88 : vector<1x224xf32> to vector<8x224xf32>
    %90 = arith.addf %86, %89 : vector<8x224xf32>
    %c0_63 = arith.constant 0 : index
    %c0_64 = arith.constant 0 : index
    %91 = vector.load %arg6[%c0_63, %c0_64] : memref<224x256xbf16, #tpu.memory_space<vmem>>, vector<224x256xbf16>
    %92 = arith.truncf %90 : vector<8x224xf32> to vector<8x224xbf16>
    %cst_65 = arith.constant dense<0.000000e+00> : vector<8x256xf32>
    %93 = tpu.matmul %92, %91, %cst_65 {dimension_numbers = #tpu.dot_dimension_numbers<[1], [0], [0], [1], [0, 0, 1, 1], [], []>} : vector<8x224xbf16>, vector<224x256xbf16>, vector<8x256xf32> -> vector<8x256xf32>
    %94 = vector.extract_strided_slice %93 {offsets = [0, 0], sizes = [8, 128], strides = [1, 1]} : vector<8x256xf32> to vector<8x128xf32>
    %95 = vector.extract_strided_slice %93 {offsets = [0, 128], sizes = [8, 128], strides = [1, 1]} : vector<8x256xf32> to vector<8x128xf32>
    %96 = arith.mulf %94, %94 : vector<8x128xf32>
    %97 = arith.mulf %95, %95 : vector<8x128xf32>
    %98 = arith.addf %96, %97 : vector<8x128xf32>
    %c0_66 = arith.constant 0 : index
    %c0_67 = arith.constant 0 : index
    %99 = vector.load %arg8[%c0_66, %c0_67] : memref<128x128xf32, #tpu.memory_space<vmem>>, vector<128x128xf32>
    %cst_68 = arith.constant dense<0.000000e+00> : vector<8x128xf32>
    %100 = tpu.matmul %98, %99, %cst_68 {dimension_numbers = #tpu.dot_dimension_numbers<[1], [0], [0], [1], [0, 0, 1, 1], [], []>} : vector<8x128xf32>, vector<128x128xf32>, vector<8x128xf32> -> vector<8x128xf32>
    %cst_69 = arith.constant 0.000000e+00 : f32
    %101 = vector.broadcast %cst_69 : f32 to vector<8x128xf32>
    %102 = vector.extract_strided_slice %100 {offsets = [0, 0], sizes = [8, 1], strides = [1, 1]} : vector<8x128xf32> to vector<8x1xf32>
    %103 = vector.broadcast %102 : vector<8x1xf32> to vector<8x128xf32>
    %104 = arith.cmpf ole, %103, %100 : vector<8x128xf32>
    %105 = arith.extui %104 : vector<8x128xi1> to vector<8x128xi32>
    %106 = arith.sitofp %105 : vector<8x128xi32> to vector<8x128xf32>
    %107 = arith.addf %101, %106 : vector<8x128xf32>
    %108 = vector.extract_strided_slice %100 {offsets = [0, 32], sizes = [8, 1], strides = [1, 1]} : vector<8x128xf32> to vector<8x1xf32>
    %109 = vector.broadcast %108 : vector<8x1xf32> to vector<8x128xf32>
    %110 = arith.cmpf ole, %109, %100 : vector<8x128xf32>
    %111 = arith.extui %110 : vector<8x128xi1> to vector<8x128xi32>
    %112 = arith.sitofp %111 : vector<8x128xi32> to vector<8x128xf32>
    %113 = arith.addf %107, %112 : vector<8x128xf32>
    %114 = vector.extract_strided_slice %100 {offsets = [0, 64], sizes = [8, 1], strides = [1, 1]} : vector<8x128xf32> to vector<8x1xf32>
    %115 = vector.broadcast %114 : vector<8x1xf32> to vector<8x128xf32>
    %116 = arith.cmpf ole, %115, %100 : vector<8x128xf32>
    %117 = arith.extui %116 : vector<8x128xi1> to vector<8x128xi32>
    %118 = arith.sitofp %117 : vector<8x128xi32> to vector<8x128xf32>
    %119 = arith.addf %113, %118 : vector<8x128xf32>
    %120 = vector.extract_strided_slice %100 {offsets = [0, 96], sizes = [8, 1], strides = [1, 1]} : vector<8x128xf32> to vector<8x1xf32>
    %121 = vector.broadcast %120 : vector<8x1xf32> to vector<8x128xf32>
    %122 = arith.cmpf ole, %121, %100 : vector<8x128xf32>
    %123 = arith.extui %122 : vector<8x128xi1> to vector<8x128xi32>
    %124 = arith.sitofp %123 : vector<8x128xi32> to vector<8x128xf32>
    %125 = arith.addf %119, %124 : vector<8x128xf32>
    %cst_70 = arith.constant 2.000000e+00 : f32
    %126 = vector.broadcast %cst_70 : f32 to vector<8x128xf32>
    %127 = arith.cmpf oge, %125, %126 : vector<8x128xf32>
    %cst_71 = arith.constant 0x7F800000 : f32
    %128 = vector.broadcast %cst_71 : f32 to vector<8x128xf32>
    %129 = arith.select %127, %100, %128 : vector<8x128xi1>, vector<8x128xf32>
    %cst_72 = arith.constant dense<0x7F800000> : vector<8xf32>
    %130 = vector.multi_reduction <minimumf>, %129, %cst_72 [1] : vector<8x128xf32> to vector<8xf32>
    %131 = vector.shape_cast %130 : vector<8xf32> to vector<8x1xf32>
    %cst_73 = arith.constant 9.99999997E-7 : f32
    %132 = vector.broadcast %cst_73 : f32 to vector<8x1xf32>
    %133 = arith.addf %131, %132 : vector<8x1xf32>
    %c0_74 = arith.constant 0 : index
    %134 = memref.load %arg1[%c0_74] : memref<2xf32, #tpu.memory_space<smem>>
    %135 = vector.broadcast %134 : f32 to vector<8x1xf32>
    %136 = arith.mulf %133, %135 : vector<8x1xf32>
    %137 = vector.broadcast %136 : vector<8x1xf32> to vector<8x128xf32>
    %138 = arith.cmpf ogt, %100, %137 : vector<8x128xf32>
    %139 = arith.extui %138 : vector<8x128xi1> to vector<8x128xi32>
    %140 = arith.sitofp %139 : vector<8x128xi32> to vector<8x128xf32>
    %c0_75 = arith.constant 0 : index
    %c0_76 = arith.constant 0 : index
    %c0_77 = arith.constant 0 : index
    %141 = vector.load %arg13[%c0_75, %c0_76, %c0_77] : memref<2x1x128xf32, #tpu.memory_space<vmem>>, vector<1x1x128xf32>
    %142 = vector.shape_cast %141 : vector<1x1x128xf32> to vector<1x128xf32>
    %c0_78 = arith.constant 0 : index
    %c0_79 = arith.constant 0 : index
    %c0_80 = arith.constant 0 : index
    %143 = vector.load %arg15[%c0_78, %c0_79, %c0_80] : memref<2x1x128xf32, #tpu.memory_space<vmem>>, vector<1x1x128xf32>
    %144 = vector.shape_cast %143 : vector<1x1x128xf32> to vector<1x128xf32>
    %145 = vector.broadcast %144 : vector<1x128xf32> to vector<8x128xf32>
    %146 = arith.mulf %140, %145 : vector<8x128xf32>
    %147 = vector.broadcast %142 : vector<1x128xf32> to vector<8x128xf32>
    %148 = arith.addf %147, %146 : vector<8x128xf32>
    %c0_81 = arith.constant 0 : index
    %c0_82 = arith.constant 0 : index
    %c0_83 = arith.constant 0 : index
    %149 = vector.load %arg14[%c0_81, %c0_82, %c0_83] : memref<2x1x128xf32, #tpu.memory_space<vmem>>, vector<1x1x128xf32>
    %150 = vector.shape_cast %149 : vector<1x1x128xf32> to vector<1x128xf32>
    %c0_84 = arith.constant 0 : index
    %c0_85 = arith.constant 0 : index
    %c0_86 = arith.constant 0 : index
    %151 = vector.load %arg16[%c0_84, %c0_85, %c0_86] : memref<2x1x128xf32, #tpu.memory_space<vmem>>, vector<1x1x128xf32>
    %152 = vector.shape_cast %151 : vector<1x1x128xf32> to vector<1x128xf32>
    %153 = vector.broadcast %152 : vector<1x128xf32> to vector<8x128xf32>
    %154 = arith.mulf %140, %153 : vector<8x128xf32>
    %155 = vector.broadcast %150 : vector<1x128xf32> to vector<8x128xf32>
    %156 = arith.addf %155, %154 : vector<8x128xf32>
    %157 = arith.mulf %94, %148 : vector<8x128xf32>
    %158 = arith.mulf %95, %156 : vector<8x128xf32>
    %159 = arith.subf %157, %158 : vector<8x128xf32>
    %160 = arith.mulf %94, %156 : vector<8x128xf32>
    %161 = arith.mulf %95, %148 : vector<8x128xf32>
    %162 = arith.addf %160, %161 : vector<8x128xf32>
    %163 = tpu.concatenate %159, %162 in 1 : vector<8x128xf32>, vector<8x128xf32> -> vector<8x256xf32>
    %c0_87 = arith.constant 0 : index
    %c0_88 = arith.constant 0 : index
    %164 = vector.load %arg7[%c0_87, %c0_88] : memref<256x224xbf16, #tpu.memory_space<vmem>>, vector<256x224xbf16>
    %165 = arith.truncf %163 : vector<8x256xf32> to vector<8x256xbf16>
    %cst_89 = arith.constant dense<0.000000e+00> : vector<8x224xf32>
    %166 = tpu.matmul %165, %164, %cst_89 {dimension_numbers = #tpu.dot_dimension_numbers<[1], [0], [0], [1], [0, 0, 1, 1], [], []>} : vector<8x256xbf16>, vector<256x224xbf16>, vector<8x224xf32> -> vector<8x224xf32>
    %c0_90 = arith.constant 0 : index
    %c0_91 = arith.constant 0 : index
    %167 = vector.load %arg5[%c0_90, %c0_91] : memref<224x224xf32, #tpu.memory_space<vmem>>, vector<224x224xf32>
    %cst_92 = arith.constant dense<0.000000e+00> : vector<8x224xf32>
    %168 = tpu.matmul %166, %167, %cst_92 {dimension_numbers = #tpu.dot_dimension_numbers<[1], [0], [0], [1], [0, 0, 1, 1], [], []>} : vector<8x224xf32>, vector<224x224xf32>, vector<8x224xf32> -> vector<8x224xf32>
    %169 = arith.subf %166, %168 : vector<8x224xf32>
    %170 = arith.mulf %169, %169 : vector<8x224xf32>
    %c0_93 = arith.constant 0 : index
    %c0_94 = arith.constant 0 : index
    %171 = vector.load %arg5[%c0_93, %c0_94] : memref<224x224xf32, #tpu.memory_space<vmem>>, vector<224x224xf32>
    %cst_95 = arith.constant dense<0.000000e+00> : vector<8x224xf32>
    %172 = tpu.matmul %170, %171, %cst_95 {dimension_numbers = #tpu.dot_dimension_numbers<[1], [0], [0], [1], [0, 0, 1, 1], [], []>} : vector<8x224xf32>, vector<224x224xf32>, vector<8x224xf32> -> vector<8x224xf32>
    %cst_96 = arith.constant 9.99999974E-6 : f32
    %173 = vector.broadcast %cst_96 : f32 to vector<8x224xf32>
    %174 = arith.addf %172, %173 : vector<8x224xf32>
    %175 = math.rsqrt %174 : vector<8x224xf32>
    %176 = arith.mulf %169, %175 : vector<8x224xf32>
    %c0_97 = arith.constant 0 : index
    %c0_98 = arith.constant 0 : index
    %c0_99 = arith.constant 0 : index
    %177 = vector.load %arg11[%c0_97, %c0_98, %c0_99] : memref<2x1x224xf32, #tpu.memory_space<vmem>>, vector<1x1x224xf32>
    %178 = vector.shape_cast %177 : vector<1x1x224xf32> to vector<1x224xf32>
    %179 = vector.broadcast %178 : vector<1x224xf32> to vector<8x224xf32>
    %180 = arith.mulf %176, %179 : vector<8x224xf32>
    %c0_100 = arith.constant 0 : index
    %c0_101 = arith.constant 0 : index
    %c0_102 = arith.constant 0 : index
    %181 = vector.load %arg12[%c0_100, %c0_101, %c0_102] : memref<2x1x224xf32, #tpu.memory_space<vmem>>, vector<1x1x224xf32>
    %182 = vector.shape_cast %181 : vector<1x1x224xf32> to vector<1x224xf32>
    %183 = vector.broadcast %182 : vector<1x224xf32> to vector<8x224xf32>
    %184 = arith.addf %180, %183 : vector<8x224xf32>
    %185 = arith.truncf %184 : vector<8x224xf32> to vector<8x224xbf16>
    %c0_103 = arith.constant 0 : index
    %c0_104 = arith.constant 0 : index
    %c0_105 = arith.constant 0 : index
    %186 = vector.load %arg17[%c0_103, %c0_104, %c0_105] : memref<2x224x672xbf16, #tpu.memory_space<vmem>>, vector<1x224x672xbf16>
    %187 = vector.shape_cast %186 : vector<1x224x672xbf16> to vector<224x672xbf16>
    %cst_106 = arith.constant dense<0.000000e+00> : vector<8x672xf32>
    %188 = tpu.matmul %185, %187, %cst_106 {dimension_numbers = #tpu.dot_dimension_numbers<[1], [0], [0], [1], [0, 0, 1, 1], [], []>} : vector<8x224xbf16>, vector<224x672xbf16>, vector<8x672xf32> -> vector<8x672xf32>
    %c0_107 = arith.constant 0 : index
    %c0_108 = arith.constant 0 : index
    %c0_109 = arith.constant 0 : index
    %189 = vector.load %arg18[%c0_107, %c0_108, %c0_109] : memref<2x1x672xf32, #tpu.memory_space<vmem>>, vector<1x1x672xf32>
    %190 = vector.shape_cast %189 : vector<1x1x672xf32> to vector<1x672xf32>
    %191 = vector.broadcast %190 : vector<1x672xf32> to vector<8x672xf32>
    %192 = arith.addf %188, %191 : vector<8x672xf32>
    %c0_110 = arith.constant 0 : index
    %c0_111 = arith.constant 0 : index
    %c0_112 = arith.constant 0 : index
    %193 = vector.load %arg19[%c0_110, %c0_111, %c0_112] : memref<2x224x672xbf16, #tpu.memory_space<vmem>>, vector<1x224x672xbf16>
    %194 = vector.shape_cast %193 : vector<1x224x672xbf16> to vector<224x672xbf16>
    %cst_113 = arith.constant dense<0.000000e+00> : vector<8x672xf32>
    %195 = tpu.matmul %185, %194, %cst_113 {dimension_numbers = #tpu.dot_dimension_numbers<[1], [0], [0], [1], [0, 0, 1, 1], [], []>} : vector<8x224xbf16>, vector<224x672xbf16>, vector<8x672xf32> -> vector<8x672xf32>
    %c0_114 = arith.constant 0 : index
    %c0_115 = arith.constant 0 : index
    %c0_116 = arith.constant 0 : index
    %196 = vector.load %arg20[%c0_114, %c0_115, %c0_116] : memref<2x1x672xf32, #tpu.memory_space<vmem>>, vector<1x1x672xf32>
    %197 = vector.shape_cast %196 : vector<1x1x672xf32> to vector<1x672xf32>
    %198 = vector.broadcast %197 : vector<1x672xf32> to vector<8x672xf32>
    %199 = arith.addf %195, %198 : vector<8x672xf32>
    %cst_117 = arith.constant 5.000000e-01 : f32
    %200 = vector.broadcast %cst_117 : f32 to vector<8x672xf32>
    %201 = arith.mulf %200, %192 : vector<8x672xf32>
    %cst_118 = arith.constant 4.471500e-02 : f32
    %202 = vector.broadcast %cst_118 : f32 to vector<8x672xf32>
    %203 = arith.mulf %202, %192 : vector<8x672xf32>
    %204 = arith.mulf %203, %192 : vector<8x672xf32>
    %205 = arith.mulf %204, %192 : vector<8x672xf32>
    %206 = arith.addf %192, %205 : vector<8x672xf32>
    %cst_119 = arith.constant 0.797884583 : f32
    %207 = vector.broadcast %cst_119 : f32 to vector<8x672xf32>
    %208 = arith.mulf %207, %206 : vector<8x672xf32>
    %209 = math.tanh %208 : vector<8x672xf32>
    %cst_120 = arith.constant 1.000000e+00 : f32
    %210 = vector.broadcast %cst_120 : f32 to vector<8x672xf32>
    %211 = arith.addf %210, %209 : vector<8x672xf32>
    %212 = arith.mulf %201, %211 : vector<8x672xf32>
    %cst_121 = arith.constant 5.000000e-01 : f32
    %213 = vector.broadcast %cst_121 : f32 to vector<8x672xf32>
    %214 = arith.mulf %213, %199 : vector<8x672xf32>
    %cst_122 = arith.constant 4.471500e-02 : f32
    %215 = vector.broadcast %cst_122 : f32 to vector<8x672xf32>
    %216 = arith.mulf %215, %199 : vector<8x672xf32>
    %217 = arith.mulf %216, %199 : vector<8x672xf32>
    %218 = arith.mulf %217, %199 : vector<8x672xf32>
    %219 = arith.addf %199, %218 : vector<8x672xf32>
    %cst_123 = arith.constant 0.797884583 : f32
    %220 = vector.broadcast %cst_123 : f32 to vector<8x672xf32>
    %221 = arith.mulf %220, %219 : vector<8x672xf32>
    %222 = math.tanh %221 : vector<8x672xf32>
    %cst_124 = arith.constant 1.000000e+00 : f32
    %223 = vector.broadcast %cst_124 : f32 to vector<8x672xf32>
    %224 = arith.addf %223, %222 : vector<8x672xf32>
    %225 = arith.mulf %214, %224 : vector<8x672xf32>
    %226 = arith.mulf %192, %225 : vector<8x672xf32>
    %227 = arith.mulf %199, %212 : vector<8x672xf32>
    %228 = arith.addf %226, %227 : vector<8x672xf32>
    %c0_125 = arith.constant 0 : index
    %c0_126 = arith.constant 0 : index
    %c0_127 = arith.constant 0 : index
    %229 = vector.load %arg21[%c0_125, %c0_126, %c0_127] : memref<2x672x224xbf16, #tpu.memory_space<vmem>>, vector<1x672x224xbf16>
    %230 = vector.shape_cast %229 : vector<1x672x224xbf16> to vector<672x224xbf16>
    %231 = arith.truncf %228 : vector<8x672xf32> to vector<8x672xbf16>
    %cst_128 = arith.constant dense<0.000000e+00> : vector<8x224xf32>
    %232 = tpu.matmul %231, %230, %cst_128 {dimension_numbers = #tpu.dot_dimension_numbers<[1], [0], [0], [1], [0, 0, 1, 1], [], []>} : vector<8x672xbf16>, vector<672x224xbf16>, vector<8x224xf32> -> vector<8x224xf32>
    %c0_129 = arith.constant 0 : index
    %c0_130 = arith.constant 0 : index
    %c0_131 = arith.constant 0 : index
    %233 = vector.load %arg22[%c0_129, %c0_130, %c0_131] : memref<2x1x224xf32, #tpu.memory_space<vmem>>, vector<1x1x224xf32>
    %234 = vector.shape_cast %233 : vector<1x1x224xf32> to vector<1x224xf32>
    %235 = vector.broadcast %234 : vector<1x224xf32> to vector<8x224xf32>
    %236 = arith.addf %232, %235 : vector<8x224xf32>
    %237 = arith.addf %72, %236 : vector<8x224xf32>
    %c0_132 = arith.constant 0 : index
    %c0_133 = arith.constant 0 : index
    %238 = vector.load %arg5[%c0_132, %c0_133] : memref<224x224xf32, #tpu.memory_space<vmem>>, vector<224x224xf32>
    %cst_134 = arith.constant dense<0.000000e+00> : vector<8x224xf32>
    %239 = tpu.matmul %237, %238, %cst_134 {dimension_numbers = #tpu.dot_dimension_numbers<[1], [0], [0], [1], [0, 0, 1, 1], [], []>} : vector<8x224xf32>, vector<224x224xf32>, vector<8x224xf32> -> vector<8x224xf32>
    %240 = arith.subf %237, %239 : vector<8x224xf32>
    %241 = arith.mulf %240, %240 : vector<8x224xf32>
    %c0_135 = arith.constant 0 : index
    %c0_136 = arith.constant 0 : index
    %242 = vector.load %arg5[%c0_135, %c0_136] : memref<224x224xf32, #tpu.memory_space<vmem>>, vector<224x224xf32>
    %cst_137 = arith.constant dense<0.000000e+00> : vector<8x224xf32>
    %243 = tpu.matmul %241, %242, %cst_137 {dimension_numbers = #tpu.dot_dimension_numbers<[1], [0], [0], [1], [0, 0, 1, 1], [], []>} : vector<8x224xf32>, vector<224x224xf32>, vector<8x224xf32> -> vector<8x224xf32>
    %cst_138 = arith.constant 9.99999974E-6 : f32
    %244 = vector.broadcast %cst_138 : f32 to vector<8x224xf32>
    %245 = arith.addf %243, %244 : vector<8x224xf32>
    %246 = math.rsqrt %245 : vector<8x224xf32>
    %247 = arith.mulf %240, %246 : vector<8x224xf32>
    %c1 = arith.constant 1 : index
    %c0_139 = arith.constant 0 : index
    %c0_140 = arith.constant 0 : index
    %248 = vector.load %arg9[%c1, %c0_139, %c0_140] : memref<2x1x224xf32, #tpu.memory_space<vmem>>, vector<1x1x224xf32>
    %249 = vector.shape_cast %248 : vector<1x1x224xf32> to vector<1x224xf32>
    %250 = vector.broadcast %249 : vector<1x224xf32> to vector<8x224xf32>
    %251 = arith.mulf %247, %250 : vector<8x224xf32>
    %c1_141 = arith.constant 1 : index
    %c0_142 = arith.constant 0 : index
    %c0_143 = arith.constant 0 : index
    %252 = vector.load %arg10[%c1_141, %c0_142, %c0_143] : memref<2x1x224xf32, #tpu.memory_space<vmem>>, vector<1x1x224xf32>
    %253 = vector.shape_cast %252 : vector<1x1x224xf32> to vector<1x224xf32>
    %254 = vector.broadcast %253 : vector<1x224xf32> to vector<8x224xf32>
    %255 = arith.addf %251, %254 : vector<8x224xf32>
    %c0_144 = arith.constant 0 : index
    %c0_145 = arith.constant 0 : index
    %256 = vector.load %arg6[%c0_144, %c0_145] : memref<224x256xbf16, #tpu.memory_space<vmem>>, vector<224x256xbf16>
    %257 = arith.truncf %255 : vector<8x224xf32> to vector<8x224xbf16>
    %cst_146 = arith.constant dense<0.000000e+00> : vector<8x256xf32>
    %258 = tpu.matmul %257, %256, %cst_146 {dimension_numbers = #tpu.dot_dimension_numbers<[1], [0], [0], [1], [0, 0, 1, 1], [], []>} : vector<8x224xbf16>, vector<224x256xbf16>, vector<8x256xf32> -> vector<8x256xf32>
    %259 = vector.extract_strided_slice %258 {offsets = [0, 0], sizes = [8, 128], strides = [1, 1]} : vector<8x256xf32> to vector<8x128xf32>
    %260 = vector.extract_strided_slice %258 {offsets = [0, 128], sizes = [8, 128], strides = [1, 1]} : vector<8x256xf32> to vector<8x128xf32>
    %261 = arith.mulf %259, %259 : vector<8x128xf32>
    %262 = arith.mulf %260, %260 : vector<8x128xf32>
    %263 = arith.addf %261, %262 : vector<8x128xf32>
    %c0_147 = arith.constant 0 : index
    %c0_148 = arith.constant 0 : index
    %264 = vector.load %arg8[%c0_147, %c0_148] : memref<128x128xf32, #tpu.memory_space<vmem>>, vector<128x128xf32>
    %cst_149 = arith.constant dense<0.000000e+00> : vector<8x128xf32>
    %265 = tpu.matmul %263, %264, %cst_149 {dimension_numbers = #tpu.dot_dimension_numbers<[1], [0], [0], [1], [0, 0, 1, 1], [], []>} : vector<8x128xf32>, vector<128x128xf32>, vector<8x128xf32> -> vector<8x128xf32>
    %cst_150 = arith.constant 0.000000e+00 : f32
    %266 = vector.broadcast %cst_150 : f32 to vector<8x128xf32>
    %267 = vector.extract_strided_slice %265 {offsets = [0, 0], sizes = [8, 1], strides = [1, 1]} : vector<8x128xf32> to vector<8x1xf32>
    %268 = vector.broadcast %267 : vector<8x1xf32> to vector<8x128xf32>
    %269 = arith.cmpf ole, %268, %265 : vector<8x128xf32>
    %270 = arith.extui %269 : vector<8x128xi1> to vector<8x128xi32>
    %271 = arith.sitofp %270 : vector<8x128xi32> to vector<8x128xf32>
    %272 = arith.addf %266, %271 : vector<8x128xf32>
    %273 = vector.extract_strided_slice %265 {offsets = [0, 32], sizes = [8, 1], strides = [1, 1]} : vector<8x128xf32> to vector<8x1xf32>
    %274 = vector.broadcast %273 : vector<8x1xf32> to vector<8x128xf32>
    %275 = arith.cmpf ole, %274, %265 : vector<8x128xf32>
    %276 = arith.extui %275 : vector<8x128xi1> to vector<8x128xi32>
    %277 = arith.sitofp %276 : vector<8x128xi32> to vector<8x128xf32>
    %278 = arith.addf %272, %277 : vector<8x128xf32>
    %279 = vector.extract_strided_slice %265 {offsets = [0, 64], sizes = [8, 1], strides = [1, 1]} : vector<8x128xf32> to vector<8x1xf32>
    %280 = vector.broadcast %279 : vector<8x1xf32> to vector<8x128xf32>
    %281 = arith.cmpf ole, %280, %265 : vector<8x128xf32>
    %282 = arith.extui %281 : vector<8x128xi1> to vector<8x128xi32>
    %283 = arith.sitofp %282 : vector<8x128xi32> to vector<8x128xf32>
    %284 = arith.addf %278, %283 : vector<8x128xf32>
    %285 = vector.extract_strided_slice %265 {offsets = [0, 96], sizes = [8, 1], strides = [1, 1]} : vector<8x128xf32> to vector<8x1xf32>
    %286 = vector.broadcast %285 : vector<8x1xf32> to vector<8x128xf32>
    %287 = arith.cmpf ole, %286, %265 : vector<8x128xf32>
    %288 = arith.extui %287 : vector<8x128xi1> to vector<8x128xi32>
    %289 = arith.sitofp %288 : vector<8x128xi32> to vector<8x128xf32>
    %290 = arith.addf %284, %289 : vector<8x128xf32>
    %cst_151 = arith.constant 2.000000e+00 : f32
    %291 = vector.broadcast %cst_151 : f32 to vector<8x128xf32>
    %292 = arith.cmpf oge, %290, %291 : vector<8x128xf32>
    %cst_152 = arith.constant 0x7F800000 : f32
    %293 = vector.broadcast %cst_152 : f32 to vector<8x128xf32>
    %294 = arith.select %292, %265, %293 : vector<8x128xi1>, vector<8x128xf32>
    %cst_153 = arith.constant dense<0x7F800000> : vector<8xf32>
    %295 = vector.multi_reduction <minimumf>, %294, %cst_153 [1] : vector<8x128xf32> to vector<8xf32>
    %296 = vector.shape_cast %295 : vector<8xf32> to vector<8x1xf32>
    %cst_154 = arith.constant 9.99999997E-7 : f32
    %297 = vector.broadcast %cst_154 : f32 to vector<8x1xf32>
    %298 = arith.addf %296, %297 : vector<8x1xf32>
    %c1_155 = arith.constant 1 : index
    %299 = memref.load %arg1[%c1_155] : memref<2xf32, #tpu.memory_space<smem>>
    %300 = vector.broadcast %299 : f32 to vector<8x1xf32>
    %301 = arith.mulf %298, %300 : vector<8x1xf32>
    %302 = vector.broadcast %301 : vector<8x1xf32> to vector<8x128xf32>
    %303 = arith.cmpf ogt, %265, %302 : vector<8x128xf32>
    %304 = arith.extui %303 : vector<8x128xi1> to vector<8x128xi32>
    %305 = arith.sitofp %304 : vector<8x128xi32> to vector<8x128xf32>
    %c1_156 = arith.constant 1 : index
    %c0_157 = arith.constant 0 : index
    %c0_158 = arith.constant 0 : index
    %306 = vector.load %arg13[%c1_156, %c0_157, %c0_158] : memref<2x1x128xf32, #tpu.memory_space<vmem>>, vector<1x1x128xf32>
    %307 = vector.shape_cast %306 : vector<1x1x128xf32> to vector<1x128xf32>
    %c1_159 = arith.constant 1 : index
    %c0_160 = arith.constant 0 : index
    %c0_161 = arith.constant 0 : index
    %308 = vector.load %arg15[%c1_159, %c0_160, %c0_161] : memref<2x1x128xf32, #tpu.memory_space<vmem>>, vector<1x1x128xf32>
    %309 = vector.shape_cast %308 : vector<1x1x128xf32> to vector<1x128xf32>
    %310 = vector.broadcast %309 : vector<1x128xf32> to vector<8x128xf32>
    %311 = arith.mulf %305, %310 : vector<8x128xf32>
    %312 = vector.broadcast %307 : vector<1x128xf32> to vector<8x128xf32>
    %313 = arith.addf %312, %311 : vector<8x128xf32>
    %c1_162 = arith.constant 1 : index
    %c0_163 = arith.constant 0 : index
    %c0_164 = arith.constant 0 : index
    %314 = vector.load %arg14[%c1_162, %c0_163, %c0_164] : memref<2x1x128xf32, #tpu.memory_space<vmem>>, vector<1x1x128xf32>
    %315 = vector.shape_cast %314 : vector<1x1x128xf32> to vector<1x128xf32>
    %c1_165 = arith.constant 1 : index
    %c0_166 = arith.constant 0 : index
    %c0_167 = arith.constant 0 : index
    %316 = vector.load %arg16[%c1_165, %c0_166, %c0_167] : memref<2x1x128xf32, #tpu.memory_space<vmem>>, vector<1x1x128xf32>
    %317 = vector.shape_cast %316 : vector<1x1x128xf32> to vector<1x128xf32>
    %318 = vector.broadcast %317 : vector<1x128xf32> to vector<8x128xf32>
    %319 = arith.mulf %305, %318 : vector<8x128xf32>
    %320 = vector.broadcast %315 : vector<1x128xf32> to vector<8x128xf32>
    %321 = arith.addf %320, %319 : vector<8x128xf32>
    %322 = arith.mulf %259, %313 : vector<8x128xf32>
    %323 = arith.mulf %260, %321 : vector<8x128xf32>
    %324 = arith.subf %322, %323 : vector<8x128xf32>
    %325 = arith.mulf %259, %321 : vector<8x128xf32>
    %326 = arith.mulf %260, %313 : vector<8x128xf32>
    %327 = arith.addf %325, %326 : vector<8x128xf32>
    %328 = tpu.concatenate %324, %327 in 1 : vector<8x128xf32>, vector<8x128xf32> -> vector<8x256xf32>
    %c0_168 = arith.constant 0 : index
    %c0_169 = arith.constant 0 : index
    %329 = vector.load %arg7[%c0_168, %c0_169] : memref<256x224xbf16, #tpu.memory_space<vmem>>, vector<256x224xbf16>
    %330 = arith.truncf %328 : vector<8x256xf32> to vector<8x256xbf16>
    %cst_170 = arith.constant dense<0.000000e+00> : vector<8x224xf32>
    %331 = tpu.matmul %330, %329, %cst_170 {dimension_numbers = #tpu.dot_dimension_numbers<[1], [0], [0], [1], [0, 0, 1, 1], [], []>} : vector<8x256xbf16>, vector<256x224xbf16>, vector<8x224xf32> -> vector<8x224xf32>
    %c0_171 = arith.constant 0 : index
    %c0_172 = arith.constant 0 : index
    %332 = vector.load %arg5[%c0_171, %c0_172] : memref<224x224xf32, #tpu.memory_space<vmem>>, vector<224x224xf32>
    %cst_173 = arith.constant dense<0.000000e+00> : vector<8x224xf32>
    %333 = tpu.matmul %331, %332, %cst_173 {dimension_numbers = #tpu.dot_dimension_numbers<[1], [0], [0], [1], [0, 0, 1, 1], [], []>} : vector<8x224xf32>, vector<224x224xf32>, vector<8x224xf32> -> vector<8x224xf32>
    %334 = arith.subf %331, %333 : vector<8x224xf32>
    %335 = arith.mulf %334, %334 : vector<8x224xf32>
    %c0_174 = arith.constant 0 : index
    %c0_175 = arith.constant 0 : index
    %336 = vector.load %arg5[%c0_174, %c0_175] : memref<224x224xf32, #tpu.memory_space<vmem>>, vector<224x224xf32>
    %cst_176 = arith.constant dense<0.000000e+00> : vector<8x224xf32>
    %337 = tpu.matmul %335, %336, %cst_176 {dimension_numbers = #tpu.dot_dimension_numbers<[1], [0], [0], [1], [0, 0, 1, 1], [], []>} : vector<8x224xf32>, vector<224x224xf32>, vector<8x224xf32> -> vector<8x224xf32>
    %cst_177 = arith.constant 9.99999974E-6 : f32
    %338 = vector.broadcast %cst_177 : f32 to vector<8x224xf32>
    %339 = arith.addf %337, %338 : vector<8x224xf32>
    %340 = math.rsqrt %339 : vector<8x224xf32>
    %341 = arith.mulf %334, %340 : vector<8x224xf32>
    %c1_178 = arith.constant 1 : index
    %c0_179 = arith.constant 0 : index
    %c0_180 = arith.constant 0 : index
    %342 = vector.load %arg11[%c1_178, %c0_179, %c0_180] : memref<2x1x224xf32, #tpu.memory_space<vmem>>, vector<1x1x224xf32>
    %343 = vector.shape_cast %342 : vector<1x1x224xf32> to vector<1x224xf32>
    %344 = vector.broadcast %343 : vector<1x224xf32> to vector<8x224xf32>
    %345 = arith.mulf %341, %344 : vector<8x224xf32>
    %c1_181 = arith.constant 1 : index
    %c0_182 = arith.constant 0 : index
    %c0_183 = arith.constant 0 : index
    %346 = vector.load %arg12[%c1_181, %c0_182, %c0_183] : memref<2x1x224xf32, #tpu.memory_space<vmem>>, vector<1x1x224xf32>
    %347 = vector.shape_cast %346 : vector<1x1x224xf32> to vector<1x224xf32>
    %348 = vector.broadcast %347 : vector<1x224xf32> to vector<8x224xf32>
    %349 = arith.addf %345, %348 : vector<8x224xf32>
    %350 = arith.truncf %349 : vector<8x224xf32> to vector<8x224xbf16>
    %c1_184 = arith.constant 1 : index
    %c0_185 = arith.constant 0 : index
    %c0_186 = arith.constant 0 : index
    %351 = vector.load %arg17[%c1_184, %c0_185, %c0_186] : memref<2x224x672xbf16, #tpu.memory_space<vmem>>, vector<1x224x672xbf16>
    %352 = vector.shape_cast %351 : vector<1x224x672xbf16> to vector<224x672xbf16>
    %cst_187 = arith.constant dense<0.000000e+00> : vector<8x672xf32>
    %353 = tpu.matmul %350, %352, %cst_187 {dimension_numbers = #tpu.dot_dimension_numbers<[1], [0], [0], [1], [0, 0, 1, 1], [], []>} : vector<8x224xbf16>, vector<224x672xbf16>, vector<8x672xf32> -> vector<8x672xf32>
    %c1_188 = arith.constant 1 : index
    %c0_189 = arith.constant 0 : index
    %c0_190 = arith.constant 0 : index
    %354 = vector.load %arg18[%c1_188, %c0_189, %c0_190] : memref<2x1x672xf32, #tpu.memory_space<vmem>>, vector<1x1x672xf32>
    %355 = vector.shape_cast %354 : vector<1x1x672xf32> to vector<1x672xf32>
    %356 = vector.broadcast %355 : vector<1x672xf32> to vector<8x672xf32>
    %357 = arith.addf %353, %356 : vector<8x672xf32>
    %c1_191 = arith.constant 1 : index
    %c0_192 = arith.constant 0 : index
    %c0_193 = arith.constant 0 : index
    %358 = vector.load %arg19[%c1_191, %c0_192, %c0_193] : memref<2x224x672xbf16, #tpu.memory_space<vmem>>, vector<1x224x672xbf16>
    %359 = vector.shape_cast %358 : vector<1x224x672xbf16> to vector<224x672xbf16>
    %cst_194 = arith.constant dense<0.000000e+00> : vector<8x672xf32>
    %360 = tpu.matmul %350, %359, %cst_194 {dimension_numbers = #tpu.dot_dimension_numbers<[1], [0], [0], [1], [0, 0, 1, 1], [], []>} : vector<8x224xbf16>, vector<224x672xbf16>, vector<8x672xf32> -> vector<8x672xf32>
    %c1_195 = arith.constant 1 : index
    %c0_196 = arith.constant 0 : index
    %c0_197 = arith.constant 0 : index
    %361 = vector.load %arg20[%c1_195, %c0_196, %c0_197] : memref<2x1x672xf32, #tpu.memory_space<vmem>>, vector<1x1x672xf32>
    %362 = vector.shape_cast %361 : vector<1x1x672xf32> to vector<1x672xf32>
    %363 = vector.broadcast %362 : vector<1x672xf32> to vector<8x672xf32>
    %364 = arith.addf %360, %363 : vector<8x672xf32>
    %cst_198 = arith.constant 5.000000e-01 : f32
    %365 = vector.broadcast %cst_198 : f32 to vector<8x672xf32>
    %366 = arith.mulf %365, %357 : vector<8x672xf32>
    %cst_199 = arith.constant 4.471500e-02 : f32
    %367 = vector.broadcast %cst_199 : f32 to vector<8x672xf32>
    %368 = arith.mulf %367, %357 : vector<8x672xf32>
    %369 = arith.mulf %368, %357 : vector<8x672xf32>
    %370 = arith.mulf %369, %357 : vector<8x672xf32>
    %371 = arith.addf %357, %370 : vector<8x672xf32>
    %cst_200 = arith.constant 0.797884583 : f32
    %372 = vector.broadcast %cst_200 : f32 to vector<8x672xf32>
    %373 = arith.mulf %372, %371 : vector<8x672xf32>
    %374 = math.tanh %373 : vector<8x672xf32>
    %cst_201 = arith.constant 1.000000e+00 : f32
    %375 = vector.broadcast %cst_201 : f32 to vector<8x672xf32>
    %376 = arith.addf %375, %374 : vector<8x672xf32>
    %377 = arith.mulf %366, %376 : vector<8x672xf32>
    %cst_202 = arith.constant 5.000000e-01 : f32
    %378 = vector.broadcast %cst_202 : f32 to vector<8x672xf32>
    %379 = arith.mulf %378, %364 : vector<8x672xf32>
    %cst_203 = arith.constant 4.471500e-02 : f32
    %380 = vector.broadcast %cst_203 : f32 to vector<8x672xf32>
    %381 = arith.mulf %380, %364 : vector<8x672xf32>
    %382 = arith.mulf %381, %364 : vector<8x672xf32>
    %383 = arith.mulf %382, %364 : vector<8x672xf32>
    %384 = arith.addf %364, %383 : vector<8x672xf32>
    %cst_204 = arith.constant 0.797884583 : f32
    %385 = vector.broadcast %cst_204 : f32 to vector<8x672xf32>
    %386 = arith.mulf %385, %384 : vector<8x672xf32>
    %387 = math.tanh %386 : vector<8x672xf32>
    %cst_205 = arith.constant 1.000000e+00 : f32
    %388 = vector.broadcast %cst_205 : f32 to vector<8x672xf32>
    %389 = arith.addf %388, %387 : vector<8x672xf32>
    %390 = arith.mulf %379, %389 : vector<8x672xf32>
    %391 = arith.mulf %357, %390 : vector<8x672xf32>
    %392 = arith.mulf %364, %377 : vector<8x672xf32>
    %393 = arith.addf %391, %392 : vector<8x672xf32>
    %c1_206 = arith.constant 1 : index
    %c0_207 = arith.constant 0 : index
    %c0_208 = arith.constant 0 : index
    %394 = vector.load %arg21[%c1_206, %c0_207, %c0_208] : memref<2x672x224xbf16, #tpu.memory_space<vmem>>, vector<1x672x224xbf16>
    %395 = vector.shape_cast %394 : vector<1x672x224xbf16> to vector<672x224xbf16>
    %396 = arith.truncf %393 : vector<8x672xf32> to vector<8x672xbf16>
    %cst_209 = arith.constant dense<0.000000e+00> : vector<8x224xf32>
    %397 = tpu.matmul %396, %395, %cst_209 {dimension_numbers = #tpu.dot_dimension_numbers<[1], [0], [0], [1], [0, 0, 1, 1], [], []>} : vector<8x672xbf16>, vector<672x224xbf16>, vector<8x224xf32> -> vector<8x224xf32>
    %c1_210 = arith.constant 1 : index
    %c0_211 = arith.constant 0 : index
    %c0_212 = arith.constant 0 : index
    %398 = vector.load %arg22[%c1_210, %c0_211, %c0_212] : memref<2x1x224xf32, #tpu.memory_space<vmem>>, vector<1x1x224xf32>
    %399 = vector.shape_cast %398 : vector<1x1x224xf32> to vector<1x224xf32>
    %400 = vector.broadcast %399 : vector<1x224xf32> to vector<8x224xf32>
    %401 = arith.addf %397, %400 : vector<8x224xf32>
    %402 = arith.addf %237, %401 : vector<8x224xf32>
    %c0_213 = arith.constant 0 : index
    %c0_214 = arith.constant 0 : index
    %403 = vector.load %arg37[%c0_213, %c0_214] : memref<224x128xbf16, #tpu.memory_space<vmem>>, vector<224x128xbf16>
    %404 = arith.truncf %402 : vector<8x224xf32> to vector<8x224xbf16>
    %cst_215 = arith.constant dense<0.000000e+00> : vector<8x128xf32>
    %405 = tpu.matmul %404, %403, %cst_215 {dimension_numbers = #tpu.dot_dimension_numbers<[1], [0], [0], [1], [0, 0, 1, 1], [], []>} : vector<8x224xbf16>, vector<224x128xbf16>, vector<8x128xf32> -> vector<8x128xf32>
    %c0_216 = arith.constant 0 : index
    %c0_217 = arith.constant 0 : index
    %406 = vector.load %arg38[%c0_216, %c0_217] : memref<128x128xbf16, #tpu.memory_space<vmem>>, vector<128x128xbf16>
    %407 = arith.truncf %66 : vector<8x128xf32> to vector<8x128xbf16>
    %cst_218 = arith.constant dense<0.000000e+00> : vector<8x128xf32>
    %408 = tpu.matmul %407, %406, %cst_218 {dimension_numbers = #tpu.dot_dimension_numbers<[1], [0], [0], [1], [0, 0, 1, 1], [], []>} : vector<8x128xbf16>, vector<128x128xbf16>, vector<8x128xf32> -> vector<8x128xf32>
    %409 = arith.addf %405, %408 : vector<8x128xf32>
    %c0_219 = arith.constant 0 : index
    %c0_220 = arith.constant 0 : index
    %410 = vector.load %arg39[%c0_219, %c0_220] : memref<1x128xf32, #tpu.memory_space<vmem>>, vector<1x128xf32>
    %411 = vector.broadcast %410 : vector<1x128xf32> to vector<8x128xf32>
    %412 = arith.addf %409, %411 : vector<8x128xf32>
    %c0_221 = arith.constant 0 : index
    %c0_222 = arith.constant 0 : index
    %413 = vector.load %arg40[%c0_221, %c0_222] : memref<8x128xf32, #tpu.memory_space<vmem>>, vector<8x128xf32>
    tpu.vector_store %arg40[%c0_221, %c0_222], %412 {strides = array<i32>} : memref<8x128xf32, #tpu.memory_space<vmem>>, vector<8x128xf32>,
    return
  }
  func.func @transform_0(%arg0: i32, %arg1: memref<2xf32, #tpu.memory_space<smem>>) -> (i32, i32) {
    %c0_i32 = arith.constant 0 : i32
    %c0_i32_0 = arith.constant 0 : i32
    return %arg0, %c0_i32 : i32, i32
  }
  func.func @transform_1(%arg0: i32, %arg1: memref<2xf32, #tpu.memory_space<smem>>) -> (i32, i32) {
    %c0_i32 = arith.constant 0 : i32
    %c0_i32_0 = arith.constant 0 : i32
    %c0_i32_1 = arith.constant 0 : i32
    return %c0_i32, %c0_i32_0 : i32, i32
  }
  func.func @transform_2(%arg0: i32, %arg1: memref<2xf32, #tpu.memory_space<smem>>) -> (i32, i32) {
    %c0_i32 = arith.constant 0 : i32
    %c0_i32_0 = arith.constant 0 : i32
    %c0_i32_1 = arith.constant 0 : i32
    return %c0_i32, %c0_i32_0 : i32, i32
  }
  func.func @transform_3(%arg0: i32, %arg1: memref<2xf32, #tpu.memory_space<smem>>) -> (i32, i32) {
    %c0_i32 = arith.constant 0 : i32
    %c0_i32_0 = arith.constant 0 : i32
    %c0_i32_1 = arith.constant 0 : i32
    return %c0_i32, %c0_i32_0 : i32, i32
  }
  func.func @transform_4(%arg0: i32, %arg1: memref<2xf32, #tpu.memory_space<smem>>) -> (i32, i32) {
    %c0_i32 = arith.constant 0 : i32
    %c0_i32_0 = arith.constant 0 : i32
    %c0_i32_1 = arith.constant 0 : i32
    return %c0_i32, %c0_i32_0 : i32, i32
  }
  func.func @transform_5(%arg0: i32, %arg1: memref<2xf32, #tpu.memory_space<smem>>) -> (i32, i32) {
    %c0_i32 = arith.constant 0 : i32
    %c0_i32_0 = arith.constant 0 : i32
    %c0_i32_1 = arith.constant 0 : i32
    return %c0_i32, %c0_i32_0 : i32, i32
  }
  func.func @transform_6(%arg0: i32, %arg1: memref<2xf32, #tpu.memory_space<smem>>) -> (i32, i32) {
    %c0_i32 = arith.constant 0 : i32
    %c0_i32_0 = arith.constant 0 : i32
    %c0_i32_1 = arith.constant 0 : i32
    return %c0_i32, %c0_i32_0 : i32, i32
  }
  func.func @transform_7(%arg0: i32, %arg1: memref<2xf32, #tpu.memory_space<smem>>) -> (i32, i32, i32) {
    %c0_i32 = arith.constant 0 : i32
    %c0_i32_0 = arith.constant 0 : i32
    %c0_i32_1 = arith.constant 0 : i32
    %c0_i32_2 = arith.constant 0 : i32
    return %c0_i32, %c0_i32_0, %c0_i32_1 : i32, i32, i32
  }
  func.func @transform_8(%arg0: i32, %arg1: memref<2xf32, #tpu.memory_space<smem>>) -> (i32, i32, i32) {
    %c0_i32 = arith.constant 0 : i32
    %c0_i32_0 = arith.constant 0 : i32
    %c0_i32_1 = arith.constant 0 : i32
    %c0_i32_2 = arith.constant 0 : i32
    return %c0_i32, %c0_i32_0, %c0_i32_1 : i32, i32, i32
  }
  func.func @transform_9(%arg0: i32, %arg1: memref<2xf32, #tpu.memory_space<smem>>) -> (i32, i32, i32) {
    %c0_i32 = arith.constant 0 : i32
    %c0_i32_0 = arith.constant 0 : i32
    %c0_i32_1 = arith.constant 0 : i32
    %c0_i32_2 = arith.constant 0 : i32
    return %c0_i32, %c0_i32_0, %c0_i32_1 : i32, i32, i32
  }
  func.func @transform_10(%arg0: i32, %arg1: memref<2xf32, #tpu.memory_space<smem>>) -> (i32, i32, i32) {
    %c0_i32 = arith.constant 0 : i32
    %c0_i32_0 = arith.constant 0 : i32
    %c0_i32_1 = arith.constant 0 : i32
    %c0_i32_2 = arith.constant 0 : i32
    return %c0_i32, %c0_i32_0, %c0_i32_1 : i32, i32, i32
  }
  func.func @transform_11(%arg0: i32, %arg1: memref<2xf32, #tpu.memory_space<smem>>) -> (i32, i32, i32) {
    %c0_i32 = arith.constant 0 : i32
    %c0_i32_0 = arith.constant 0 : i32
    %c0_i32_1 = arith.constant 0 : i32
    %c0_i32_2 = arith.constant 0 : i32
    return %c0_i32, %c0_i32_0, %c0_i32_1 : i32, i32, i32
  }
  func.func @transform_12(%arg0: i32, %arg1: memref<2xf32, #tpu.memory_space<smem>>) -> (i32, i32, i32) {
    %c0_i32 = arith.constant 0 : i32
    %c0_i32_0 = arith.constant 0 : i32
    %c0_i32_1 = arith.constant 0 : i32
    %c0_i32_2 = arith.constant 0 : i32
    return %c0_i32, %c0_i32_0, %c0_i32_1 : i32, i32, i32
  }
  func.func @transform_13(%arg0: i32, %arg1: memref<2xf32, #tpu.memory_space<smem>>) -> (i32, i32, i32) {
    %c0_i32 = arith.constant 0 : i32
    %c0_i32_0 = arith.constant 0 : i32
    %c0_i32_1 = arith.constant 0 : i32
    %c0_i32_2 = arith.constant 0 : i32
    return %c0_i32, %c0_i32_0, %c0_i32_1 : i32, i32, i32
  }
  func.func @transform_14(%arg0: i32, %arg1: memref<2xf32, #tpu.memory_space<smem>>) -> (i32, i32, i32) {
    %c0_i32 = arith.constant 0 : i32
    %c0_i32_0 = arith.constant 0 : i32
    %c0_i32_1 = arith.constant 0 : i32
    %c0_i32_2 = arith.constant 0 : i32
    return %c0_i32, %c0_i32_0, %c0_i32_1 : i32, i32, i32
  }
  func.func @transform_15(%arg0: i32, %arg1: memref<2xf32, #tpu.memory_space<smem>>) -> (i32, i32, i32) {
    %c0_i32 = arith.constant 0 : i32
    %c0_i32_0 = arith.constant 0 : i32
    %c0_i32_1 = arith.constant 0 : i32
    %c0_i32_2 = arith.constant 0 : i32
    return %c0_i32, %c0_i32_0, %c0_i32_1 : i32, i32, i32
  }
  func.func @transform_16(%arg0: i32, %arg1: memref<2xf32, #tpu.memory_space<smem>>) -> (i32, i32, i32) {
    %c0_i32 = arith.constant 0 : i32
    %c0_i32_0 = arith.constant 0 : i32
    %c0_i32_1 = arith.constant 0 : i32
    %c0_i32_2 = arith.constant 0 : i32
    return %c0_i32, %c0_i32_0, %c0_i32_1 : i32, i32, i32
  }
  func.func @transform_17(%arg0: i32, %arg1: memref<2xf32, #tpu.memory_space<smem>>) -> (i32, i32, i32) {
    %c0_i32 = arith.constant 0 : i32
    %c0_i32_0 = arith.constant 0 : i32
    %c0_i32_1 = arith.constant 0 : i32
    %c0_i32_2 = arith.constant 0 : i32
    return %c0_i32, %c0_i32_0, %c0_i32_1 : i32, i32, i32
  }
  func.func @transform_18(%arg0: i32, %arg1: memref<2xf32, #tpu.memory_space<smem>>) -> (i32, i32, i32) {
    %c0_i32 = arith.constant 0 : i32
    %c0_i32_0 = arith.constant 0 : i32
    %c0_i32_1 = arith.constant 0 : i32
    %c0_i32_2 = arith.constant 0 : i32
    return %c0_i32, %c0_i32_0, %c0_i32_1 : i32, i32, i32
  }
  func.func @transform_19(%arg0: i32, %arg1: memref<2xf32, #tpu.memory_space<smem>>) -> (i32, i32, i32) {
    %c0_i32 = arith.constant 0 : i32
    %c0_i32_0 = arith.constant 0 : i32
    %c0_i32_1 = arith.constant 0 : i32
    %c0_i32_2 = arith.constant 0 : i32
    return %c0_i32, %c0_i32_0, %c0_i32_1 : i32, i32, i32
  }
  func.func @transform_20(%arg0: i32, %arg1: memref<2xf32, #tpu.memory_space<smem>>) -> (i32, i32, i32) {
    %c0_i32 = arith.constant 0 : i32
    %c0_i32_0 = arith.constant 0 : i32
    %c0_i32_1 = arith.constant 0 : i32
    %c0_i32_2 = arith.constant 0 : i32
    return %c0_i32, %c0_i32_0, %c0_i32_1 : i32, i32, i32
  }
  func.func @transform_21(%arg0: i32, %arg1: memref<2xf32, #tpu.memory_space<smem>>) -> (i32, i32) {
    %c0_i32 = arith.constant 0 : i32
    %c0_i32_0 = arith.constant 0 : i32
    %c0_i32_1 = arith.constant 0 : i32
    return %c0_i32, %c0_i32_0 : i32, i32
  }
  func.func @transform_22(%arg0: i32, %arg1: memref<2xf32, #tpu.memory_space<smem>>) -> (i32, i32) {
    %c0_i32 = arith.constant 0 : i32
    %c0_i32_0 = arith.constant 0 : i32
    %c0_i32_1 = arith.constant 0 : i32
    return %c0_i32, %c0_i32_0 : i32, i32
  }
  func.func @transform_23(%arg0: i32, %arg1: memref<2xf32, #tpu.memory_space<smem>>) -> (i32, i32) {
    %c0_i32 = arith.constant 0 : i32
    %c0_i32_0 = arith.constant 0 : i32
    %c0_i32_1 = arith.constant 0 : i32
    return %c0_i32, %c0_i32_0 : i32, i32
  }
  func.func @transform_24(%arg0: i32, %arg1: memref<2xf32, #tpu.memory_space<smem>>) -> (i32, i32) {
    %c0_i32 = arith.constant 0 : i32
    %c0_i32_0 = arith.constant 0 : i32
    %c0_i32_1 = arith.constant 0 : i32
    return %c0_i32, %c0_i32_0 : i32, i32
  }
  func.func @transform_25(%arg0: i32, %arg1: memref<2xf32, #tpu.memory_space<smem>>) -> (i32, i32) {
    %c0_i32 = arith.constant 0 : i32
    %c0_i32_0 = arith.constant 0 : i32
    %c0_i32_1 = arith.constant 0 : i32
    return %c0_i32, %c0_i32_0 : i32, i32
  }
  func.func @transform_26(%arg0: i32, %arg1: memref<2xf32, #tpu.memory_space<smem>>) -> (i32, i32) {
    %c0_i32 = arith.constant 0 : i32
    %c0_i32_0 = arith.constant 0 : i32
    %c0_i32_1 = arith.constant 0 : i32
    return %c0_i32, %c0_i32_0 : i32, i32
  }
  func.func @transform_27(%arg0: i32, %arg1: memref<2xf32, #tpu.memory_space<smem>>) -> (i32, i32) {
    %c0_i32 = arith.constant 0 : i32
    %c0_i32_0 = arith.constant 0 : i32
    %c0_i32_1 = arith.constant 0 : i32
    return %c0_i32, %c0_i32_0 : i32, i32
  }
  func.func @transform_28(%arg0: i32, %arg1: memref<2xf32, #tpu.memory_space<smem>>) -> (i32, i32) {
    %c0_i32 = arith.constant 0 : i32
    %c0_i32_0 = arith.constant 0 : i32
    %c0_i32_1 = arith.constant 0 : i32
    return %c0_i32, %c0_i32_0 : i32, i32
  }
  func.func @transform_29(%arg0: i32, %arg1: memref<2xf32, #tpu.memory_space<smem>>) -> (i32, i32) {
    %c0_i32 = arith.constant 0 : i32
    %c0_i32_0 = arith.constant 0 : i32
    %c0_i32_1 = arith.constant 0 : i32
    return %c0_i32, %c0_i32_0 : i32, i32
  }
  func.func @transform_30(%arg0: i32, %arg1: memref<2xf32, #tpu.memory_space<smem>>) -> (i32, i32) {
    %c0_i32 = arith.constant 0 : i32
    %c0_i32_0 = arith.constant 0 : i32
    %c0_i32_1 = arith.constant 0 : i32
    return %c0_i32, %c0_i32_0 : i32, i32
  }
  func.func @transform_31(%arg0: i32, %arg1: memref<2xf32, #tpu.memory_space<smem>>) -> (i32, i32) {
    %c0_i32 = arith.constant 0 : i32
    %c0_i32_0 = arith.constant 0 : i32
    %c0_i32_1 = arith.constant 0 : i32
    return %c0_i32, %c0_i32_0 : i32, i32
  }
  func.func @transform_32(%arg0: i32, %arg1: memref<2xf32, #tpu.memory_space<smem>>) -> (i32, i32) {
    %c0_i32 = arith.constant 0 : i32
    %c0_i32_0 = arith.constant 0 : i32
    %c0_i32_1 = arith.constant 0 : i32
    return %c0_i32, %c0_i32_0 : i32, i32
  }
  func.func @transform_33(%arg0: i32, %arg1: memref<2xf32, #tpu.memory_space<smem>>) -> (i32, i32) {
    %c0_i32 = arith.constant 0 : i32
    %c0_i32_0 = arith.constant 0 : i32
    %c0_i32_1 = arith.constant 0 : i32
    return %c0_i32, %c0_i32_0 : i32, i32
  }
  func.func @transform_34(%arg0: i32, %arg1: memref<2xf32, #tpu.memory_space<smem>>) -> (i32, i32) {
    %c0_i32 = arith.constant 0 : i32
    %c0_i32_0 = arith.constant 0 : i32
    %c0_i32_1 = arith.constant 0 : i32
    return %c0_i32, %c0_i32_0 : i32, i32
  }
  func.func @transform_35(%arg0: i32, %arg1: memref<2xf32, #tpu.memory_space<smem>>) -> (i32, i32) {
    %c0_i32 = arith.constant 0 : i32
    %c0_i32_0 = arith.constant 0 : i32
    %c0_i32_1 = arith.constant 0 : i32
    return %c0_i32, %c0_i32_0 : i32, i32
  }
  func.func @transform_36(%arg0: i32, %arg1: memref<2xf32, #tpu.memory_space<smem>>) -> (i32, i32) {
    %c0_i32 = arith.constant 0 : i32
    %c0_i32_0 = arith.constant 0 : i32
    %c0_i32_1 = arith.constant 0 : i32
    return %c0_i32, %c0_i32_0 : i32, i32
  }
  func.func @transform_37(%arg0: i32, %arg1: memref<2xf32, #tpu.memory_space<smem>>) -> (i32, i32) {
    %c0_i32 = arith.constant 0 : i32
    %c0_i32_0 = arith.constant 0 : i32
    %c0_i32_1 = arith.constant 0 : i32
    return %c0_i32, %c0_i32_0 : i32, i32
  }
  func.func @transform_38(%arg0: i32, %arg1: memref<2xf32, #tpu.memory_space<smem>>) -> (i32, i32) {
    %c0_i32 = arith.constant 0 : i32
    %c0_i32_0 = arith.constant 0 : i32
    return %arg0, %c0_i32 : i32, i32
  }
}

</mosaic_0001>

<llo_original>
// kernel: tpu_custom_call.1
$region0: #{tpu_custom_call.1}
  #allocation0 [shape = 'u32[]', space=smem, size = 0x4, offset = 0x4, fixed_abs, tag = 'smem constant byte address 0x4 - core index']
  #allocation1 [shape = 'u32[144,128]{1,0:T(1,128)}', space=vmem, size = 0x12000, scoped, tag = 'internal scratch']
  #allocation2 [shape = 's32[1]{0}', space=sflag, size = 0x4, scoped, tag = 'scoped memory for tpu_custom_call.1']
  #allocation3 [shape = 'u8[512]{0}', space=smem, size = 0x200, scoped, tag = 'prefetched SMEM operand 0']
  %s0 = inlined_call_operand.smem [shape: u32[40], index: -1, kind: input, shape index: {}]
  %s1 = sld [smem:[%s0]]
  %s2 = scalar_lea.smem %s0, 1
  %s3 = sld [smem:[%s2]]
  %s4 = scalar_lea.smem %s0, 2
  %s5 = sld [smem:[%s4]]
  %s6 = scalar_lea.smem %s0, 3
  %s7 = sld [smem:[%s6]]
  %s8 = scalar_lea.smem %s0, 4
  %s9 = sld [smem:[%s8]]
  %s10 = scalar_lea.smem %s0, 5
  %s11 = sld [smem:[%s10]]
  %s12 = scalar_lea.smem %s0, 6
  %s13 = sld [smem:[%s12]]
  %s14 = scalar_lea.smem %s0, 7
  %s15 = sld [smem:[%s14]]
  %s16 = scalar_lea.smem %s0, 8
  %s17 = sld [smem:[%s16]]
  %s18 = scalar_lea.smem %s0, 9
  %s19 = sld [smem:[%s18]]
  %s20 = scalar_lea.smem %s0, 10
  %s21 = sld [smem:[%s20]]
  %s22 = scalar_lea.smem %s0, 11
  %s23 = sld [smem:[%s22]]
  %s24 = scalar_lea.smem %s0, 12
  %s25 = sld [smem:[%s24]]
  %s26 = scalar_lea.smem %s0, 13
  %s27 = sld [smem:[%s26]]
  %s28 = scalar_lea.smem %s0, 14
  %s29 = sld [smem:[%s28]]
  %s30 = scalar_lea.smem %s0, 15
  %s31 = sld [smem:[%s30]]
  %s32 = scalar_lea.smem %s0, 16
  %s33 = sld [smem:[%s32]]
  %s34 = scalar_lea.smem %s0, 17
  %s35 = sld [smem:[%s34]]
  %s36 = scalar_lea.smem %s0, 18
  %s37 = sld [smem:[%s36]]
  %s38 = scalar_lea.smem %s0, 19
  %s39 = sld [smem:[%s38]]
  %s40 = scalar_lea.smem %s0, 20
  %s41 = sld [smem:[%s40]]
  %s42 = scalar_lea.smem %s0, 21
  %s43 = sld [smem:[%s42]]
  %s44 = scalar_lea.smem %s0, 22
  %s45 = sld [smem:[%s44]]
  %s46 = scalar_lea.smem %s0, 23
  %s47 = sld [smem:[%s46]]
  %s48 = scalar_lea.smem %s0, 24
  %s49 = sld [smem:[%s48]]
  %s50 = scalar_lea.smem %s0, 25
  %s51 = sld [smem:[%s50]]
  %s52 = scalar_lea.smem %s0, 26
  %s53 = sld [smem:[%s52]]
  %s54 = scalar_lea.smem %s0, 27
  %s55 = sld [smem:[%s54]]
  %s56 = scalar_lea.smem %s0, 28
  %s57 = sld [smem:[%s56]]
  %s58 = scalar_lea.smem %s0, 29
  %s59 = sld [smem:[%s58]]
  %s60 = scalar_lea.smem %s0, 30
  %s61 = sld [smem:[%s60]]
  %s62 = scalar_lea.smem %s0, 31
  %s63 = sld [smem:[%s62]]
  %s64 = scalar_lea.smem %s0, 32
  %s65 = sld [smem:[%s64]]
  %s66 = scalar_lea.smem %s0, 33
  %s67 = sld [smem:[%s66]]
  %s68 = scalar_lea.smem %s0, 34
  %s69 = sld [smem:[%s68]]
  %s70 = scalar_lea.smem %s0, 35
  %s71 = sld [smem:[%s70]]
  %s72 = scalar_lea.smem %s0, 36
  %s73 = sld [smem:[%s72]]
  %s74 = scalar_lea.smem %s0, 37
  %s75 = sld [smem:[%s74]]
  %s76 = scalar_lea.smem %s0, 38
  %s77 = sld [smem:[%s76]]
  %s78 = scalar_lea.smem %s0, 39
  %s79 = sld [smem:[%s78]]
  %s80 = sld [smem:[#allocation0]]
  $region266: #{tpu_custom_call.1} parent=0
    _
  %s82 = ssub.s32 1, %s80
  %s83 = scalar_select 0, %s82, %s80
  %s84 = sshll.u32 %s1, 4
  %s85 = int_to_ptr.vmem [resolvable:$true] %s84
  %87 = dma.vmem_to_smem %s85, 16, [#allocation3], [#allocation2]
  %88 = dma.done [#allocation2], 16
  %89 = sfence
  $region1: #{tpu_custom_call.1} parent=0
    #allocation4 [shape = 'u8[4096]{0}', space=vmem, size = 0x1000, scoped, tag = 'input window, operand 1, single buffered']
    #allocation5 [shape = 's32[1]{0}', space=sflag, size = 0x4, scoped, tag = 'scoped memory for tpu_custom_call.1']
    #allocation6 [shape = 's32[1]{0}', space=sflag, size = 0x4, scoped, tag = 'scoped memory for tpu_custom_call.1']
    #allocation7 [shape = 'u8[28672]{0}', space=vmem, size = 0x7000, scoped, tag = 'input window, operand 2, single buffered']
    #allocation8 [shape = 's32[1]{0}', space=sflag, size = 0x4, scoped, tag = 'scoped memory for tpu_custom_call.1']
    #allocation9 [shape = 'u8[1024]{0}', space=vmem, size = 0x400, scoped, tag = 'input window, operand 3, single buffered']
    #allocation10 [shape = 'u8[229376]{0}', space=vmem, size = 0x38000, scoped, tag = 'input window, operand 4, single buffered']
    #allocation11 [shape = 's32[1]{0}', space=sflag, size = 0x4, scoped, tag = 'scoped memory for tpu_custom_call.1']
    #allocation12 [shape = 'u8[114688]{0}', space=vmem, size = 0x1c000, scoped, tag = 'input window, operand 5, single buffered']
    #allocation13 [shape = 'u8[65536]{0}', space=vmem, size = 0x10000, scoped, tag = 'input window, operand 7, single buffered']
    #allocation14 [shape = 's32[1]{0}', space=sflag, size = 0x4, scoped, tag = 'scoped memory for tpu_custom_call.1']
    #allocation15 [shape = 'u8[2048]{0}', space=vmem, size = 0x800, scoped, tag = 'input window, operand 9, single buffered']
    #allocation16 [shape = 'u8[2048]{0}', space=vmem, size = 0x800, scoped, tag = 'input window, operand 10, single buffered']
    #allocation17 [shape = 's32[1]{0}', space=sflag, size = 0x4, scoped, tag = 'scoped memory for tpu_custom_call.1']
    #allocation18 [shape = 'u8[2048]{0}', space=vmem, size = 0x800, scoped, tag = 'input window, operand 11, single buffered']
    #allocation19 [shape = 'u8[1024]{0}', space=vmem, size = 0x400, scoped, tag = 'input window, operand 12, single buffered']
    #allocation20 [shape = 's32[1]{0}', space=sflag, size = 0x4, scoped, tag = 'scoped memory for tpu_custom_call.1']
    #allocation21 [shape = 'u8[1024]{0}', space=vmem, size = 0x400, scoped, tag = 'input window, operand 13, single buffered']
    #allocation22 [shape = 'u8[1024]{0}', space=vmem, size = 0x400, scoped, tag = 'input window, operand 14, single buffered']
    #allocation23 [shape = 's32[1]{0}', space=sflag, size = 0x4, scoped, tag = 'scoped memory for tpu_custom_call.1']
    #allocation24 [shape = 'u8[1024]{0}', space=vmem, size = 0x400, scoped, tag = 'input window, operand 15, single buffered']
    #allocation25 [shape = 'u8[6144]{0}', space=vmem, size = 0x1800, scoped, tag = 'input window, operand 17, single buffered']
    #allocation26 [shape = 's32[1]{0}', space=sflag, size = 0x4, scoped, tag = 'scoped memory for tpu_custom_call.1']
    #allocation27 [shape = 'u8[688128]{0}', space=vmem, size = 0xa8000, scoped, tag = 'input window, operand 18, single buffered']
    #allocation28 [shape = 'u8[6144]{0}', space=vmem, size = 0x1800, scoped, tag = 'input window, operand 19, single buffered']
    #allocation29 [shape = 's32[1]{0}', space=sflag, size = 0x4, scoped, tag = 'scoped memory for tpu_custom_call.1']
    #allocation30 [shape = 'u8[688128]{0}', space=vmem, size = 0xa8000, scoped, tag = 'input window, operand 20, single buffered']
    #allocation31 [shape = 'u8[2048]{0}', space=vmem, size = 0x800, scoped, tag = 'input window, operand 21, single buffered']
    #allocation32 [shape = 's32[1]{0}', space=sflag, size = 0x4, scoped, tag = 'scoped memory for tpu_custom_call.1']
    #allocation33 [shape = 'u8[4096]{0}', space=vmem, size = 0x1000, scoped, tag = 'input window, operand 23, single buffered']
    #allocation34 [shape = 'u8[512]{0}', space=vmem, size = 0x400, scoped, tag = 'input window, operand 25, single buffered']
    #allocation35 [shape = 's32[1]{0}', space=sflag, size = 0x4, scoped, tag = 'scoped memory for tpu_custom_call.1']
    #allocation36 [shape = 'u8[12288]{0}', space=vmem, size = 0x3000, scoped, tag = 'input window, operand 26, single buffered']
    #allocation37 [shape = 'u8[1024]{0}', space=vmem, size = 0x400, scoped, tag = 'input window, operand 27, single buffered']
    #allocation38 [shape = 's32[1]{0}', space=sflag, size = 0x4, scoped, tag = 'scoped memory for tpu_custom_call.1']
    #allocation39 [shape = 'u8[49152]{0}', space=vmem, size = 0xc000, scoped, tag = 'input window, operand 30, single buffered']
    #allocation40 [shape = 'u8[1024]{0}', space=vmem, size = 0x400, scoped, tag = 'input window, operand 31, single buffered']
    #allocation41 [shape = 's32[1]{0}', space=sflag, size = 0x4, scoped, tag = 'scoped memory for tpu_custom_call.1']
    #allocation42 [shape = 'u8[16384]{0}', space=vmem, size = 0x4000, scoped, tag = 'input window, operand 34, single buffered']
    #allocation43 [shape = 'u8[57344]{0}', space=vmem, size = 0xe000, scoped, tag = 'input window, operand 36, single buffered']
    #allocation44 [shape = 's32[1]{0}', space=sflag, size = 0x4, scoped, tag = 'scoped memory for tpu_custom_call.1']
    #allocation45 [shape = 'u8[4096]{0}', space=vmem, size = 0x1000, scoped, tag = 'output window, operand 0, single buffered']
    %90 = vsyncpa [#allocation5], 0
    %91 = vsyncpa [#allocation8], 0
    %92 = vsyncpa [#allocation11], 0
    %93 = vsyncpa [#allocation14], 0
    %94 = vsyncpa [#allocation17], 0
    %95 = vsyncpa [#allocation20], 0
    %96 = vsyncpa [#allocation23], 0
    %97 = vsyncpa [#allocation26], 0
    %98 = vsyncpa [#allocation29], 0
    %99 = vsyncpa [#allocation32], 0
    %100 = vsyncpa [#allocation35], 0
    %101 = vsyncpa [#allocation38], 0
    %102 = vsyncpa [#allocation41], 0
    %103 = vsyncpa [#allocation44], 0
    %104 = vsyncpa [#allocation6], 0
    // Predicated region
    $region2: #{tpu_custom_call.1} parent=1 // pred_check
      _
    $region3: #{tpu_custom_call.1} parent=1 // pred_check_branch
      %106 = sbr.rel (0) target = $region5
    $region4: #{tpu_custom_call.1} parent=1 // pred_region
      %s108 = ssub.s32 128, 128
      %109 = vsyncadd [#allocation5], %s108
      %s111 = sshll.u32 [#allocation4], 4
      %s112 = int_to_ptr.vmem [resolvable:$true] %s111
      %114 = dma.hbm_to_vmem [thread:$0]  %s3, 128, %s112, [#allocation5]
    $region5: #{tpu_custom_call.1} parent=1 // pred_fallthru
      _
    // Predicated region
    $region6: #{tpu_custom_call.1} parent=1 // pred_check
      _
    $region7: #{tpu_custom_call.1} parent=1 // pred_check_branch
      %116 = sbr.rel (0) target = $region9
    $region8: #{tpu_custom_call.1} parent=1 // pred_region
      %s118 = ssub.s32 896, 896
      %119 = vsyncadd [#allocation8], %s118
      %s120 = sshll.u32 [#allocation7], 4
      %s121 = int_to_ptr.vmem [resolvable:$true] %s120
      %126 = dma.hbm_to_vmem [thread:$0]  %s5, 896, %s121, [#allocation8], 128, 128, 8
    $region9: #{tpu_custom_call.1} parent=1 // pred_fallthru
      _
    // Predicated region
    $region10: #{tpu_custom_call.1} parent=1 // pred_check
      _
    $region11: #{tpu_custom_call.1} parent=1 // pred_check_branch
      %128 = sbr.rel (0) target = $region13
    $region12: #{tpu_custom_call.1} parent=1 // pred_region
      %s130 = ssub.s32 32, 32
      %131 = vsyncadd [#allocation8], %s130
      %s133 = sshll.u32 [#allocation9], 4
      %s134 = int_to_ptr.vmem [resolvable:$true] %s133
      %136 = dma.hbm_to_vmem [thread:$0]  %s7, 32, %s134, [#allocation8]
    $region13: #{tpu_custom_call.1} parent=1 // pred_fallthru
      _
    // Predicated region
    $region14: #{tpu_custom_call.1} parent=1 // pred_check
      _
    $region15: #{tpu_custom_call.1} parent=1 // pred_check_branch
      %138 = sbr.rel (0) target = $region17
    $region16: #{tpu_custom_call.1} parent=1 // pred_region
      %s140 = ssub.s32 7168, 7168
      %141 = vsyncadd [#allocation11], %s140
      %s142 = sshll.u32 [#allocation10], 4
      %s143 = int_to_ptr.vmem [resolvable:$true] %s142
      %148 = dma.hbm_to_vmem [thread:$0]  %s9, 7168, %s143, [#allocation11], 256, 256, 16
    $region17: #{tpu_custom_call.1} parent=1 // pred_fallthru
      _
    // Predicated region
    $region18: #{tpu_custom_call.1} parent=1 // pred_check
      _
    $region19: #{tpu_custom_call.1} parent=1 // pred_check_branch
      %150 = sbr.rel (0) target = $region21
    $region20: #{tpu_custom_call.1} parent=1 // pred_region
      %s152 = ssub.s32 3584, 3584
      %153 = vsyncadd [#allocation11], %s152
      %s154 = sshll.u32 [#allocation12], 4
      %s155 = int_to_ptr.vmem [resolvable:$true] %s154
      %160 = dma.hbm_to_vmem [thread:$0]  %s11, 3584, %s155, [#allocation11], 128, 128, 8
    $region21: #{tpu_custom_call.1} parent=1 // pred_fallthru
      _
    // Predicated region
    $region22: #{tpu_custom_call.1} parent=1 // pred_check
      _
    $region23: #{tpu_custom_call.1} parent=1 // pred_check_branch
      %162 = sbr.rel (0) target = $region25
    $region24: #{tpu_custom_call.1} parent=1 // pred_region
      _
    $region25: #{tpu_custom_call.1} parent=1 // pred_fallthru
      _
    // Predicated region
    $region26: #{tpu_custom_call.1} parent=1 // pred_check
      _
    $region27: #{tpu_custom_call.1} parent=1 // pred_check_branch
      %164 = sbr.rel (0) target = $region29
    $region28: #{tpu_custom_call.1} parent=1 // pred_region
      %s166 = ssub.s32 2048, 2048
      %167 = vsyncadd [#allocation14], %s166
      %s168 = sshll.u32 [#allocation13], 4
      %s169 = int_to_ptr.vmem [resolvable:$true] %s168
      %174 = dma.hbm_to_vmem [thread:$0]  %s15, 2048, %s169, [#allocation14], 128, 128, 8
    $region29: #{tpu_custom_call.1} parent=1 // pred_fallthru
      _
    // Predicated region
    $region30: #{tpu_custom_call.1} parent=1 // pred_check
      _
    $region31: #{tpu_custom_call.1} parent=1 // pred_check_branch
      %176 = sbr.rel (0) target = $region33
    $region32: #{tpu_custom_call.1} parent=1 // pred_region
      _
    $region33: #{tpu_custom_call.1} parent=1 // pred_fallthru
      _
    // Predicated region
    $region34: #{tpu_custom_call.1} parent=1 // pred_check
      _
    $region35: #{tpu_custom_call.1} parent=1 // pred_check_branch
      %178 = sbr.rel (0) target = $region37
    $region36: #{tpu_custom_call.1} parent=1 // pred_region
      %s180 = ssub.s32 64, 64
      %181 = vsyncadd [#allocation14], %s180
      %s182 = sshll.u32 [#allocation15], 4
      %s183 = int_to_ptr.vmem [resolvable:$true] %s182
      %188 = dma.hbm_to_vmem [thread:$0]  %s19, 64, %s183, [#allocation14], 32, 32, 2
    $region37: #{tpu_custom_call.1} parent=1 // pred_fallthru
      _
    // Predicated region
    $region38: #{tpu_custom_call.1} parent=1 // pred_check
      _
    $region39: #{tpu_custom_call.1} parent=1 // pred_check_branch
      %190 = sbr.rel (0) target = $region41
    $region40: #{tpu_custom_call.1} parent=1 // pred_region
      %s192 = ssub.s32 64, 64
      %193 = vsyncadd [#allocation17], %s192
      %s194 = sshll.u32 [#allocation16], 4
      %s195 = int_to_ptr.vmem [resolvable:$true] %s194
      %200 = dma.hbm_to_vmem [thread:$0]  %s21, 64, %s195, [#allocation17], 32, 32, 2
    $region41: #{tpu_custom_call.1} parent=1 // pred_fallthru
      _
    // Predicated region
    $region42: #{tpu_custom_call.1} parent=1 // pred_check
      _
    $region43: #{tpu_custom_call.1} parent=1 // pred_check_branch
      %202 = sbr.rel (0) target = $region45
    $region44: #{tpu_custom_call.1} parent=1 // pred_region
      %s204 = ssub.s32 64, 64
      %205 = vsyncadd [#allocation17], %s204
      %s206 = sshll.u32 [#allocation18], 4
      %s207 = int_to_ptr.vmem [resolvable:$true] %s206
      %212 = dma.hbm_to_vmem [thread:$0]  %s23, 64, %s207, [#allocation17], 32, 32, 2
    $region45: #{tpu_custom_call.1} parent=1 // pred_fallthru
      _
    // Predicated region
    $region46: #{tpu_custom_call.1} parent=1 // pred_check
      _
    $region47: #{tpu_custom_call.1} parent=1 // pred_check_branch
      %214 = sbr.rel (0) target = $region49
    $region48: #{tpu_custom_call.1} parent=1 // pred_region
      %s216 = ssub.s32 32, 32
      %217 = vsyncadd [#allocation20], %s216
      %s218 = sshll.u32 [#allocation19], 4
      %s219 = int_to_ptr.vmem [resolvable:$true] %s218
      %224 = dma.hbm_to_vmem [thread:$0]  %s25, 32, %s219, [#allocation20], 16, 16, 1
    $region49: #{tpu_custom_call.1} parent=1 // pred_fallthru
      _
    // Predicated region
    $region50: #{tpu_custom_call.1} parent=1 // pred_check
      _
    $region51: #{tpu_custom_call.1} parent=1 // pred_check_branch
      %226 = sbr.rel (0) target = $region53
    $region52: #{tpu_custom_call.1} parent=1 // pred_region
      %s228 = ssub.s32 32, 32
      %229 = vsyncadd [#allocation20], %s228
      %s230 = sshll.u32 [#allocation21], 4
      %s231 = int_to_ptr.vmem [resolvable:$true] %s230
      %236 = dma.hbm_to_vmem [thread:$0]  %s27, 32, %s231, [#allocation20], 16, 16, 1
    $region53: #{tpu_custom_call.1} parent=1 // pred_fallthru
      _
    // Predicated region
    $region54: #{tpu_custom_call.1} parent=1 // pred_check
      _
    $region55: #{tpu_custom_call.1} parent=1 // pred_check_branch
      %238 = sbr.rel (0) target = $region57
    $region56: #{tpu_custom_call.1} parent=1 // pred_region
      %s240 = ssub.s32 32, 32
      %241 = vsyncadd [#allocation23], %s240
      %s242 = sshll.u32 [#allocation22], 4
      %s243 = int_to_ptr.vmem [resolvable:$true] %s242
      %248 = dma.hbm_to_vmem [thread:$0]  %s29, 32, %s243, [#allocation23], 16, 16, 1
    $region57: #{tpu_custom_call.1} parent=1 // pred_fallthru
      _
    // Predicated region
    $region58: #{tpu_custom_call.1} parent=1 // pred_check
      _
    $region59: #{tpu_custom_call.1} parent=1 // pred_check_branch
      %250 = sbr.rel (0) target = $region61
    $region60: #{tpu_custom_call.1} parent=1 // pred_region
      %s252 = ssub.s32 32, 32
      %253 = vsyncadd [#allocation23], %s252
      %s254 = sshll.u32 [#allocation24], 4
      %s255 = int_to_ptr.vmem [resolvable:$true] %s254
      %260 = dma.hbm_to_vmem [thread:$0]  %s31, 32, %s255, [#allocation23], 16, 16, 1
    $region61: #{tpu_custom_call.1} parent=1 // pred_fallthru
      _
    // Predicated region
    $region62: #{tpu_custom_call.1} parent=1 // pred_check
      _
    $region63: #{tpu_custom_call.1} parent=1 // pred_check_branch
      %262 = sbr.rel (0) target = $region65
    $region64: #{tpu_custom_call.1} parent=1 // pred_region
      _
    $region65: #{tpu_custom_call.1} parent=1 // pred_fallthru
      _
    // Predicated region
    $region66: #{tpu_custom_call.1} parent=1 // pred_check
      _
    $region67: #{tpu_custom_call.1} parent=1 // pred_check_branch
      %264 = sbr.rel (0) target = $region69
    $region68: #{tpu_custom_call.1} parent=1 // pred_region
      %s266 = ssub.s32 192, 192
      %267 = vsyncadd [#allocation26], %s266
      %s268 = sshll.u32 [#allocation25], 4
      %s269 = int_to_ptr.vmem [resolvable:$true] %s268
      %274 = dma.hbm_to_vmem [thread:$0]  %s35, 192, %s269, [#allocation26], 96, 96, 6
    $region69: #{tpu_custom_call.1} parent=1 // pred_fallthru
      _
    // Predicated region
    $region70: #{tpu_custom_call.1} parent=1 // pred_check
      _
    $region71: #{tpu_custom_call.1} parent=1 // pred_check_branch
      %276 = sbr.rel (0) target = $region73
    $region72: #{tpu_custom_call.1} parent=1 // pred_region
      %s278 = ssub.s32 21504, 21504
      %279 = vsyncadd [#allocation26], %s278
      %s280 = sshll.u32 [#allocation27], 4
      %s281 = int_to_ptr.vmem [resolvable:$true] %s280
      %286 = dma.hbm_to_vmem [thread:$0]  %s37, 21504, %s281, [#allocation26], 384, 384, 24
    $region73: #{tpu_custom_call.1} parent=1 // pred_fallthru
      _
    // Predicated region
    $region74: #{tpu_custom_call.1} parent=1 // pred_check
      _
    $region75: #{tpu_custom_call.1} parent=1 // pred_check_branch
      %288 = sbr.rel (0) target = $region77
    $region76: #{tpu_custom_call.1} parent=1 // pred_region
      %s290 = ssub.s32 192, 192
      %291 = vsyncadd [#allocation29], %s290
      %s292 = sshll.u32 [#allocation28], 4
      %s293 = int_to_ptr.vmem [resolvable:$true] %s292
      %298 = dma.hbm_to_vmem [thread:$0]  %s39, 192, %s293, [#allocation29], 96, 96, 6
    $region77: #{tpu_custom_call.1} parent=1 // pred_fallthru
      _
    // Predicated region
    $region78: #{tpu_custom_call.1} parent=1 // pred_check
      _
    $region79: #{tpu_custom_call.1} parent=1 // pred_check_branch
      %300 = sbr.rel (0) target = $region81
    $region80: #{tpu_custom_call.1} parent=1 // pred_region
      %s302 = ssub.s32 21504, 21504
      %303 = vsyncadd [#allocation29], %s302
      %s304 = sshll.u32 [#allocation30], 4
      %s305 = int_to_ptr.vmem [resolvable:$true] %s304
      %310 = dma.hbm_to_vmem [thread:$0]  %s41, 21504, %s305, [#allocation29], 128, 128, 8
    $region81: #{tpu_custom_call.1} parent=1 // pred_fallthru
      _
    // Predicated region
    $region82: #{tpu_custom_call.1} parent=1 // pred_check
      _
    $region83: #{tpu_custom_call.1} parent=1 // pred_check_branch
      %312 = sbr.rel (0) target = $region85
    $region84: #{tpu_custom_call.1} parent=1 // pred_region
      %s314 = ssub.s32 64, 64
      %315 = vsyncadd [#allocation32], %s314
      %s316 = sshll.u32 [#allocation31], 4
      %s317 = int_to_ptr.vmem [resolvable:$true] %s316
      %322 = dma.hbm_to_vmem [thread:$0]  %s43, 64, %s317, [#allocation32], 32, 32, 2
    $region85: #{tpu_custom_call.1} parent=1 // pred_fallthru
      _
    // Predicated region
    $region86: #{tpu_custom_call.1} parent=1 // pred_check
      _
    $region87: #{tpu_custom_call.1} parent=1 // pred_check_branch
      %324 = sbr.rel (0) target = $region89
    $region88: #{tpu_custom_call.1} parent=1 // pred_region
      _
    $region89: #{tpu_custom_call.1} parent=1 // pred_fallthru
      _
    // Predicated region
    $region90: #{tpu_custom_call.1} parent=1 // pred_check
      _
    $region91: #{tpu_custom_call.1} parent=1 // pred_check_branch
      %326 = sbr.rel (0) target = $region93
    $region92: #{tpu_custom_call.1} parent=1 // pred_region
      %s328 = ssub.s32 128, 128
      %329 = vsyncadd [#allocation32], %s328
      %s331 = sshll.u32 [#allocation33], 4
      %s332 = int_to_ptr.vmem [resolvable:$true] %s331
      %334 = dma.hbm_to_vmem [thread:$0]  %s47, 128, %s332, [#allocation32]
    $region93: #{tpu_custom_call.1} parent=1 // pred_fallthru
      _
    // Predicated region
    $region94: #{tpu_custom_call.1} parent=1 // pred_check
      _
    $region95: #{tpu_custom_call.1} parent=1 // pred_check_branch
      %336 = sbr.rel (0) target = $region97
    $region96: #{tpu_custom_call.1} parent=1 // pred_region
      _
    $region97: #{tpu_custom_call.1} parent=1 // pred_fallthru
      _
    // Predicated region
    $region98: #{tpu_custom_call.1} parent=1 // pred_check
      _
    $region99: #{tpu_custom_call.1} parent=1 // pred_check_branch
      %338 = sbr.rel (0) target = $region101
    $region100: #{tpu_custom_call.1} parent=1 // pred_region
      %s340 = ssub.s32 16, 16
      %341 = vsyncadd [#allocation35], %s340
      %s343 = sshll.u32 [#allocation34], 4
      %s344 = int_to_ptr.vmem [resolvable:$true] %s343
      %346 = dma.hbm_to_vmem [thread:$0]  %s51, 16, %s344, [#allocation35]
    $region101: #{tpu_custom_call.1} parent=1 // pred_fallthru
      _
    // Predicated region
    $region102: #{tpu_custom_call.1} parent=1 // pred_check
      _
    $region103: #{tpu_custom_call.1} parent=1 // pred_check_branch
      %348 = sbr.rel (0) target = $region105
    $region104: #{tpu_custom_call.1} parent=1 // pred_region
      %s350 = ssub.s32 384, 384
      %351 = vsyncadd [#allocation35], %s350
      %s352 = sshll.u32 [#allocation36], 4
      %s353 = int_to_ptr.vmem [resolvable:$true] %s352
      %358 = dma.hbm_to_vmem [thread:$0]  %s53, 384, %s353, [#allocation35], 128, 128, 8
    $region105: #{tpu_custom_call.1} parent=1 // pred_fallthru
      _
    // Predicated region
    $region106: #{tpu_custom_call.1} parent=1 // pred_check
      _
    $region107: #{tpu_custom_call.1} parent=1 // pred_check_branch
      %360 = sbr.rel (0) target = $region109
    $region108: #{tpu_custom_call.1} parent=1 // pred_region
      %s362 = ssub.s32 32, 32
      %363 = vsyncadd [#allocation38], %s362
      %s365 = sshll.u32 [#allocation37], 4
      %s366 = int_to_ptr.vmem [resolvable:$true] %s365
      %368 = dma.hbm_to_vmem [thread:$0]  %s55, 32, %s366, [#allocation38]
    $region109: #{tpu_custom_call.1} parent=1 // pred_fallthru
      _
    // Predicated region
    $region110: #{tpu_custom_call.1} parent=1 // pred_check
      _
    $region111: #{tpu_custom_call.1} parent=1 // pred_check_branch
      %370 = sbr.rel (0) target = $region113
    $region112: #{tpu_custom_call.1} parent=1 // pred_region
      _
    $region113: #{tpu_custom_call.1} parent=1 // pred_fallthru
      _
    // Predicated region
    $region114: #{tpu_custom_call.1} parent=1 // pred_check
      _
    $region115: #{tpu_custom_call.1} parent=1 // pred_check_branch
      %372 = sbr.rel (0) target = $region117
    $region116: #{tpu_custom_call.1} parent=1 // pred_region
      _
    $region117: #{tpu_custom_call.1} parent=1 // pred_fallthru
      _
    // Predicated region
    $region118: #{tpu_custom_call.1} parent=1 // pred_check
      _
    $region119: #{tpu_custom_call.1} parent=1 // pred_check_branch
      %374 = sbr.rel (0) target = $region121
    $region120: #{tpu_custom_call.1} parent=1 // pred_region
      %s376 = ssub.s32 1536, 1536
      %377 = vsyncadd [#allocation38], %s376
      %s378 = sshll.u32 [#allocation39], 4
      %s379 = int_to_ptr.vmem [resolvable:$true] %s378
      %384 = dma.hbm_to_vmem [thread:$0]  %s61, 1536, %s379, [#allocation38], 128, 128, 8
    $region121: #{tpu_custom_call.1} parent=1 // pred_fallthru
      _
    // Predicated region
    $region122: #{tpu_custom_call.1} parent=1 // pred_check
      _
    $region123: #{tpu_custom_call.1} parent=1 // pred_check_branch
      %386 = sbr.rel (0) target = $region125
    $region124: #{tpu_custom_call.1} parent=1 // pred_region
      %s388 = ssub.s32 32, 32
      %389 = vsyncadd [#allocation41], %s388
      %s391 = sshll.u32 [#allocation40], 4
      %s392 = int_to_ptr.vmem [resolvable:$true] %s391
      %394 = dma.hbm_to_vmem [thread:$0]  %s63, 32, %s392, [#allocation41]
    $region125: #{tpu_custom_call.1} parent=1 // pred_fallthru
      _
    // Predicated region
    $region126: #{tpu_custom_call.1} parent=1 // pred_check
      _
    $region127: #{tpu_custom_call.1} parent=1 // pred_check_branch
      %396 = sbr.rel (0) target = $region129
    $region128: #{tpu_custom_call.1} parent=1 // pred_region
      _
    $region129: #{tpu_custom_call.1} parent=1 // pred_fallthru
      _
    // Predicated region
    $region130: #{tpu_custom_call.1} parent=1 // pred_check
      _
    $region131: #{tpu_custom_call.1} parent=1 // pred_check_branch
      %398 = sbr.rel (0) target = $region133
    $region132: #{tpu_custom_call.1} parent=1 // pred_region
      _
    $region133: #{tpu_custom_call.1} parent=1 // pred_fallthru
      _
    // Predicated region
    $region134: #{tpu_custom_call.1} parent=1 // pred_check
      _
    $region135: #{tpu_custom_call.1} parent=1 // pred_check_branch
      %400 = sbr.rel (0) target = $region137
    $region136: #{tpu_custom_call.1} parent=1 // pred_region
      %s402 = ssub.s32 512, 512
      %403 = vsyncadd [#allocation41], %s402
      %s404 = sshll.u32 [#allocation42], 4
      %s405 = int_to_ptr.vmem [resolvable:$true] %s404
      %410 = dma.hbm_to_vmem [thread:$0]  %s69, 512, %s405, [#allocation41], 64, 64, 4
    $region137: #{tpu_custom_call.1} parent=1 // pred_fallthru
      _
    // Predicated region
    $region138: #{tpu_custom_call.1} parent=1 // pred_check
      _
    $region139: #{tpu_custom_call.1} parent=1 // pred_check_branch
      %412 = sbr.rel (0) target = $region141
    $region140: #{tpu_custom_call.1} parent=1 // pred_region
      _
    $region141: #{tpu_custom_call.1} parent=1 // pred_fallthru
      _
    // Predicated region
    $region142: #{tpu_custom_call.1} parent=1 // pred_check
      _
    $region143: #{tpu_custom_call.1} parent=1 // pred_check_branch
      %414 = sbr.rel (0) target = $region145
    $region144: #{tpu_custom_call.1} parent=1 // pred_region
      %s416 = ssub.s32 1792, 1792
      %417 = vsyncadd [#allocation44], %s416
      %s418 = sshll.u32 [#allocation43], 4
      %s419 = int_to_ptr.vmem [resolvable:$true] %s418
      %424 = dma.hbm_to_vmem [thread:$0]  %s73, 1792, %s419, [#allocation44], 64, 64, 4
    $region145: #{tpu_custom_call.1} parent=1 // pred_fallthru
      _
    // Predicated region
    $region146: #{tpu_custom_call.1} parent=1 // pred_check
      _
    $region147: #{tpu_custom_call.1} parent=1 // pred_check_branch
      %426 = sbr.rel (0) target = $region149
    $region148: #{tpu_custom_call.1} parent=1 // pred_region
      _
    $region149: #{tpu_custom_call.1} parent=1 // pred_fallthru
      _
    // Predicated region
    $region150: #{tpu_custom_call.1} parent=1 // pred_check
      _
    $region151: #{tpu_custom_call.1} parent=1 // pred_check_branch
      %428 = sbr.rel (0) target = $region153
    $region152: #{tpu_custom_call.1} parent=1 // pred_region
      _
    $region153: #{tpu_custom_call.1} parent=1 // pred_fallthru
      _
    // Predicated region
    $region154: #{tpu_custom_call.1} parent=1 // pred_check
      _
    $region155: #{tpu_custom_call.1} parent=1 // pred_check_branch
      %430 = sbr.rel (0) target = $region157
    $region156: #{tpu_custom_call.1} parent=1 // pred_region
      %431 = dma.done [#allocation5], 128
    $region157: #{tpu_custom_call.1} parent=1 // pred_fallthru
      _
    // Predicated region
    $region158: #{tpu_custom_call.1} parent=1 // pred_check
      _
    $region159: #{tpu_custom_call.1} parent=1 // pred_check_branch
      %433 = sbr.rel (0) target = $region161
    $region160: #{tpu_custom_call.1} parent=1 // pred_region
      %434 = dma.done [#allocation8], 896
    $region161: #{tpu_custom_call.1} parent=1 // pred_fallthru
      _
    // Predicated region
    $region162: #{tpu_custom_call.1} parent=1 // pred_check
      _
    $region163: #{tpu_custom_call.1} parent=1 // pred_check_branch
      %436 = sbr.rel (0) target = $region165
    $region164: #{tpu_custom_call.1} parent=1 // pred_region
      %437 = dma.done [#allocation8], 32
    $region165: #{tpu_custom_call.1} parent=1 // pred_fallthru
      _
    // Predicated region
    $region166: #{tpu_custom_call.1} parent=1 // pred_check
      _
    $region167: #{tpu_custom_call.1} parent=1 // pred_check_branch
      %439 = sbr.rel (0) target = $region169
    $region168: #{tpu_custom_call.1} parent=1 // pred_region
      %440 = dma.done [#allocation11], 7168
    $region169: #{tpu_custom_call.1} parent=1 // pred_fallthru
      _
    // Predicated region
    $region170: #{tpu_custom_call.1} parent=1 // pred_check
      _
    $region171: #{tpu_custom_call.1} parent=1 // pred_check_branch
      %442 = sbr.rel (0) target = $region173
    $region172: #{tpu_custom_call.1} parent=1 // pred_region
      %443 = dma.done [#allocation11], 3584
    $region173: #{tpu_custom_call.1} parent=1 // pred_fallthru
      _
    // Predicated region
    $region174: #{tpu_custom_call.1} parent=1 // pred_check
      _
    $region175: #{tpu_custom_call.1} parent=1 // pred_check_branch
      %445 = sbr.rel (0) target = $region177
    $region176: #{tpu_custom_call.1} parent=1 // pred_region
      %446 = dma.done [#allocation14], 2048
    $region177: #{tpu_custom_call.1} parent=1 // pred_fallthru
      _
    // Predicated region
    $region178: #{tpu_custom_call.1} parent=1 // pred_check
      _
    $region179: #{tpu_custom_call.1} parent=1 // pred_check_branch
      %448 = sbr.rel (0) target = $region181
    $region180: #{tpu_custom_call.1} parent=1 // pred_region
      %449 = dma.done [#allocation14], 64
    $region181: #{tpu_custom_call.1} parent=1 // pred_fallthru
      _
    // Predicated region
    $region182: #{tpu_custom_call.1} parent=1 // pred_check
      _
    $region183: #{tpu_custom_call.1} parent=1 // pred_check_branch
      %451 = sbr.rel (0) target = $region185
    $region184: #{tpu_custom_call.1} parent=1 // pred_region
      %452 = dma.done [#allocation17], 64
    $region185: #{tpu_custom_call.1} parent=1 // pred_fallthru
      _
    // Predicated region
    $region186: #{tpu_custom_call.1} parent=1 // pred_check
      _
    $region187: #{tpu_custom_call.1} parent=1 // pred_check_branch
      %454 = sbr.rel (0) target = $region189
    $region188: #{tpu_custom_call.1} parent=1 // pred_region
      %455 = dma.done [#allocation17], 64
    $region189: #{tpu_custom_call.1} parent=1 // pred_fallthru
      _
    // Predicated region
    $region190: #{tpu_custom_call.1} parent=1 // pred_check
      _
    $region191: #{tpu_custom_call.1} parent=1 // pred_check_branch
      %457 = sbr.rel (0) target = $region193
    $region192: #{tpu_custom_call.1} parent=1 // pred_region
      %458 = dma.done [#allocation20], 32
    $region193: #{tpu_custom_call.1} parent=1 // pred_fallthru
      _
    // Predicated region
    $region194: #{tpu_custom_call.1} parent=1 // pred_check
      _
    $region195: #{tpu_custom_call.1} parent=1 // pred_check_branch
      %460 = sbr.rel (0) target = $region197
    $region196: #{tpu_custom_call.1} parent=1 // pred_region
      %461 = dma.done [#allocation20], 32
    $region197: #{tpu_custom_call.1} parent=1 // pred_fallthru
      _
    // Predicated region
    $region198: #{tpu_custom_call.1} parent=1 // pred_check
      _
    $region199: #{tpu_custom_call.1} parent=1 // pred_check_branch
      %463 = sbr.rel (0) target = $region201
    $region200: #{tpu_custom_call.1} parent=1 // pred_region
      %464 = dma.done [#allocation23], 32
    $region201: #{tpu_custom_call.1} parent=1 // pred_fallthru
      _
    // Predicated region
    $region202: #{tpu_custom_call.1} parent=1 // pred_check
      _
    $region203: #{tpu_custom_call.1} parent=1 // pred_check_branch
      %466 = sbr.rel (0) target = $region205
    $region204: #{tpu_custom_call.1} parent=1 // pred_region
      %467 = dma.done [#allocation23], 32
    $region205: #{tpu_custom_call.1} parent=1 // pred_fallthru
      _
    // Predicated region
    $region206: #{tpu_custom_call.1} parent=1 // pred_check
      _
    $region207: #{tpu_custom_call.1} parent=1 // pred_check_branch
      %469 = sbr.rel (0) target = $region209
    $region208: #{tpu_custom_call.1} parent=1 // pred_region
      %470 = dma.done [#allocation26], 192
    $region209: #{tpu_custom_call.1} parent=1 // pred_fallthru
      _
    // Predicated region
    $region210: #{tpu_custom_call.1} parent=1 // pred_check
      _
    $region211: #{tpu_custom_call.1} parent=1 // pred_check_branch
      %472 = sbr.rel (0) target = $region213
    $region212: #{tpu_custom_call.1} parent=1 // pred_region
      %473 = dma.done [#allocation26], 21504
    $region213: #{tpu_custom_call.1} parent=1 // pred_fallthru
      _
    // Predicated region
    $region214: #{tpu_custom_call.1} parent=1 // pred_check
      _
    $region215: #{tpu_custom_call.1} parent=1 // pred_check_branch
      %475 = sbr.rel (0) target = $region217
    $region216: #{tpu_custom_call.1} parent=1 // pred_region
      %476 = dma.done [#allocation29], 192
    $region217: #{tpu_custom_call.1} parent=1 // pred_fallthru
      _
    // Predicated region
    $region218: #{tpu_custom_call.1} parent=1 // pred_check
      _
    $region219: #{tpu_custom_call.1} parent=1 // pred_check_branch
      %478 = sbr.rel (0) target = $region221
    $region220: #{tpu_custom_call.1} parent=1 // pred_region
      %479 = dma.done [#allocation29], 21504
    $region221: #{tpu_custom_call.1} parent=1 // pred_fallthru
      _
    // Predicated region
    $region222: #{tpu_custom_call.1} parent=1 // pred_check
      _
    $region223: #{tpu_custom_call.1} parent=1 // pred_check_branch
      %481 = sbr.rel (0) target = $region225
    $region224: #{tpu_custom_call.1} parent=1 // pred_region
      %482 = dma.done [#allocation32], 64
    $region225: #{tpu_custom_call.1} parent=1 // pred_fallthru
      _
    // Predicated region
    $region226: #{tpu_custom_call.1} parent=1 // pred_check
      _
    $region227: #{tpu_custom_call.1} parent=1 // pred_check_branch
      %484 = sbr.rel (0) target = $region229
    $region228: #{tpu_custom_call.1} parent=1 // pred_region
      %485 = dma.done [#allocation32], 128
    $region229: #{tpu_custom_call.1} parent=1 // pred_fallthru
      _
    // Predicated region
    $region230: #{tpu_custom_call.1} parent=1 // pred_check
      _
    $region231: #{tpu_custom_call.1} parent=1 // pred_check_branch
      %487 = sbr.rel (0) target = $region233
    $region232: #{tpu_custom_call.1} parent=1 // pred_region
      %488 = dma.done [#allocation35], 16
    $region233: #{tpu_custom_call.1} parent=1 // pred_fallthru
      _
    // Predicated region
    $region234: #{tpu_custom_call.1} parent=1 // pred_check
      _
    $region235: #{tpu_custom_call.1} parent=1 // pred_check_branch
      %490 = sbr.rel (0) target = $region237
    $region236: #{tpu_custom_call.1} parent=1 // pred_region
      %491 = dma.done [#allocation35], 384
    $region237: #{tpu_custom_call.1} parent=1 // pred_fallthru
      _
    // Predicated region
    $region238: #{tpu_custom_call.1} parent=1 // pred_check
      _
    $region239: #{tpu_custom_call.1} parent=1 // pred_check_branch
      %493 = sbr.rel (0) target = $region241
    $region240: #{tpu_custom_call.1} parent=1 // pred_region
      %494 = dma.done [#allocation38], 32
    $region241: #{tpu_custom_call.1} parent=1 // pred_fallthru
      _
    // Predicated region
    $region242: #{tpu_custom_call.1} parent=1 // pred_check
      _
    $region243: #{tpu_custom_call.1} parent=1 // pred_check_branch
      %496 = sbr.rel (0) target = $region245
    $region244: #{tpu_custom_call.1} parent=1 // pred_region
      %497 = dma.done [#allocation38], 1536
    $region245: #{tpu_custom_call.1} parent=1 // pred_fallthru
      _
    // Predicated region
    $region246: #{tpu_custom_call.1} parent=1 // pred_check
      _
    $region247: #{tpu_custom_call.1} parent=1 // pred_check_branch
      %499 = sbr.rel (0) target = $region249
    $region248: #{tpu_custom_call.1} parent=1 // pred_region
      %500 = dma.done [#allocation41], 32
    $region249: #{tpu_custom_call.1} parent=1 // pred_fallthru
      _
    // Predicated region
    $region250: #{tpu_custom_call.1} parent=1 // pred_check
      _
    $region251: #{tpu_custom_call.1} parent=1 // pred_check_branch
      %502 = sbr.rel (0) target = $region253
    $region252: #{tpu_custom_call.1} parent=1 // pred_region
      %503 = dma.done [#allocation41], 512
    $region253: #{tpu_custom_call.1} parent=1 // pred_fallthru
      _
    // Predicated region
    $region254: #{tpu_custom_call.1} parent=1 // pred_check
      _
    $region255: #{tpu_custom_call.1} parent=1 // pred_check_branch
      %505 = sbr.rel (0) target = $region257
    $region256: #{tpu_custom_call.1} parent=1 // pred_region
      %506 = dma.done [#allocation44], 1792
    $region257: #{tpu_custom_call.1} parent=1 // pred_fallthru
      _
    %v508 = vld [vmem:[#allocation4] sm:$0xff]
    %v509 = vld [vmem:[%s45] sm:$0xff]
    %v510 = vld [vmem:[%s45 + $0x8] sm:$0xff]
    %v511 = vld [vmem:[%s45 + $0x10] sm:$0xff]
    %v512 = vld [vmem:[%s45 + $0x18] sm:$0xff]
    %v513 = vld [vmem:[%s45 + $0x20] sm:$0xff]
    %v514 = vld [vmem:[%s45 + $0x28] sm:$0xff]
    %v515 = vld [vmem:[%s45 + $0x30] sm:$0xff]
    %vm516 = vcmask 457728
    %v518 = vsel %vm516, %v508, 0
    %520 = vmatprep.subr.mxu0 0.0
    %521 = vmatpush1.msra.mxu0 %v509
    %522 = vmatprep.subr.mxu0 0.0
    %523 = vmatpush1.msra.mxu0 %v510
    %524 = vmatprep.subr.mxu0 0.0
    %525 = vmatpush1.msra.mxu0 %v511
    %526 = vmatprep.subr.mxu0 0.0
    %527 = vmatpush1.msra.mxu0 %v512
    %528 = vmatprep.subr.mxu0 0.0
    %529 = vmatpush1.msra.mxu0 %v513
    %530 = vmatprep.subr.mxu0 0.0
    %531 = vmatpush1.msra.mxu0 %v514
    %532 = vmatprep.subr.mxu0 0.0
    %533 = vmatpush1.msra.mxu0 %v515
    %534 = vmatprep.subr.mxu0 0.0
    %535 = vmatpush1.msra.mxu0 0.0
    %536 = vmatprep.subr.mxu0 0.0
    %537 = vmatpush1.msra.mxu0 0.0
    %538 = vmatprep.subr.mxu0 0.0
    %539 = vmatpush1.msra.mxu0 0.0
    %540 = vmatprep.subr.mxu0 0.0
    %541 = vmatpush1.msra.mxu0 0.0
    %542 = vmatprep.subr.mxu0 0.0
    %543 = vmatpush1.msra.mxu0 0.0
    %544 = vmatprep.subr.mxu0 0.0
    %545 = vmatpush1.msra.mxu0 0.0
    %546 = vmatprep.subr.mxu0 0.0
    %547 = vmatpush1.msra.mxu0 0.0
    %548 = vmatprep.subr.mxu0 0.0
    %549 = vmatpush1.msra.mxu0 0.0
    %550 = vmatprep.subr.mxu0 0.0
    %551 = vmatpush1.msra.mxu0 0.0
    %552 = vmatprep.subr.mxu0 0.0
    %553 = vmatpush1.msra.mxu0 0.0
    %554 = vmatprep.subr.mxu0 0.0
    %555 = vmatpush1.msra.mxu0 0.0
    %556 = vmatprep.subr.mxu0 0.0
    %557 = vmatpush1.msra.mxu0 0.0
    %558 = vmatprep.subr.mxu0 0.0
    %559 = vmatpush1.msra.mxu0 0.0
    %560 = vmatprep.subr.mxu0 0.0
    %561 = vmatpush1.msra.mxu0 0.0
    %562 = vmatprep.subr.mxu0 0.0
    %563 = vmatpush1.msra.mxu0 0.0
    %564 = vmatprep.subr.mxu0 0.0
    %565 = vmatpush1.msra.mxu0 0.0
    %566 = vmatprep.subr.mxu0 0.0
    %567 = vmatpush1.msra.mxu0 0.0
    %568 = vmatprep.subr.mxu0 0.0
    %569 = vmatpush1.msra.mxu0 0.0
    %570 = vmatprep.subr.mxu0 0.0
    %571 = vmatpush1.msra.mxu0 0.0
    %572 = vmatprep.subr.mxu0 0.0
    %573 = vmatpush1.msra.mxu0 0.0
    %574 = vmatprep.subr.mxu0 0.0
    %575 = vmatpush1.msra.mxu0 0.0
    %576 = vmatprep.subr.mxu0 0.0
    %577 = vmatpush1.msra.mxu0 0.0
    %578 = vmatprep.subr.mxu0 0.0
    %579 = vmatpush1.msra.mxu0 0.0
    %580 = vmatprep.subr.mxu0 0.0
    %581 = vmatpush1.msra.mxu0 0.0
    %582 = vmatprep.subr.mxu0 0.0
    %583 = vmatpush1.msra.mxu0 0.0
    %584 = vmatprep.mubr.f32.mxu0 0.0
    %585 = vmatmul.mubr.f32.gmra.mrb[0].mxu0 %v518
    %v586 = vpop.f32.mrb[0].mxu0
    %v587 = vadd.f32 0.0, %v586
    %v588 = vpop.f32.mrb[0].mxu0
    %589 = vdwg.mxu0
    %v590 = vld [vmem:[#allocation33] sm:$0x7f]
    %vm591 = vcmask 56320
    %v593 = vsel %vm591, %v587, 0
    %vm595 = vcmask 1046528
    %v597 = vsel %vm595, %v590, 0
    %599 = vmatprep.subr.mxu0 0.0
    %600 = vmatpush1.msra.mxu0 %v597
    %601 = vmatprep.subr.mxu0 0.0
    %602 = vmatpush1.msra.mxu0 0.0
    %603 = vmatprep.subr.mxu0 0.0
    %604 = vmatpush1.msra.mxu0 0.0
    %605 = vmatprep.subr.mxu0 0.0
    %606 = vmatpush1.msra.mxu0 0.0
    %607 = vmatprep.subr.mxu0 0.0
    %608 = vmatpush1.msra.mxu0 0.0
    %609 = vmatprep.subr.mxu0 0.0
    %610 = vmatpush1.msra.mxu0 0.0
    %611 = vmatprep.subr.mxu0 0.0
    %612 = vmatpush1.msra.mxu0 0.0
    %613 = vmatprep.subr.mxu0 0.0
    %614 = vmatpush1.msra.mxu0 0.0
    %615 = vmatprep.subr.mxu0 0.0
    %616 = vmatpush1.msra.mxu0 0.0
    %617 = vmatprep.subr.mxu0 0.0
    %618 = vmatpush1.msra.mxu0 0.0
    %619 = vmatprep.subr.mxu0 0.0
    %620 = vmatpush1.msra.mxu0 0.0
    %621 = vmatprep.subr.mxu0 0.0
    %622 = vmatpush1.msra.mxu0 0.0
    %623 = vmatprep.subr.mxu0 0.0
    %624 = vmatpush1.msra.mxu0 0.0
    %625 = vmatprep.subr.mxu0 0.0
    %626 = vmatpush1.msra.mxu0 0.0
    %627 = vmatprep.subr.mxu0 0.0
    %628 = vmatpush1.msra.mxu0 0.0
    %629 = vmatprep.subr.mxu0 0.0
    %630 = vmatpush1.msra.mxu0 0.0
    %631 = vmatprep.subr.mxu0 0.0
    %632 = vmatpush1.msra.mxu0 0.0
    %633 = vmatprep.subr.mxu0 0.0
    %634 = vmatpush1.msra.mxu0 0.0
    %635 = vmatprep.subr.mxu0 0.0
    %636 = vmatpush1.msra.mxu0 0.0
    %637 = vmatprep.subr.mxu0 0.0
    %638 = vmatpush1.msra.mxu0 0.0
    %639 = vmatprep.subr.mxu0 0.0
    %640 = vmatpush1.msra.mxu0 0.0
    %641 = vmatprep.subr.mxu0 0.0
    %642 = vmatpush1.msra.mxu0 0.0
    %643 = vmatprep.subr.mxu0 0.0
    %644 = vmatpush1.msra.mxu0 0.0
    %645 = vmatprep.subr.mxu0 0.0
    %646 = vmatpush1.msra.mxu0 0.0
    %647 = vmatprep.subr.mxu0 0.0
    %648 = vmatpush1.msra.mxu0 0.0
    %649 = vmatprep.subr.mxu0 0.0
    %650 = vmatpush1.msra.mxu0 0.0
    %651 = vmatprep.subr.mxu0 0.0
    %652 = vmatpush1.msra.mxu0 0.0
    %653 = vmatprep.subr.mxu0 0.0
    %654 = vmatpush1.msra.mxu0 0.0
    %655 = vmatprep.subr.mxu0 0.0
    %656 = vmatpush1.msra.mxu0 0.0
    %657 = vmatprep.subr.mxu0 0.0
    %658 = vmatpush1.msra.mxu0 0.0
    %659 = vmatprep.subr.mxu0 0.0
    %660 = vmatpush1.msra.mxu0 0.0
    %661 = vmatprep.subr.mxu0 0.0
    %662 = vmatpush1.msra.mxu0 0.0
    %663 = vmatprep.mubr.f32.mxu0 0.0
    %664 = vmatmul.mubr.f32.gmra.mrb[0].mxu0 %v593
    %v665 = vpop.f32.mrb[0].mxu0
    %v666 = vadd.f32 0.0, %v665
    %v667 = vpop.f32.mrb[0].mxu0
    %668 = vdwg.mxu0
    %v669 = vsub.f32 %v508, %v666
    %v670 = vmul.f32 %v669, %v669
    %v672 = vsel %vm516, %v670, 0
    %674 = vmatprep.subr.mxu0 0.0
    %675 = vmatpush1.msra.mxu0 %v509
    %676 = vmatprep.subr.mxu0 0.0
    %677 = vmatpush1.msra.mxu0 %v510
    %678 = vmatprep.subr.mxu0 0.0
    %679 = vmatpush1.msra.mxu0 %v511
    %680 = vmatprep.subr.mxu0 0.0
    %681 = vmatpush1.msra.mxu0 %v512
    %682 = vmatprep.subr.mxu0 0.0
    %683 = vmatpush1.msra.mxu0 %v513
    %684 = vmatprep.subr.mxu0 0.0
    %685 = vmatpush1.msra.mxu0 %v514
    %686 = vmatprep.subr.mxu0 0.0
    %687 = vmatpush1.msra.mxu0 %v515
    %688 = vmatprep.subr.mxu0 0.0
    %689 = vmatpush1.msra.mxu0 0.0
    %690 = vmatprep.subr.mxu0 0.0
    %691 = vmatpush1.msra.mxu0 0.0
    %692 = vmatprep.subr.mxu0 0.0
    %693 = vmatpush1.msra.mxu0 0.0
    %694 = vmatprep.subr.mxu0 0.0
    %695 = vmatpush1.msra.mxu0 0.0
    %696 = vmatprep.subr.mxu0 0.0
    %697 = vmatpush1.msra.mxu0 0.0
    %698 = vmatprep.subr.mxu0 0.0
    %699 = vmatpush1.msra.mxu0 0.0
    %700 = vmatprep.subr.mxu0 0.0
    %701 = vmatpush1.msra.mxu0 0.0
    %702 = vmatprep.subr.mxu0 0.0
    %703 = vmatpush1.msra.mxu0 0.0
    %704 = vmatprep.subr.mxu0 0.0
    %705 = vmatpush1.msra.mxu0 0.0
    %706 = vmatprep.subr.mxu0 0.0
    %707 = vmatpush1.msra.mxu0 0.0
    %708 = vmatprep.subr.mxu0 0.0
    %709 = vmatpush1.msra.mxu0 0.0
    %710 = vmatprep.subr.mxu0 0.0
    %711 = vmatpush1.msra.mxu0 0.0
    %712 = vmatprep.subr.mxu0 0.0
    %713 = vmatpush1.msra.mxu0 0.0
    %714 = vmatprep.subr.mxu0 0.0
    %715 = vmatpush1.msra.mxu0 0.0
    %716 = vmatprep.subr.mxu0 0.0
    %717 = vmatpush1.msra.mxu0 0.0
    %718 = vmatprep.subr.mxu0 0.0
    %719 = vmatpush1.msra.mxu0 0.0
    %720 = vmatprep.subr.mxu0 0.0
    %721 = vmatpush1.msra.mxu0 0.0
    %722 = vmatprep.subr.mxu0 0.0
    %723 = vmatpush1.msra.mxu0 0.0
    %724 = vmatprep.subr.mxu0 0.0
    %725 = vmatpush1.msra.mxu0 0.0
    %726 = vmatprep.subr.mxu0 0.0
    %727 = vmatpush1.msra.mxu0 0.0
    %728 = vmatprep.subr.mxu0 0.0
    %729 = vmatpush1.msra.mxu0 0.0
    %730 = vmatprep.subr.mxu0 0.0
    %731 = vmatpush1.msra.mxu0 0.0
    %732 = vmatprep.subr.mxu0 0.0
    %733 = vmatpush1.msra.mxu0 0.0
    %734 = vmatprep.subr.mxu0 0.0
    %735 = vmatpush1.msra.mxu0 0.0
    %736 = vmatprep.subr.mxu0 0.0
    %737 = vmatpush1.msra.mxu0 0.0
    %738 = vmatprep.mubr.f32.mxu0 0.0
    %739 = vmatmul.mubr.f32.gmra.mrb[0].mxu0 %v672
    %v740 = vpop.f32.mrb[0].mxu0
    %v741 = vadd.f32 0.0, %v740
    %v742 = vpop.f32.mrb[0].mxu0
    %743 = vdwg.mxu0
    %v744 = vmul.f32 %v741, 1.1428572
    %v745 = vrsqrt.pop %v744
    %v746 = vmul.f32 %v744, %v745
    %vm747 = vcmp.eq.f32.partialorder %v744, inf
    %v748 = vsel %vm747, %v744, %v746
    %vm749 = vcmp.eq.f32.partialorder %v744, 0.0
    %v750 = vand.u32 %v744, 2147483648
    %v751 = vsel %vm749, %v750, %v748
    %752 = vrot.lane.b32.xlu0 %v508, 8
    %v753 = vpop.permute.xlu0 %752
    %v755 = vsub.f32 %v508, %v753
    %757 = vrot.lane.b32.xlu0 %v755, 127
    %v758 = vpop.permute.xlu0 %757
    %v760 = vmax.f32 %v755, %v758
    %762 = vrot.lane.b32.xlu0 %v760, 126
    %v763 = vpop.permute.xlu0 %762
    %v765 = vmax.f32 %v760, %v763
    %767 = vrot.lane.b32.xlu0 %v765, 124
    %v768 = vpop.permute.xlu0 %767
    %v770 = vmax.f32 %v765, %v768
    %v771 = vld [vmem:[%s49] sm:$0xf]
    %v772 = vld [vmem:[%s49 + $0x4] sm:$0xf]
    %v773 = vld [vmem:[%s49 + $0x8] sm:$0xf]
    %v774 = vld [vmem:[%s49 + $0xc] sm:$0xf]
    %v775 = vld [vmem:[%s49 + $0x10] sm:$0xf]
    %v776 = vld [vmem:[%s49 + $0x14] sm:$0x1]
    %v777 = vpack.c.bf16 %v770, %v770
    %v778 = vld [vmem:[#allocation34] sm:$0x1]
    %v780 = vlaneseq
    %v781 = vshrl.u32 %v780, 7
    %v782 = vsub.s32 0, %v781
    %v783 = vrot.slane %v778, %v782
    %786 = vrot.lane.b32.xlu0 %v777, 120
    %v787 = vpop.permute.xlu0 %786
    %v794 = vunpack.c.l.b16 %v771
    %v795 = vunpack.c.l.b16 %v772
    %v796 = vunpack.c.l.b16 %v773
    %v797 = vunpack.c.l.b16 %v774
    %v798 = vunpack.c.l.b16 %v775
    %v799 = vunpack.c.l.b16 %v776
    %v800 = vpack.c.b16 %v795, %v794
    %v801 = vpack.c.b16 %v797, %v796
    %v802 = vpack.c.b16 %v799, %v798
    %vm805 = vcmask 334848
    %v807 = vsel %vm805, %v787, 0
    %vm809 = vcmask 1043456
    %vm810 = vcmask 1044480
    %v811 = vsel %vm809, 4294967295, 65535
    %v812 = vsel %vm810, %v811, 0
    %v814 = vand.u32 %v802, %v812
    %816 = vmatprep.subr.bf16.mxu0 0
    %817 = vmatpush1.bf16.msra.mxu0 %v800
    %818 = vmatprep.subr.bf16.mxu0 0
    %819 = vmatpush1.bf16.msra.mxu0 %v801
    %820 = vmatprep.subr.bf16.mxu0 0
    %821 = vmatpush1.bf16.msra.mxu0 %v814
    %822 = vmatprep.subr.bf16.mxu0 0
    %823 = vmatpush1.bf16.msra.mxu0 0
    %824 = vmatprep.subr.bf16.mxu0 0
    %825 = vmatpush1.bf16.msra.mxu0 0
    %826 = vmatprep.subr.bf16.mxu0 0
    %827 = vmatpush1.bf16.msra.mxu0 0
    %828 = vmatprep.subr.bf16.mxu0 0
    %829 = vmatpush1.bf16.msra.mxu0 0
    %830 = vmatprep.subr.bf16.mxu0 0
    %831 = vmatpush1.bf16.msra.mxu0 0
    %832 = vmatprep.subr.bf16.mxu0 0
    %833 = vmatpush1.bf16.msra.mxu0 0
    %834 = vmatprep.subr.bf16.mxu0 0
    %835 = vmatpush1.bf16.msra.mxu0 0
    %836 = vmatprep.subr.bf16.mxu0 0
    %837 = vmatpush1.bf16.msra.mxu0 0
    %838 = vmatprep.subr.bf16.mxu0 0
    %839 = vmatpush1.bf16.msra.mxu0 0
    %840 = vmatprep.subr.bf16.mxu0 0
    %841 = vmatpush1.bf16.msra.mxu0 0
    %842 = vmatprep.subr.bf16.mxu0 0
    %843 = vmatpush1.bf16.msra.mxu0 0
    %844 = vmatprep.subr.bf16.mxu0 0
    %845 = vmatpush1.bf16.msra.mxu0 0
    %846 = vmatprep.subr.bf16.mxu0 0
    %847 = vmatpush1.bf16.msra.mxu0 0
    %848 = vmatprep.mubr.bf16.mxu0 0
    %849 = vmatmul.mubr.bf16.gmra.mrb[0].mxu0 %v807
    %v850 = vpop.f32.mrb[0].mxu0
    %v851 = vadd.f32 %v783, %v850
    %v852 = vpop.f32.mrb[0].mxu0
    %v853 = vpop.f32.mrb[0].mxu0
    %v854 = vpop.f32.mrb[0].mxu0
    %855 = vdwg.mxu0
    %857 = vrot.lane.b32.xlu0 %v751, 7
    %v858 = vpop.permute.xlu0 %857
    %861 = vrot.lane.b32.xlu0 %v851, 14
    %v862 = vpop.permute.xlu0 %861
    %v864 = vsel %vm591, %v587, %v858
    %vm865 = vcmask 113664
    %v866 = vsel %vm865, %v864, %v862
    %v867 = vld [vmem:[#allocation36] sm:$0xff]
    %v868 = vld [vmem:[#allocation36 + $0x8] sm:$0xff]
    %v869 = vld [vmem:[#allocation36 + $0x10] sm:$0x77]
    %v870 = vpack.c.bf16 %v866, %v866
    %v871 = vld [vmem:[#allocation37] sm:$0x3]
    %v873 = vlaneseq
    %v874 = vshrl.u32 %v873, 7
    %v875 = vsub.s32 0, %v874
    %v876 = vrot.slane %v871, %v875
    %v877 = vlaneseq
    %v878 = vshrl.u32 %v877, 7
    %v879 = vsub.s32 1, %v878
    %v880 = vrot.slane %v871, %v879
    %v886 = vunpack.c.l.b16 %v867
    %v887 = vunpack.c.h.b16 %v867
    %v888 = vunpack.c.l.b16 %v868
    %v889 = vunpack.c.h.b16 %v868
    %v890 = vunpack.c.l.b16 %v869
    %v891 = vunpack.c.h.b16 %v869
    %v892 = vpack.c.b16 %v888, %v886
    %v893 = vpack.c.b16 %v889, %v887
    %v894 = vpack.c.b16 %v890, %v890
    %v895 = vpack.c.b16 %v891, %v891
    %vm898 = vcmask 171008
    %v900 = vsel %vm898, %v870, 0
    %vm902 = vcmask 1041408
    %vm903 = vcmask 1042432
    %v904 = vsel %vm902, 4294967295, 65535
    %v905 = vsel %vm903, %v904, 0
    %v907 = vand.u32 %v894, %v905
    %v910 = vand.u32 %v895, %v905
    %912 = vmatprep.subr.bf16.mxu0 %v893
    %913 = vmatpush1.bf16.msra.mxu0 %v892
    %914 = vmatprep.subr.bf16.mxu0 %v910
    %915 = vmatpush1.bf16.msra.mxu0 %v907
    %916 = vmatprep.subr.bf16.mxu0 0
    %917 = vmatpush1.bf16.msra.mxu0 0
    %918 = vmatprep.subr.bf16.mxu0 0
    %919 = vmatpush1.bf16.msra.mxu0 0
    %920 = vmatprep.subr.bf16.mxu0 0
    %921 = vmatpush1.bf16.msra.mxu0 0
    %922 = vmatprep.subr.bf16.mxu0 0
    %923 = vmatpush1.bf16.msra.mxu0 0
    %924 = vmatprep.subr.bf16.mxu0 0
    %925 = vmatpush1.bf16.msra.mxu0 0
    %926 = vmatprep.subr.bf16.mxu0 0
    %927 = vmatpush1.bf16.msra.mxu0 0
    %928 = vmatprep.subr.bf16.mxu0 0
    %929 = vmatpush1.bf16.msra.mxu0 0
    %930 = vmatprep.subr.bf16.mxu0 0
    %931 = vmatpush1.bf16.msra.mxu0 0
    %932 = vmatprep.subr.bf16.mxu0 0
    %933 = vmatpush1.bf16.msra.mxu0 0
    %934 = vmatprep.subr.bf16.mxu0 0
    %935 = vmatpush1.bf16.msra.mxu0 0
    %936 = vmatprep.subr.bf16.mxu0 0
    %937 = vmatpush1.bf16.msra.mxu0 0
    %938 = vmatprep.subr.bf16.mxu0 0
    %939 = vmatpush1.bf16.msra.mxu0 0
    %940 = vmatprep.subr.bf16.mxu0 0
    %941 = vmatpush1.bf16.msra.mxu0 0
    %942 = vmatprep.subr.bf16.mxu0 0
    %943 = vmatpush1.bf16.msra.mxu0 0
    %944 = vmatprep.mubr.bf16.mxu0 0
    %945 = vmatmul.mubr.bf16.gmra.mrb[0].mxu0 %v900
    %v946 = vpop.f32.mrb[0].mxu0
    %v947 = vadd.f32 %v876, %v946
    %v948 = vpop.f32.mrb[0].mxu0
    %v949 = vadd.f32 %v880, %v948
    %v950 = vpop.f32.mrb[0].mxu0
    %v951 = vpop.f32.mrb[0].mxu0
    %952 = vdwg.mxu0
    %v953 = vmax.f32 %v947, 0.0
    %v954 = vmax.f32 %v949, 0.0
    %v955 = vpack.c.bf16 %v953, %v953
    %v956 = vpack.c.bf16 %v954, %v954
    %v957 = vld [vmem:[%s57] sm:$0xf]
    %v958 = vld [vmem:[%s57 + $0x4] sm:$0xf]
    %v959 = vld [vmem:[%s57 + $0x8] sm:$0xf]
    %v960 = vld [vmem:[%s57 + $0xc] sm:$0xf]
    %v961 = vld [vmem:[%s57 + $0x10] sm:$0xf]
    %v962 = vld [vmem:[%s57 + $0x14] sm:$0xf]
    %v963 = vld [vmem:[%s57 + $0x18] sm:$0xf]
    %v964 = vld [vmem:[%s57 + $0x1c] sm:$0xf]
    %v965 = vld [vmem:[%s57 + $0x20] sm:$0xf]
    %v966 = vld [vmem:[%s57 + $0x24] sm:$0xf]
    %v967 = vld [vmem:[%s57 + $0x28] sm:$0xf]
    %v968 = vld [vmem:[%s57 + $0x2c] sm:$0xf]
    %v969 = vld [vmem:[%s57 + $0x30] sm:$0xf]
    %v970 = vld [vmem:[%s57 + $0x34] sm:$0xf]
    %v971 = vld [vmem:[%s57 + $0x38] sm:$0xf]
    %v972 = vld [vmem:[%s57 + $0x3c] sm:$0xf]
    %v973 = vld [vmem:[%s57 + $0x40] sm:$0xf]
    %v974 = vld [vmem:[%s57 + $0x44] sm:$0xf]
    %v975 = vld [vmem:[%s57 + $0x48] sm:$0xf]
    %v976 = vld [vmem:[%s57 + $0x4c] sm:$0xf]
    %v977 = vld [vmem:[%s57 + $0x50] sm:$0xf]
    %v978 = vld [vmem:[%s57 + $0x54] sm:$0xf]
    %v979 = vld [vmem:[%s57 + $0x58] sm:$0xf]
    %v980 = vld [vmem:[%s57 + $0x5c] sm:$0xf]
    %v981 = vld [vmem:[%s57 + $0x60] sm:$0xf]
    %v982 = vld [vmem:[%s57 + $0x64] sm:$0xf]
    %v983 = vld [vmem:[%s57 + $0x68] sm:$0xf]
    %v984 = vld [vmem:[%s57 + $0x6c] sm:$0xf]
    %v1013 = vunpack.c.l.b16 %v957
    %v1014 = vunpack.c.l.b16 %v958
    %v1015 = vunpack.c.l.b16 %v959
    %v1016 = vunpack.c.l.b16 %v960
    %v1017 = vunpack.c.l.b16 %v961
    %v1018 = vunpack.c.l.b16 %v962
    %v1019 = vunpack.c.l.b16 %v963
    %v1020 = vunpack.c.l.b16 %v964
    %v1021 = vunpack.c.l.b16 %v965
    %v1022 = vunpack.c.l.b16 %v966
    %v1023 = vunpack.c.l.b16 %v967
    %v1024 = vunpack.c.l.b16 %v968
    %v1025 = vunpack.c.l.b16 %v969
    %v1026 = vunpack.c.l.b16 %v970
    %v1027 = vunpack.c.l.b16 %v971
    %v1028 = vunpack.c.l.b16 %v972
    %v1029 = vunpack.c.l.b16 %v973
    %v1030 = vunpack.c.l.b16 %v974
    %v1031 = vunpack.c.l.b16 %v975
    %v1032 = vunpack.c.l.b16 %v976
    %v1033 = vunpack.c.l.b16 %v977
    %v1034 = vunpack.c.l.b16 %v978
    %v1035 = vunpack.c.l.b16 %v979
    %v1036 = vunpack.c.l.b16 %v980
    %v1037 = vunpack.c.l.b16 %v981
    %v1038 = vunpack.c.l.b16 %v982
    %v1039 = vunpack.c.l.b16 %v983
    %v1040 = vunpack.c.l.b16 %v984
    %v1041 = vpack.c.b16 %v1014, %v1013
    %v1042 = vpack.c.b16 %v1016, %v1015
    %v1043 = vpack.c.b16 %v1018, %v1017
    %v1044 = vpack.c.b16 %v1020, %v1019
    %v1045 = vpack.c.b16 %v1022, %v1021
    %v1046 = vpack.c.b16 %v1024, %v1023
    %v1047 = vpack.c.b16 %v1026, %v1025
    %v1048 = vpack.c.b16 %v1028, %v1027
    %v1049 = vpack.c.b16 %v1030, %v1029
    %v1050 = vpack.c.b16 %v1032, %v1031
    %v1051 = vpack.c.b16 %v1034, %v1033
    %v1052 = vpack.c.b16 %v1036, %v1035
    %v1053 = vpack.c.b16 %v1038, %v1037
    %v1054 = vpack.c.b16 %v1040, %v1039
    %vm1069 = vcmask 785408
    %v1071 = vsel %vm1069, %v956, 0
    %1073 = vmatprep.subr.bf16.mxu0 0
    %1074 = vmatpush1.bf16.msra.mxu0 %v1041
    %1075 = vmatprep.subr.bf16.mxu0 0
    %1076 = vmatpush1.bf16.msra.mxu0 %v1042
    %1077 = vmatprep.subr.bf16.mxu0 0
    %1078 = vmatpush1.bf16.msra.mxu0 %v1043
    %1079 = vmatprep.subr.bf16.mxu0 0
    %1080 = vmatpush1.bf16.msra.mxu0 %v1044
    %1081 = vmatprep.subr.bf16.mxu0 0
    %1082 = vmatpush1.bf16.msra.mxu0 %v1045
    %1083 = vmatprep.subr.bf16.mxu0 0
    %1084 = vmatpush1.bf16.msra.mxu0 %v1046
    %1085 = vmatprep.subr.bf16.mxu0 0
    %1086 = vmatpush1.bf16.msra.mxu0 %v1047
    %1087 = vmatprep.subr.bf16.mxu0 0
    %1088 = vmatpush1.bf16.msra.mxu0 %v1048
    %1089 = vmatprep.subr.bf16.mxu0 0
    %1090 = vmatpush1.bf16.msra.mxu0 %v1049
    %1091 = vmatprep.subr.bf16.mxu0 0
    %1092 = vmatpush1.bf16.msra.mxu0 %v1050
    %1093 = vmatprep.subr.bf16.mxu0 0
    %1094 = vmatpush1.bf16.msra.mxu0 %v1051
    %1095 = vmatprep.subr.bf16.mxu0 0
    %1096 = vmatpush1.bf16.msra.mxu0 %v1052
    %1097 = vmatprep.subr.bf16.mxu0 0
    %1098 = vmatpush1.bf16.msra.mxu0 %v1053
    %1099 = vmatprep.subr.bf16.mxu0 0
    %1100 = vmatpush1.bf16.msra.mxu0 %v1054
    %1101 = vmatprep.subr.bf16.mxu0 0
    %1102 = vmatpush1.bf16.msra.mxu0 0
    %1103 = vmatprep.subr.bf16.mxu0 0
    %1104 = vmatpush1.bf16.msra.mxu0 0
    %1105 = vmatprep.mubr.bf16.mxu0 %v1071
    %1106 = vmatmul.mubr.bf16.gmra.mrb[0].mxu0 %v955
    %v1107 = vpop.f32.mrb[0].mxu0
    %v1108 = vadd.f32 0.0, %v1107
    %v1109 = vpop.f32.mrb[0].mxu0
    %v1110 = vpop.f32.mrb[0].mxu0
    %v1111 = vpop.f32.mrb[0].mxu0
    %1112 = vdwg.mxu0
    %v1113 = vld [vmem:[%s59] sm:$0xf]
    %v1114 = vld [vmem:[%s59 + $0x4] sm:$0xf]
    %v1115 = vld [vmem:[%s59 + $0x8] sm:$0xf]
    %v1116 = vld [vmem:[%s59 + $0xc] sm:$0xf]
    %v1117 = vld [vmem:[%s59 + $0x10] sm:$0xf]
    %v1118 = vld [vmem:[%s59 + $0x14] sm:$0xf]
    %v1119 = vld [vmem:[%s59 + $0x18] sm:$0xf]
    %v1120 = vld [vmem:[%s59 + $0x1c] sm:$0xf]
    %v1121 = vld [vmem:[%s59 + $0x20] sm:$0xf]
    %v1122 = vld [vmem:[%s59 + $0x24] sm:$0xf]
    %v1123 = vld [vmem:[%s59 + $0x28] sm:$0xf]
    %v1124 = vld [vmem:[%s59 + $0x2c] sm:$0xf]
    %v1125 = vld [vmem:[%s59 + $0x30] sm:$0xf]
    %v1126 = vld [vmem:[%s59 + $0x34] sm:$0xf]
    %v1127 = vld [vmem:[%s59 + $0x38] sm:$0xf]
    %v1128 = vld [vmem:[%s59 + $0x3c] sm:$0xf]
    %v1129 = vld [vmem:[%s59 + $0x40] sm:$0xf]
    %v1130 = vld [vmem:[%s59 + $0x44] sm:$0xf]
    %v1131 = vld [vmem:[%s59 + $0x48] sm:$0xf]
    %v1132 = vld [vmem:[%s59 + $0x4c] sm:$0xf]
    %v1133 = vld [vmem:[%s59 + $0x50] sm:$0xf]
    %v1134 = vld [vmem:[%s59 + $0x54] sm:$0xf]
    %v1135 = vld [vmem:[%s59 + $0x58] sm:$0xf]
    %v1136 = vld [vmem:[%s59 + $0x5c] sm:$0xf]
    %v1137 = vld [vmem:[%s59 + $0x60] sm:$0xf]
    %v1138 = vld [vmem:[%s59 + $0x64] sm:$0xf]
    %v1139 = vld [vmem:[%s59 + $0x68] sm:$0xf]
    %v1140 = vld [vmem:[%s59 + $0x6c] sm:$0xf]
    %v1169 = vunpack.c.l.b16 %v1113
    %v1170 = vunpack.c.l.b16 %v1114
    %v1171 = vunpack.c.l.b16 %v1115
    %v1172 = vunpack.c.l.b16 %v1116
    %v1173 = vunpack.c.l.b16 %v1117
    %v1174 = vunpack.c.l.b16 %v1118
    %v1175 = vunpack.c.l.b16 %v1119
    %v1176 = vunpack.c.l.b16 %v1120
    %v1177 = vunpack.c.l.b16 %v1121
    %v1178 = vunpack.c.l.b16 %v1122
    %v1179 = vunpack.c.l.b16 %v1123
    %v1180 = vunpack.c.l.b16 %v1124
    %v1181 = vunpack.c.l.b16 %v1125
    %v1182 = vunpack.c.l.b16 %v1126
    %v1183 = vunpack.c.l.b16 %v1127
    %v1184 = vunpack.c.l.b16 %v1128
    %v1185 = vunpack.c.l.b16 %v1129
    %v1186 = vunpack.c.l.b16 %v1130
    %v1187 = vunpack.c.l.b16 %v1131
    %v1188 = vunpack.c.l.b16 %v1132
    %v1189 = vunpack.c.l.b16 %v1133
    %v1190 = vunpack.c.l.b16 %v1134
    %v1191 = vunpack.c.l.b16 %v1135
    %v1192 = vunpack.c.l.b16 %v1136
    %v1193 = vunpack.c.l.b16 %v1137
    %v1194 = vunpack.c.l.b16 %v1138
    %v1195 = vunpack.c.l.b16 %v1139
    %v1196 = vunpack.c.l.b16 %v1140
    %v1197 = vpack.c.b16 %v1170, %v1169
    %v1198 = vpack.c.b16 %v1172, %v1171
    %v1199 = vpack.c.b16 %v1174, %v1173
    %v1200 = vpack.c.b16 %v1176, %v1175
    %v1201 = vpack.c.b16 %v1178, %v1177
    %v1202 = vpack.c.b16 %v1180, %v1179
    %v1203 = vpack.c.b16 %v1182, %v1181
    %v1204 = vpack.c.b16 %v1184, %v1183
    %v1205 = vpack.c.b16 %v1186, %v1185
    %v1206 = vpack.c.b16 %v1188, %v1187
    %v1207 = vpack.c.b16 %v1190, %v1189
    %v1208 = vpack.c.b16 %v1192, %v1191
    %v1209 = vpack.c.b16 %v1194, %v1193
    %v1210 = vpack.c.b16 %v1196, %v1195
    %1225 = vmatprep.subr.bf16.mxu0 0
    %1226 = vmatpush1.bf16.msra.mxu0 %v1197
    %1227 = vmatprep.subr.bf16.mxu0 0
    %1228 = vmatpush1.bf16.msra.mxu0 %v1198
    %1229 = vmatprep.subr.bf16.mxu0 0
    %1230 = vmatpush1.bf16.msra.mxu0 %v1199
    %1231 = vmatprep.subr.bf16.mxu0 0
    %1232 = vmatpush1.bf16.msra.mxu0 %v1200
    %1233 = vmatprep.subr.bf16.mxu0 0
    %1234 = vmatpush1.bf16.msra.mxu0 %v1201
    %1235 = vmatprep.subr.bf16.mxu0 0
    %1236 = vmatpush1.bf16.msra.mxu0 %v1202
    %1237 = vmatprep.subr.bf16.mxu0 0
    %1238 = vmatpush1.bf16.msra.mxu0 %v1203
    %1239 = vmatprep.subr.bf16.mxu0 0
    %1240 = vmatpush1.bf16.msra.mxu0 %v1204
    %1241 = vmatprep.subr.bf16.mxu0 0
    %1242 = vmatpush1.bf16.msra.mxu0 %v1205
    %1243 = vmatprep.subr.bf16.mxu0 0
    %1244 = vmatpush1.bf16.msra.mxu0 %v1206
    %1245 = vmatprep.subr.bf16.mxu0 0
    %1246 = vmatpush1.bf16.msra.mxu0 %v1207
    %1247 = vmatprep.subr.bf16.mxu0 0
    %1248 = vmatpush1.bf16.msra.mxu0 %v1208
    %1249 = vmatprep.subr.bf16.mxu0 0
    %1250 = vmatpush1.bf16.msra.mxu0 %v1209
    %1251 = vmatprep.subr.bf16.mxu0 0
    %1252 = vmatpush1.bf16.msra.mxu0 %v1210
    %1253 = vmatprep.subr.bf16.mxu0 0
    %1254 = vmatpush1.bf16.msra.mxu0 0
    %1255 = vmatprep.subr.bf16.mxu0 0
    %1256 = vmatpush1.bf16.msra.mxu0 0
    %1257 = vmatprep.mubr.bf16.mxu0 %v1071
    %1258 = vmatmul.mubr.bf16.gmra.mrb[0].mxu0 %v955
    %v1259 = vpop.f32.mrb[0].mxu0
    %v1260 = vadd.f32 0.0, %v1259
    %v1261 = vpop.f32.mrb[0].mxu0
    %v1262 = vpop.f32.mrb[0].mxu0
    %v1263 = vpop.f32.mrb[0].mxu0
    %1264 = vdwg.mxu0
    %v1265 = vmax.f32 %v1108, %v1260
    %v1266 = vld [vmem:[#allocation39] sm:$0xff]
    %v1267 = vld [vmem:[#allocation39 + $0x8] sm:$0xff]
    %v1268 = vld [vmem:[#allocation39 + $0x10] sm:$0xff]
    %v1269 = vld [vmem:[#allocation39 + $0x18] sm:$0xff]
    %v1270 = vld [vmem:[#allocation39 + $0x20] sm:$0xff]
    %v1271 = vld [vmem:[#allocation39 + $0x28] sm:$0xff]
    %v1272 = vld [vmem:[#allocation39 + $0x30] sm:$0xff]
    %v1273 = vld [vmem:[#allocation39 + $0x38] sm:$0xff]
    %v1274 = vld [vmem:[#allocation39 + $0x40] sm:$0xff]
    %v1275 = vld [vmem:[#allocation39 + $0x48] sm:$0xff]
    %v1276 = vld [vmem:[#allocation39 + $0x50] sm:$0xff]
    %v1277 = vld [vmem:[#allocation39 + $0x58] sm:$0xff]
    %v1278 = vpack.c.bf16 %v1265, %v1265
    %v1279 = vld [vmem:[#allocation40] sm:$0x3]
    %v1281 = vlaneseq
    %v1282 = vshrl.u32 %v1281, 7
    %v1283 = vsub.s32 0, %v1282
    %v1284 = vrot.slane %v1279, %v1283
    %v1285 = vlaneseq
    %v1286 = vshrl.u32 %v1285, 7
    %v1287 = vsub.s32 1, %v1286
    %v1288 = vrot.slane %v1279, %v1287
    %v1303 = vunpack.c.l.b16 %v1266
    %v1304 = vunpack.c.h.b16 %v1266
    %v1305 = vunpack.c.l.b16 %v1267
    %v1306 = vunpack.c.h.b16 %v1267
    %v1307 = vunpack.c.l.b16 %v1268
    %v1308 = vunpack.c.h.b16 %v1268
    %v1309 = vunpack.c.l.b16 %v1269
    %v1310 = vunpack.c.h.b16 %v1269
    %v1311 = vunpack.c.l.b16 %v1270
    %v1312 = vunpack.c.h.b16 %v1270
    %v1313 = vunpack.c.l.b16 %v1271
    %v1314 = vunpack.c.h.b16 %v1271
    %v1315 = vunpack.c.l.b16 %v1272
    %v1316 = vunpack.c.h.b16 %v1272
    %v1317 = vunpack.c.l.b16 %v1273
    %v1318 = vunpack.c.h.b16 %v1273
    %v1319 = vunpack.c.l.b16 %v1274
    %v1320 = vunpack.c.h.b16 %v1274
    %v1321 = vunpack.c.l.b16 %v1275
    %v1322 = vunpack.c.h.b16 %v1275
    %v1323 = vunpack.c.l.b16 %v1276
    %v1324 = vunpack.c.h.b16 %v1276
    %v1325 = vunpack.c.l.b16 %v1277
    %v1326 = vunpack.c.h.b16 %v1277
    %v1327 = vpack.c.b16 %v1305, %v1303
    %v1328 = vpack.c.b16 %v1306, %v1304
    %v1329 = vpack.c.b16 %v1309, %v1307
    %v1330 = vpack.c.b16 %v1310, %v1308
    %v1331 = vpack.c.b16 %v1313, %v1311
    %v1332 = vpack.c.b16 %v1314, %v1312
    %v1333 = vpack.c.b16 %v1317, %v1315
    %v1334 = vpack.c.b16 %v1318, %v1316
    %v1335 = vpack.c.b16 %v1321, %v1319
    %v1336 = vpack.c.b16 %v1322, %v1320
    %v1337 = vpack.c.b16 %v1325, %v1323
    %v1338 = vpack.c.b16 %v1326, %v1324
    %v1352 = vsel %vm1069, %v1278, 0
    %1354 = vmatprep.subr.bf16.mxu0 %v1328
    %1355 = vmatpush1.bf16.msra.mxu0 %v1327
    %1356 = vmatprep.subr.bf16.mxu0 %v1330
    %1357 = vmatpush1.bf16.msra.mxu0 %v1329
    %1358 = vmatprep.subr.bf16.mxu0 %v1332
    %1359 = vmatpush1.bf16.msra.mxu0 %v1331
    %1360 = vmatprep.subr.bf16.mxu0 %v1334
    %1361 = vmatpush1.bf16.msra.mxu0 %v1333
    %1362 = vmatprep.subr.bf16.mxu0 %v1336
    %1363 = vmatpush1.bf16.msra.mxu0 %v1335
    %1364 = vmatprep.subr.bf16.mxu0 %v1338
    %1365 = vmatpush1.bf16.msra.mxu0 %v1337
    %1366 = vmatprep.subr.bf16.mxu0 0
    %1367 = vmatpush1.bf16.msra.mxu0 0
    %1368 = vmatprep.subr.bf16.mxu0 0
    %1369 = vmatpush1.bf16.msra.mxu0 0
    %1370 = vmatprep.subr.bf16.mxu0 0
    %1371 = vmatpush1.bf16.msra.mxu0 0
    %1372 = vmatprep.subr.bf16.mxu0 0
    %1373 = vmatpush1.bf16.msra.mxu0 0
    %1374 = vmatprep.subr.bf16.mxu0 0
    %1375 = vmatpush1.bf16.msra.mxu0 0
    %1376 = vmatprep.subr.bf16.mxu0 0
    %1377 = vmatpush1.bf16.msra.mxu0 0
    %1378 = vmatprep.subr.bf16.mxu0 0
    %1379 = vmatpush1.bf16.msra.mxu0 0
    %1380 = vmatprep.subr.bf16.mxu0 0
    %1381 = vmatpush1.bf16.msra.mxu0 0
    %1382 = vmatprep.subr.bf16.mxu0 0
    %1383 = vmatpush1.bf16.msra.mxu0 0
    %1384 = vmatprep.subr.bf16.mxu0 0
    %1385 = vmatpush1.bf16.msra.mxu0 0
    %1386 = vmatprep.mubr.bf16.mxu0 0
    %1387 = vmatmul.mubr.bf16.gmra.mrb[0].mxu0 %v1352
    %v1388 = vpop.f32.mrb[0].mxu0
    %v1389 = vadd.f32 %v1284, %v1388
    %v1390 = vpop.f32.mrb[0].mxu0
    %v1391 = vadd.f32 %v1288, %v1390
    %v1392 = vpop.f32.mrb[0].mxu0
    %v1393 = vpop.f32.mrb[0].mxu0
    %1394 = vdwg.mxu0
    %v1395 = vmax.f32 %v1389, 0.0
    %v1396 = vmax.f32 %v1391, 0.0
    %v1397 = vpack.c.bf16 %v1395, %v1395
    %v1398 = vpack.c.bf16 %v1396, %v1396
    %v1399 = vld [vmem:[%s65] sm:$0xf]
    %v1400 = vld [vmem:[%s65 + $0x4] sm:$0xf]
    %v1401 = vld [vmem:[%s65 + $0x8] sm:$0xf]
    %v1402 = vld [vmem:[%s65 + $0xc] sm:$0xf]
    %v1403 = vld [vmem:[%s65 + $0x10] sm:$0xf]
    %v1404 = vld [vmem:[%s65 + $0x14] sm:$0xf]
    %v1405 = vld [vmem:[%s65 + $0x18] sm:$0xf]
    %v1406 = vld [vmem:[%s65 + $0x1c] sm:$0xf]
    %v1407 = vld [vmem:[%s65 + $0x20] sm:$0xf]
    %v1408 = vld [vmem:[%s65 + $0x24] sm:$0xf]
    %v1409 = vld [vmem:[%s65 + $0x28] sm:$0xf]
    %v1410 = vld [vmem:[%s65 + $0x2c] sm:$0xf]
    %v1411 = vld [vmem:[%s65 + $0x30] sm:$0xf]
    %v1412 = vld [vmem:[%s65 + $0x34] sm:$0xf]
    %v1413 = vld [vmem:[%s65 + $0x38] sm:$0xf]
    %v1414 = vld [vmem:[%s65 + $0x3c] sm:$0xf]
    %v1415 = vld [vmem:[%s65 + $0x40] sm:$0xf]
    %v1416 = vld [vmem:[%s65 + $0x44] sm:$0xf]
    %v1417 = vld [vmem:[%s65 + $0x48] sm:$0xf]
    %v1418 = vld [vmem:[%s65 + $0x4c] sm:$0xf]
    %v1419 = vld [vmem:[%s65 + $0x50] sm:$0xf]
    %v1420 = vld [vmem:[%s65 + $0x54] sm:$0xf]
    %v1421 = vld [vmem:[%s65 + $0x58] sm:$0xf]
    %v1422 = vld [vmem:[%s65 + $0x5c] sm:$0xf]
    %v1447 = vunpack.c.l.b16 %v1399
    %v1448 = vunpack.c.l.b16 %v1400
    %v1449 = vunpack.c.l.b16 %v1401
    %v1450 = vunpack.c.l.b16 %v1402
    %v1451 = vunpack.c.l.b16 %v1403
    %v1452 = vunpack.c.l.b16 %v1404
    %v1453 = vunpack.c.l.b16 %v1405
    %v1454 = vunpack.c.l.b16 %v1406
    %v1455 = vunpack.c.l.b16 %v1407
    %v1456 = vunpack.c.l.b16 %v1408
    %v1457 = vunpack.c.l.b16 %v1409
    %v1458 = vunpack.c.l.b16 %v1410
    %v1459 = vunpack.c.l.b16 %v1411
    %v1460 = vunpack.c.l.b16 %v1412
    %v1461 = vunpack.c.l.b16 %v1413
    %v1462 = vunpack.c.l.b16 %v1414
    %v1463 = vunpack.c.l.b16 %v1415
    %v1464 = vunpack.c.l.b16 %v1416
    %v1465 = vunpack.c.l.b16 %v1417
    %v1466 = vunpack.c.l.b16 %v1418
    %v1467 = vunpack.c.l.b16 %v1419
    %v1468 = vunpack.c.l.b16 %v1420
    %v1469 = vunpack.c.l.b16 %v1421
    %v1470 = vunpack.c.l.b16 %v1422
    %v1471 = vpack.c.b16 %v1448, %v1447
    %v1472 = vpack.c.b16 %v1450, %v1449
    %v1473 = vpack.c.b16 %v1452, %v1451
    %v1474 = vpack.c.b16 %v1454, %v1453
    %v1475 = vpack.c.b16 %v1456, %v1455
    %v1476 = vpack.c.b16 %v1458, %v1457
    %v1477 = vpack.c.b16 %v1460, %v1459
    %v1478 = vpack.c.b16 %v1462, %v1461
    %v1479 = vpack.c.b16 %v1464, %v1463
    %v1480 = vpack.c.b16 %v1466, %v1465
    %v1481 = vpack.c.b16 %v1468, %v1467
    %v1482 = vpack.c.b16 %v1470, %v1469
    %vm1495 = vcmask 523264
    %v1497 = vsel %vm1495, %v1398, 0
    %1499 = vmatprep.subr.bf16.mxu0 0
    %1500 = vmatpush1.bf16.msra.mxu0 %v1471
    %1501 = vmatprep.subr.bf16.mxu0 0
    %1502 = vmatpush1.bf16.msra.mxu0 %v1472
    %1503 = vmatprep.subr.bf16.mxu0 0
    %1504 = vmatpush1.bf16.msra.mxu0 %v1473
    %1505 = vmatprep.subr.bf16.mxu0 0
    %1506 = vmatpush1.bf16.msra.mxu0 %v1474
    %1507 = vmatprep.subr.bf16.mxu0 0
    %1508 = vmatpush1.bf16.msra.mxu0 %v1475
    %1509 = vmatprep.subr.bf16.mxu0 0
    %1510 = vmatpush1.bf16.msra.mxu0 %v1476
    %1511 = vmatprep.subr.bf16.mxu0 0
    %1512 = vmatpush1.bf16.msra.mxu0 %v1477
    %1513 = vmatprep.subr.bf16.mxu0 0
    %1514 = vmatpush1.bf16.msra.mxu0 %v1478
    %1515 = vmatprep.subr.bf16.mxu0 0
    %1516 = vmatpush1.bf16.msra.mxu0 %v1479
    %1517 = vmatprep.subr.bf16.mxu0 0
    %1518 = vmatpush1.bf16.msra.mxu0 %v1480
    %1519 = vmatprep.subr.bf16.mxu0 0
    %1520 = vmatpush1.bf16.msra.mxu0 %v1481
    %1521 = vmatprep.subr.bf16.mxu0 0
    %1522 = vmatpush1.bf16.msra.mxu0 %v1482
    %1523 = vmatprep.subr.bf16.mxu0 0
    %1524 = vmatpush1.bf16.msra.mxu0 0
    %1525 = vmatprep.subr.bf16.mxu0 0
    %1526 = vmatpush1.bf16.msra.mxu0 0
    %1527 = vmatprep.subr.bf16.mxu0 0
    %1528 = vmatpush1.bf16.msra.mxu0 0
    %1529 = vmatprep.subr.bf16.mxu0 0
    %1530 = vmatpush1.bf16.msra.mxu0 0
    %1531 = vmatprep.mubr.bf16.mxu0 %v1497
    %1532 = vmatmul.mubr.bf16.gmra.mrb[0].mxu0 %v1397
    %v1533 = vpop.f32.mrb[0].mxu0
    %v1534 = vadd.f32 0.0, %v1533
    %v1535 = vpop.f32.mrb[0].mxu0
    %v1536 = vpop.f32.mrb[0].mxu0
    %v1537 = vpop.f32.mrb[0].mxu0
    %1538 = vdwg.mxu0
    %v1539 = vld [vmem:[%s67] sm:$0xf]
    %v1540 = vld [vmem:[%s67 + $0x4] sm:$0xf]
    %v1541 = vld [vmem:[%s67 + $0x8] sm:$0xf]
    %v1542 = vld [vmem:[%s67 + $0xc] sm:$0xf]
    %v1543 = vld [vmem:[%s67 + $0x10] sm:$0xf]
    %v1544 = vld [vmem:[%s67 + $0x14] sm:$0xf]
    %v1545 = vld [vmem:[%s67 + $0x18] sm:$0xf]
    %v1546 = vld [vmem:[%s67 + $0x1c] sm:$0xf]
    %v1547 = vld [vmem:[%s67 + $0x20] sm:$0xf]
    %v1548 = vld [vmem:[%s67 + $0x24] sm:$0xf]
    %v1549 = vld [vmem:[%s67 + $0x28] sm:$0xf]
    %v1550 = vld [vmem:[%s67 + $0x2c] sm:$0xf]
    %v1551 = vld [vmem:[%s67 + $0x30] sm:$0xf]
    %v1552 = vld [vmem:[%s67 + $0x34] sm:$0xf]
    %v1553 = vld [vmem:[%s67 + $0x38] sm:$0xf]
    %v1554 = vld [vmem:[%s67 + $0x3c] sm:$0xf]
    %v1555 = vld [vmem:[%s67 + $0x40] sm:$0xf]
    %v1556 = vld [vmem:[%s67 + $0x44] sm:$0xf]
    %v1557 = vld [vmem:[%s67 + $0x48] sm:$0xf]
    %v1558 = vld [vmem:[%s67 + $0x4c] sm:$0xf]
    %v1559 = vld [vmem:[%s67 + $0x50] sm:$0xf]
    %v1560 = vld [vmem:[%s67 + $0x54] sm:$0xf]
    %v1561 = vld [vmem:[%s67 + $0x58] sm:$0xf]
    %v1562 = vld [vmem:[%s67 + $0x5c] sm:$0xf]
    %v1587 = vunpack.c.l.b16 %v1539
    %v1588 = vunpack.c.l.b16 %v1540
    %v1589 = vunpack.c.l.b16 %v1541
    %v1590 = vunpack.c.l.b16 %v1542
    %v1591 = vunpack.c.l.b16 %v1543
    %v1592 = vunpack.c.l.b16 %v1544
    %v1593 = vunpack.c.l.b16 %v1545
    %v1594 = vunpack.c.l.b16 %v1546
    %v1595 = vunpack.c.l.b16 %v1547
    %v1596 = vunpack.c.l.b16 %v1548
    %v1597 = vunpack.c.l.b16 %v1549
    %v1598 = vunpack.c.l.b16 %v1550
    %v1599 = vunpack.c.l.b16 %v1551
    %v1600 = vunpack.c.l.b16 %v1552
    %v1601 = vunpack.c.l.b16 %v1553
    %v1602 = vunpack.c.l.b16 %v1554
    %v1603 = vunpack.c.l.b16 %v1555
    %v1604 = vunpack.c.l.b16 %v1556
    %v1605 = vunpack.c.l.b16 %v1557
    %v1606 = vunpack.c.l.b16 %v1558
    %v1607 = vunpack.c.l.b16 %v1559
    %v1608 = vunpack.c.l.b16 %v1560
    %v1609 = vunpack.c.l.b16 %v1561
    %v1610 = vunpack.c.l.b16 %v1562
    %v1611 = vpack.c.b16 %v1588, %v1587
    %v1612 = vpack.c.b16 %v1590, %v1589
    %v1613 = vpack.c.b16 %v1592, %v1591
    %v1614 = vpack.c.b16 %v1594, %v1593
    %v1615 = vpack.c.b16 %v1596, %v1595
    %v1616 = vpack.c.b16 %v1598, %v1597
    %v1617 = vpack.c.b16 %v1600, %v1599
    %v1618 = vpack.c.b16 %v1602, %v1601
    %v1619 = vpack.c.b16 %v1604, %v1603
    %v1620 = vpack.c.b16 %v1606, %v1605
    %v1621 = vpack.c.b16 %v1608, %v1607
    %v1622 = vpack.c.b16 %v1610, %v1609
    %1635 = vmatprep.subr.bf16.mxu0 0
    %1636 = vmatpush1.bf16.msra.mxu0 %v1611
    %1637 = vmatprep.subr.bf16.mxu0 0
    %1638 = vmatpush1.bf16.msra.mxu0 %v1612
    %1639 = vmatprep.subr.bf16.mxu0 0
    %1640 = vmatpush1.bf16.msra.mxu0 %v1613
    %1641 = vmatprep.subr.bf16.mxu0 0
    %1642 = vmatpush1.bf16.msra.mxu0 %v1614
    %1643 = vmatprep.subr.bf16.mxu0 0
    %1644 = vmatpush1.bf16.msra.mxu0 %v1615
    %1645 = vmatprep.subr.bf16.mxu0 0
    %1646 = vmatpush1.bf16.msra.mxu0 %v1616
    %1647 = vmatprep.subr.bf16.mxu0 0
    %1648 = vmatpush1.bf16.msra.mxu0 %v1617
    %1649 = vmatprep.subr.bf16.mxu0 0
    %1650 = vmatpush1.bf16.msra.mxu0 %v1618
    %1651 = vmatprep.subr.bf16.mxu0 0
    %1652 = vmatpush1.bf16.msra.mxu0 %v1619
    %1653 = vmatprep.subr.bf16.mxu0 0
    %1654 = vmatpush1.bf16.msra.mxu0 %v1620
    %1655 = vmatprep.subr.bf16.mxu0 0
    %1656 = vmatpush1.bf16.msra.mxu0 %v1621
    %1657 = vmatprep.subr.bf16.mxu0 0
    %1658 = vmatpush1.bf16.msra.mxu0 %v1622
    %1659 = vmatprep.subr.bf16.mxu0 0
    %1660 = vmatpush1.bf16.msra.mxu0 0
    %1661 = vmatprep.subr.bf16.mxu0 0
    %1662 = vmatpush1.bf16.msra.mxu0 0
    %1663 = vmatprep.subr.bf16.mxu0 0
    %1664 = vmatpush1.bf16.msra.mxu0 0
    %1665 = vmatprep.subr.bf16.mxu0 0
    %1666 = vmatpush1.bf16.msra.mxu0 0
    %1667 = vmatprep.mubr.bf16.mxu0 %v1497
    %1668 = vmatmul.mubr.bf16.gmra.mrb[0].mxu0 %v1397
    %v1669 = vpop.f32.mrb[0].mxu0
    %v1670 = vadd.f32 0.0, %v1669
    %v1671 = vpop.f32.mrb[0].mxu0
    %v1672 = vpop.f32.mrb[0].mxu0
    %v1673 = vpop.f32.mrb[0].mxu0
    %1674 = vdwg.mxu0
    %v1675 = vmax.f32 %v1534, %v1670
    %v1676 = vld [vmem:[#allocation42] sm:$0xf]
    %v1677 = vld [vmem:[#allocation42 + $0x4] sm:$0xf]
    %v1678 = vld [vmem:[#allocation42 + $0x8] sm:$0xf]
    %v1679 = vld [vmem:[#allocation42 + $0xc] sm:$0xf]
    %v1680 = vld [vmem:[#allocation42 + $0x10] sm:$0xf]
    %v1681 = vld [vmem:[#allocation42 + $0x14] sm:$0xf]
    %v1682 = vld [vmem:[#allocation42 + $0x18] sm:$0xf]
    %v1683 = vld [vmem:[#allocation42 + $0x1c] sm:$0xf]
    %v1684 = vpack.c.bf16 %v1675, %v1675
    %v1685 = vld [vmem:[%s71] sm:$0x1]
    %v1687 = vlaneseq
    %v1688 = vshrl.u32 %v1687, 7
    %v1689 = vsub.s32 0, %v1688
    %v1690 = vrot.slane %v1685, %v1689
    %v1700 = vunpack.c.l.b16 %v1676
    %v1701 = vunpack.c.l.b16 %v1677
    %v1702 = vunpack.c.l.b16 %v1678
    %v1703 = vunpack.c.l.b16 %v1679
    %v1704 = vunpack.c.l.b16 %v1680
    %v1705 = vunpack.c.l.b16 %v1681
    %v1706 = vunpack.c.l.b16 %v1682
    %v1707 = vunpack.c.l.b16 %v1683
    %v1708 = vpack.c.b16 %v1701, %v1700
    %v1709 = vpack.c.b16 %v1703, %v1702
    %v1710 = vpack.c.b16 %v1705, %v1704
    %v1711 = vpack.c.b16 %v1707, %v1706
    %v1717 = vsel %vm1495, %v1684, 0
    %1719 = vmatprep.subr.bf16.mxu0 0
    %1720 = vmatpush1.bf16.msra.mxu0 %v1708
    %1721 = vmatprep.subr.bf16.mxu0 0
    %1722 = vmatpush1.bf16.msra.mxu0 %v1709
    %1723 = vmatprep.subr.bf16.mxu0 0
    %1724 = vmatpush1.bf16.msra.mxu0 %v1710
    %1725 = vmatprep.subr.bf16.mxu0 0
    %1726 = vmatpush1.bf16.msra.mxu0 %v1711
    %1727 = vmatprep.subr.bf16.mxu0 0
    %1728 = vmatpush1.bf16.msra.mxu0 0
    %1729 = vmatprep.subr.bf16.mxu0 0
    %1730 = vmatpush1.bf16.msra.mxu0 0
    %1731 = vmatprep.subr.bf16.mxu0 0
    %1732 = vmatpush1.bf16.msra.mxu0 0
    %1733 = vmatprep.subr.bf16.mxu0 0
    %1734 = vmatpush1.bf16.msra.mxu0 0
    %1735 = vmatprep.subr.bf16.mxu0 0
    %1736 = vmatpush1.bf16.msra.mxu0 0
    %1737 = vmatprep.subr.bf16.mxu0 0
    %1738 = vmatpush1.bf16.msra.mxu0 0
    %1739 = vmatprep.subr.bf16.mxu0 0
    %1740 = vmatpush1.bf16.msra.mxu0 0
    %1741 = vmatprep.subr.bf16.mxu0 0
    %1742 = vmatpush1.bf16.msra.mxu0 0
    %1743 = vmatprep.subr.bf16.mxu0 0
    %1744 = vmatpush1.bf16.msra.mxu0 0
    %1745 = vmatprep.subr.bf16.mxu0 0
    %1746 = vmatpush1.bf16.msra.mxu0 0
    %1747 = vmatprep.subr.bf16.mxu0 0
    %1748 = vmatpush1.bf16.msra.mxu0 0
    %1749 = vmatprep.subr.bf16.mxu0 0
    %1750 = vmatpush1.bf16.msra.mxu0 0
    %1751 = vmatprep.mubr.bf16.mxu0 0
    %1752 = vmatmul.mubr.bf16.gmra.mrb[0].mxu0 %v1717
    %v1753 = vpop.f32.mrb[0].mxu0
    %v1754 = vadd.f32 %v1690, %v1753
    %v1755 = vpop.f32.mrb[0].mxu0
    %v1756 = vpop.f32.mrb[0].mxu0
    %v1757 = vpop.f32.mrb[0].mxu0
    %1758 = vdwg.mxu0
    %v1759 = vmax.f32 %v1754, 0.0
    %v1760 = vld [vmem:[#allocation7] sm:$0xff]
    %v1761 = vld [vmem:[#allocation7 + $0x8] sm:$0xff]
    %v1762 = vld [vmem:[#allocation7 + $0x10] sm:$0xff]
    %v1763 = vld [vmem:[#allocation7 + $0x18] sm:$0xff]
    %v1764 = vld [vmem:[#allocation7 + $0x20] sm:$0xff]
    %v1765 = vld [vmem:[#allocation7 + $0x28] sm:$0xff]
    %v1766 = vld [vmem:[#allocation7 + $0x30] sm:$0xff]
    %v1767 = vpack.c.bf16 %v508, %v508
    %v1768 = vld [vmem:[#allocation9] sm:$0x3]
    %v1770 = vlaneseq
    %v1771 = vshrl.u32 %v1770, 7
    %v1772 = vsub.s32 0, %v1771
    %v1773 = vrot.slane %v1768, %v1772
    %v1774 = vlaneseq
    %v1775 = vshrl.u32 %v1774, 7
    %v1776 = vsub.s32 1, %v1775
    %v1777 = vrot.slane %v1768, %v1776
    %v1787 = vunpack.c.l.b16 %v1760
    %v1788 = vunpack.c.h.b16 %v1760
    %v1789 = vunpack.c.l.b16 %v1761
    %v1790 = vunpack.c.h.b16 %v1761
    %v1791 = vunpack.c.l.b16 %v1762
    %v1792 = vunpack.c.h.b16 %v1762
    %v1793 = vunpack.c.l.b16 %v1763
    %v1794 = vunpack.c.h.b16 %v1763
    %v1795 = vunpack.c.l.b16 %v1764
    %v1796 = vunpack.c.h.b16 %v1764
    %v1797 = vunpack.c.l.b16 %v1765
    %v1798 = vunpack.c.h.b16 %v1765
    %v1799 = vunpack.c.l.b16 %v1766
    %v1800 = vunpack.c.h.b16 %v1766
    %v1801 = vpack.c.b16 %v1789, %v1787
    %v1802 = vpack.c.b16 %v1790, %v1788
    %v1803 = vpack.c.b16 %v1793, %v1791
    %v1804 = vpack.c.b16 %v1794, %v1792
    %v1805 = vpack.c.b16 %v1797, %v1795
    %v1806 = vpack.c.b16 %v1798, %v1796
    %v1807 = vpack.c.b16 %v1799, %v1799
    %v1808 = vpack.c.b16 %v1800, %v1800
    %v1816 = vsel %vm516, %v1767, 0
    %v1819 = vsel %vm809, %v1807, 0
    %v1822 = vsel %vm809, %v1808, 0
    %1824 = vmatprep.subr.bf16.mxu0 %v1802
    %1825 = vmatpush1.bf16.msra.mxu0 %v1801
    %1826 = vmatprep.subr.bf16.mxu0 %v1804
    %1827 = vmatpush1.bf16.msra.mxu0 %v1803
    %1828 = vmatprep.subr.bf16.mxu0 %v1806
    %1829 = vmatpush1.bf16.msra.mxu0 %v1805
    %1830 = vmatprep.subr.bf16.mxu0 %v1822
    %1831 = vmatpush1.bf16.msra.mxu0 %v1819
    %1832 = vmatprep.subr.bf16.mxu0 0
    %1833 = vmatpush1.bf16.msra.mxu0 0
    %1834 = vmatprep.subr.bf16.mxu0 0
    %1835 = vmatpush1.bf16.msra.mxu0 0
    %1836 = vmatprep.subr.bf16.mxu0 0
    %1837 = vmatpush1.bf16.msra.mxu0 0
    %1838 = vmatprep.subr.bf16.mxu0 0
    %1839 = vmatpush1.bf16.msra.mxu0 0
    %1840 = vmatprep.subr.bf16.mxu0 0
    %1841 = vmatpush1.bf16.msra.mxu0 0
    %1842 = vmatprep.subr.bf16.mxu0 0
    %1843 = vmatpush1.bf16.msra.mxu0 0
    %1844 = vmatprep.subr.bf16.mxu0 0
    %1845 = vmatpush1.bf16.msra.mxu0 0
    %1846 = vmatprep.subr.bf16.mxu0 0
    %1847 = vmatpush1.bf16.msra.mxu0 0
    %1848 = vmatprep.subr.bf16.mxu0 0
    %1849 = vmatpush1.bf16.msra.mxu0 0
    %1850 = vmatprep.subr.bf16.mxu0 0
    %1851 = vmatpush1.bf16.msra.mxu0 0
    %1852 = vmatprep.subr.bf16.mxu0 0
    %1853 = vmatpush1.bf16.msra.mxu0 0
    %1854 = vmatprep.subr.bf16.mxu0 0
    %1855 = vmatpush1.bf16.msra.mxu0 0
    %1856 = vmatprep.mubr.bf16.mxu0 0
    %1857 = vmatmul.mubr.bf16.gmra.mrb[0].mxu0 %v1816
    %v1858 = vpop.f32.mrb[0].mxu0
    %v1859 = vadd.f32 %v1773, %v1858
    %v1860 = vpop.f32.mrb[0].mxu0
    %v1861 = vadd.f32 %v1777, %v1860
    %v1862 = vpop.f32.mrb[0].mxu0
    %v1863 = vpop.f32.mrb[0].mxu0
    %1864 = vdwg.mxu0
    %v1865 = vld [vmem:[#allocation10] sm:$0xff]
    %v1866 = vld [vmem:[#allocation10 + $0x8] sm:$0xff]
    %v1867 = vld [vmem:[#allocation10 + $0x10] sm:$0xff]
    %v1868 = vld [vmem:[#allocation10 + $0x18] sm:$0xff]
    %v1869 = vld [vmem:[#allocation10 + $0x20] sm:$0xff]
    %v1870 = vld [vmem:[#allocation10 + $0x28] sm:$0xff]
    %v1871 = vld [vmem:[#allocation10 + $0x30] sm:$0xff]
    %v1872 = vld [vmem:[#allocation10 + $0x38] sm:$0xff]
    %v1873 = vld [vmem:[#allocation10 + $0x40] sm:$0xff]
    %v1874 = vld [vmem:[#allocation10 + $0x48] sm:$0xff]
    %v1875 = vld [vmem:[#allocation10 + $0x50] sm:$0xff]
    %v1876 = vld [vmem:[#allocation10 + $0x58] sm:$0xff]
    %v1877 = vld [vmem:[#allocation10 + $0x60] sm:$0xff]
    %v1878 = vld [vmem:[#allocation10 + $0x68] sm:$0xff]
    %v1879 = vld [vmem:[#allocation10 + $0x70] sm:$0xff]
    %v1880 = vld [vmem:[#allocation10 + $0x78] sm:$0xff]
    %v1881 = vld [vmem:[#allocation10 + $0x80] sm:$0xff]
    %v1882 = vld [vmem:[#allocation10 + $0x88] sm:$0xff]
    %v1883 = vld [vmem:[#allocation10 + $0x90] sm:$0xff]
    %v1884 = vld [vmem:[#allocation10 + $0x98] sm:$0xff]
    %v1885 = vld [vmem:[#allocation10 + $0xa0] sm:$0xff]
    %v1886 = vld [vmem:[#allocation10 + $0xa8] sm:$0xff]
    %v1887 = vld [vmem:[#allocation10 + $0xb0] sm:$0xff]
    %v1888 = vld [vmem:[#allocation10 + $0xb8] sm:$0xff]
    %v1889 = vld [vmem:[#allocation10 + $0xc0] sm:$0xff]
    %v1890 = vld [vmem:[#allocation10 + $0xc8] sm:$0xff]
    %v1891 = vld [vmem:[#allocation10 + $0xd0] sm:$0xff]
    %v1892 = vld [vmem:[#allocation10 + $0xd8] sm:$0xff]
    %v1893 = vld [vmem:[#allocation10 + $0xe0] sm:$0xff]
    %v1894 = vld [vmem:[#allocation10 + $0xe8] sm:$0xff]
    %v1895 = vld [vmem:[#allocation10 + $0xf0] sm:$0xff]
    %v1896 = vld [vmem:[#allocation10 + $0xf8] sm:$0xff]
    %v1897 = vld [vmem:[#allocation10 + $0x100] sm:$0xff]
    %v1898 = vld [vmem:[#allocation10 + $0x108] sm:$0xff]
    %v1899 = vld [vmem:[#allocation10 + $0x110] sm:$0xff]
    %v1900 = vld [vmem:[#allocation10 + $0x118] sm:$0xff]
    %v1901 = vld [vmem:[#allocation10 + $0x120] sm:$0xff]
    %v1902 = vld [vmem:[#allocation10 + $0x128] sm:$0xff]
    %v1903 = vld [vmem:[#allocation10 + $0x130] sm:$0xff]
    %v1904 = vld [vmem:[#allocation10 + $0x138] sm:$0xff]
    %v1905 = vld [vmem:[#allocation10 + $0x140] sm:$0xff]
    %v1906 = vld [vmem:[#allocation10 + $0x148] sm:$0xff]
    %v1907 = vld [vmem:[#allocation10 + $0x150] sm:$0xff]
    %v1908 = vld [vmem:[#allocation10 + $0x158] sm:$0xff]
    %v1909 = vld [vmem:[#allocation10 + $0x160] sm:$0xff]
    %v1910 = vld [vmem:[#allocation10 + $0x168] sm:$0xff]
    %v1911 = vld [vmem:[#allocation10 + $0x170] sm:$0xff]
    %v1912 = vld [vmem:[#allocation10 + $0x178] sm:$0xff]
    %v1913 = vld [vmem:[#allocation10 + $0x180] sm:$0xff]
    %v1914 = vld [vmem:[#allocation10 + $0x188] sm:$0xff]
    %v1915 = vld [vmem:[#allocation10 + $0x190] sm:$0xff]
    %v1916 = vld [vmem:[#allocation10 + $0x198] sm:$0xff]
    %v1917 = vld [vmem:[#allocation10 + $0x1a0] sm:$0xff]
    %v1918 = vld [vmem:[#allocation10 + $0x1a8] sm:$0xff]
    %v1919 = vld [vmem:[#allocation10 + $0x1b0] sm:$0xff]
    %v1920 = vld [vmem:[#allocation10 + $0x1b8] sm:$0xff]
    %v1922 = vsel %vm1069, %v1861, 0
    %1924 = vmatprep.subr.mxu0 %v1866
    %1925 = vmatpush1.msra.mxu0 %v1865
    %1926 = vmatprep.subr.mxu0 %v1868
    %1927 = vmatpush1.msra.mxu0 %v1867
    %1928 = vmatprep.subr.mxu0 %v1870
    %1929 = vmatpush1.msra.mxu0 %v1869
    %1930 = vmatprep.subr.mxu0 %v1872
    %1931 = vmatpush1.msra.mxu0 %v1871
    %1932 = vmatprep.subr.mxu0 %v1874
    %1933 = vmatpush1.msra.mxu0 %v1873
    %1934 = vmatprep.subr.mxu0 %v1876
    %1935 = vmatpush1.msra.mxu0 %v1875
    %1936 = vmatprep.subr.mxu0 %v1878
    %1937 = vmatpush1.msra.mxu0 %v1877
    %1938 = vmatprep.subr.mxu0 %v1880
    %1939 = vmatpush1.msra.mxu0 %v1879
    %1940 = vmatprep.subr.mxu0 %v1882
    %1941 = vmatpush1.msra.mxu0 %v1881
    %1942 = vmatprep.subr.mxu0 %v1884
    %1943 = vmatpush1.msra.mxu0 %v1883
    %1944 = vmatprep.subr.mxu0 %v1886
    %1945 = vmatpush1.msra.mxu0 %v1885
    %1946 = vmatprep.subr.mxu0 %v1888
    %1947 = vmatpush1.msra.mxu0 %v1887
    %1948 = vmatprep.subr.mxu0 %v1890
    %1949 = vmatpush1.msra.mxu0 %v1889
    %1950 = vmatprep.subr.mxu0 %v1892
    %1951 = vmatpush1.msra.mxu0 %v1891
    %1952 = vmatprep.subr.mxu0 %v1894
    %1953 = vmatpush1.msra.mxu0 %v1893
    %1954 = vmatprep.subr.mxu0 %v1896
    %1955 = vmatpush1.msra.mxu0 %v1895
    %1956 = vmatprep.subr.mxu0 %v1898
    %1957 = vmatpush1.msra.mxu0 %v1897
    %1958 = vmatprep.subr.mxu0 %v1900
    %1959 = vmatpush1.msra.mxu0 %v1899
    %1960 = vmatprep.subr.mxu0 %v1902
    %1961 = vmatpush1.msra.mxu0 %v1901
    %1962 = vmatprep.subr.mxu0 %v1904
    %1963 = vmatpush1.msra.mxu0 %v1903
    %1964 = vmatprep.subr.mxu0 %v1906
    %1965 = vmatpush1.msra.mxu0 %v1905
    %1966 = vmatprep.subr.mxu0 %v1908
    %1967 = vmatpush1.msra.mxu0 %v1907
    %1968 = vmatprep.subr.mxu0 %v1910
    %1969 = vmatpush1.msra.mxu0 %v1909
    %1970 = vmatprep.subr.mxu0 %v1912
    %1971 = vmatpush1.msra.mxu0 %v1911
    %1972 = vmatprep.subr.mxu0 %v1914
    %1973 = vmatpush1.msra.mxu0 %v1913
    %1974 = vmatprep.subr.mxu0 %v1916
    %1975 = vmatpush1.msra.mxu0 %v1915
    %1976 = vmatprep.subr.mxu0 %v1918
    %1977 = vmatpush1.msra.mxu0 %v1917
    %1978 = vmatprep.subr.mxu0 %v1920
    %1979 = vmatpush1.msra.mxu0 %v1919
    %1980 = vmatprep.subr.mxu0 0.0
    %1981 = vmatpush1.msra.mxu0 0.0
    %1982 = vmatprep.subr.mxu0 0.0
    %1983 = vmatpush1.msra.mxu0 0.0
    %1984 = vmatprep.subr.mxu0 0.0
    %1985 = vmatpush1.msra.mxu0 0.0
    %1986 = vmatprep.subr.mxu0 0.0
    %1987 = vmatpush1.msra.mxu0 0.0
    %1988 = vmatprep.mubr.f32.mxu0 %v1922
    %1989 = vmatmul.mubr.f32.gmra.mrb[0].mxu0 %v1859
    %v1990 = vpop.f32.mrb[0].mxu0
    %v1991 = vadd.f32 0.0, %v1990
    %v1992 = vpop.f32.mrb[0].mxu0
    %v1993 = vadd.f32 0.0, %v1992
    %1994 = vdwg.mxu0
    %v1995 = vsub.f32 %v1859, %v1991
    %v1996 = vsub.f32 %v1861, %v1993
    %v1997 = vmul.f32 %v1995, %v1995
    %v1998 = vmul.f32 %v1996, %v1996
    %v2000 = vsel %vm1069, %v1998, 0
    %2002 = vmatprep.subr.mxu0 %v1866
    %2003 = vmatpush1.msra.mxu0 %v1865
    %2004 = vmatprep.subr.mxu0 %v1868
    %2005 = vmatpush1.msra.mxu0 %v1867
    %2006 = vmatprep.subr.mxu0 %v1870
    %2007 = vmatpush1.msra.mxu0 %v1869
    %2008 = vmatprep.subr.mxu0 %v1872
    %2009 = vmatpush1.msra.mxu0 %v1871
    %2010 = vmatprep.subr.mxu0 %v1874
    %2011 = vmatpush1.msra.mxu0 %v1873
    %2012 = vmatprep.subr.mxu0 %v1876
    %2013 = vmatpush1.msra.mxu0 %v1875
    %2014 = vmatprep.subr.mxu0 %v1878
    %2015 = vmatpush1.msra.mxu0 %v1877
    %2016 = vmatprep.subr.mxu0 %v1880
    %2017 = vmatpush1.msra.mxu0 %v1879
    %2018 = vmatprep.subr.mxu0 %v1882
    %2019 = vmatpush1.msra.mxu0 %v1881
    %2020 = vmatprep.subr.mxu0 %v1884
    %2021 = vmatpush1.msra.mxu0 %v1883
    %2022 = vmatprep.subr.mxu0 %v1886
    %2023 = vmatpush1.msra.mxu0 %v1885
    %2024 = vmatprep.subr.mxu0 %v1888
    %2025 = vmatpush1.msra.mxu0 %v1887
    %2026 = vmatprep.subr.mxu0 %v1890
    %2027 = vmatpush1.msra.mxu0 %v1889
    %2028 = vmatprep.subr.mxu0 %v1892
    %2029 = vmatpush1.msra.mxu0 %v1891
    %2030 = vmatprep.subr.mxu0 %v1894
    %2031 = vmatpush1.msra.mxu0 %v1893
    %2032 = vmatprep.subr.mxu0 %v1896
    %2033 = vmatpush1.msra.mxu0 %v1895
    %2034 = vmatprep.subr.mxu0 %v1898
    %2035 = vmatpush1.msra.mxu0 %v1897
    %2036 = vmatprep.subr.mxu0 %v1900
    %2037 = vmatpush1.msra.mxu0 %v1899
    %2038 = vmatprep.subr.mxu0 %v1902
    %2039 = vmatpush1.msra.mxu0 %v1901
    %2040 = vmatprep.subr.mxu0 %v1904
    %2041 = vmatpush1.msra.mxu0 %v1903
    %2042 = vmatprep.subr.mxu0 %v1906
    %2043 = vmatpush1.msra.mxu0 %v1905
    %2044 = vmatprep.subr.mxu0 %v1908
    %2045 = vmatpush1.msra.mxu0 %v1907
    %2046 = vmatprep.subr.mxu0 %v1910
    %2047 = vmatpush1.msra.mxu0 %v1909
    %2048 = vmatprep.subr.mxu0 %v1912
    %2049 = vmatpush1.msra.mxu0 %v1911
    %2050 = vmatprep.subr.mxu0 %v1914
    %2051 = vmatpush1.msra.mxu0 %v1913
    %2052 = vmatprep.subr.mxu0 %v1916
    %2053 = vmatpush1.msra.mxu0 %v1915
    %2054 = vmatprep.subr.mxu0 %v1918
    %2055 = vmatpush1.msra.mxu0 %v1917
    %2056 = vmatprep.subr.mxu0 %v1920
    %2057 = vmatpush1.msra.mxu0 %v1919
    %2058 = vmatprep.subr.mxu0 0.0
    %2059 = vmatpush1.msra.mxu0 0.0
    %2060 = vmatprep.subr.mxu0 0.0
    %2061 = vmatpush1.msra.mxu0 0.0
    %2062 = vmatprep.subr.mxu0 0.0
    %2063 = vmatpush1.msra.mxu0 0.0
    %2064 = vmatprep.subr.mxu0 0.0
    %2065 = vmatpush1.msra.mxu0 0.0
    %2066 = vmatprep.mubr.f32.mxu0 %v2000
    %2067 = vmatmul.mubr.f32.gmra.mrb[0].mxu0 %v1997
    %v2068 = vpop.f32.mrb[0].mxu0
    %v2069 = vadd.f32 1e-05, %v2068
    %v2070 = vpop.f32.mrb[0].mxu0
    %v2071 = vadd.f32 1e-05, %v2070
    %2072 = vdwg.mxu0
    %v2073 = vrsqrt.pop %v2069
    %v2074 = vrsqrt.pop %v2071
    %v2075 = vmul.f32 %v1995, %v2073
    %v2076 = vmul.f32 %v1996, %v2074
    %v2077 = vld [vmem:[%s17] sm:$0x3]
    %v2079 = vlaneseq
    %v2080 = vshrl.u32 %v2079, 7
    %v2081 = vsub.s32 0, %v2080
    %v2082 = vrot.slane %v2077, %v2081
    %v2083 = vlaneseq
    %v2084 = vshrl.u32 %v2083, 7
    %v2085 = vsub.s32 1, %v2084
    %v2086 = vrot.slane %v2077, %v2085
    %v2089 = vmul.f32 %v2075, %v2082
    %v2090 = vmul.f32 %v2076, %v2086
    %v2091 = vld [vmem:[#allocation15] sm:$0x3]
    %v2093 = vlaneseq
    %v2094 = vshrl.u32 %v2093, 7
    %v2095 = vsub.s32 0, %v2094
    %v2096 = vrot.slane %v2091, %v2095
    %v2097 = vlaneseq
    %v2098 = vshrl.u32 %v2097, 7
    %v2099 = vsub.s32 1, %v2098
    %v2100 = vrot.slane %v2091, %v2099
    %v2103 = vadd.f32 %v2089, %v2096
    %v2104 = vadd.f32 %v2090, %v2100
    %v2105 = vld [vmem:[#allocation12] sm:$0xff]
    %v2106 = vld [vmem:[#allocation12 + $0x8] sm:$0xff]
    %v2107 = vld [vmem:[#allocation12 + $0x10] sm:$0xff]
    %v2108 = vld [vmem:[#allocation12 + $0x18] sm:$0xff]
    %v2109 = vld [vmem:[#allocation12 + $0x20] sm:$0xff]
    %v2110 = vld [vmem:[#allocation12 + $0x28] sm:$0xff]
    %v2111 = vld [vmem:[#allocation12 + $0x30] sm:$0xff]
    %v2112 = vld [vmem:[#allocation12 + $0x38] sm:$0xff]
    %v2113 = vld [vmem:[#allocation12 + $0x40] sm:$0xff]
    %v2114 = vld [vmem:[#allocation12 + $0x48] sm:$0xff]
    %v2115 = vld [vmem:[#allocation12 + $0x50] sm:$0xff]
    %v2116 = vld [vmem:[#allocation12 + $0x58] sm:$0xff]
    %v2117 = vld [vmem:[#allocation12 + $0x60] sm:$0xff]
    %v2118 = vld [vmem:[#allocation12 + $0x68] sm:$0xff]
    %v2119 = vld [vmem:[#allocation12 + $0x70] sm:$0xff]
    %v2120 = vld [vmem:[#allocation12 + $0x78] sm:$0xff]
    %v2121 = vld [vmem:[#allocation12 + $0x80] sm:$0xff]
    %v2122 = vld [vmem:[#allocation12 + $0x88] sm:$0xff]
    %v2123 = vld [vmem:[#allocation12 + $0x90] sm:$0xff]
    %v2124 = vld [vmem:[#allocation12 + $0x98] sm:$0xff]
    %v2125 = vld [vmem:[#allocation12 + $0xa0] sm:$0xff]
    %v2126 = vld [vmem:[#allocation12 + $0xa8] sm:$0xff]
    %v2127 = vld [vmem:[#allocation12 + $0xb0] sm:$0xff]
    %v2128 = vld [vmem:[#allocation12 + $0xb8] sm:$0xff]
    %v2129 = vld [vmem:[#allocation12 + $0xc0] sm:$0xff]
    %v2130 = vld [vmem:[#allocation12 + $0xc8] sm:$0xff]
    %v2131 = vld [vmem:[#allocation12 + $0xd0] sm:$0xff]
    %v2132 = vld [vmem:[#allocation12 + $0xd8] sm:$0xff]
    %v2133 = vpack.c.bf16 %v2103, %v2103
    %v2134 = vpack.c.bf16 %v2104, %v2104
    %v2163 = vunpack.c.l.b16 %v2105
    %v2164 = vunpack.c.h.b16 %v2105
    %v2165 = vunpack.c.l.b16 %v2106
    %v2166 = vunpack.c.h.b16 %v2106
    %v2167 = vunpack.c.l.b16 %v2107
    %v2168 = vunpack.c.h.b16 %v2107
    %v2169 = vunpack.c.l.b16 %v2108
    %v2170 = vunpack.c.h.b16 %v2108
    %v2171 = vunpack.c.l.b16 %v2109
    %v2172 = vunpack.c.h.b16 %v2109
    %v2173 = vunpack.c.l.b16 %v2110
    %v2174 = vunpack.c.h.b16 %v2110
    %v2175 = vunpack.c.l.b16 %v2111
    %v2176 = vunpack.c.h.b16 %v2111
    %v2177 = vunpack.c.l.b16 %v2112
    %v2178 = vunpack.c.h.b16 %v2112
    %v2179 = vunpack.c.l.b16 %v2113
    %v2180 = vunpack.c.h.b16 %v2113
    %v2181 = vunpack.c.l.b16 %v2114
    %v2182 = vunpack.c.h.b16 %v2114
    %v2183 = vunpack.c.l.b16 %v2115
    %v2184 = vunpack.c.h.b16 %v2115
    %v2185 = vunpack.c.l.b16 %v2116
    %v2186 = vunpack.c.h.b16 %v2116
    %v2187 = vunpack.c.l.b16 %v2117
    %v2188 = vunpack.c.h.b16 %v2117
    %v2189 = vunpack.c.l.b16 %v2118
    %v2190 = vunpack.c.h.b16 %v2118
    %v2191 = vunpack.c.l.b16 %v2119
    %v2192 = vunpack.c.h.b16 %v2119
    %v2193 = vunpack.c.l.b16 %v2120
    %v2194 = vunpack.c.h.b16 %v2120
    %v2195 = vunpack.c.l.b16 %v2121
    %v2196 = vunpack.c.h.b16 %v2121
    %v2197 = vunpack.c.l.b16 %v2122
    %v2198 = vunpack.c.h.b16 %v2122
    %v2199 = vunpack.c.l.b16 %v2123
    %v2200 = vunpack.c.h.b16 %v2123
    %v2201 = vunpack.c.l.b16 %v2124
    %v2202 = vunpack.c.h.b16 %v2124
    %v2203 = vunpack.c.l.b16 %v2125
    %v2204 = vunpack.c.h.b16 %v2125
    %v2205 = vunpack.c.l.b16 %v2126
    %v2206 = vunpack.c.h.b16 %v2126
    %v2207 = vunpack.c.l.b16 %v2127
    %v2208 = vunpack.c.h.b16 %v2127
    %v2209 = vunpack.c.l.b16 %v2128
    %v2210 = vunpack.c.h.b16 %v2128
    %v2211 = vunpack.c.l.b16 %v2129
    %v2212 = vunpack.c.h.b16 %v2129
    %v2213 = vunpack.c.l.b16 %v2130
    %v2214 = vunpack.c.h.b16 %v2130
    %v2215 = vunpack.c.l.b16 %v2131
    %v2216 = vunpack.c.h.b16 %v2131
    %v2217 = vunpack.c.l.b16 %v2132
    %v2218 = vunpack.c.h.b16 %v2132
    %v2219 = vpack.c.b16 %v2165, %v2163
    %v2220 = vpack.c.b16 %v2166, %v2164
    %v2221 = vpack.c.b16 %v2169, %v2167
    %v2222 = vpack.c.b16 %v2170, %v2168
    %v2223 = vpack.c.b16 %v2173, %v2171
    %v2224 = vpack.c.b16 %v2174, %v2172
    %v2225 = vpack.c.b16 %v2177, %v2175
    %v2226 = vpack.c.b16 %v2178, %v2176
    %v2227 = vpack.c.b16 %v2181, %v2179
    %v2228 = vpack.c.b16 %v2182, %v2180
    %v2229 = vpack.c.b16 %v2185, %v2183
    %v2230 = vpack.c.b16 %v2186, %v2184
    %v2231 = vpack.c.b16 %v2189, %v2187
    %v2232 = vpack.c.b16 %v2190, %v2188
    %v2233 = vpack.c.b16 %v2193, %v2191
    %v2234 = vpack.c.b16 %v2194, %v2192
    %v2235 = vpack.c.b16 %v2197, %v2195
    %v2236 = vpack.c.b16 %v2198, %v2196
    %v2237 = vpack.c.b16 %v2201, %v2199
    %v2238 = vpack.c.b16 %v2202, %v2200
    %v2239 = vpack.c.b16 %v2205, %v2203
    %v2240 = vpack.c.b16 %v2206, %v2204
    %v2241 = vpack.c.b16 %v2209, %v2207
    %v2242 = vpack.c.b16 %v2210, %v2208
    %v2243 = vpack.c.b16 %v2213, %v2211
    %v2244 = vpack.c.b16 %v2214, %v2212
    %v2245 = vpack.c.b16 %v2217, %v2215
    %v2246 = vpack.c.b16 %v2218, %v2216
    %v2276 = vsel %vm1069, %v2134, 0
    %2278 = vmatprep.subr.bf16.mxu0 %v2220
    %2279 = vmatpush1.bf16.msra.mxu0 %v2219
    %2280 = vmatprep.subr.bf16.mxu0 %v2222
    %2281 = vmatpush1.bf16.msra.mxu0 %v2221
    %2282 = vmatprep.subr.bf16.mxu0 %v2224
    %2283 = vmatpush1.bf16.msra.mxu0 %v2223
    %2284 = vmatprep.subr.bf16.mxu0 %v2226
    %2285 = vmatpush1.bf16.msra.mxu0 %v2225
    %2286 = vmatprep.subr.bf16.mxu0 %v2228
    %2287 = vmatpush1.bf16.msra.mxu0 %v2227
    %2288 = vmatprep.subr.bf16.mxu0 %v2230
    %2289 = vmatpush1.bf16.msra.mxu0 %v2229
    %2290 = vmatprep.subr.bf16.mxu0 %v2232
    %2291 = vmatpush1.bf16.msra.mxu0 %v2231
    %2292 = vmatprep.subr.bf16.mxu0 %v2234
    %2293 = vmatpush1.bf16.msra.mxu0 %v2233
    %2294 = vmatprep.subr.bf16.mxu0 %v2236
    %2295 = vmatpush1.bf16.msra.mxu0 %v2235
    %2296 = vmatprep.subr.bf16.mxu0 %v2238
    %2297 = vmatpush1.bf16.msra.mxu0 %v2237
    %2298 = vmatprep.subr.bf16.mxu0 %v2240
    %2299 = vmatpush1.bf16.msra.mxu0 %v2239
    %2300 = vmatprep.subr.bf16.mxu0 %v2242
    %2301 = vmatpush1.bf16.msra.mxu0 %v2241
    %2302 = vmatprep.subr.bf16.mxu0 %v2244
    %2303 = vmatpush1.bf16.msra.mxu0 %v2243
    %2304 = vmatprep.subr.bf16.mxu0 %v2246
    %2305 = vmatpush1.bf16.msra.mxu0 %v2245
    %2306 = vmatprep.subr.bf16.mxu0 0
    %2307 = vmatpush1.bf16.msra.mxu0 0
    %2308 = vmatprep.subr.bf16.mxu0 0
    %2309 = vmatpush1.bf16.msra.mxu0 0
    %2310 = vmatprep.mubr.bf16.mxu0 %v2276
    %2311 = vmatmul.mubr.bf16.gmra.mrb[0].mxu0 %v2133
    %v2312 = vpop.f32.mrb[0].mxu0
    %v2313 = vadd.f32 0.0, %v2312
    %v2314 = vpop.f32.mrb[0].mxu0
    %v2315 = vadd.f32 0.0, %v2314
    %v2316 = vpop.f32.mrb[0].mxu0
    %v2317 = vpop.f32.mrb[0].mxu0
    %2318 = vdwg.mxu0
    %v2319 = vmul.f32 %v2313, %v2313
    %v2320 = vmul.f32 %v2315, %v2315
    %v2321 = vadd.f32 %v2319, %v2320
    %v2322 = vld [vmem:[#allocation13] sm:$0xff]
    %v2323 = vld [vmem:[#allocation13 + $0x8] sm:$0xff]
    %v2324 = vld [vmem:[#allocation13 + $0x10] sm:$0xff]
    %v2325 = vld [vmem:[#allocation13 + $0x18] sm:$0xff]
    %v2326 = vld [vmem:[#allocation13 + $0x20] sm:$0xff]
    %v2327 = vld [vmem:[#allocation13 + $0x28] sm:$0xff]
    %v2328 = vld [vmem:[#allocation13 + $0x30] sm:$0xff]
    %v2329 = vld [vmem:[#allocation13 + $0x38] sm:$0xff]
    %v2330 = vld [vmem:[#allocation13 + $0x40] sm:$0xff]
    %v2331 = vld [vmem:[#allocation13 + $0x48] sm:$0xff]
    %v2332 = vld [vmem:[#allocation13 + $0x50] sm:$0xff]
    %v2333 = vld [vmem:[#allocation13 + $0x58] sm:$0xff]
    %v2334 = vld [vmem:[#allocation13 + $0x60] sm:$0xff]
    %v2335 = vld [vmem:[#allocation13 + $0x68] sm:$0xff]
    %v2336 = vld [vmem:[#allocation13 + $0x70] sm:$0xff]
    %v2337 = vld [vmem:[#allocation13 + $0x78] sm:$0xff]
    %2338 = vmatprep.subr.mxu0 0.0
    %2339 = vmatpush1.msra.mxu0 %v2322
    %2340 = vmatprep.subr.mxu0 0.0
    %2341 = vmatpush1.msra.mxu0 %v2323
    %2342 = vmatprep.subr.mxu0 0.0
    %2343 = vmatpush1.msra.mxu0 %v2324
    %2344 = vmatprep.subr.mxu0 0.0
    %2345 = vmatpush1.msra.mxu0 %v2325
    %2346 = vmatprep.subr.mxu0 0.0
    %2347 = vmatpush1.msra.mxu0 %v2326
    %2348 = vmatprep.subr.mxu0 0.0
    %2349 = vmatpush1.msra.mxu0 %v2327
    %2350 = vmatprep.subr.mxu0 0.0
    %2351 = vmatpush1.msra.mxu0 %v2328
    %2352 = vmatprep.subr.mxu0 0.0
    %2353 = vmatpush1.msra.mxu0 %v2329
    %2354 = vmatprep.subr.mxu0 0.0
    %2355 = vmatpush1.msra.mxu0 %v2330
    %2356 = vmatprep.subr.mxu0 0.0
    %2357 = vmatpush1.msra.mxu0 %v2331
    %2358 = vmatprep.subr.mxu0 0.0
    %2359 = vmatpush1.msra.mxu0 %v2332
    %2360 = vmatprep.subr.mxu0 0.0
    %2361 = vmatpush1.msra.mxu0 %v2333
    %2362 = vmatprep.subr.mxu0 0.0
    %2363 = vmatpush1.msra.mxu0 %v2334
    %2364 = vmatprep.subr.mxu0 0.0
    %2365 = vmatpush1.msra.mxu0 %v2335
    %2366 = vmatprep.subr.mxu0 0.0
    %2367 = vmatpush1.msra.mxu0 %v2336
    %2368 = vmatprep.subr.mxu0 0.0
    %2369 = vmatpush1.msra.mxu0 %v2337
    %2370 = vmatprep.subr.mxu0 0.0
    %2371 = vmatpush1.msra.mxu0 0.0
    %2372 = vmatprep.subr.mxu0 0.0
    %2373 = vmatpush1.msra.mxu0 0.0
    %2374 = vmatprep.subr.mxu0 0.0
    %2375 = vmatpush1.msra.mxu0 0.0
    %2376 = vmatprep.subr.mxu0 0.0
    %2377 = vmatpush1.msra.mxu0 0.0
    %2378 = vmatprep.subr.mxu0 0.0
    %2379 = vmatpush1.msra.mxu0 0.0
    %2380 = vmatprep.subr.mxu0 0.0
    %2381 = vmatpush1.msra.mxu0 0.0
    %2382 = vmatprep.subr.mxu0 0.0
    %2383 = vmatpush1.msra.mxu0 0.0
    %2384 = vmatprep.subr.mxu0 0.0
    %2385 = vmatpush1.msra.mxu0 0.0
    %2386 = vmatprep.subr.mxu0 0.0
    %2387 = vmatpush1.msra.mxu0 0.0
    %2388 = vmatprep.subr.mxu0 0.0
    %2389 = vmatpush1.msra.mxu0 0.0
    %2390 = vmatprep.subr.mxu0 0.0
    %2391 = vmatpush1.msra.mxu0 0.0
    %2392 = vmatprep.subr.mxu0 0.0
    %2393 = vmatpush1.msra.mxu0 0.0
    %2394 = vmatprep.subr.mxu0 0.0
    %2395 = vmatpush1.msra.mxu0 0.0
    %2396 = vmatprep.subr.mxu0 0.0
    %2397 = vmatpush1.msra.mxu0 0.0
    %2398 = vmatprep.subr.mxu0 0.0
    %2399 = vmatpush1.msra.mxu0 0.0
    %2400 = vmatprep.subr.mxu0 0.0
    %2401 = vmatpush1.msra.mxu0 0.0
    %2402 = vmatprep.mubr.f32.mxu0 0.0
    %2403 = vmatmul.mubr.f32.gmra.mrb[0].mxu0 %v2321
    %v2404 = vpop.f32.mrb[0].mxu0
    %v2405 = vadd.f32 0.0, %v2404
    %v2406 = vpop.f32.mrb[0].mxu0
    %2407 = vdwg.mxu0
    %2409 = vset.pattern.permute.xlu0 0
    %2410 = vperm.xlu0 %2409, %v2405
    %v2411 = vpop.permute.xlu0 %2410
    %vm2413 = vcmp.le.f32.partialorder %v2411, %v2405
    %v2414 = vsel %vm2413, 1, 0
    %v2415 = vcvt.s32.f32 %v2414
    %v2416 = vadd.f32 %v2415, 0.0
    %2417 = vset.pattern.permute.xlu0 32
    %2418 = vperm.xlu0 %2417, %v2405
    %v2419 = vpop.permute.xlu0 %2418
    %vm2421 = vcmp.le.f32.partialorder %v2419, %v2405
    %v2422 = vsel %vm2421, 1, 0
    %v2423 = vcvt.s32.f32 %v2422
    %v2424 = vadd.f32 %v2416, %v2423
    %2425 = vset.pattern.permute.xlu0 64
    %2426 = vperm.xlu0 %2425, %v2405
    %v2427 = vpop.permute.xlu0 %2426
    %vm2429 = vcmp.le.f32.partialorder %v2427, %v2405
    %v2430 = vsel %vm2429, 1, 0
    %v2431 = vcvt.s32.f32 %v2430
    %v2432 = vadd.f32 %v2424, %v2431
    %2433 = vset.pattern.permute.xlu0 96
    %2434 = vperm.xlu0 %2433, %v2405
    %v2435 = vpop.permute.xlu0 %2434
    %vm2437 = vcmp.le.f32.partialorder %v2435, %v2405
    %v2438 = vsel %vm2437, 1, 0
    %v2439 = vcvt.s32.f32 %v2438
    %v2440 = vadd.f32 %v2432, %v2439
    %vm2441 = vcmp.ge.f32.partialorder %v2440, 2.0
    %v2442 = vsel %vm2441, %v2405, inf
    %2443 = vmin.xlane.f32.xlu0 %v2442
    %v2444 = vpop.xlane.xlu0 %2443
    %v2445 = vadd.f32 %v2444, 1e-06
    %s2446 = sld [smem:[#allocation3]]
    %v2447 = vstv %s2446
    %v2448 = vmul.f32 %v2445, %v2447
    %vm2449 = vcmp.gt.f32.partialorder %v2405, %v2448
    %v2450 = vsel %vm2449, 1, 0
    %v2451 = vcvt.s32.f32 %v2450
    %v2452 = vld [vmem:[#allocation19] sm:$0x1]
    %v2453 = vld [vmem:[#allocation22] sm:$0x1]
    %v2455 = vlaneseq
    %v2456 = vshrl.u32 %v2455, 7
    %v2457 = vsub.s32 0, %v2456
    %v2458 = vrot.slane %v2453, %v2457
    %v2460 = vmul.f32 %v2451, %v2458
    %v2462 = vlaneseq
    %v2463 = vshrl.u32 %v2462, 7
    %v2464 = vsub.s32 0, %v2463
    %v2465 = vrot.slane %v2452, %v2464
    %v2467 = vadd.f32 %v2465, %v2460
    %v2468 = vld [vmem:[#allocation21] sm:$0x1]
    %v2469 = vld [vmem:[#allocation24] sm:$0x1]
    %v2471 = vlaneseq
    %v2472 = vshrl.u32 %v2471, 7
    %v2473 = vsub.s32 0, %v2472
    %v2474 = vrot.slane %v2469, %v2473
    %v2476 = vmul.f32 %v2451, %v2474
    %v2478 = vlaneseq
    %v2479 = vshrl.u32 %v2478, 7
    %v2480 = vsub.s32 0, %v2479
    %v2481 = vrot.slane %v2468, %v2480
    %v2483 = vadd.f32 %v2481, %v2476
    %v2484 = vmul.f32 %v2313, %v2467
    %v2485 = vmul.f32 %v2315, %v2483
    %v2486 = vsub.f32 %v2484, %v2485
    %v2487 = vmul.f32 %v2313, %v2483
    %v2488 = vmul.f32 %v2315, %v2467
    %v2489 = vadd.f32 %v2487, %v2488
    %v2490 = vld [vmem:[%s13] sm:$0xff]
    %v2491 = vld [vmem:[%s13 + $0x8] sm:$0xff]
    %v2492 = vld [vmem:[%s13 + $0x10] sm:$0xff]
    %v2493 = vld [vmem:[%s13 + $0x18] sm:$0xff]
    %v2494 = vld [vmem:[%s13 + $0x20] sm:$0xff]
    %v2495 = vld [vmem:[%s13 + $0x28] sm:$0xff]
    %v2496 = vld [vmem:[%s13 + $0x30] sm:$0xff]
    %v2497 = vld [vmem:[%s13 + $0x38] sm:$0xff]
    %v2498 = vld [vmem:[%s13 + $0x40] sm:$0xff]
    %v2499 = vld [vmem:[%s13 + $0x48] sm:$0xff]
    %v2500 = vld [vmem:[%s13 + $0x50] sm:$0xff]
    %v2501 = vld [vmem:[%s13 + $0x58] sm:$0xff]
    %v2502 = vld [vmem:[%s13 + $0x60] sm:$0xff]
    %v2503 = vld [vmem:[%s13 + $0x68] sm:$0xff]
    %v2504 = vld [vmem:[%s13 + $0x70] sm:$0xff]
    %v2505 = vld [vmem:[%s13 + $0x78] sm:$0xff]
    %v2506 = vld [vmem:[%s13 + $0x80] sm:$0xff]
    %v2507 = vld [vmem:[%s13 + $0x88] sm:$0xff]
    %v2508 = vld [vmem:[%s13 + $0x90] sm:$0xff]
    %v2509 = vld [vmem:[%s13 + $0x98] sm:$0xff]
    %v2510 = vld [vmem:[%s13 + $0xa0] sm:$0xff]
    %v2511 = vld [vmem:[%s13 + $0xa8] sm:$0xff]
    %v2512 = vld [vmem:[%s13 + $0xb0] sm:$0xff]
    %v2513 = vld [vmem:[%s13 + $0xb8] sm:$0xff]
    %v2514 = vld [vmem:[%s13 + $0xc0] sm:$0xff]
    %v2515 = vld [vmem:[%s13 + $0xc8] sm:$0xff]
    %v2516 = vld [vmem:[%s13 + $0xd0] sm:$0xff]
    %v2517 = vld [vmem:[%s13 + $0xd8] sm:$0xff]
    %v2518 = vld [vmem:[%s13 + $0xe0] sm:$0xff]
    %v2519 = vld [vmem:[%s13 + $0xe8] sm:$0xff]
    %v2520 = vld [vmem:[%s13 + $0xf0] sm:$0xff]
    %v2521 = vld [vmem:[%s13 + $0xf8] sm:$0xff]
    %v2522 = vpack.c.bf16 %v2486, %v2486
    %v2523 = vpack.c.bf16 %v2489, %v2489
    %v2556 = vunpack.c.l.b16 %v2490
    %v2557 = vunpack.c.h.b16 %v2490
    %v2558 = vunpack.c.l.b16 %v2491
    %v2559 = vunpack.c.h.b16 %v2491
    %v2560 = vunpack.c.l.b16 %v2492
    %v2561 = vunpack.c.h.b16 %v2492
    %v2562 = vunpack.c.l.b16 %v2493
    %v2563 = vunpack.c.h.b16 %v2493
    %v2564 = vunpack.c.l.b16 %v2494
    %v2565 = vunpack.c.h.b16 %v2494
    %v2566 = vunpack.c.l.b16 %v2495
    %v2567 = vunpack.c.h.b16 %v2495
    %v2568 = vunpack.c.l.b16 %v2496
    %v2569 = vunpack.c.h.b16 %v2496
    %v2570 = vunpack.c.l.b16 %v2497
    %v2571 = vunpack.c.h.b16 %v2497
    %v2572 = vunpack.c.l.b16 %v2498
    %v2573 = vunpack.c.h.b16 %v2498
    %v2574 = vunpack.c.l.b16 %v2499
    %v2575 = vunpack.c.h.b16 %v2499
    %v2576 = vunpack.c.l.b16 %v2500
    %v2577 = vunpack.c.h.b16 %v2500
    %v2578 = vunpack.c.l.b16 %v2501
    %v2579 = vunpack.c.h.b16 %v2501
    %v2580 = vunpack.c.l.b16 %v2502
    %v2581 = vunpack.c.h.b16 %v2502
    %v2582 = vunpack.c.l.b16 %v2503
    %v2583 = vunpack.c.h.b16 %v2503
    %v2584 = vunpack.c.l.b16 %v2504
    %v2585 = vunpack.c.h.b16 %v2504
    %v2586 = vunpack.c.l.b16 %v2505
    %v2587 = vunpack.c.h.b16 %v2505
    %v2588 = vunpack.c.l.b16 %v2506
    %v2589 = vunpack.c.h.b16 %v2506
    %v2590 = vunpack.c.l.b16 %v2507
    %v2591 = vunpack.c.h.b16 %v2507
    %v2592 = vunpack.c.l.b16 %v2508
    %v2593 = vunpack.c.h.b16 %v2508
    %v2594 = vunpack.c.l.b16 %v2509
    %v2595 = vunpack.c.h.b16 %v2509
    %v2596 = vunpack.c.l.b16 %v2510
    %v2597 = vunpack.c.h.b16 %v2510
    %v2598 = vunpack.c.l.b16 %v2511
    %v2599 = vunpack.c.h.b16 %v2511
    %v2600 = vunpack.c.l.b16 %v2512
    %v2601 = vunpack.c.h.b16 %v2512
    %v2602 = vunpack.c.l.b16 %v2513
    %v2603 = vunpack.c.h.b16 %v2513
    %v2604 = vunpack.c.l.b16 %v2514
    %v2605 = vunpack.c.h.b16 %v2514
    %v2606 = vunpack.c.l.b16 %v2515
    %v2607 = vunpack.c.h.b16 %v2515
    %v2608 = vunpack.c.l.b16 %v2516
    %v2609 = vunpack.c.h.b16 %v2516
    %v2610 = vunpack.c.l.b16 %v2517
    %v2611 = vunpack.c.h.b16 %v2517
    %v2612 = vunpack.c.l.b16 %v2518
    %v2613 = vunpack.c.h.b16 %v2518
    %v2614 = vunpack.c.l.b16 %v2519
    %v2615 = vunpack.c.h.b16 %v2519
    %v2616 = vunpack.c.l.b16 %v2520
    %v2617 = vunpack.c.h.b16 %v2520
    %v2618 = vunpack.c.l.b16 %v2521
    %v2619 = vunpack.c.h.b16 %v2521
    %v2620 = vpack.c.b16 %v2558, %v2556
    %v2621 = vpack.c.b16 %v2559, %v2557
    %v2622 = vpack.c.b16 %v2562, %v2560
    %v2623 = vpack.c.b16 %v2563, %v2561
    %v2624 = vpack.c.b16 %v2566, %v2564
    %v2625 = vpack.c.b16 %v2567, %v2565
    %v2626 = vpack.c.b16 %v2570, %v2568
    %v2627 = vpack.c.b16 %v2571, %v2569
    %v2628 = vpack.c.b16 %v2574, %v2572
    %v2629 = vpack.c.b16 %v2575, %v2573
    %v2630 = vpack.c.b16 %v2578, %v2576
    %v2631 = vpack.c.b16 %v2579, %v2577
    %v2632 = vpack.c.b16 %v2582, %v2580
    %v2633 = vpack.c.b16 %v2583, %v2581
    %v2634 = vpack.c.b16 %v2586, %v2584
    %v2635 = vpack.c.b16 %v2587, %v2585
    %v2636 = vpack.c.b16 %v2590, %v2588
    %v2637 = vpack.c.b16 %v2591, %v2589
    %v2638 = vpack.c.b16 %v2594, %v2592
    %v2639 = vpack.c.b16 %v2595, %v2593
    %v2640 = vpack.c.b16 %v2598, %v2596
    %v2641 = vpack.c.b16 %v2599, %v2597
    %v2642 = vpack.c.b16 %v2602, %v2600
    %v2643 = vpack.c.b16 %v2603, %v2601
    %v2644 = vpack.c.b16 %v2606, %v2604
    %v2645 = vpack.c.b16 %v2607, %v2605
    %v2646 = vpack.c.b16 %v2610, %v2608
    %v2647 = vpack.c.b16 %v2611, %v2609
    %v2648 = vpack.c.b16 %v2614, %v2612
    %v2649 = vpack.c.b16 %v2615, %v2613
    %v2650 = vpack.c.b16 %v2618, %v2616
    %v2651 = vpack.c.b16 %v2619, %v2617
    %2684 = vmatprep.subr.bf16.mxu0 %v2621
    %2685 = vmatpush1.bf16.msra.mxu0 %v2620
    %2686 = vmatprep.subr.bf16.mxu0 %v2623
    %2687 = vmatpush1.bf16.msra.mxu0 %v2622
    %2688 = vmatprep.subr.bf16.mxu0 %v2625
    %2689 = vmatpush1.bf16.msra.mxu0 %v2624
    %2690 = vmatprep.subr.bf16.mxu0 %v2627
    %2691 = vmatpush1.bf16.msra.mxu0 %v2626
    %2692 = vmatprep.subr.bf16.mxu0 %v2629
    %2693 = vmatpush1.bf16.msra.mxu0 %v2628
    %2694 = vmatprep.subr.bf16.mxu0 %v2631
    %2695 = vmatpush1.bf16.msra.mxu0 %v2630
    %2696 = vmatprep.subr.bf16.mxu0 %v2633
    %2697 = vmatpush1.bf16.msra.mxu0 %v2632
    %2698 = vmatprep.subr.bf16.mxu0 %v2635
    %2699 = vmatpush1.bf16.msra.mxu0 %v2634
    %2700 = vmatprep.subr.bf16.mxu0 %v2637
    %2701 = vmatpush1.bf16.msra.mxu0 %v2636
    %2702 = vmatprep.subr.bf16.mxu0 %v2639
    %2703 = vmatpush1.bf16.msra.mxu0 %v2638
    %2704 = vmatprep.subr.bf16.mxu0 %v2641
    %2705 = vmatpush1.bf16.msra.mxu0 %v2640
    %2706 = vmatprep.subr.bf16.mxu0 %v2643
    %2707 = vmatpush1.bf16.msra.mxu0 %v2642
    %2708 = vmatprep.subr.bf16.mxu0 %v2645
    %2709 = vmatpush1.bf16.msra.mxu0 %v2644
    %2710 = vmatprep.subr.bf16.mxu0 %v2647
    %2711 = vmatpush1.bf16.msra.mxu0 %v2646
    %2712 = vmatprep.subr.bf16.mxu0 %v2649
    %2713 = vmatpush1.bf16.msra.mxu0 %v2648
    %2714 = vmatprep.subr.bf16.mxu0 %v2651
    %2715 = vmatpush1.bf16.msra.mxu0 %v2650
    %2716 = vmatprep.mubr.bf16.mxu0 %v2523
    %2717 = vmatmul.mubr.bf16.gmra.mrb[0].mxu0 %v2522
    %v2718 = vpop.f32.mrb[0].mxu0
    %v2719 = vadd.f32 0.0, %v2718
    %v2720 = vpop.f32.mrb[0].mxu0
    %v2721 = vadd.f32 0.0, %v2720
    %v2722 = vpop.f32.mrb[0].mxu0
    %v2723 = vpop.f32.mrb[0].mxu0
    %2724 = vdwg.mxu0
    %v2726 = vsel %vm1069, %v2721, 0
    %2728 = vmatprep.subr.mxu0 %v1866
    %2729 = vmatpush1.msra.mxu0 %v1865
    %2730 = vmatprep.subr.mxu0 %v1868
    %2731 = vmatpush1.msra.mxu0 %v1867
    %2732 = vmatprep.subr.mxu0 %v1870
    %2733 = vmatpush1.msra.mxu0 %v1869
    %2734 = vmatprep.subr.mxu0 %v1872
    %2735 = vmatpush1.msra.mxu0 %v1871
    %2736 = vmatprep.subr.mxu0 %v1874
    %2737 = vmatpush1.msra.mxu0 %v1873
    %2738 = vmatprep.subr.mxu0 %v1876
    %2739 = vmatpush1.msra.mxu0 %v1875
    %2740 = vmatprep.subr.mxu0 %v1878
    %2741 = vmatpush1.msra.mxu0 %v1877
    %2742 = vmatprep.subr.mxu0 %v1880
    %2743 = vmatpush1.msra.mxu0 %v1879
    %2744 = vmatprep.subr.mxu0 %v1882
    %2745 = vmatpush1.msra.mxu0 %v1881
    %2746 = vmatprep.subr.mxu0 %v1884
    %2747 = vmatpush1.msra.mxu0 %v1883
    %2748 = vmatprep.subr.mxu0 %v1886
    %2749 = vmatpush1.msra.mxu0 %v1885
    %2750 = vmatprep.subr.mxu0 %v1888
    %2751 = vmatpush1.msra.mxu0 %v1887
    %2752 = vmatprep.subr.mxu0 %v1890
    %2753 = vmatpush1.msra.mxu0 %v1889
    %2754 = vmatprep.subr.mxu0 %v1892
    %2755 = vmatpush1.msra.mxu0 %v1891
    %2756 = vmatprep.subr.mxu0 %v1894
    %2757 = vmatpush1.msra.mxu0 %v1893
    %2758 = vmatprep.subr.mxu0 %v1896
    %2759 = vmatpush1.msra.mxu0 %v1895
    %2760 = vmatprep.subr.mxu0 %v1898
    %2761 = vmatpush1.msra.mxu0 %v1897
    %2762 = vmatprep.subr.mxu0 %v1900
    %2763 = vmatpush1.msra.mxu0 %v1899
    %2764 = vmatprep.subr.mxu0 %v1902
    %2765 = vmatpush1.msra.mxu0 %v1901
    %2766 = vmatprep.subr.mxu0 %v1904
    %2767 = vmatpush1.msra.mxu0 %v1903
    %2768 = vmatprep.subr.mxu0 %v1906
    %2769 = vmatpush1.msra.mxu0 %v1905
    %2770 = vmatprep.subr.mxu0 %v1908
    %2771 = vmatpush1.msra.mxu0 %v1907
    %2772 = vmatprep.subr.mxu0 %v1910
    %2773 = vmatpush1.msra.mxu0 %v1909
    %2774 = vmatprep.subr.mxu0 %v1912
    %2775 = vmatpush1.msra.mxu0 %v1911
    %2776 = vmatprep.subr.mxu0 %v1914
    %2777 = vmatpush1.msra.mxu0 %v1913
    %2778 = vmatprep.subr.mxu0 %v1916
    %2779 = vmatpush1.msra.mxu0 %v1915
    %2780 = vmatprep.subr.mxu0 %v1918
    %2781 = vmatpush1.msra.mxu0 %v1917
    %2782 = vmatprep.subr.mxu0 %v1920
    %2783 = vmatpush1.msra.mxu0 %v1919
    %2784 = vmatprep.subr.mxu0 0.0
    %2785 = vmatpush1.msra.mxu0 0.0
    %2786 = vmatprep.subr.mxu0 0.0
    %2787 = vmatpush1.msra.mxu0 0.0
    %2788 = vmatprep.subr.mxu0 0.0
    %2789 = vmatpush1.msra.mxu0 0.0
    %2790 = vmatprep.subr.mxu0 0.0
    %2791 = vmatpush1.msra.mxu0 0.0
    %2792 = vmatprep.mubr.f32.mxu0 %v2726
    %2793 = vmatmul.mubr.f32.gmra.mrb[0].mxu0 %v2719
    %v2794 = vpop.f32.mrb[0].mxu0
    %v2795 = vadd.f32 0.0, %v2794
    %v2796 = vpop.f32.mrb[0].mxu0
    %v2797 = vadd.f32 0.0, %v2796
    %2798 = vdwg.mxu0
    %v2799 = vsub.f32 %v2719, %v2795
    %v2800 = vsub.f32 %v2721, %v2797
    %v2801 = vmul.f32 %v2799, %v2799
    %v2802 = vmul.f32 %v2800, %v2800
    %v2804 = vsel %vm1069, %v2802, 0
    %2806 = vmatprep.subr.mxu0 %v1866
    %2807 = vmatpush1.msra.mxu0 %v1865
    %2808 = vmatprep.subr.mxu0 %v1868
    %2809 = vmatpush1.msra.mxu0 %v1867
    %2810 = vmatprep.subr.mxu0 %v1870
    %2811 = vmatpush1.msra.mxu0 %v1869
    %2812 = vmatprep.subr.mxu0 %v1872
    %2813 = vmatpush1.msra.mxu0 %v1871
    %2814 = vmatprep.subr.mxu0 %v1874
    %2815 = vmatpush1.msra.mxu0 %v1873
    %2816 = vmatprep.subr.mxu0 %v1876
    %2817 = vmatpush1.msra.mxu0 %v1875
    %2818 = vmatprep.subr.mxu0 %v1878
    %2819 = vmatpush1.msra.mxu0 %v1877
    %2820 = vmatprep.subr.mxu0 %v1880
    %2821 = vmatpush1.msra.mxu0 %v1879
    %2822 = vmatprep.subr.mxu0 %v1882
    %2823 = vmatpush1.msra.mxu0 %v1881
    %2824 = vmatprep.subr.mxu0 %v1884
    %2825 = vmatpush1.msra.mxu0 %v1883
    %2826 = vmatprep.subr.mxu0 %v1886
    %2827 = vmatpush1.msra.mxu0 %v1885
    %2828 = vmatprep.subr.mxu0 %v1888
    %2829 = vmatpush1.msra.mxu0 %v1887
    %2830 = vmatprep.subr.mxu0 %v1890
    %2831 = vmatpush1.msra.mxu0 %v1889
    %2832 = vmatprep.subr.mxu0 %v1892
    %2833 = vmatpush1.msra.mxu0 %v1891
    %2834 = vmatprep.subr.mxu0 %v1894
    %2835 = vmatpush1.msra.mxu0 %v1893
    %2836 = vmatprep.subr.mxu0 %v1896
    %2837 = vmatpush1.msra.mxu0 %v1895
    %2838 = vmatprep.subr.mxu0 %v1898
    %2839 = vmatpush1.msra.mxu0 %v1897
    %2840 = vmatprep.subr.mxu0 %v1900
    %2841 = vmatpush1.msra.mxu0 %v1899
    %2842 = vmatprep.subr.mxu0 %v1902
    %2843 = vmatpush1.msra.mxu0 %v1901
    %2844 = vmatprep.subr.mxu0 %v1904
    %2845 = vmatpush1.msra.mxu0 %v1903
    %2846 = vmatprep.subr.mxu0 %v1906
    %2847 = vmatpush1.msra.mxu0 %v1905
    %2848 = vmatprep.subr.mxu0 %v1908
    %2849 = vmatpush1.msra.mxu0 %v1907
    %2850 = vmatprep.subr.mxu0 %v1910
    %2851 = vmatpush1.msra.mxu0 %v1909
    %2852 = vmatprep.subr.mxu0 %v1912
    %2853 = vmatpush1.msra.mxu0 %v1911
    %2854 = vmatprep.subr.mxu0 %v1914
    %2855 = vmatpush1.msra.mxu0 %v1913
    %2856 = vmatprep.subr.mxu0 %v1916
    %2857 = vmatpush1.msra.mxu0 %v1915
    %2858 = vmatprep.subr.mxu0 %v1918
    %2859 = vmatpush1.msra.mxu0 %v1917
    %2860 = vmatprep.subr.mxu0 %v1920
    %2861 = vmatpush1.msra.mxu0 %v1919
    %2862 = vmatprep.subr.mxu0 0.0
    %2863 = vmatpush1.msra.mxu0 0.0
    %2864 = vmatprep.subr.mxu0 0.0
    %2865 = vmatpush1.msra.mxu0 0.0
    %2866 = vmatprep.subr.mxu0 0.0
    %2867 = vmatpush1.msra.mxu0 0.0
    %2868 = vmatprep.subr.mxu0 0.0
    %2869 = vmatpush1.msra.mxu0 0.0
    %2870 = vmatprep.mubr.f32.mxu0 %v2804
    %2871 = vmatmul.mubr.f32.gmra.mrb[0].mxu0 %v2801
    %v2872 = vpop.f32.mrb[0].mxu0
    %v2873 = vadd.f32 1e-05, %v2872
    %v2874 = vpop.f32.mrb[0].mxu0
    %v2875 = vadd.f32 1e-05, %v2874
    %2876 = vdwg.mxu0
    %v2877 = vrsqrt.pop %v2873
    %v2878 = vrsqrt.pop %v2875
    %v2879 = vmul.f32 %v2799, %v2877
    %v2880 = vmul.f32 %v2800, %v2878
    %v2881 = vld [vmem:[#allocation16] sm:$0x3]
    %v2883 = vlaneseq
    %v2884 = vshrl.u32 %v2883, 7
    %v2885 = vsub.s32 0, %v2884
    %v2886 = vrot.slane %v2881, %v2885
    %v2887 = vlaneseq
    %v2888 = vshrl.u32 %v2887, 7
    %v2889 = vsub.s32 1, %v2888
    %v2890 = vrot.slane %v2881, %v2889
    %v2893 = vmul.f32 %v2879, %v2886
    %v2894 = vmul.f32 %v2880, %v2890
    %v2895 = vld [vmem:[#allocation18] sm:$0x3]
    %v2897 = vlaneseq
    %v2898 = vshrl.u32 %v2897, 7
    %v2899 = vsub.s32 0, %v2898
    %v2900 = vrot.slane %v2895, %v2899
    %v2901 = vlaneseq
    %v2902 = vshrl.u32 %v2901, 7
    %v2903 = vsub.s32 1, %v2902
    %v2904 = vrot.slane %v2895, %v2903
    %v2907 = vadd.f32 %v2893, %v2900
    %v2908 = vadd.f32 %v2894, %v2904
    %v2909 = vpack.c.bf16 %v2907, %v2907
    %v2910 = vpack.c.bf16 %v2908, %v2908
    %v2911 = vld [vmem:[%s33] sm:$0xff]
    %v2912 = vld [vmem:[%s33 + $0x8] sm:$0xff]
    %v2913 = vld [vmem:[%s33 + $0x10] sm:$0xff]
    %v2914 = vld [vmem:[%s33 + $0x18] sm:$0xff]
    %v2915 = vld [vmem:[%s33 + $0x20] sm:$0xff]
    %v2916 = vld [vmem:[%s33 + $0x28] sm:$0xff]
    %v2917 = vld [vmem:[%s33 + $0x30] sm:$0xff]
    %v2918 = vld [vmem:[%s33 + $0x38] sm:$0xff]
    %v2919 = vld [vmem:[%s33 + $0x40] sm:$0xff]
    %v2920 = vld [vmem:[%s33 + $0x48] sm:$0xff]
    %v2921 = vld [vmem:[%s33 + $0x50] sm:$0xff]
    %v2922 = vld [vmem:[%s33 + $0x58] sm:$0xff]
    %v2923 = vld [vmem:[%s33 + $0x60] sm:$0xff]
    %v2924 = vld [vmem:[%s33 + $0x68] sm:$0xff]
    %v2925 = vld [vmem:[%s33 + $0x70] sm:$0xff]
    %v2926 = vld [vmem:[%s33 + $0x78] sm:$0xff]
    %v2927 = vld [vmem:[%s33 + $0x80] sm:$0xff]
    %v2928 = vld [vmem:[%s33 + $0x88] sm:$0xff]
    %v2929 = vld [vmem:[%s33 + $0x90] sm:$0xff]
    %v2930 = vld [vmem:[%s33 + $0x98] sm:$0xff]
    %v2931 = vld [vmem:[%s33 + $0xa0] sm:$0xff]
    %v2932 = vld [vmem:[%s33 + $0xa8] sm:$0xff]
    %v2933 = vld [vmem:[%s33 + $0xb0] sm:$0xff]
    %v2934 = vld [vmem:[%s33 + $0xb8] sm:$0xff]
    %v2935 = vld [vmem:[%s33 + $0xc0] sm:$0xff]
    %v2936 = vld [vmem:[%s33 + $0xc8] sm:$0xff]
    %v2937 = vld [vmem:[%s33 + $0xd0] sm:$0xff]
    %v2938 = vld [vmem:[%s33 + $0xd8] sm:$0xff]
    %v2939 = vld [vmem:[%s33 + $0xe0] sm:$0xff]
    %v2940 = vld [vmem:[%s33 + $0xe8] sm:$0xff]
    %v2941 = vld [vmem:[%s33 + $0xf0] sm:$0xff]
    %v2942 = vld [vmem:[%s33 + $0xf8] sm:$0xff]
    %v2943 = vld [vmem:[%s33 + $0x100] sm:$0xff]
    %v2944 = vld [vmem:[%s33 + $0x108] sm:$0xff]
    %v2945 = vld [vmem:[%s33 + $0x110] sm:$0xff]
    %v2946 = vld [vmem:[%s33 + $0x118] sm:$0xff]
    %v2947 = vld [vmem:[%s33 + $0x120] sm:$0xff]
    %v2948 = vld [vmem:[%s33 + $0x128] sm:$0xff]
    %v2949 = vld [vmem:[%s33 + $0x130] sm:$0xff]
    %v2950 = vld [vmem:[%s33 + $0x138] sm:$0xff]
    %v2951 = vld [vmem:[%s33 + $0x140] sm:$0xff]
    %v2952 = vld [vmem:[%s33 + $0x148] sm:$0xff]
    %v2953 = vld [vmem:[%s33 + $0x150] sm:$0xff]
    %v2954 = vld [vmem:[%s33 + $0x158] sm:$0xff]
    %v2955 = vld [vmem:[%s33 + $0x160] sm:$0xff]
    %v2956 = vld [vmem:[%s33 + $0x168] sm:$0xff]
    %v2957 = vld [vmem:[%s33 + $0x170] sm:$0xff]
    %v2958 = vld [vmem:[%s33 + $0x178] sm:$0xff]
    %v2959 = vld [vmem:[%s33 + $0x180] sm:$0xff]
    %v2960 = vld [vmem:[%s33 + $0x188] sm:$0xff]
    %v2961 = vld [vmem:[%s33 + $0x190] sm:$0xff]
    %v2962 = vld [vmem:[%s33 + $0x198] sm:$0xff]
    %v2963 = vld [vmem:[%s33 + $0x1a0] sm:$0xff]
    %v2964 = vld [vmem:[%s33 + $0x1a8] sm:$0xff]
    %v2965 = vld [vmem:[%s33 + $0x1b0] sm:$0xff]
    %v2966 = vld [vmem:[%s33 + $0x1b8] sm:$0xff]
    %v2967 = vld [vmem:[%s33 + $0x1c0] sm:$0xff]
    %v2968 = vld [vmem:[%s33 + $0x1c8] sm:$0xff]
    %v2969 = vld [vmem:[%s33 + $0x1d0] sm:$0xff]
    %v2970 = vld [vmem:[%s33 + $0x1d8] sm:$0xff]
    %v2971 = vld [vmem:[%s33 + $0x1e0] sm:$0xff]
    %v2972 = vld [vmem:[%s33 + $0x1e8] sm:$0xff]
    %v2973 = vld [vmem:[%s33 + $0x1f0] sm:$0xff]
    %v2974 = vld [vmem:[%s33 + $0x1f8] sm:$0xff]
    %v2975 = vld [vmem:[%s33 + $0x200] sm:$0xff]
    %v2976 = vld [vmem:[%s33 + $0x208] sm:$0xff]
    %v2977 = vld [vmem:[%s33 + $0x210] sm:$0xff]
    %v2978 = vld [vmem:[%s33 + $0x218] sm:$0xff]
    %v2979 = vld [vmem:[%s33 + $0x220] sm:$0xff]
    %v2980 = vld [vmem:[%s33 + $0x228] sm:$0xff]
    %v2981 = vld [vmem:[%s33 + $0x230] sm:$0xff]
    %v2982 = vld [vmem:[%s33 + $0x238] sm:$0xff]
    %v2983 = vld [vmem:[%s33 + $0x240] sm:$0xff]
    %v2984 = vld [vmem:[%s33 + $0x248] sm:$0xff]
    %v2985 = vld [vmem:[%s33 + $0x250] sm:$0xff]
    %v2986 = vld [vmem:[%s33 + $0x258] sm:$0xff]
    %v2987 = vld [vmem:[%s33 + $0x260] sm:$0xff]
    %v2988 = vld [vmem:[%s33 + $0x268] sm:$0xff]
    %v2989 = vld [vmem:[%s33 + $0x270] sm:$0xff]
    %v2990 = vld [vmem:[%s33 + $0x278] sm:$0xff]
    %v2991 = vld [vmem:[%s33 + $0x280] sm:$0xff]
    %v2992 = vld [vmem:[%s33 + $0x288] sm:$0xff]
    %v2993 = vld [vmem:[%s33 + $0x290] sm:$0xff]
    %v2994 = vld [vmem:[%s33 + $0x298] sm:$0xff]
    %v2995 = vld [vmem:[#allocation25] sm:$0x3f]
    %v2997 = vlaneseq
    %v2998 = vshrl.u32 %v2997, 7
    %v2999 = vsub.s32 0, %v2998
    %v3000 = vrot.slane %v2995, %v2999
    %v3001 = vlaneseq
    %v3002 = vshrl.u32 %v3001, 7
    %v3003 = vsub.s32 1, %v3002
    %v3004 = vrot.slane %v2995, %v3003
    %v3005 = vlaneseq
    %v3006 = vshrl.u32 %v3005, 7
    %v3007 = vsub.s32 2, %v3006
    %v3008 = vrot.slane %v2995, %v3007
    %v3009 = vlaneseq
    %v3010 = vshrl.u32 %v3009, 7
    %v3011 = vsub.s32 3, %v3010
    %v3012 = vrot.slane %v2995, %v3011
    %v3013 = vlaneseq
    %v3014 = vshrl.u32 %v3013, 7
    %v3015 = vsub.s32 4, %v3014
    %v3016 = vrot.slane %v2995, %v3015
    %v3017 = vlaneseq
    %v3018 = vshrl.u32 %v3017, 7
    %v3019 = vsub.s32 5, %v3018
    %v3020 = vrot.slane %v2995, %v3019
    %v3111 = vunpack.c.l.b16 %v2911
    %v3112 = vunpack.c.h.b16 %v2911
    %v3113 = vunpack.c.l.b16 %v2912
    %v3114 = vunpack.c.h.b16 %v2912
    %v3115 = vunpack.c.l.b16 %v2913
    %v3116 = vunpack.c.h.b16 %v2913
    %v3117 = vunpack.c.l.b16 %v2914
    %v3118 = vunpack.c.h.b16 %v2914
    %v3119 = vunpack.c.l.b16 %v2915
    %v3120 = vunpack.c.h.b16 %v2915
    %v3121 = vunpack.c.l.b16 %v2916
    %v3122 = vunpack.c.h.b16 %v2916
    %v3123 = vunpack.c.l.b16 %v2917
    %v3124 = vunpack.c.h.b16 %v2917
    %v3125 = vunpack.c.l.b16 %v2918
    %v3126 = vunpack.c.h.b16 %v2918
    %v3127 = vunpack.c.l.b16 %v2919
    %v3128 = vunpack.c.h.b16 %v2919
    %v3129 = vunpack.c.l.b16 %v2920
    %v3130 = vunpack.c.h.b16 %v2920
    %v3131 = vunpack.c.l.b16 %v2921
    %v3132 = vunpack.c.h.b16 %v2921
    %v3133 = vunpack.c.l.b16 %v2922
    %v3134 = vunpack.c.h.b16 %v2922
    %v3135 = vunpack.c.l.b16 %v2923
    %v3136 = vunpack.c.h.b16 %v2923
    %v3137 = vunpack.c.l.b16 %v2924
    %v3138 = vunpack.c.h.b16 %v2924
    %v3139 = vunpack.c.l.b16 %v2925
    %v3140 = vunpack.c.h.b16 %v2925
    %v3141 = vunpack.c.l.b16 %v2926
    %v3142 = vunpack.c.h.b16 %v2926
    %v3143 = vunpack.c.l.b16 %v2927
    %v3144 = vunpack.c.h.b16 %v2927
    %v3145 = vunpack.c.l.b16 %v2928
    %v3146 = vunpack.c.h.b16 %v2928
    %v3147 = vunpack.c.l.b16 %v2929
    %v3148 = vunpack.c.h.b16 %v2929
    %v3149 = vunpack.c.l.b16 %v2930
    %v3150 = vunpack.c.h.b16 %v2930
    %v3151 = vunpack.c.l.b16 %v2931
    %v3152 = vunpack.c.h.b16 %v2931
    %v3153 = vunpack.c.l.b16 %v2932
    %v3154 = vunpack.c.h.b16 %v2932
    %v3155 = vunpack.c.l.b16 %v2933
    %v3156 = vunpack.c.h.b16 %v2933
    %v3157 = vunpack.c.l.b16 %v2934
    %v3158 = vunpack.c.h.b16 %v2934
    %v3159 = vunpack.c.l.b16 %v2935
    %v3160 = vunpack.c.h.b16 %v2935
    %v3161 = vunpack.c.l.b16 %v2936
    %v3162 = vunpack.c.h.b16 %v2936
    %v3163 = vunpack.c.l.b16 %v2937
    %v3164 = vunpack.c.h.b16 %v2937
    %v3165 = vunpack.c.l.b16 %v2938
    %v3166 = vunpack.c.h.b16 %v2938
    %v3167 = vunpack.c.l.b16 %v2939
    %v3168 = vunpack.c.h.b16 %v2939
    %v3169 = vunpack.c.l.b16 %v2940
    %v3170 = vunpack.c.h.b16 %v2940
    %v3171 = vunpack.c.l.b16 %v2941
    %v3172 = vunpack.c.h.b16 %v2941
    %v3173 = vunpack.c.l.b16 %v2942
    %v3174 = vunpack.c.h.b16 %v2942
    %v3175 = vunpack.c.l.b16 %v2943
    %v3176 = vunpack.c.h.b16 %v2943
    %v3177 = vunpack.c.l.b16 %v2944
    %v3178 = vunpack.c.h.b16 %v2944
    %v3179 = vunpack.c.l.b16 %v2945
    %v3180 = vunpack.c.h.b16 %v2945
    %v3181 = vunpack.c.l.b16 %v2946
    %v3182 = vunpack.c.h.b16 %v2946
    %v3183 = vunpack.c.l.b16 %v2947
    %v3184 = vunpack.c.h.b16 %v2947
    %v3185 = vunpack.c.l.b16 %v2948
    %v3186 = vunpack.c.h.b16 %v2948
    %v3187 = vunpack.c.l.b16 %v2949
    %v3188 = vunpack.c.h.b16 %v2949
    %v3189 = vunpack.c.l.b16 %v2950
    %v3190 = vunpack.c.h.b16 %v2950
    %v3191 = vunpack.c.l.b16 %v2951
    %v3192 = vunpack.c.h.b16 %v2951
    %v3193 = vunpack.c.l.b16 %v2952
    %v3194 = vunpack.c.h.b16 %v2952
    %v3195 = vunpack.c.l.b16 %v2953
    %v3196 = vunpack.c.h.b16 %v2953
    %v3197 = vunpack.c.l.b16 %v2954
    %v3198 = vunpack.c.h.b16 %v2954
    %v3199 = vunpack.c.l.b16 %v2955
    %v3200 = vunpack.c.h.b16 %v2955
    %v3201 = vunpack.c.l.b16 %v2956
    %v3202 = vunpack.c.h.b16 %v2956
    %v3203 = vunpack.c.l.b16 %v2957
    %v3204 = vunpack.c.h.b16 %v2957
    %v3205 = vunpack.c.l.b16 %v2958
    %v3206 = vunpack.c.h.b16 %v2958
    %v3207 = vunpack.c.l.b16 %v2959
    %v3208 = vunpack.c.h.b16 %v2959
    %v3209 = vunpack.c.l.b16 %v2960
    %v3210 = vunpack.c.h.b16 %v2960
    %v3211 = vunpack.c.l.b16 %v2961
    %v3212 = vunpack.c.h.b16 %v2961
    %v3213 = vunpack.c.l.b16 %v2962
    %v3214 = vunpack.c.h.b16 %v2962
    %v3215 = vunpack.c.l.b16 %v2963
    %v3216 = vunpack.c.h.b16 %v2963
    %v3217 = vunpack.c.l.b16 %v2964
    %v3218 = vunpack.c.h.b16 %v2964
    %v3219 = vunpack.c.l.b16 %v2965
    %v3220 = vunpack.c.h.b16 %v2965
    %v3221 = vunpack.c.l.b16 %v2966
    %v3222 = vunpack.c.h.b16 %v2966
    %v3223 = vunpack.c.l.b16 %v2967
    %v3224 = vunpack.c.h.b16 %v2967
    %v3225 = vunpack.c.l.b16 %v2968
    %v3226 = vunpack.c.h.b16 %v2968
    %v3227 = vunpack.c.l.b16 %v2969
    %v3228 = vunpack.c.h.b16 %v2969
    %v3229 = vunpack.c.l.b16 %v2970
    %v3230 = vunpack.c.h.b16 %v2970
    %v3231 = vunpack.c.l.b16 %v2971
    %v3232 = vunpack.c.h.b16 %v2971
    %v3233 = vunpack.c.l.b16 %v2972
    %v3234 = vunpack.c.h.b16 %v2972
    %v3235 = vunpack.c.l.b16 %v2973
    %v3236 = vunpack.c.h.b16 %v2973
    %v3237 = vunpack.c.l.b16 %v2974
    %v3238 = vunpack.c.h.b16 %v2974
    %v3239 = vunpack.c.l.b16 %v2975
    %v3240 = vunpack.c.h.b16 %v2975
    %v3241 = vunpack.c.l.b16 %v2976
    %v3242 = vunpack.c.h.b16 %v2976
    %v3243 = vunpack.c.l.b16 %v2977
    %v3244 = vunpack.c.h.b16 %v2977
    %v3245 = vunpack.c.l.b16 %v2978
    %v3246 = vunpack.c.h.b16 %v2978
    %v3247 = vunpack.c.l.b16 %v2979
    %v3248 = vunpack.c.h.b16 %v2979
    %v3249 = vunpack.c.l.b16 %v2980
    %v3250 = vunpack.c.h.b16 %v2980
    %v3251 = vunpack.c.l.b16 %v2981
    %v3252 = vunpack.c.h.b16 %v2981
    %v3253 = vunpack.c.l.b16 %v2982
    %v3254 = vunpack.c.h.b16 %v2982
    %v3255 = vunpack.c.l.b16 %v2983
    %v3256 = vunpack.c.h.b16 %v2983
    %v3257 = vunpack.c.l.b16 %v2984
    %v3258 = vunpack.c.h.b16 %v2984
    %v3259 = vunpack.c.l.b16 %v2985
    %v3260 = vunpack.c.h.b16 %v2985
    %v3261 = vunpack.c.l.b16 %v2986
    %v3262 = vunpack.c.h.b16 %v2986
    %v3263 = vunpack.c.l.b16 %v2987
    %v3264 = vunpack.c.h.b16 %v2987
    %v3265 = vunpack.c.l.b16 %v2988
    %v3266 = vunpack.c.h.b16 %v2988
    %v3267 = vunpack.c.l.b16 %v2989
    %v3268 = vunpack.c.h.b16 %v2989
    %v3269 = vunpack.c.l.b16 %v2990
    %v3270 = vunpack.c.h.b16 %v2990
    %v3271 = vunpack.c.l.b16 %v2991
    %v3272 = vunpack.c.h.b16 %v2991
    %v3273 = vunpack.c.l.b16 %v2992
    %v3274 = vunpack.c.h.b16 %v2992
    %v3275 = vunpack.c.l.b16 %v2993
    %v3276 = vunpack.c.h.b16 %v2993
    %v3277 = vunpack.c.l.b16 %v2994
    %v3278 = vunpack.c.h.b16 %v2994
    %v3279 = vpack.c.b16 %v3117, %v3111
    %v3280 = vpack.c.b16 %v3118, %v3112
    %v3281 = vpack.c.b16 %v3119, %v3113
    %v3282 = vpack.c.b16 %v3120, %v3114
    %v3283 = vpack.c.b16 %v3121, %v3115
    %v3284 = vpack.c.b16 %v3122, %v3116
    %v3285 = vpack.c.b16 %v3129, %v3123
    %v3286 = vpack.c.b16 %v3130, %v3124
    %v3287 = vpack.c.b16 %v3131, %v3125
    %v3288 = vpack.c.b16 %v3132, %v3126
    %v3289 = vpack.c.b16 %v3133, %v3127
    %v3290 = vpack.c.b16 %v3134, %v3128
    %v3291 = vpack.c.b16 %v3141, %v3135
    %v3292 = vpack.c.b16 %v3142, %v3136
    %v3293 = vpack.c.b16 %v3143, %v3137
    %v3294 = vpack.c.b16 %v3144, %v3138
    %v3295 = vpack.c.b16 %v3145, %v3139
    %v3296 = vpack.c.b16 %v3146, %v3140
    %v3297 = vpack.c.b16 %v3153, %v3147
    %v3298 = vpack.c.b16 %v3154, %v3148
    %v3299 = vpack.c.b16 %v3155, %v3149
    %v3300 = vpack.c.b16 %v3156, %v3150
    %v3301 = vpack.c.b16 %v3157, %v3151
    %v3302 = vpack.c.b16 %v3158, %v3152
    %v3303 = vpack.c.b16 %v3165, %v3159
    %v3304 = vpack.c.b16 %v3166, %v3160
    %v3305 = vpack.c.b16 %v3167, %v3161
    %v3306 = vpack.c.b16 %v3168, %v3162
    %v3307 = vpack.c.b16 %v3169, %v3163
    %v3308 = vpack.c.b16 %v3170, %v3164
    %v3309 = vpack.c.b16 %v3177, %v3171
    %v3310 = vpack.c.b16 %v3178, %v3172
    %v3311 = vpack.c.b16 %v3179, %v3173
    %v3312 = vpack.c.b16 %v3180, %v3174
    %v3313 = vpack.c.b16 %v3181, %v3175
    %v3314 = vpack.c.b16 %v3182, %v3176
    %v3315 = vpack.c.b16 %v3189, %v3183
    %v3316 = vpack.c.b16 %v3190, %v3184
    %v3317 = vpack.c.b16 %v3191, %v3185
    %v3318 = vpack.c.b16 %v3192, %v3186
    %v3319 = vpack.c.b16 %v3193, %v3187
    %v3320 = vpack.c.b16 %v3194, %v3188
    %v3321 = vpack.c.b16 %v3201, %v3195
    %v3322 = vpack.c.b16 %v3202, %v3196
    %v3323 = vpack.c.b16 %v3203, %v3197
    %v3324 = vpack.c.b16 %v3204, %v3198
    %v3325 = vpack.c.b16 %v3205, %v3199
    %v3326 = vpack.c.b16 %v3206, %v3200
    %v3327 = vpack.c.b16 %v3213, %v3207
    %v3328 = vpack.c.b16 %v3214, %v3208
    %v3329 = vpack.c.b16 %v3215, %v3209
    %v3330 = vpack.c.b16 %v3216, %v3210
    %v3331 = vpack.c.b16 %v3217, %v3211
    %v3332 = vpack.c.b16 %v3218, %v3212
    %v3333 = vpack.c.b16 %v3225, %v3219
    %v3334 = vpack.c.b16 %v3226, %v3220
    %v3335 = vpack.c.b16 %v3227, %v3221
    %v3336 = vpack.c.b16 %v3228, %v3222
    %v3337 = vpack.c.b16 %v3229, %v3223
    %v3338 = vpack.c.b16 %v3230, %v3224
    %v3339 = vpack.c.b16 %v3237, %v3231
    %v3340 = vpack.c.b16 %v3238, %v3232
    %v3341 = vpack.c.b16 %v3239, %v3233
    %v3342 = vpack.c.b16 %v3240, %v3234
    %v3343 = vpack.c.b16 %v3241, %v3235
    %v3344 = vpack.c.b16 %v3242, %v3236
    %v3345 = vpack.c.b16 %v3249, %v3243
    %v3346 = vpack.c.b16 %v3250, %v3244
    %v3347 = vpack.c.b16 %v3251, %v3245
    %v3348 = vpack.c.b16 %v3252, %v3246
    %v3349 = vpack.c.b16 %v3253, %v3247
    %v3350 = vpack.c.b16 %v3254, %v3248
    %v3351 = vpack.c.b16 %v3261, %v3255
    %v3352 = vpack.c.b16 %v3262, %v3256
    %v3353 = vpack.c.b16 %v3263, %v3257
    %v3354 = vpack.c.b16 %v3264, %v3258
    %v3355 = vpack.c.b16 %v3265, %v3259
    %v3356 = vpack.c.b16 %v3266, %v3260
    %v3357 = vpack.c.b16 %v3273, %v3267
    %v3358 = vpack.c.b16 %v3274, %v3268
    %v3359 = vpack.c.b16 %v3275, %v3269
    %v3360 = vpack.c.b16 %v3276, %v3270
    %v3361 = vpack.c.b16 %v3277, %v3271
    %v3362 = vpack.c.b16 %v3278, %v3272
    %v3448 = vsel %vm1069, %v2910, 0
    %3450 = vmatprep.subr.bf16.mxu0 %v3280
    %3451 = vmatpush1.bf16.msra.mxu0 %v3279
    %3452 = vmatprep.subr.bf16.mxu0 %v3286
    %3453 = vmatpush1.bf16.msra.mxu0 %v3285
    %3454 = vmatprep.subr.bf16.mxu0 %v3292
    %3455 = vmatpush1.bf16.msra.mxu0 %v3291
    %3456 = vmatprep.subr.bf16.mxu0 %v3298
    %3457 = vmatpush1.bf16.msra.mxu0 %v3297
    %3458 = vmatprep.subr.bf16.mxu0 %v3304
    %3459 = vmatpush1.bf16.msra.mxu0 %v3303
    %3460 = vmatprep.subr.bf16.mxu0 %v3310
    %3461 = vmatpush1.bf16.msra.mxu0 %v3309
    %3462 = vmatprep.subr.bf16.mxu0 %v3316
    %3463 = vmatpush1.bf16.msra.mxu0 %v3315
    %3464 = vmatprep.subr.bf16.mxu0 %v3322
    %3465 = vmatpush1.bf16.msra.mxu0 %v3321
    %3466 = vmatprep.subr.bf16.mxu0 %v3328
    %3467 = vmatpush1.bf16.msra.mxu0 %v3327
    %3468 = vmatprep.subr.bf16.mxu0 %v3334
    %3469 = vmatpush1.bf16.msra.mxu0 %v3333
    %3470 = vmatprep.subr.bf16.mxu0 %v3340
    %3471 = vmatpush1.bf16.msra.mxu0 %v3339
    %3472 = vmatprep.subr.bf16.mxu0 %v3346
    %3473 = vmatpush1.bf16.msra.mxu0 %v3345
    %3474 = vmatprep.subr.bf16.mxu0 %v3352
    %3475 = vmatpush1.bf16.msra.mxu0 %v3351
    %3476 = vmatprep.subr.bf16.mxu0 %v3358
    %3477 = vmatpush1.bf16.msra.mxu0 %v3357
    %3478 = vmatprep.subr.bf16.mxu0 0
    %3479 = vmatpush1.bf16.msra.mxu0 0
    %3480 = vmatprep.subr.bf16.mxu0 0
    %3481 = vmatpush1.bf16.msra.mxu0 0
    %3482 = vmatprep.mubr.bf16.mxu0 %v3448
    %3483 = vmatmul.mubr.bf16.gmra.mrb[0].mxu0 %v2909
    %v3484 = vpop.f32.mrb[0].mxu0
    %v3485 = vadd.f32 %v3000, %v3484
    %v3486 = vpop.f32.mrb[0].mxu0
    %v3487 = vadd.f32 %v3004, %v3486
    %v3488 = vpop.f32.mrb[0].mxu0
    %v3489 = vpop.f32.mrb[0].mxu0
    %3490 = vdwg.mxu0
    %3491 = vmatprep.subr.bf16.mxu0 %v3282
    %3492 = vmatpush1.bf16.msra.mxu0 %v3281
    %3493 = vmatprep.subr.bf16.mxu0 %v3288
    %3494 = vmatpush1.bf16.msra.mxu0 %v3287
    %3495 = vmatprep.subr.bf16.mxu0 %v3294
    %3496 = vmatpush1.bf16.msra.mxu0 %v3293
    %3497 = vmatprep.subr.bf16.mxu0 %v3300
    %3498 = vmatpush1.bf16.msra.mxu0 %v3299
    %3499 = vmatprep.subr.bf16.mxu0 %v3306
    %3500 = vmatpush1.bf16.msra.mxu0 %v3305
    %3501 = vmatprep.subr.bf16.mxu0 %v3312
    %3502 = vmatpush1.bf16.msra.mxu0 %v3311
    %3503 = vmatprep.subr.bf16.mxu0 %v3318
    %3504 = vmatpush1.bf16.msra.mxu0 %v3317
    %3505 = vmatprep.subr.bf16.mxu0 %v3324
    %3506 = vmatpush1.bf16.msra.mxu0 %v3323
    %3507 = vmatprep.subr.bf16.mxu0 %v3330
    %3508 = vmatpush1.bf16.msra.mxu0 %v3329
    %3509 = vmatprep.subr.bf16.mxu0 %v3336
    %3510 = vmatpush1.bf16.msra.mxu0 %v3335
    %3511 = vmatprep.subr.bf16.mxu0 %v3342
    %3512 = vmatpush1.bf16.msra.mxu0 %v3341
    %3513 = vmatprep.subr.bf16.mxu0 %v3348
    %3514 = vmatpush1.bf16.msra.mxu0 %v3347
    %3515 = vmatprep.subr.bf16.mxu0 %v3354
    %3516 = vmatpush1.bf16.msra.mxu0 %v3353
    %3517 = vmatprep.subr.bf16.mxu0 %v3360
    %3518 = vmatpush1.bf16.msra.mxu0 %v3359
    %3519 = vmatprep.subr.bf16.mxu0 0
    %3520 = vmatpush1.bf16.msra.mxu0 0
    %3521 = vmatprep.subr.bf16.mxu0 0
    %3522 = vmatpush1.bf16.msra.mxu0 0
    %3523 = vmatprep.mubr.bf16.mxu0 %v3448
    %3524 = vmatmul.mubr.bf16.gmra.mrb[0].mxu0 %v2909
    %v3525 = vpop.f32.mrb[0].mxu0
    %v3526 = vadd.f32 %v3008, %v3525
    %v3527 = vpop.f32.mrb[0].mxu0
    %v3528 = vadd.f32 %v3012, %v3527
    %v3529 = vpop.f32.mrb[0].mxu0
    %v3530 = vpop.f32.mrb[0].mxu0
    %3531 = vdwg.mxu0
    %3532 = vmatprep.subr.bf16.mxu0 %v3284
    %3533 = vmatpush1.bf16.msra.mxu0 %v3283
    %3534 = vmatprep.subr.bf16.mxu0 %v3290
    %3535 = vmatpush1.bf16.msra.mxu0 %v3289
    %3536 = vmatprep.subr.bf16.mxu0 %v3296
    %3537 = vmatpush1.bf16.msra.mxu0 %v3295
    %3538 = vmatprep.subr.bf16.mxu0 %v3302
    %3539 = vmatpush1.bf16.msra.mxu0 %v3301
    %3540 = vmatprep.subr.bf16.mxu0 %v3308
    %3541 = vmatpush1.bf16.msra.mxu0 %v3307
    %3542 = vmatprep.subr.bf16.mxu0 %v3314
    %3543 = vmatpush1.bf16.msra.mxu0 %v3313
    %3544 = vmatprep.subr.bf16.mxu0 %v3320
    %3545 = vmatpush1.bf16.msra.mxu0 %v3319
    %3546 = vmatprep.subr.bf16.mxu0 %v3326
    %3547 = vmatpush1.bf16.msra.mxu0 %v3325
    %3548 = vmatprep.subr.bf16.mxu0 %v3332
    %3549 = vmatpush1.bf16.msra.mxu0 %v3331
    %3550 = vmatprep.subr.bf16.mxu0 %v3338
    %3551 = vmatpush1.bf16.msra.mxu0 %v3337
    %3552 = vmatprep.subr.bf16.mxu0 %v3344
    %3553 = vmatpush1.bf16.msra.mxu0 %v3343
    %3554 = vmatprep.subr.bf16.mxu0 %v3350
    %3555 = vmatpush1.bf16.msra.mxu0 %v3349
    %3556 = vmatprep.subr.bf16.mxu0 %v3356
    %3557 = vmatpush1.bf16.msra.mxu0 %v3355
    %3558 = vmatprep.subr.bf16.mxu0 %v3362
    %3559 = vmatpush1.bf16.msra.mxu0 %v3361
    %3560 = vmatprep.subr.bf16.mxu0 0
    %3561 = vmatpush1.bf16.msra.mxu0 0
    %3562 = vmatprep.subr.bf16.mxu0 0
    %3563 = vmatpush1.bf16.msra.mxu0 0
    %3564 = vmatprep.mubr.bf16.mxu0 %v3448
    %3565 = vmatmul.mubr.bf16.gmra.mrb[0].mxu0 %v2909
    %v3566 = vpop.f32.mrb[0].mxu0
    %v3567 = vadd.f32 %v3016, %v3566
    %v3568 = vpop.f32.mrb[0].mxu0
    %v3569 = vadd.f32 %v3020, %v3568
    %v3570 = vpop.f32.mrb[0].mxu0
    %v3571 = vpop.f32.mrb[0].mxu0
    %3572 = vdwg.mxu0
    %v3573 = vld [vmem:[#allocation27] sm:$0xff]
    %v3574 = vld [vmem:[#allocation27 + $0x8] sm:$0xff]
    %v3575 = vld [vmem:[#allocation27 + $0x10] sm:$0xff]
    %v3576 = vld [vmem:[#allocation27 + $0x18] sm:$0xff]
    %v3577 = vld [vmem:[#allocation27 + $0x20] sm:$0xff]
    %v3578 = vld [vmem:[#allocation27 + $0x28] sm:$0xff]
    %v3579 = vld [vmem:[#allocation27 + $0x30] sm:$0xff]
    %v3580 = vld [vmem:[#allocation27 + $0x38] sm:$0xff]
    %v3581 = vld [vmem:[#allocation27 + $0x40] sm:$0xff]
    %v3582 = vld [vmem:[#allocation27 + $0x48] sm:$0xff]
    %v3583 = vld [vmem:[#allocation27 + $0x50] sm:$0xff]
    %v3584 = vld [vmem:[#allocation27 + $0x58] sm:$0xff]
    %v3585 = vld [vmem:[#allocation27 + $0x60] sm:$0xff]
    %v3586 = vld [vmem:[#allocation27 + $0x68] sm:$0xff]
    %v3587 = vld [vmem:[#allocation27 + $0x70] sm:$0xff]
    %v3588 = vld [vmem:[#allocation27 + $0x78] sm:$0xff]
    %v3589 = vld [vmem:[#allocation27 + $0x80] sm:$0xff]
    %v3590 = vld [vmem:[#allocation27 + $0x88] sm:$0xff]
    %v3591 = vld [vmem:[#allocation27 + $0x90] sm:$0xff]
    %v3592 = vld [vmem:[#allocation27 + $0x98] sm:$0xff]
    %v3593 = vld [vmem:[#allocation27 + $0xa0] sm:$0xff]
    %v3594 = vld [vmem:[#allocation27 + $0xa8] sm:$0xff]
    %v3595 = vld [vmem:[#allocation27 + $0xb0] sm:$0xff]
    %v3596 = vld [vmem:[#allocation27 + $0xb8] sm:$0xff]
    %v3597 = vld [vmem:[#allocation27 + $0xc0] sm:$0xff]
    %v3598 = vld [vmem:[#allocation27 + $0xc8] sm:$0xff]
    %v3599 = vld [vmem:[#allocation27 + $0xd0] sm:$0xff]
    %v3600 = vld [vmem:[#allocation27 + $0xd8] sm:$0xff]
    %v3601 = vld [vmem:[#allocation27 + $0xe0] sm:$0xff]
    %v3602 = vld [vmem:[#allocation27 + $0xe8] sm:$0xff]
    %v3603 = vld [vmem:[#allocation27 + $0xf0] sm:$0xff]
    %v3604 = vld [vmem:[#allocation27 + $0xf8] sm:$0xff]
    %v3605 = vld [vmem:[#allocation27 + $0x100] sm:$0xff]
    %v3606 = vld [vmem:[#allocation27 + $0x108] sm:$0xff]
    %v3607 = vld [vmem:[#allocation27 + $0x110] sm:$0xff]
    %v3608 = vld [vmem:[#allocation27 + $0x118] sm:$0xff]
    %v3609 = vld [vmem:[#allocation27 + $0x120] sm:$0xff]
    %v3610 = vld [vmem:[#allocation27 + $0x128] sm:$0xff]
    %v3611 = vld [vmem:[#allocation27 + $0x130] sm:$0xff]
    %v3612 = vld [vmem:[#allocation27 + $0x138] sm:$0xff]
    %v3613 = vld [vmem:[#allocation27 + $0x140] sm:$0xff]
    %v3614 = vld [vmem:[#allocation27 + $0x148] sm:$0xff]
    %v3615 = vld [vmem:[#allocation27 + $0x150] sm:$0xff]
    %v3616 = vld [vmem:[#allocation27 + $0x158] sm:$0xff]
    %v3617 = vld [vmem:[#allocation27 + $0x160] sm:$0xff]
    %v3618 = vld [vmem:[#allocation27 + $0x168] sm:$0xff]
    %v3619 = vld [vmem:[#allocation27 + $0x170] sm:$0xff]
    %v3620 = vld [vmem:[#allocation27 + $0x178] sm:$0xff]
    %v3621 = vld [vmem:[#allocation27 + $0x180] sm:$0xff]
    %v3622 = vld [vmem:[#allocation27 + $0x188] sm:$0xff]
    %v3623 = vld [vmem:[#allocation27 + $0x190] sm:$0xff]
    %v3624 = vld [vmem:[#allocation27 + $0x198] sm:$0xff]
    %v3625 = vld [vmem:[#allocation27 + $0x1a0] sm:$0xff]
    %v3626 = vld [vmem:[#allocation27 + $0x1a8] sm:$0xff]
    %v3627 = vld [vmem:[#allocation27 + $0x1b0] sm:$0xff]
    %v3628 = vld [vmem:[#allocation27 + $0x1b8] sm:$0xff]
    %v3629 = vld [vmem:[#allocation27 + $0x1c0] sm:$0xff]
    %v3630 = vld [vmem:[#allocation27 + $0x1c8] sm:$0xff]
    %v3631 = vld [vmem:[#allocation27 + $0x1d0] sm:$0xff]
    %v3632 = vld [vmem:[#allocation27 + $0x1d8] sm:$0xff]
    %v3633 = vld [vmem:[#allocation27 + $0x1e0] sm:$0xff]
    %v3634 = vld [vmem:[#allocation27 + $0x1e8] sm:$0xff]
    %v3635 = vld [vmem:[#allocation27 + $0x1f0] sm:$0xff]
    %v3636 = vld [vmem:[#allocation27 + $0x1f8] sm:$0xff]
    %v3637 = vld [vmem:[#allocation27 + $0x200] sm:$0xff]
    %v3638 = vld [vmem:[#allocation27 + $0x208] sm:$0xff]
    %v3639 = vld [vmem:[#allocation27 + $0x210] sm:$0xff]
    %v3640 = vld [vmem:[#allocation27 + $0x218] sm:$0xff]
    %v3641 = vld [vmem:[#allocation27 + $0x220] sm:$0xff]
    %v3642 = vld [vmem:[#allocation27 + $0x228] sm:$0xff]
    %v3643 = vld [vmem:[#allocation27 + $0x230] sm:$0xff]
    %v3644 = vld [vmem:[#allocation27 + $0x238] sm:$0xff]
    %v3645 = vld [vmem:[#allocation27 + $0x240] sm:$0xff]
    %v3646 = vld [vmem:[#allocation27 + $0x248] sm:$0xff]
    %v3647 = vld [vmem:[#allocation27 + $0x250] sm:$0xff]
    %v3648 = vld [vmem:[#allocation27 + $0x258] sm:$0xff]
    %v3649 = vld [vmem:[#allocation27 + $0x260] sm:$0xff]
    %v3650 = vld [vmem:[#allocation27 + $0x268] sm:$0xff]
    %v3651 = vld [vmem:[#allocation27 + $0x270] sm:$0xff]
    %v3652 = vld [vmem:[#allocation27 + $0x278] sm:$0xff]
    %v3653 = vld [vmem:[#allocation27 + $0x280] sm:$0xff]
    %v3654 = vld [vmem:[#allocation27 + $0x288] sm:$0xff]
    %v3655 = vld [vmem:[#allocation27 + $0x290] sm:$0xff]
    %v3656 = vld [vmem:[#allocation27 + $0x298] sm:$0xff]
    %v3657 = vld [vmem:[#allocation28] sm:$0x3f]
    %v3659 = vlaneseq
    %v3660 = vshrl.u32 %v3659, 7
    %v3661 = vsub.s32 0, %v3660
    %v3662 = vrot.slane %v3657, %v3661
    %v3663 = vlaneseq
    %v3664 = vshrl.u32 %v3663, 7
    %v3665 = vsub.s32 1, %v3664
    %v3666 = vrot.slane %v3657, %v3665
    %v3667 = vlaneseq
    %v3668 = vshrl.u32 %v3667, 7
    %v3669 = vsub.s32 2, %v3668
    %v3670 = vrot.slane %v3657, %v3669
    %v3671 = vlaneseq
    %v3672 = vshrl.u32 %v3671, 7
    %v3673 = vsub.s32 3, %v3672
    %v3674 = vrot.slane %v3657, %v3673
    %v3675 = vlaneseq
    %v3676 = vshrl.u32 %v3675, 7
    %v3677 = vsub.s32 4, %v3676
    %v3678 = vrot.slane %v3657, %v3677
    %v3679 = vlaneseq
    %v3680 = vshrl.u32 %v3679, 7
    %v3681 = vsub.s32 5, %v3680
    %v3682 = vrot.slane %v3657, %v3681
    %v3773 = vunpack.c.l.b16 %v3573
    %v3774 = vunpack.c.h.b16 %v3573
    %v3775 = vunpack.c.l.b16 %v3574
    %v3776 = vunpack.c.h.b16 %v3574
    %v3777 = vunpack.c.l.b16 %v3575
    %v3778 = vunpack.c.h.b16 %v3575
    %v3779 = vunpack.c.l.b16 %v3576
    %v3780 = vunpack.c.h.b16 %v3576
    %v3781 = vunpack.c.l.b16 %v3577
    %v3782 = vunpack.c.h.b16 %v3577
    %v3783 = vunpack.c.l.b16 %v3578
    %v3784 = vunpack.c.h.b16 %v3578
    %v3785 = vunpack.c.l.b16 %v3579
    %v3786 = vunpack.c.h.b16 %v3579
    %v3787 = vunpack.c.l.b16 %v3580
    %v3788 = vunpack.c.h.b16 %v3580
    %v3789 = vunpack.c.l.b16 %v3581
    %v3790 = vunpack.c.h.b16 %v3581
    %v3791 = vunpack.c.l.b16 %v3582
    %v3792 = vunpack.c.h.b16 %v3582
    %v3793 = vunpack.c.l.b16 %v3583
    %v3794 = vunpack.c.h.b16 %v3583
    %v3795 = vunpack.c.l.b16 %v3584
    %v3796 = vunpack.c.h.b16 %v3584
    %v3797 = vunpack.c.l.b16 %v3585
    %v3798 = vunpack.c.h.b16 %v3585
    %v3799 = vunpack.c.l.b16 %v3586
    %v3800 = vunpack.c.h.b16 %v3586
    %v3801 = vunpack.c.l.b16 %v3587
    %v3802 = vunpack.c.h.b16 %v3587
    %v3803 = vunpack.c.l.b16 %v3588
    %v3804 = vunpack.c.h.b16 %v3588
    %v3805 = vunpack.c.l.b16 %v3589
    %v3806 = vunpack.c.h.b16 %v3589
    %v3807 = vunpack.c.l.b16 %v3590
    %v3808 = vunpack.c.h.b16 %v3590
    %v3809 = vunpack.c.l.b16 %v3591
    %v3810 = vunpack.c.h.b16 %v3591
    %v3811 = vunpack.c.l.b16 %v3592
    %v3812 = vunpack.c.h.b16 %v3592
    %v3813 = vunpack.c.l.b16 %v3593
    %v3814 = vunpack.c.h.b16 %v3593
    %v3815 = vunpack.c.l.b16 %v3594
    %v3816 = vunpack.c.h.b16 %v3594
    %v3817 = vunpack.c.l.b16 %v3595
    %v3818 = vunpack.c.h.b16 %v3595
    %v3819 = vunpack.c.l.b16 %v3596
    %v3820 = vunpack.c.h.b16 %v3596
    %v3821 = vunpack.c.l.b16 %v3597
    %v3822 = vunpack.c.h.b16 %v3597
    %v3823 = vunpack.c.l.b16 %v3598
    %v3824 = vunpack.c.h.b16 %v3598
    %v3825 = vunpack.c.l.b16 %v3599
    %v3826 = vunpack.c.h.b16 %v3599
    %v3827 = vunpack.c.l.b16 %v3600
    %v3828 = vunpack.c.h.b16 %v3600
    %v3829 = vunpack.c.l.b16 %v3601
    %v3830 = vunpack.c.h.b16 %v3601
    %v3831 = vunpack.c.l.b16 %v3602
    %v3832 = vunpack.c.h.b16 %v3602
    %v3833 = vunpack.c.l.b16 %v3603
    %v3834 = vunpack.c.h.b16 %v3603
    %v3835 = vunpack.c.l.b16 %v3604
    %v3836 = vunpack.c.h.b16 %v3604
    %v3837 = vunpack.c.l.b16 %v3605
    %v3838 = vunpack.c.h.b16 %v3605
    %v3839 = vunpack.c.l.b16 %v3606
    %v3840 = vunpack.c.h.b16 %v3606
    %v3841 = vunpack.c.l.b16 %v3607
    %v3842 = vunpack.c.h.b16 %v3607
    %v3843 = vunpack.c.l.b16 %v3608
    %v3844 = vunpack.c.h.b16 %v3608
    %v3845 = vunpack.c.l.b16 %v3609
    %v3846 = vunpack.c.h.b16 %v3609
    %v3847 = vunpack.c.l.b16 %v3610
    %v3848 = vunpack.c.h.b16 %v3610
    %v3849 = vunpack.c.l.b16 %v3611
    %v3850 = vunpack.c.h.b16 %v3611
    %v3851 = vunpack.c.l.b16 %v3612
    %v3852 = vunpack.c.h.b16 %v3612
    %v3853 = vunpack.c.l.b16 %v3613
    %v3854 = vunpack.c.h.b16 %v3613
    %v3855 = vunpack.c.l.b16 %v3614
    %v3856 = vunpack.c.h.b16 %v3614
    %v3857 = vunpack.c.l.b16 %v3615
    %v3858 = vunpack.c.h.b16 %v3615
    %v3859 = vunpack.c.l.b16 %v3616
    %v3860 = vunpack.c.h.b16 %v3616
    %v3861 = vunpack.c.l.b16 %v3617
    %v3862 = vunpack.c.h.b16 %v3617
    %v3863 = vunpack.c.l.b16 %v3618
    %v3864 = vunpack.c.h.b16 %v3618
    %v3865 = vunpack.c.l.b16 %v3619
    %v3866 = vunpack.c.h.b16 %v3619
    %v3867 = vunpack.c.l.b16 %v3620
    %v3868 = vunpack.c.h.b16 %v3620
    %v3869 = vunpack.c.l.b16 %v3621
    %v3870 = vunpack.c.h.b16 %v3621
    %v3871 = vunpack.c.l.b16 %v3622
    %v3872 = vunpack.c.h.b16 %v3622
    %v3873 = vunpack.c.l.b16 %v3623
    %v3874 = vunpack.c.h.b16 %v3623
    %v3875 = vunpack.c.l.b16 %v3624
    %v3876 = vunpack.c.h.b16 %v3624
    %v3877 = vunpack.c.l.b16 %v3625
    %v3878 = vunpack.c.h.b16 %v3625
    %v3879 = vunpack.c.l.b16 %v3626
    %v3880 = vunpack.c.h.b16 %v3626
    %v3881 = vunpack.c.l.b16 %v3627
    %v3882 = vunpack.c.h.b16 %v3627
    %v3883 = vunpack.c.l.b16 %v3628
    %v3884 = vunpack.c.h.b16 %v3628
    %v3885 = vunpack.c.l.b16 %v3629
    %v3886 = vunpack.c.h.b16 %v3629
    %v3887 = vunpack.c.l.b16 %v3630
    %v3888 = vunpack.c.h.b16 %v3630
    %v3889 = vunpack.c.l.b16 %v3631
    %v3890 = vunpack.c.h.b16 %v3631
    %v3891 = vunpack.c.l.b16 %v3632
    %v3892 = vunpack.c.h.b16 %v3632
    %v3893 = vunpack.c.l.b16 %v3633
    %v3894 = vunpack.c.h.b16 %v3633
    %v3895 = vunpack.c.l.b16 %v3634
    %v3896 = vunpack.c.h.b16 %v3634
    %v3897 = vunpack.c.l.b16 %v3635
    %v3898 = vunpack.c.h.b16 %v3635
    %v3899 = vunpack.c.l.b16 %v3636
    %v3900 = vunpack.c.h.b16 %v3636
    %v3901 = vunpack.c.l.b16 %v3637
    %v3902 = vunpack.c.h.b16 %v3637
    %v3903 = vunpack.c.l.b16 %v3638
    %v3904 = vunpack.c.h.b16 %v3638
    %v3905 = vunpack.c.l.b16 %v3639
    %v3906 = vunpack.c.h.b16 %v3639
    %v3907 = vunpack.c.l.b16 %v3640
    %v3908 = vunpack.c.h.b16 %v3640
    %v3909 = vunpack.c.l.b16 %v3641
    %v3910 = vunpack.c.h.b16 %v3641
    %v3911 = vunpack.c.l.b16 %v3642
    %v3912 = vunpack.c.h.b16 %v3642
    %v3913 = vunpack.c.l.b16 %v3643
    %v3914 = vunpack.c.h.b16 %v3643
    %v3915 = vunpack.c.l.b16 %v3644
    %v3916 = vunpack.c.h.b16 %v3644
    %v3917 = vunpack.c.l.b16 %v3645
    %v3918 = vunpack.c.h.b16 %v3645
    %v3919 = vunpack.c.l.b16 %v3646
    %v3920 = vunpack.c.h.b16 %v3646
    %v3921 = vunpack.c.l.b16 %v3647
    %v3922 = vunpack.c.h.b16 %v3647
    %v3923 = vunpack.c.l.b16 %v3648
    %v3924 = vunpack.c.h.b16 %v3648
    %v3925 = vunpack.c.l.b16 %v3649
    %v3926 = vunpack.c.h.b16 %v3649
    %v3927 = vunpack.c.l.b16 %v3650
    %v3928 = vunpack.c.h.b16 %v3650
    %v3929 = vunpack.c.l.b16 %v3651
    %v3930 = vunpack.c.h.b16 %v3651
    %v3931 = vunpack.c.l.b16 %v3652
    %v3932 = vunpack.c.h.b16 %v3652
    %v3933 = vunpack.c.l.b16 %v3653
    %v3934 = vunpack.c.h.b16 %v3653
    %v3935 = vunpack.c.l.b16 %v3654
    %v3936 = vunpack.c.h.b16 %v3654
    %v3937 = vunpack.c.l.b16 %v3655
    %v3938 = vunpack.c.h.b16 %v3655
    %v3939 = vunpack.c.l.b16 %v3656
    %v3940 = vunpack.c.h.b16 %v3656
    %v3941 = vpack.c.b16 %v3779, %v3773
    %v3942 = vpack.c.b16 %v3780, %v3774
    %v3943 = vpack.c.b16 %v3781, %v3775
    %v3944 = vpack.c.b16 %v3782, %v3776
    %v3945 = vpack.c.b16 %v3783, %v3777
    %v3946 = vpack.c.b16 %v3784, %v3778
    %v3947 = vpack.c.b16 %v3791, %v3785
    %v3948 = vpack.c.b16 %v3792, %v3786
    %v3949 = vpack.c.b16 %v3793, %v3787
    %v3950 = vpack.c.b16 %v3794, %v3788
    %v3951 = vpack.c.b16 %v3795, %v3789
    %v3952 = vpack.c.b16 %v3796, %v3790
    %v3953 = vpack.c.b16 %v3803, %v3797
    %v3954 = vpack.c.b16 %v3804, %v3798
    %v3955 = vpack.c.b16 %v3805, %v3799
    %v3956 = vpack.c.b16 %v3806, %v3800
    %v3957 = vpack.c.b16 %v3807, %v3801
    %v3958 = vpack.c.b16 %v3808, %v3802
    %v3959 = vpack.c.b16 %v3815, %v3809
    %v3960 = vpack.c.b16 %v3816, %v3810
    %v3961 = vpack.c.b16 %v3817, %v3811
    %v3962 = vpack.c.b16 %v3818, %v3812
    %v3963 = vpack.c.b16 %v3819, %v3813
    %v3964 = vpack.c.b16 %v3820, %v3814
    %v3965 = vpack.c.b16 %v3827, %v3821
    %v3966 = vpack.c.b16 %v3828, %v3822
    %v3967 = vpack.c.b16 %v3829, %v3823
    %v3968 = vpack.c.b16 %v3830, %v3824
    %v3969 = vpack.c.b16 %v3831, %v3825
    %v3970 = vpack.c.b16 %v3832, %v3826
    %v3971 = vpack.c.b16 %v3839, %v3833
    %v3972 = vpack.c.b16 %v3840, %v3834
    %v3973 = vpack.c.b16 %v3841, %v3835
    %v3974 = vpack.c.b16 %v3842, %v3836
    %v3975 = vpack.c.b16 %v3843, %v3837
    %v3976 = vpack.c.b16 %v3844, %v3838
    %v3977 = vpack.c.b16 %v3851, %v3845
    %v3978 = vpack.c.b16 %v3852, %v3846
    %v3979 = vpack.c.b16 %v3853, %v3847
    %v3980 = vpack.c.b16 %v3854, %v3848
    %v3981 = vpack.c.b16 %v3855, %v3849
    %v3982 = vpack.c.b16 %v3856, %v3850
    %v3983 = vpack.c.b16 %v3863, %v3857
    %v3984 = vpack.c.b16 %v3864, %v3858
    %v3985 = vpack.c.b16 %v3865, %v3859
    %v3986 = vpack.c.b16 %v3866, %v3860
    %v3987 = vpack.c.b16 %v3867, %v3861
    %v3988 = vpack.c.b16 %v3868, %v3862
    %v3989 = vpack.c.b16 %v3875, %v3869
    %v3990 = vpack.c.b16 %v3876, %v3870
    %v3991 = vpack.c.b16 %v3877, %v3871
    %v3992 = vpack.c.b16 %v3878, %v3872
    %v3993 = vpack.c.b16 %v3879, %v3873
    %v3994 = vpack.c.b16 %v3880, %v3874
    %v3995 = vpack.c.b16 %v3887, %v3881
    %v3996 = vpack.c.b16 %v3888, %v3882
    %v3997 = vpack.c.b16 %v3889, %v3883
    %v3998 = vpack.c.b16 %v3890, %v3884
    %v3999 = vpack.c.b16 %v3891, %v3885
    %v4000 = vpack.c.b16 %v3892, %v3886
    %v4001 = vpack.c.b16 %v3899, %v3893
    %v4002 = vpack.c.b16 %v3900, %v3894
    %v4003 = vpack.c.b16 %v3901, %v3895
    %v4004 = vpack.c.b16 %v3902, %v3896
    %v4005 = vpack.c.b16 %v3903, %v3897
    %v4006 = vpack.c.b16 %v3904, %v3898
    %v4007 = vpack.c.b16 %v3911, %v3905
    %v4008 = vpack.c.b16 %v3912, %v3906
    %v4009 = vpack.c.b16 %v3913, %v3907
    %v4010 = vpack.c.b16 %v3914, %v3908
    %v4011 = vpack.c.b16 %v3915, %v3909
    %v4012 = vpack.c.b16 %v3916, %v3910
    %v4013 = vpack.c.b16 %v3923, %v3917
    %v4014 = vpack.c.b16 %v3924, %v3918
    %v4015 = vpack.c.b16 %v3925, %v3919
    %v4016 = vpack.c.b16 %v3926, %v3920
    %v4017 = vpack.c.b16 %v3927, %v3921
    %v4018 = vpack.c.b16 %v3928, %v3922
    %v4019 = vpack.c.b16 %v3935, %v3929
    %v4020 = vpack.c.b16 %v3936, %v3930
    %v4021 = vpack.c.b16 %v3937, %v3931
    %v4022 = vpack.c.b16 %v3938, %v3932
    %v4023 = vpack.c.b16 %v3939, %v3933
    %v4024 = vpack.c.b16 %v3940, %v3934
    %4109 = vmatprep.subr.bf16.mxu0 %v3942
    %4110 = vmatpush1.bf16.msra.mxu0 %v3941
    %4111 = vmatprep.subr.bf16.mxu0 %v3948
    %4112 = vmatpush1.bf16.msra.mxu0 %v3947
    %4113 = vmatprep.subr.bf16.mxu0 %v3954
    %4114 = vmatpush1.bf16.msra.mxu0 %v3953
    %4115 = vmatprep.subr.bf16.mxu0 %v3960
    %4116 = vmatpush1.bf16.msra.mxu0 %v3959
    %4117 = vmatprep.subr.bf16.mxu0 %v3966
    %4118 = vmatpush1.bf16.msra.mxu0 %v3965
    %4119 = vmatprep.subr.bf16.mxu0 %v3972
    %4120 = vmatpush1.bf16.msra.mxu0 %v3971
    %4121 = vmatprep.subr.bf16.mxu0 %v3978
    %4122 = vmatpush1.bf16.msra.mxu0 %v3977
    %4123 = vmatprep.subr.bf16.mxu0 %v3984
    %4124 = vmatpush1.bf16.msra.mxu0 %v3983
    %4125 = vmatprep.subr.bf16.mxu0 %v3990
    %4126 = vmatpush1.bf16.msra.mxu0 %v3989
    %4127 = vmatprep.subr.bf16.mxu0 %v3996
    %4128 = vmatpush1.bf16.msra.mxu0 %v3995
    %4129 = vmatprep.subr.bf16.mxu0 %v4002
    %4130 = vmatpush1.bf16.msra.mxu0 %v4001
    %4131 = vmatprep.subr.bf16.mxu0 %v4008
    %4132 = vmatpush1.bf16.msra.mxu0 %v4007
    %4133 = vmatprep.subr.bf16.mxu0 %v4014
    %4134 = vmatpush1.bf16.msra.mxu0 %v4013
    %4135 = vmatprep.subr.bf16.mxu0 %v4020
    %4136 = vmatpush1.bf16.msra.mxu0 %v4019
    %4137 = vmatprep.subr.bf16.mxu0 0
    %4138 = vmatpush1.bf16.msra.mxu0 0
    %4139 = vmatprep.subr.bf16.mxu0 0
    %4140 = vmatpush1.bf16.msra.mxu0 0
    %4141 = vmatprep.mubr.bf16.mxu0 %v3448
    %4142 = vmatmul.mubr.bf16.gmra.mrb[0].mxu0 %v2909
    %v4143 = vpop.f32.mrb[0].mxu0
    %v4144 = vadd.f32 %v3662, %v4143
    %v4145 = vpop.f32.mrb[0].mxu0
    %v4146 = vadd.f32 %v3666, %v4145
    %v4147 = vpop.f32.mrb[0].mxu0
    %v4148 = vpop.f32.mrb[0].mxu0
    %4149 = vdwg.mxu0
    %4150 = vmatprep.subr.bf16.mxu0 %v3944
    %4151 = vmatpush1.bf16.msra.mxu0 %v3943
    %4152 = vmatprep.subr.bf16.mxu0 %v3950
    %4153 = vmatpush1.bf16.msra.mxu0 %v3949
    %4154 = vmatprep.subr.bf16.mxu0 %v3956
    %4155 = vmatpush1.bf16.msra.mxu0 %v3955
    %4156 = vmatprep.subr.bf16.mxu0 %v3962
    %4157 = vmatpush1.bf16.msra.mxu0 %v3961
    %4158 = vmatprep.subr.bf16.mxu0 %v3968
    %4159 = vmatpush1.bf16.msra.mxu0 %v3967
    %4160 = vmatprep.subr.bf16.mxu0 %v3974
    %4161 = vmatpush1.bf16.msra.mxu0 %v3973
    %4162 = vmatprep.subr.bf16.mxu0 %v3980
    %4163 = vmatpush1.bf16.msra.mxu0 %v3979
    %4164 = vmatprep.subr.bf16.mxu0 %v3986
    %4165 = vmatpush1.bf16.msra.mxu0 %v3985
    %4166 = vmatprep.subr.bf16.mxu0 %v3992
    %4167 = vmatpush1.bf16.msra.mxu0 %v3991
    %4168 = vmatprep.subr.bf16.mxu0 %v3998
    %4169 = vmatpush1.bf16.msra.mxu0 %v3997
    %4170 = vmatprep.subr.bf16.mxu0 %v4004
    %4171 = vmatpush1.bf16.msra.mxu0 %v4003
    %4172 = vmatprep.subr.bf16.mxu0 %v4010
    %4173 = vmatpush1.bf16.msra.mxu0 %v4009
    %4174 = vmatprep.subr.bf16.mxu0 %v4016
    %4175 = vmatpush1.bf16.msra.mxu0 %v4015
    %4176 = vmatprep.subr.bf16.mxu0 %v4022
    %4177 = vmatpush1.bf16.msra.mxu0 %v4021
    %4178 = vmatprep.subr.bf16.mxu0 0
    %4179 = vmatpush1.bf16.msra.mxu0 0
    %4180 = vmatprep.subr.bf16.mxu0 0
    %4181 = vmatpush1.bf16.msra.mxu0 0
    %4182 = vmatprep.mubr.bf16.mxu0 %v3448
    %4183 = vmatmul.mubr.bf16.gmra.mrb[0].mxu0 %v2909
    %v4184 = vpop.f32.mrb[0].mxu0
    %v4185 = vadd.f32 %v3670, %v4184
    %v4186 = vpop.f32.mrb[0].mxu0
    %v4187 = vadd.f32 %v3674, %v4186
    %v4188 = vpop.f32.mrb[0].mxu0
    %v4189 = vpop.f32.mrb[0].mxu0
    %4190 = vdwg.mxu0
    %4191 = vmatprep.subr.bf16.mxu0 %v3946
    %4192 = vmatpush1.bf16.msra.mxu0 %v3945
    %4193 = vmatprep.subr.bf16.mxu0 %v3952
    %4194 = vmatpush1.bf16.msra.mxu0 %v3951
    %4195 = vmatprep.subr.bf16.mxu0 %v3958
    %4196 = vmatpush1.bf16.msra.mxu0 %v3957
    %4197 = vmatprep.subr.bf16.mxu0 %v3964
    %4198 = vmatpush1.bf16.msra.mxu0 %v3963
    %4199 = vmatprep.subr.bf16.mxu0 %v3970
    %4200 = vmatpush1.bf16.msra.mxu0 %v3969
    %4201 = vmatprep.subr.bf16.mxu0 %v3976
    %4202 = vmatpush1.bf16.msra.mxu0 %v3975
    %4203 = vmatprep.subr.bf16.mxu0 %v3982
    %4204 = vmatpush1.bf16.msra.mxu0 %v3981
    %4205 = vmatprep.subr.bf16.mxu0 %v3988
    %4206 = vmatpush1.bf16.msra.mxu0 %v3987
    %4207 = vmatprep.subr.bf16.mxu0 %v3994
    %4208 = vmatpush1.bf16.msra.mxu0 %v3993
    %4209 = vmatprep.subr.bf16.mxu0 %v4000
    %4210 = vmatpush1.bf16.msra.mxu0 %v3999
    %4211 = vmatprep.subr.bf16.mxu0 %v4006
    %4212 = vmatpush1.bf16.msra.mxu0 %v4005
    %4213 = vmatprep.subr.bf16.mxu0 %v4012
    %4214 = vmatpush1.bf16.msra.mxu0 %v4011
    %4215 = vmatprep.subr.bf16.mxu0 %v4018
    %4216 = vmatpush1.bf16.msra.mxu0 %v4017
    %4217 = vmatprep.subr.bf16.mxu0 %v4024
    %4218 = vmatpush1.bf16.msra.mxu0 %v4023
    %4219 = vmatprep.subr.bf16.mxu0 0
    %4220 = vmatpush1.bf16.msra.mxu0 0
    %4221 = vmatprep.subr.bf16.mxu0 0
    %4222 = vmatpush1.bf16.msra.mxu0 0
    %4223 = vmatprep.mubr.bf16.mxu0 %v3448
    %4224 = vmatmul.mubr.bf16.gmra.mrb[0].mxu0 %v2909
    %v4225 = vpop.f32.mrb[0].mxu0
    %v4226 = vadd.f32 %v3678, %v4225
    %v4227 = vpop.f32.mrb[0].mxu0
    %v4228 = vadd.f32 %v3682, %v4227
    %v4229 = vpop.f32.mrb[0].mxu0
    %v4230 = vpop.f32.mrb[0].mxu0
    %4231 = vdwg.mxu0
    %v4232 = vmul.f32 %v3485, 0.5
    %v4233 = vmul.f32 %v3487, 0.5
    %v4234 = vmul.f32 %v3526, 0.5
    %v4235 = vmul.f32 %v3528, 0.5
    %v4236 = vmul.f32 %v3567, 0.5
    %v4237 = vmul.f32 %v3569, 0.5
    %v4238 = vmul.f32 %v3485, 0.044715
    %v4239 = vmul.f32 %v3487, 0.044715
    %v4240 = vmul.f32 %v3526, 0.044715
    %v4241 = vmul.f32 %v3528, 0.044715
    %v4242 = vmul.f32 %v3567, 0.044715
    %v4243 = vmul.f32 %v3569, 0.044715
    %v4244 = vmul.f32 %v4238, %v3485
    %v4245 = vmul.f32 %v4239, %v3487
    %v4246 = vmul.f32 %v4240, %v3526
    %v4247 = vmul.f32 %v4241, %v3528
    %v4248 = vmul.f32 %v4242, %v3567
    %v4249 = vmul.f32 %v4243, %v3569
    %v4250 = vmul.f32 %v4244, %v3485
    %v4251 = vmul.f32 %v4245, %v3487
    %v4252 = vmul.f32 %v4246, %v3526
    %v4253 = vmul.f32 %v4247, %v3528
    %v4254 = vmul.f32 %v4248, %v3567
    %v4255 = vmul.f32 %v4249, %v3569
    %v4256 = vadd.f32 %v3485, %v4250
    %v4257 = vadd.f32 %v3487, %v4251
    %v4258 = vadd.f32 %v3526, %v4252
    %v4259 = vadd.f32 %v3528, %v4253
    %v4260 = vadd.f32 %v3567, %v4254
    %v4261 = vadd.f32 %v3569, %v4255
    %v4262 = vmul.f32 %v4256, 0.7978846
    %v4263 = vmul.f32 %v4257, 0.7978846
    %v4264 = vmul.f32 %v4258, 0.7978846
    %v4265 = vmul.f32 %v4259, 0.7978846
    %v4266 = vmul.f32 %v4260, 0.7978846
    %v4267 = vmul.f32 %v4261, 0.7978846
    %v4268 = vtanh.pop %v4262
    %v4269 = vtanh.pop %v4263
    %v4270 = vtanh.pop %v4264
    %v4271 = vtanh.pop %v4265
    %v4272 = vtanh.pop %v4266
    %v4273 = vtanh.pop %v4267
    %v4274 = vadd.f32 %v4268, 1.0
    %v4275 = vadd.f32 %v4269, 1.0
    %v4276 = vadd.f32 %v4270, 1.0
    %v4277 = vadd.f32 %v4271, 1.0
    %v4278 = vadd.f32 %v4272, 1.0
    %v4279 = vadd.f32 %v4273, 1.0
    %v4280 = vmul.f32 %v4232, %v4274
    %v4281 = vmul.f32 %v4233, %v4275
    %v4282 = vmul.f32 %v4234, %v4276
    %v4283 = vmul.f32 %v4235, %v4277
    %v4284 = vmul.f32 %v4236, %v4278
    %v4285 = vmul.f32 %v4237, %v4279
    %v4286 = vmul.f32 %v4144, 0.5
    %v4287 = vmul.f32 %v4146, 0.5
    %v4288 = vmul.f32 %v4185, 0.5
    %v4289 = vmul.f32 %v4187, 0.5
    %v4290 = vmul.f32 %v4226, 0.5
    %v4291 = vmul.f32 %v4228, 0.5
    %v4292 = vmul.f32 %v4144, 0.044715
    %v4293 = vmul.f32 %v4146, 0.044715
    %v4294 = vmul.f32 %v4185, 0.044715
    %v4295 = vmul.f32 %v4187, 0.044715
    %v4296 = vmul.f32 %v4226, 0.044715
    %v4297 = vmul.f32 %v4228, 0.044715
    %v4298 = vmul.f32 %v4292, %v4144
    %v4299 = vmul.f32 %v4293, %v4146
    %v4300 = vmul.f32 %v4294, %v4185
    %v4301 = vmul.f32 %v4295, %v4187
    %v4302 = vmul.f32 %v4296, %v4226
    %v4303 = vmul.f32 %v4297, %v4228
    %v4304 = vmul.f32 %v4298, %v4144
    %v4305 = vmul.f32 %v4299, %v4146
    %v4306 = vmul.f32 %v4300, %v4185
    %v4307 = vmul.f32 %v4301, %v4187
    %v4308 = vmul.f32 %v4302, %v4226
    %v4309 = vmul.f32 %v4303, %v4228
    %v4310 = vadd.f32 %v4144, %v4304
    %v4311 = vadd.f32 %v4146, %v4305
    %v4312 = vadd.f32 %v4185, %v4306
    %v4313 = vadd.f32 %v4187, %v4307
    %v4314 = vadd.f32 %v4226, %v4308
    %v4315 = vadd.f32 %v4228, %v4309
    %v4316 = vmul.f32 %v4310, 0.7978846
    %v4317 = vmul.f32 %v4311, 0.7978846
    %v4318 = vmul.f32 %v4312, 0.7978846
    %v4319 = vmul.f32 %v4313, 0.7978846
    %v4320 = vmul.f32 %v4314, 0.7978846
    %v4321 = vmul.f32 %v4315, 0.7978846
    %v4322 = vtanh.pop %v4316
    %v4323 = vtanh.pop %v4317
    %v4324 = vtanh.pop %v4318
    %v4325 = vtanh.pop %v4319
    %v4326 = vtanh.pop %v4320
    %v4327 = vtanh.pop %v4321
    %v4328 = vadd.f32 %v4322, 1.0
    %v4329 = vadd.f32 %v4323, 1.0
    %v4330 = vadd.f32 %v4324, 1.0
    %v4331 = vadd.f32 %v4325, 1.0
    %v4332 = vadd.f32 %v4326, 1.0
    %v4333 = vadd.f32 %v4327, 1.0
    %v4334 = vmul.f32 %v4286, %v4328
    %v4335 = vmul.f32 %v4287, %v4329
    %v4336 = vmul.f32 %v4288, %v4330
    %v4337 = vmul.f32 %v4289, %v4331
    %v4338 = vmul.f32 %v4290, %v4332
    %v4339 = vmul.f32 %v4291, %v4333
    %v4340 = vmul.f32 %v3485, %v4334
    %v4341 = vmul.f32 %v3487, %v4335
    %v4342 = vmul.f32 %v3526, %v4336
    %v4343 = vmul.f32 %v3528, %v4337
    %v4344 = vmul.f32 %v3567, %v4338
    %v4345 = vmul.f32 %v3569, %v4339
    %v4346 = vmul.f32 %v4144, %v4280
    %v4347 = vmul.f32 %v4146, %v4281
    %v4348 = vmul.f32 %v4185, %v4282
    %v4349 = vmul.f32 %v4187, %v4283
    %v4350 = vmul.f32 %v4226, %v4284
    %v4351 = vmul.f32 %v4228, %v4285
    %v4352 = vadd.f32 %v4340, %v4346
    %v4353 = vadd.f32 %v4341, %v4347
    %v4354 = vadd.f32 %v4342, %v4348
    %v4355 = vadd.f32 %v4343, %v4349
    %v4356 = vadd.f32 %v4344, %v4350
    %v4357 = vadd.f32 %v4345, %v4351
    %v4358 = vld [vmem:[#allocation30] sm:$0xff]
    %v4359 = vld [vmem:[#allocation30 + $0x8] sm:$0xff]
    %v4360 = vld [vmem:[#allocation30 + $0x10] sm:$0xff]
    %v4361 = vld [vmem:[#allocation30 + $0x18] sm:$0xff]
    %v4362 = vld [vmem:[#allocation30 + $0x20] sm:$0xff]
    %v4363 = vld [vmem:[#allocation30 + $0x28] sm:$0xff]
    %v4364 = vld [vmem:[#allocation30 + $0x30] sm:$0xff]
    %v4365 = vld [vmem:[#allocation30 + $0x38] sm:$0xff]
    %v4366 = vld [vmem:[#allocation30 + $0x40] sm:$0xff]
    %v4367 = vld [vmem:[#allocation30 + $0x48] sm:$0xff]
    %v4368 = vld [vmem:[#allocation30 + $0x50] sm:$0xff]
    %v4369 = vld [vmem:[#allocation30 + $0x58] sm:$0xff]
    %v4370 = vld [vmem:[#allocation30 + $0x60] sm:$0xff]
    %v4371 = vld [vmem:[#allocation30 + $0x68] sm:$0xff]
    %v4372 = vld [vmem:[#allocation30 + $0x70] sm:$0xff]
    %v4373 = vld [vmem:[#allocation30 + $0x78] sm:$0xff]
    %v4374 = vld [vmem:[#allocation30 + $0x80] sm:$0xff]
    %v4375 = vld [vmem:[#allocation30 + $0x88] sm:$0xff]
    %v4376 = vld [vmem:[#allocation30 + $0x90] sm:$0xff]
    %v4377 = vld [vmem:[#allocation30 + $0x98] sm:$0xff]
    %v4378 = vld [vmem:[#allocation30 + $0xa0] sm:$0xff]
    %v4379 = vld [vmem:[#allocation30 + $0xa8] sm:$0xff]
    %v4380 = vld [vmem:[#allocation30 + $0xb0] sm:$0xff]
    %v4381 = vld [vmem:[#allocation30 + $0xb8] sm:$0xff]
    %v4382 = vld [vmem:[#allocation30 + $0xc0] sm:$0xff]
    %v4383 = vld [vmem:[#allocation30 + $0xc8] sm:$0xff]
    %v4384 = vld [vmem:[#allocation30 + $0xd0] sm:$0xff]
    %v4385 = vld [vmem:[#allocation30 + $0xd8] sm:$0xff]
    %v4386 = vld [vmem:[#allocation30 + $0xe0] sm:$0xff]
    %v4387 = vld [vmem:[#allocation30 + $0xe8] sm:$0xff]
    %v4388 = vld [vmem:[#allocation30 + $0xf0] sm:$0xff]
    %v4389 = vld [vmem:[#allocation30 + $0xf8] sm:$0xff]
    %v4390 = vld [vmem:[#allocation30 + $0x100] sm:$0xff]
    %v4391 = vld [vmem:[#allocation30 + $0x108] sm:$0xff]
    %v4392 = vld [vmem:[#allocation30 + $0x110] sm:$0xff]
    %v4393 = vld [vmem:[#allocation30 + $0x118] sm:$0xff]
    %v4394 = vld [vmem:[#allocation30 + $0x120] sm:$0xff]
    %v4395 = vld [vmem:[#allocation30 + $0x128] sm:$0xff]
    %v4396 = vld [vmem:[#allocation30 + $0x130] sm:$0xff]
    %v4397 = vld [vmem:[#allocation30 + $0x138] sm:$0xff]
    %v4398 = vld [vmem:[#allocation30 + $0x140] sm:$0xff]
    %v4399 = vld [vmem:[#allocation30 + $0x148] sm:$0xff]
    %v4400 = vld [vmem:[#allocation30 + $0x150] sm:$0xff]
    %v4401 = vld [vmem:[#allocation30 + $0x158] sm:$0xff]
    %v4402 = vld [vmem:[#allocation30 + $0x160] sm:$0xff]
    %v4403 = vld [vmem:[#allocation30 + $0x168] sm:$0xff]
    %v4404 = vld [vmem:[#allocation30 + $0x170] sm:$0xff]
    %v4405 = vld [vmem:[#allocation30 + $0x178] sm:$0xff]
    %v4406 = vld [vmem:[#allocation30 + $0x180] sm:$0xff]
    %v4407 = vld [vmem:[#allocation30 + $0x188] sm:$0xff]
    %v4408 = vld [vmem:[#allocation30 + $0x190] sm:$0xff]
    %v4409 = vld [vmem:[#allocation30 + $0x198] sm:$0xff]
    %v4410 = vld [vmem:[#allocation30 + $0x1a0] sm:$0xff]
    %v4411 = vld [vmem:[#allocation30 + $0x1a8] sm:$0xff]
    %v4412 = vld [vmem:[#allocation30 + $0x1b0] sm:$0xff]
    %v4413 = vld [vmem:[#allocation30 + $0x1b8] sm:$0xff]
    %v4414 = vld [vmem:[#allocation30 + $0x1c0] sm:$0xff]
    %v4415 = vld [vmem:[#allocation30 + $0x1c8] sm:$0xff]
    %v4416 = vld [vmem:[#allocation30 + $0x1d0] sm:$0xff]
    %v4417 = vld [vmem:[#allocation30 + $0x1d8] sm:$0xff]
    %v4418 = vld [vmem:[#allocation30 + $0x1e0] sm:$0xff]
    %v4419 = vld [vmem:[#allocation30 + $0x1e8] sm:$0xff]
    %v4420 = vld [vmem:[#allocation30 + $0x1f0] sm:$0xff]
    %v4421 = vld [vmem:[#allocation30 + $0x1f8] sm:$0xff]
    %v4422 = vld [vmem:[#allocation30 + $0x200] sm:$0xff]
    %v4423 = vld [vmem:[#allocation30 + $0x208] sm:$0xff]
    %v4424 = vld [vmem:[#allocation30 + $0x210] sm:$0xff]
    %v4425 = vld [vmem:[#allocation30 + $0x218] sm:$0xff]
    %v4426 = vld [vmem:[#allocation30 + $0x220] sm:$0xff]
    %v4427 = vld [vmem:[#allocation30 + $0x228] sm:$0xff]
    %v4428 = vld [vmem:[#allocation30 + $0x230] sm:$0xff]
    %v4429 = vld [vmem:[#allocation30 + $0x238] sm:$0xff]
    %v4430 = vld [vmem:[#allocation30 + $0x240] sm:$0xff]
    %v4431 = vld [vmem:[#allocation30 + $0x248] sm:$0xff]
    %v4432 = vld [vmem:[#allocation30 + $0x250] sm:$0xff]
    %v4433 = vld [vmem:[#allocation30 + $0x258] sm:$0xff]
    %v4434 = vld [vmem:[#allocation30 + $0x260] sm:$0xff]
    %v4435 = vld [vmem:[#allocation30 + $0x268] sm:$0xff]
    %v4436 = vld [vmem:[#allocation30 + $0x270] sm:$0xff]
    %v4437 = vld [vmem:[#allocation30 + $0x278] sm:$0xff]
    %v4438 = vld [vmem:[#allocation30 + $0x280] sm:$0xff]
    %v4439 = vld [vmem:[#allocation30 + $0x288] sm:$0xff]
    %v4440 = vld [vmem:[#allocation30 + $0x290] sm:$0xff]
    %v4441 = vld [vmem:[#allocation30 + $0x298] sm:$0xff]
    %v4442 = vpack.c.bf16 %v4352, %v4352
    %v4443 = vpack.c.bf16 %v4353, %v4353
    %v4444 = vpack.c.bf16 %v4354, %v4354
    %v4445 = vpack.c.bf16 %v4355, %v4355
    %v4446 = vpack.c.bf16 %v4356, %v4356
    %v4447 = vpack.c.bf16 %v4357, %v4357
    %v4448 = vld [vmem:[#allocation31] sm:$0x3]
    %v4450 = vlaneseq
    %v4451 = vshrl.u32 %v4450, 7
    %v4452 = vsub.s32 0, %v4451
    %v4453 = vrot.slane %v4448, %v4452
    %v4454 = vlaneseq
    %v4455 = vshrl.u32 %v4454, 7
    %v4456 = vsub.s32 1, %v4455
    %v4457 = vrot.slane %v4448, %v4456
    %v4544 = vunpack.c.l.b16 %v4358
    %v4545 = vunpack.c.h.b16 %v4358
    %v4546 = vunpack.c.l.b16 %v4359
    %v4547 = vunpack.c.h.b16 %v4359
    %v4548 = vunpack.c.l.b16 %v4360
    %v4549 = vunpack.c.h.b16 %v4360
    %v4550 = vunpack.c.l.b16 %v4361
    %v4551 = vunpack.c.h.b16 %v4361
    %v4552 = vunpack.c.l.b16 %v4362
    %v4553 = vunpack.c.h.b16 %v4362
    %v4554 = vunpack.c.l.b16 %v4363
    %v4555 = vunpack.c.h.b16 %v4363
    %v4556 = vunpack.c.l.b16 %v4364
    %v4557 = vunpack.c.h.b16 %v4364
    %v4558 = vunpack.c.l.b16 %v4365
    %v4559 = vunpack.c.h.b16 %v4365
    %v4560 = vunpack.c.l.b16 %v4366
    %v4561 = vunpack.c.h.b16 %v4366
    %v4562 = vunpack.c.l.b16 %v4367
    %v4563 = vunpack.c.h.b16 %v4367
    %v4564 = vunpack.c.l.b16 %v4368
    %v4565 = vunpack.c.h.b16 %v4368
    %v4566 = vunpack.c.l.b16 %v4369
    %v4567 = vunpack.c.h.b16 %v4369
    %v4568 = vunpack.c.l.b16 %v4370
    %v4569 = vunpack.c.h.b16 %v4370
    %v4570 = vunpack.c.l.b16 %v4371
    %v4571 = vunpack.c.h.b16 %v4371
    %v4572 = vunpack.c.l.b16 %v4372
    %v4573 = vunpack.c.h.b16 %v4372
    %v4574 = vunpack.c.l.b16 %v4373
    %v4575 = vunpack.c.h.b16 %v4373
    %v4576 = vunpack.c.l.b16 %v4374
    %v4577 = vunpack.c.h.b16 %v4374
    %v4578 = vunpack.c.l.b16 %v4375
    %v4579 = vunpack.c.h.b16 %v4375
    %v4580 = vunpack.c.l.b16 %v4376
    %v4581 = vunpack.c.h.b16 %v4376
    %v4582 = vunpack.c.l.b16 %v4377
    %v4583 = vunpack.c.h.b16 %v4377
    %v4584 = vunpack.c.l.b16 %v4378
    %v4585 = vunpack.c.h.b16 %v4378
    %v4586 = vunpack.c.l.b16 %v4379
    %v4587 = vunpack.c.h.b16 %v4379
    %v4588 = vunpack.c.l.b16 %v4380
    %v4589 = vunpack.c.h.b16 %v4380
    %v4590 = vunpack.c.l.b16 %v4381
    %v4591 = vunpack.c.h.b16 %v4381
    %v4592 = vunpack.c.l.b16 %v4382
    %v4593 = vunpack.c.h.b16 %v4382
    %v4594 = vunpack.c.l.b16 %v4383
    %v4595 = vunpack.c.h.b16 %v4383
    %v4596 = vunpack.c.l.b16 %v4384
    %v4597 = vunpack.c.h.b16 %v4384
    %v4598 = vunpack.c.l.b16 %v4385
    %v4599 = vunpack.c.h.b16 %v4385
    %v4600 = vunpack.c.l.b16 %v4386
    %v4601 = vunpack.c.h.b16 %v4386
    %v4602 = vunpack.c.l.b16 %v4387
    %v4603 = vunpack.c.h.b16 %v4387
    %v4604 = vunpack.c.l.b16 %v4388
    %v4605 = vunpack.c.h.b16 %v4388
    %v4606 = vunpack.c.l.b16 %v4389
    %v4607 = vunpack.c.h.b16 %v4389
    %v4608 = vunpack.c.l.b16 %v4390
    %v4609 = vunpack.c.h.b16 %v4390
    %v4610 = vunpack.c.l.b16 %v4391
    %v4611 = vunpack.c.h.b16 %v4391
    %v4612 = vunpack.c.l.b16 %v4392
    %v4613 = vunpack.c.h.b16 %v4392
    %v4614 = vunpack.c.l.b16 %v4393
    %v4615 = vunpack.c.h.b16 %v4393
    %v4616 = vunpack.c.l.b16 %v4394
    %v4617 = vunpack.c.h.b16 %v4394
    %v4618 = vunpack.c.l.b16 %v4395
    %v4619 = vunpack.c.h.b16 %v4395
    %v4620 = vunpack.c.l.b16 %v4396
    %v4621 = vunpack.c.h.b16 %v4396
    %v4622 = vunpack.c.l.b16 %v4397
    %v4623 = vunpack.c.h.b16 %v4397
    %v4624 = vunpack.c.l.b16 %v4398
    %v4625 = vunpack.c.h.b16 %v4398
    %v4626 = vunpack.c.l.b16 %v4399
    %v4627 = vunpack.c.h.b16 %v4399
    %v4628 = vunpack.c.l.b16 %v4400
    %v4629 = vunpack.c.h.b16 %v4400
    %v4630 = vunpack.c.l.b16 %v4401
    %v4631 = vunpack.c.h.b16 %v4401
    %v4632 = vunpack.c.l.b16 %v4402
    %v4633 = vunpack.c.h.b16 %v4402
    %v4634 = vunpack.c.l.b16 %v4403
    %v4635 = vunpack.c.h.b16 %v4403
    %v4636 = vunpack.c.l.b16 %v4404
    %v4637 = vunpack.c.h.b16 %v4404
    %v4638 = vunpack.c.l.b16 %v4405
    %v4639 = vunpack.c.h.b16 %v4405
    %v4640 = vunpack.c.l.b16 %v4406
    %v4641 = vunpack.c.h.b16 %v4406
    %v4642 = vunpack.c.l.b16 %v4407
    %v4643 = vunpack.c.h.b16 %v4407
    %v4644 = vunpack.c.l.b16 %v4408
    %v4645 = vunpack.c.h.b16 %v4408
    %v4646 = vunpack.c.l.b16 %v4409
    %v4647 = vunpack.c.h.b16 %v4409
    %v4648 = vunpack.c.l.b16 %v4410
    %v4649 = vunpack.c.h.b16 %v4410
    %v4650 = vunpack.c.l.b16 %v4411
    %v4651 = vunpack.c.h.b16 %v4411
    %v4652 = vunpack.c.l.b16 %v4412
    %v4653 = vunpack.c.h.b16 %v4412
    %v4654 = vunpack.c.l.b16 %v4413
    %v4655 = vunpack.c.h.b16 %v4413
    %v4656 = vunpack.c.l.b16 %v4414
    %v4657 = vunpack.c.h.b16 %v4414
    %v4658 = vunpack.c.l.b16 %v4415
    %v4659 = vunpack.c.h.b16 %v4415
    %v4660 = vunpack.c.l.b16 %v4416
    %v4661 = vunpack.c.h.b16 %v4416
    %v4662 = vunpack.c.l.b16 %v4417
    %v4663 = vunpack.c.h.b16 %v4417
    %v4664 = vunpack.c.l.b16 %v4418
    %v4665 = vunpack.c.h.b16 %v4418
    %v4666 = vunpack.c.l.b16 %v4419
    %v4667 = vunpack.c.h.b16 %v4419
    %v4668 = vunpack.c.l.b16 %v4420
    %v4669 = vunpack.c.h.b16 %v4420
    %v4670 = vunpack.c.l.b16 %v4421
    %v4671 = vunpack.c.h.b16 %v4421
    %v4672 = vunpack.c.l.b16 %v4422
    %v4673 = vunpack.c.h.b16 %v4422
    %v4674 = vunpack.c.l.b16 %v4423
    %v4675 = vunpack.c.h.b16 %v4423
    %v4676 = vunpack.c.l.b16 %v4424
    %v4677 = vunpack.c.h.b16 %v4424
    %v4678 = vunpack.c.l.b16 %v4425
    %v4679 = vunpack.c.h.b16 %v4425
    %v4680 = vunpack.c.l.b16 %v4426
    %v4681 = vunpack.c.h.b16 %v4426
    %v4682 = vunpack.c.l.b16 %v4427
    %v4683 = vunpack.c.h.b16 %v4427
    %v4684 = vunpack.c.l.b16 %v4428
    %v4685 = vunpack.c.h.b16 %v4428
    %v4686 = vunpack.c.l.b16 %v4429
    %v4687 = vunpack.c.h.b16 %v4429
    %v4688 = vunpack.c.l.b16 %v4430
    %v4689 = vunpack.c.h.b16 %v4430
    %v4690 = vunpack.c.l.b16 %v4431
    %v4691 = vunpack.c.h.b16 %v4431
    %v4692 = vunpack.c.l.b16 %v4432
    %v4693 = vunpack.c.h.b16 %v4432
    %v4694 = vunpack.c.l.b16 %v4433
    %v4695 = vunpack.c.h.b16 %v4433
    %v4696 = vunpack.c.l.b16 %v4434
    %v4697 = vunpack.c.h.b16 %v4434
    %v4698 = vunpack.c.l.b16 %v4435
    %v4699 = vunpack.c.h.b16 %v4435
    %v4700 = vunpack.c.l.b16 %v4436
    %v4701 = vunpack.c.h.b16 %v4436
    %v4702 = vunpack.c.l.b16 %v4437
    %v4703 = vunpack.c.h.b16 %v4437
    %v4704 = vunpack.c.l.b16 %v4438
    %v4705 = vunpack.c.h.b16 %v4438
    %v4706 = vunpack.c.l.b16 %v4439
    %v4707 = vunpack.c.h.b16 %v4439
    %v4708 = vunpack.c.l.b16 %v4440
    %v4709 = vunpack.c.h.b16 %v4440
    %v4710 = vunpack.c.l.b16 %v4441
    %v4711 = vunpack.c.h.b16 %v4441
    %v4712 = vpack.c.b16 %v4546, %v4544
    %v4713 = vpack.c.b16 %v4547, %v4545
    %v4714 = vpack.c.b16 %v4550, %v4548
    %v4715 = vpack.c.b16 %v4551, %v4549
    %v4716 = vpack.c.b16 %v4554, %v4552
    %v4717 = vpack.c.b16 %v4555, %v4553
    %v4718 = vpack.c.b16 %v4558, %v4556
    %v4719 = vpack.c.b16 %v4559, %v4557
    %v4720 = vpack.c.b16 %v4562, %v4560
    %v4721 = vpack.c.b16 %v4563, %v4561
    %v4722 = vpack.c.b16 %v4566, %v4564
    %v4723 = vpack.c.b16 %v4567, %v4565
    %v4724 = vpack.c.b16 %v4570, %v4568
    %v4725 = vpack.c.b16 %v4571, %v4569
    %v4726 = vpack.c.b16 %v4574, %v4572
    %v4727 = vpack.c.b16 %v4575, %v4573
    %v4728 = vpack.c.b16 %v4578, %v4576
    %v4729 = vpack.c.b16 %v4579, %v4577
    %v4730 = vpack.c.b16 %v4582, %v4580
    %v4731 = vpack.c.b16 %v4583, %v4581
    %v4732 = vpack.c.b16 %v4586, %v4584
    %v4733 = vpack.c.b16 %v4587, %v4585
    %v4734 = vpack.c.b16 %v4590, %v4588
    %v4735 = vpack.c.b16 %v4591, %v4589
    %v4736 = vpack.c.b16 %v4594, %v4592
    %v4737 = vpack.c.b16 %v4595, %v4593
    %v4738 = vpack.c.b16 %v4598, %v4596
    %v4739 = vpack.c.b16 %v4599, %v4597
    %v4740 = vpack.c.b16 %v4602, %v4600
    %v4741 = vpack.c.b16 %v4603, %v4601
    %v4742 = vpack.c.b16 %v4606, %v4604
    %v4743 = vpack.c.b16 %v4607, %v4605
    %v4744 = vpack.c.b16 %v4610, %v4608
    %v4745 = vpack.c.b16 %v4611, %v4609
    %v4746 = vpack.c.b16 %v4614, %v4612
    %v4747 = vpack.c.b16 %v4615, %v4613
    %v4748 = vpack.c.b16 %v4618, %v4616
    %v4749 = vpack.c.b16 %v4619, %v4617
    %v4750 = vpack.c.b16 %v4622, %v4620
    %v4751 = vpack.c.b16 %v4623, %v4621
    %v4752 = vpack.c.b16 %v4626, %v4624
    %v4753 = vpack.c.b16 %v4627, %v4625
    %v4754 = vpack.c.b16 %v4630, %v4628
    %v4755 = vpack.c.b16 %v4631, %v4629
    %v4756 = vpack.c.b16 %v4634, %v4632
    %v4757 = vpack.c.b16 %v4635, %v4633
    %v4758 = vpack.c.b16 %v4638, %v4636
    %v4759 = vpack.c.b16 %v4639, %v4637
    %v4760 = vpack.c.b16 %v4642, %v4640
    %v4761 = vpack.c.b16 %v4643, %v4641
    %v4762 = vpack.c.b16 %v4646, %v4644
    %v4763 = vpack.c.b16 %v4647, %v4645
    %v4764 = vpack.c.b16 %v4650, %v4648
    %v4765 = vpack.c.b16 %v4651, %v4649
    %v4766 = vpack.c.b16 %v4654, %v4652
    %v4767 = vpack.c.b16 %v4655, %v4653
    %v4768 = vpack.c.b16 %v4658, %v4656
    %v4769 = vpack.c.b16 %v4659, %v4657
    %v4770 = vpack.c.b16 %v4662, %v4660
    %v4771 = vpack.c.b16 %v4663, %v4661
    %v4772 = vpack.c.b16 %v4666, %v4664
    %v4773 = vpack.c.b16 %v4667, %v4665
    %v4774 = vpack.c.b16 %v4670, %v4668
    %v4775 = vpack.c.b16 %v4671, %v4669
    %v4776 = vpack.c.b16 %v4674, %v4672
    %v4777 = vpack.c.b16 %v4675, %v4673
    %v4778 = vpack.c.b16 %v4678, %v4676
    %v4779 = vpack.c.b16 %v4679, %v4677
    %v4780 = vpack.c.b16 %v4682, %v4680
    %v4781 = vpack.c.b16 %v4683, %v4681
    %v4782 = vpack.c.b16 %v4686, %v4684
    %v4783 = vpack.c.b16 %v4687, %v4685
    %v4784 = vpack.c.b16 %v4690, %v4688
    %v4785 = vpack.c.b16 %v4691, %v4689
    %v4786 = vpack.c.b16 %v4694, %v4692
    %v4787 = vpack.c.b16 %v4695, %v4693
    %v4788 = vpack.c.b16 %v4698, %v4696
    %v4789 = vpack.c.b16 %v4699, %v4697
    %v4790 = vpack.c.b16 %v4702, %v4700
    %v4791 = vpack.c.b16 %v4703, %v4701
    %v4792 = vpack.c.b16 %v4706, %v4704
    %v4793 = vpack.c.b16 %v4707, %v4705
    %v4794 = vpack.c.b16 %v4710, %v4708
    %v4795 = vpack.c.b16 %v4711, %v4709
    %vm4880 = vcmask 261120
    %v4882 = vsel %vm4880, %v4447, 0
    %4884 = vmatprep.subr.bf16.mxu0 %v4713
    %4885 = vmatpush1.bf16.msra.mxu0 %v4712
    %4886 = vmatprep.subr.bf16.mxu0 %v4715
    %4887 = vmatpush1.bf16.msra.mxu0 %v4714
    %4888 = vmatprep.subr.bf16.mxu0 %v4717
    %4889 = vmatpush1.bf16.msra.mxu0 %v4716
    %4890 = vmatprep.subr.bf16.mxu0 %v4719
    %4891 = vmatpush1.bf16.msra.mxu0 %v4718
    %4892 = vmatprep.subr.bf16.mxu0 %v4721
    %4893 = vmatpush1.bf16.msra.mxu0 %v4720
    %4894 = vmatprep.subr.bf16.mxu0 %v4723
    %4895 = vmatpush1.bf16.msra.mxu0 %v4722
    %4896 = vmatprep.subr.bf16.mxu0 %v4725
    %4897 = vmatpush1.bf16.msra.mxu0 %v4724
    %4898 = vmatprep.subr.bf16.mxu0 %v4727
    %4899 = vmatpush1.bf16.msra.mxu0 %v4726
    %4900 = vmatprep.subr.bf16.mxu0 %v4729
    %4901 = vmatpush1.bf16.msra.mxu0 %v4728
    %4902 = vmatprep.subr.bf16.mxu0 %v4731
    %4903 = vmatpush1.bf16.msra.mxu0 %v4730
    %4904 = vmatprep.subr.bf16.mxu0 %v4733
    %4905 = vmatpush1.bf16.msra.mxu0 %v4732
    %4906 = vmatprep.subr.bf16.mxu0 %v4735
    %4907 = vmatpush1.bf16.msra.mxu0 %v4734
    %4908 = vmatprep.subr.bf16.mxu0 %v4737
    %4909 = vmatpush1.bf16.msra.mxu0 %v4736
    %4910 = vmatprep.subr.bf16.mxu0 %v4739
    %4911 = vmatpush1.bf16.msra.mxu0 %v4738
    %4912 = vmatprep.subr.bf16.mxu0 %v4741
    %4913 = vmatpush1.bf16.msra.mxu0 %v4740
    %4914 = vmatprep.subr.bf16.mxu0 %v4743
    %4915 = vmatpush1.bf16.msra.mxu0 %v4742
    %4916 = vmatprep.mubr.bf16.mxu0 %v4443
    %4917 = vmatmul.mubr.bf16.gmra.mrb[0].mxu0 %v4442
    %v4918 = vpop.f32.mrb[0].mxu0
    %v4919 = vadd.f32 %v4453, %v4918
    %v4920 = vpop.f32.mrb[0].mxu0
    %v4921 = vadd.f32 %v4457, %v4920
    %v4922 = vpop.f32.mrb[0].mxu0
    %v4923 = vpop.f32.mrb[0].mxu0
    %4924 = vdwg.mxu0
    %4925 = vmatprep.subr.bf16.mxu0 %v4745
    %4926 = vmatpush1.bf16.msra.mxu0 %v4744
    %4927 = vmatprep.subr.bf16.mxu0 %v4747
    %4928 = vmatpush1.bf16.msra.mxu0 %v4746
    %4929 = vmatprep.subr.bf16.mxu0 %v4749
    %4930 = vmatpush1.bf16.msra.mxu0 %v4748
    %4931 = vmatprep.subr.bf16.mxu0 %v4751
    %4932 = vmatpush1.bf16.msra.mxu0 %v4750
    %4933 = vmatprep.subr.bf16.mxu0 %v4753
    %4934 = vmatpush1.bf16.msra.mxu0 %v4752
    %4935 = vmatprep.subr.bf16.mxu0 %v4755
    %4936 = vmatpush1.bf16.msra.mxu0 %v4754
    %4937 = vmatprep.subr.bf16.mxu0 %v4757
    %4938 = vmatpush1.bf16.msra.mxu0 %v4756
    %4939 = vmatprep.subr.bf16.mxu0 %v4759
    %4940 = vmatpush1.bf16.msra.mxu0 %v4758
    %4941 = vmatprep.subr.bf16.mxu0 %v4761
    %4942 = vmatpush1.bf16.msra.mxu0 %v4760
    %4943 = vmatprep.subr.bf16.mxu0 %v4763
    %4944 = vmatpush1.bf16.msra.mxu0 %v4762
    %4945 = vmatprep.subr.bf16.mxu0 %v4765
    %4946 = vmatpush1.bf16.msra.mxu0 %v4764
    %4947 = vmatprep.subr.bf16.mxu0 %v4767
    %4948 = vmatpush1.bf16.msra.mxu0 %v4766
    %4949 = vmatprep.subr.bf16.mxu0 %v4769
    %4950 = vmatpush1.bf16.msra.mxu0 %v4768
    %4951 = vmatprep.subr.bf16.mxu0 %v4771
    %4952 = vmatpush1.bf16.msra.mxu0 %v4770
    %4953 = vmatprep.subr.bf16.mxu0 %v4773
    %4954 = vmatpush1.bf16.msra.mxu0 %v4772
    %4955 = vmatprep.subr.bf16.mxu0 %v4775
    %4956 = vmatpush1.bf16.msra.mxu0 %v4774
    %4957 = vmatprep.mubr.bf16.mxu0 %v4445
    %4958 = vmatmul.mubr.bf16.gmra.mrb[0].mxu0 %v4444
    %v4959 = vpop.f32.mrb[0].mxu0
    %v4960 = vadd.f32 %v4919, %v4959
    %v4961 = vpop.f32.mrb[0].mxu0
    %v4962 = vadd.f32 %v4921, %v4961
    %v4963 = vpop.f32.mrb[0].mxu0
    %v4964 = vpop.f32.mrb[0].mxu0
    %4965 = vdwg.mxu0
    %4966 = vmatprep.subr.bf16.mxu0 %v4777
    %4967 = vmatpush1.bf16.msra.mxu0 %v4776
    %4968 = vmatprep.subr.bf16.mxu0 %v4779
    %4969 = vmatpush1.bf16.msra.mxu0 %v4778
    %4970 = vmatprep.subr.bf16.mxu0 %v4781
    %4971 = vmatpush1.bf16.msra.mxu0 %v4780
    %4972 = vmatprep.subr.bf16.mxu0 %v4783
    %4973 = vmatpush1.bf16.msra.mxu0 %v4782
    %4974 = vmatprep.subr.bf16.mxu0 %v4785
    %4975 = vmatpush1.bf16.msra.mxu0 %v4784
    %4976 = vmatprep.subr.bf16.mxu0 %v4787
    %4977 = vmatpush1.bf16.msra.mxu0 %v4786
    %4978 = vmatprep.subr.bf16.mxu0 %v4789
    %4979 = vmatpush1.bf16.msra.mxu0 %v4788
    %4980 = vmatprep.subr.bf16.mxu0 %v4791
    %4981 = vmatpush1.bf16.msra.mxu0 %v4790
    %4982 = vmatprep.subr.bf16.mxu0 %v4793
    %4983 = vmatpush1.bf16.msra.mxu0 %v4792
    %4984 = vmatprep.subr.bf16.mxu0 %v4795
    %4985 = vmatpush1.bf16.msra.mxu0 %v4794
    %4986 = vmatprep.subr.bf16.mxu0 0
    %4987 = vmatpush1.bf16.msra.mxu0 0
    %4988 = vmatprep.subr.bf16.mxu0 0
    %4989 = vmatpush1.bf16.msra.mxu0 0
    %4990 = vmatprep.subr.bf16.mxu0 0
    %4991 = vmatpush1.bf16.msra.mxu0 0
    %4992 = vmatprep.subr.bf16.mxu0 0
    %4993 = vmatpush1.bf16.msra.mxu0 0
    %4994 = vmatprep.subr.bf16.mxu0 0
    %4995 = vmatpush1.bf16.msra.mxu0 0
    %4996 = vmatprep.subr.bf16.mxu0 0
    %4997 = vmatpush1.bf16.msra.mxu0 0
    %4998 = vmatprep.mubr.bf16.mxu0 %v4882
    %4999 = vmatmul.mubr.bf16.gmra.mrb[0].mxu0 %v4446
    %v5000 = vpop.f32.mrb[0].mxu0
    %v5001 = vadd.f32 %v4960, %v5000
    %v5002 = vpop.f32.mrb[0].mxu0
    %v5003 = vadd.f32 %v4962, %v5002
    %v5004 = vpop.f32.mrb[0].mxu0
    %v5005 = vpop.f32.mrb[0].mxu0
    %5006 = vdwg.mxu0
    %v5007 = vadd.f32 %v1859, %v5001
    %v5008 = vadd.f32 %v1861, %v5003
    %v5010 = vsel %vm1069, %v5008, 0
    %5012 = vmatprep.subr.mxu0 %v1866
    %5013 = vmatpush1.msra.mxu0 %v1865
    %5014 = vmatprep.subr.mxu0 %v1868
    %5015 = vmatpush1.msra.mxu0 %v1867
    %5016 = vmatprep.subr.mxu0 %v1870
    %5017 = vmatpush1.msra.mxu0 %v1869
    %5018 = vmatprep.subr.mxu0 %v1872
    %5019 = vmatpush1.msra.mxu0 %v1871
    %5020 = vmatprep.subr.mxu0 %v1874
    %5021 = vmatpush1.msra.mxu0 %v1873
    %5022 = vmatprep.subr.mxu0 %v1876
    %5023 = vmatpush1.msra.mxu0 %v1875
    %5024 = vmatprep.subr.mxu0 %v1878
    %5025 = vmatpush1.msra.mxu0 %v1877
    %5026 = vmatprep.subr.mxu0 %v1880
    %5027 = vmatpush1.msra.mxu0 %v1879
    %5028 = vmatprep.subr.mxu0 %v1882
    %5029 = vmatpush1.msra.mxu0 %v1881
    %5030 = vmatprep.subr.mxu0 %v1884
    %5031 = vmatpush1.msra.mxu0 %v1883
    %5032 = vmatprep.subr.mxu0 %v1886
    %5033 = vmatpush1.msra.mxu0 %v1885
    %5034 = vmatprep.subr.mxu0 %v1888
    %5035 = vmatpush1.msra.mxu0 %v1887
    %5036 = vmatprep.subr.mxu0 %v1890
    %5037 = vmatpush1.msra.mxu0 %v1889
    %5038 = vmatprep.subr.mxu0 %v1892
    %5039 = vmatpush1.msra.mxu0 %v1891
    %5040 = vmatprep.subr.mxu0 %v1894
    %5041 = vmatpush1.msra.mxu0 %v1893
    %5042 = vmatprep.subr.mxu0 %v1896
    %5043 = vmatpush1.msra.mxu0 %v1895
    %5044 = vmatprep.subr.mxu0 %v1898
    %5045 = vmatpush1.msra.mxu0 %v1897
    %5046 = vmatprep.subr.mxu0 %v1900
    %5047 = vmatpush1.msra.mxu0 %v1899
    %5048 = vmatprep.subr.mxu0 %v1902
    %5049 = vmatpush1.msra.mxu0 %v1901
    %5050 = vmatprep.subr.mxu0 %v1904
    %5051 = vmatpush1.msra.mxu0 %v1903
    %5052 = vmatprep.subr.mxu0 %v1906
    %5053 = vmatpush1.msra.mxu0 %v1905
    %5054 = vmatprep.subr.mxu0 %v1908
    %5055 = vmatpush1.msra.mxu0 %v1907
    %5056 = vmatprep.subr.mxu0 %v1910
    %5057 = vmatpush1.msra.mxu0 %v1909
    %5058 = vmatprep.subr.mxu0 %v1912
    %5059 = vmatpush1.msra.mxu0 %v1911
    %5060 = vmatprep.subr.mxu0 %v1914
    %5061 = vmatpush1.msra.mxu0 %v1913
    %5062 = vmatprep.subr.mxu0 %v1916
    %5063 = vmatpush1.msra.mxu0 %v1915
    %5064 = vmatprep.subr.mxu0 %v1918
    %5065 = vmatpush1.msra.mxu0 %v1917
    %5066 = vmatprep.subr.mxu0 %v1920
    %5067 = vmatpush1.msra.mxu0 %v1919
    %5068 = vmatprep.subr.mxu0 0.0
    %5069 = vmatpush1.msra.mxu0 0.0
    %5070 = vmatprep.subr.mxu0 0.0
    %5071 = vmatpush1.msra.mxu0 0.0
    %5072 = vmatprep.subr.mxu0 0.0
    %5073 = vmatpush1.msra.mxu0 0.0
    %5074 = vmatprep.subr.mxu0 0.0
    %5075 = vmatpush1.msra.mxu0 0.0
    %5076 = vmatprep.mubr.f32.mxu0 %v5010
    %5077 = vmatmul.mubr.f32.gmra.mrb[0].mxu0 %v5007
    %v5078 = vpop.f32.mrb[0].mxu0
    %v5079 = vadd.f32 0.0, %v5078
    %v5080 = vpop.f32.mrb[0].mxu0
    %v5081 = vadd.f32 0.0, %v5080
    %5082 = vdwg.mxu0
    %v5083 = vsub.f32 %v5007, %v5079
    %v5084 = vsub.f32 %v5008, %v5081
    %v5085 = vmul.f32 %v5083, %v5083
    %v5086 = vmul.f32 %v5084, %v5084
    %v5088 = vsel %vm1069, %v5086, 0
    %5090 = vmatprep.subr.mxu0 %v1866
    %5091 = vmatpush1.msra.mxu0 %v1865
    %5092 = vmatprep.subr.mxu0 %v1868
    %5093 = vmatpush1.msra.mxu0 %v1867
    %5094 = vmatprep.subr.mxu0 %v1870
    %5095 = vmatpush1.msra.mxu0 %v1869
    %5096 = vmatprep.subr.mxu0 %v1872
    %5097 = vmatpush1.msra.mxu0 %v1871
    %5098 = vmatprep.subr.mxu0 %v1874
    %5099 = vmatpush1.msra.mxu0 %v1873
    %5100 = vmatprep.subr.mxu0 %v1876
    %5101 = vmatpush1.msra.mxu0 %v1875
    %5102 = vmatprep.subr.mxu0 %v1878
    %5103 = vmatpush1.msra.mxu0 %v1877
    %5104 = vmatprep.subr.mxu0 %v1880
    %5105 = vmatpush1.msra.mxu0 %v1879
    %5106 = vmatprep.subr.mxu0 %v1882
    %5107 = vmatpush1.msra.mxu0 %v1881
    %5108 = vmatprep.subr.mxu0 %v1884
    %5109 = vmatpush1.msra.mxu0 %v1883
    %5110 = vmatprep.subr.mxu0 %v1886
    %5111 = vmatpush1.msra.mxu0 %v1885
    %5112 = vmatprep.subr.mxu0 %v1888
    %5113 = vmatpush1.msra.mxu0 %v1887
    %5114 = vmatprep.subr.mxu0 %v1890
    %5115 = vmatpush1.msra.mxu0 %v1889
    %5116 = vmatprep.subr.mxu0 %v1892
    %5117 = vmatpush1.msra.mxu0 %v1891
    %5118 = vmatprep.subr.mxu0 %v1894
    %5119 = vmatpush1.msra.mxu0 %v1893
    %5120 = vmatprep.subr.mxu0 %v1896
    %5121 = vmatpush1.msra.mxu0 %v1895
    %5122 = vmatprep.subr.mxu0 %v1898
    %5123 = vmatpush1.msra.mxu0 %v1897
    %5124 = vmatprep.subr.mxu0 %v1900
    %5125 = vmatpush1.msra.mxu0 %v1899
    %5126 = vmatprep.subr.mxu0 %v1902
    %5127 = vmatpush1.msra.mxu0 %v1901
    %5128 = vmatprep.subr.mxu0 %v1904
    %5129 = vmatpush1.msra.mxu0 %v1903
    %5130 = vmatprep.subr.mxu0 %v1906
    %5131 = vmatpush1.msra.mxu0 %v1905
    %5132 = vmatprep.subr.mxu0 %v1908
    %5133 = vmatpush1.msra.mxu0 %v1907
    %5134 = vmatprep.subr.mxu0 %v1910
    %5135 = vmatpush1.msra.mxu0 %v1909
    %5136 = vmatprep.subr.mxu0 %v1912
    %5137 = vmatpush1.msra.mxu0 %v1911
    %5138 = vmatprep.subr.mxu0 %v1914
    %5139 = vmatpush1.msra.mxu0 %v1913
    %5140 = vmatprep.subr.mxu0 %v1916
    %5141 = vmatpush1.msra.mxu0 %v1915
    %5142 = vmatprep.subr.mxu0 %v1918
    %5143 = vmatpush1.msra.mxu0 %v1917
    %5144 = vmatprep.subr.mxu0 %v1920
    %5145 = vmatpush1.msra.mxu0 %v1919
    %5146 = vmatprep.subr.mxu0 0.0
    %5147 = vmatpush1.msra.mxu0 0.0
    %5148 = vmatprep.subr.mxu0 0.0
    %5149 = vmatpush1.msra.mxu0 0.0
    %5150 = vmatprep.subr.mxu0 0.0
    %5151 = vmatpush1.msra.mxu0 0.0
    %5152 = vmatprep.subr.mxu0 0.0
    %5153 = vmatpush1.msra.mxu0 0.0
    %5154 = vmatprep.mubr.f32.mxu0 %v5088
    %5155 = vmatmul.mubr.f32.gmra.mrb[0].mxu0 %v5085
    %v5156 = vpop.f32.mrb[0].mxu0
    %v5157 = vadd.f32 1e-05, %v5156
    %v5158 = vpop.f32.mrb[0].mxu0
    %v5159 = vadd.f32 1e-05, %v5158
    %5160 = vdwg.mxu0
    %v5161 = vrsqrt.pop %v5157
    %v5162 = vrsqrt.pop %v5159
    %v5163 = vmul.f32 %v5083, %v5161
    %v5164 = vmul.f32 %v5084, %v5162
    %s5165 = scalar_lea.vmem %s17, 2
    %v5166 = vld [vmem:[%s5165] sm:$0x3]
    %v5168 = vlaneseq
    %v5169 = vshrl.u32 %v5168, 7
    %v5170 = vsub.s32 0, %v5169
    %v5171 = vrot.slane %v5166, %v5170
    %v5172 = vlaneseq
    %v5173 = vshrl.u32 %v5172, 7
    %v5174 = vsub.s32 1, %v5173
    %v5175 = vrot.slane %v5166, %v5174
    %v5178 = vmul.f32 %v5163, %v5171
    %v5179 = vmul.f32 %v5164, %v5175
    %s5180 = scalar_lea.vmem [#allocation15], 2
    %v5181 = vld [vmem:[%s5180] sm:$0x3]
    %v5183 = vlaneseq
    %v5184 = vshrl.u32 %v5183, 7
    %v5185 = vsub.s32 0, %v5184
    %v5186 = vrot.slane %v5181, %v5185
    %v5187 = vlaneseq
    %v5188 = vshrl.u32 %v5187, 7
    %v5189 = vsub.s32 1, %v5188
    %v5190 = vrot.slane %v5181, %v5189
    %v5193 = vadd.f32 %v5178, %v5186
    %v5194 = vadd.f32 %v5179, %v5190
    %v5195 = vpack.c.bf16 %v5193, %v5193
    %v5196 = vpack.c.bf16 %v5194, %v5194
    %v5198 = vsel %vm1069, %v5196, 0
    %5200 = vmatprep.subr.bf16.mxu0 %v2220
    %5201 = vmatpush1.bf16.msra.mxu0 %v2219
    %5202 = vmatprep.subr.bf16.mxu0 %v2222
    %5203 = vmatpush1.bf16.msra.mxu0 %v2221
    %5204 = vmatprep.subr.bf16.mxu0 %v2224
    %5205 = vmatpush1.bf16.msra.mxu0 %v2223
    %5206 = vmatprep.subr.bf16.mxu0 %v2226
    %5207 = vmatpush1.bf16.msra.mxu0 %v2225
    %5208 = vmatprep.subr.bf16.mxu0 %v2228
    %5209 = vmatpush1.bf16.msra.mxu0 %v2227
    %5210 = vmatprep.subr.bf16.mxu0 %v2230
    %5211 = vmatpush1.bf16.msra.mxu0 %v2229
    %5212 = vmatprep.subr.bf16.mxu0 %v2232
    %5213 = vmatpush1.bf16.msra.mxu0 %v2231
    %5214 = vmatprep.subr.bf16.mxu0 %v2234
    %5215 = vmatpush1.bf16.msra.mxu0 %v2233
    %5216 = vmatprep.subr.bf16.mxu0 %v2236
    %5217 = vmatpush1.bf16.msra.mxu0 %v2235
    %5218 = vmatprep.subr.bf16.mxu0 %v2238
    %5219 = vmatpush1.bf16.msra.mxu0 %v2237
    %5220 = vmatprep.subr.bf16.mxu0 %v2240
    %5221 = vmatpush1.bf16.msra.mxu0 %v2239
    %5222 = vmatprep.subr.bf16.mxu0 %v2242
    %5223 = vmatpush1.bf16.msra.mxu0 %v2241
    %5224 = vmatprep.subr.bf16.mxu0 %v2244
    %5225 = vmatpush1.bf16.msra.mxu0 %v2243
    %5226 = vmatprep.subr.bf16.mxu0 %v2246
    %5227 = vmatpush1.bf16.msra.mxu0 %v2245
    %5228 = vmatprep.subr.bf16.mxu0 0
    %5229 = vmatpush1.bf16.msra.mxu0 0
    %5230 = vmatprep.subr.bf16.mxu0 0
    %5231 = vmatpush1.bf16.msra.mxu0 0
    %5232 = vmatprep.mubr.bf16.mxu0 %v5198
    %5233 = vmatmul.mubr.bf16.gmra.mrb[0].mxu0 %v5195
    %v5234 = vpop.f32.mrb[0].mxu0
    %v5235 = vadd.f32 0.0, %v5234
    %v5236 = vpop.f32.mrb[0].mxu0
    %v5237 = vadd.f32 0.0, %v5236
    %v5238 = vpop.f32.mrb[0].mxu0
    %v5239 = vpop.f32.mrb[0].mxu0
    %5240 = vdwg.mxu0
    %v5241 = vmul.f32 %v5235, %v5235
    %v5242 = vmul.f32 %v5237, %v5237
    %v5243 = vadd.f32 %v5241, %v5242
    %5244 = vmatprep.subr.mxu0 0.0
    %5245 = vmatpush1.msra.mxu0 %v2322
    %5246 = vmatprep.subr.mxu0 0.0
    %5247 = vmatpush1.msra.mxu0 %v2323
    %5248 = vmatprep.subr.mxu0 0.0
    %5249 = vmatpush1.msra.mxu0 %v2324
    %5250 = vmatprep.subr.mxu0 0.0
    %5251 = vmatpush1.msra.mxu0 %v2325
    %5252 = vmatprep.subr.mxu0 0.0
    %5253 = vmatpush1.msra.mxu0 %v2326
    %5254 = vmatprep.subr.mxu0 0.0
    %5255 = vmatpush1.msra.mxu0 %v2327
    %5256 = vmatprep.subr.mxu0 0.0
    %5257 = vmatpush1.msra.mxu0 %v2328
    %5258 = vmatprep.subr.mxu0 0.0
    %5259 = vmatpush1.msra.mxu0 %v2329
    %5260 = vmatprep.subr.mxu0 0.0
    %5261 = vmatpush1.msra.mxu0 %v2330
    %5262 = vmatprep.subr.mxu0 0.0
    %5263 = vmatpush1.msra.mxu0 %v2331
    %5264 = vmatprep.subr.mxu0 0.0
    %5265 = vmatpush1.msra.mxu0 %v2332
    %5266 = vmatprep.subr.mxu0 0.0
    %5267 = vmatpush1.msra.mxu0 %v2333
    %5268 = vmatprep.subr.mxu0 0.0
    %5269 = vmatpush1.msra.mxu0 %v2334
    %5270 = vmatprep.subr.mxu0 0.0
    %5271 = vmatpush1.msra.mxu0 %v2335
    %5272 = vmatprep.subr.mxu0 0.0
    %5273 = vmatpush1.msra.mxu0 %v2336
    %5274 = vmatprep.subr.mxu0 0.0
    %5275 = vmatpush1.msra.mxu0 %v2337
    %5276 = vmatprep.subr.mxu0 0.0
    %5277 = vmatpush1.msra.mxu0 0.0
    %5278 = vmatprep.subr.mxu0 0.0
    %5279 = vmatpush1.msra.mxu0 0.0
    %5280 = vmatprep.subr.mxu0 0.0
    %5281 = vmatpush1.msra.mxu0 0.0
    %5282 = vmatprep.subr.mxu0 0.0
    %5283 = vmatpush1.msra.mxu0 0.0
    %5284 = vmatprep.subr.mxu0 0.0
    %5285 = vmatpush1.msra.mxu0 0.0
    %5286 = vmatprep.subr.mxu0 0.0
    %5287 = vmatpush1.msra.mxu0 0.0
    %5288 = vmatprep.subr.mxu0 0.0
    %5289 = vmatpush1.msra.mxu0 0.0
    %5290 = vmatprep.subr.mxu0 0.0
    %5291 = vmatpush1.msra.mxu0 0.0
    %5292 = vmatprep.subr.mxu0 0.0
    %5293 = vmatpush1.msra.mxu0 0.0
    %5294 = vmatprep.subr.mxu0 0.0
    %5295 = vmatpush1.msra.mxu0 0.0
    %5296 = vmatprep.subr.mxu0 0.0
    %5297 = vmatpush1.msra.mxu0 0.0
    %5298 = vmatprep.subr.mxu0 0.0
    %5299 = vmatpush1.msra.mxu0 0.0
    %5300 = vmatprep.subr.mxu0 0.0
    %5301 = vmatpush1.msra.mxu0 0.0
    %5302 = vmatprep.subr.mxu0 0.0
    %5303 = vmatpush1.msra.mxu0 0.0
    %5304 = vmatprep.subr.mxu0 0.0
    %5305 = vmatpush1.msra.mxu0 0.0
    %5306 = vmatprep.subr.mxu0 0.0
    %5307 = vmatpush1.msra.mxu0 0.0
    %5308 = vmatprep.mubr.f32.mxu0 0.0
    %5309 = vmatmul.mubr.f32.gmra.mrb[0].mxu0 %v5243
    %v5310 = vpop.f32.mrb[0].mxu0
    %v5311 = vadd.f32 0.0, %v5310
    %v5312 = vpop.f32.mrb[0].mxu0
    %5313 = vdwg.mxu0
    %5315 = vset.pattern.permute.xlu0 0
    %5316 = vperm.xlu0 %5315, %v5311
    %v5317 = vpop.permute.xlu0 %5316
    %vm5319 = vcmp.le.f32.partialorder %v5317, %v5311
    %v5320 = vsel %vm5319, 1, 0
    %v5321 = vcvt.s32.f32 %v5320
    %v5322 = vadd.f32 %v5321, 0.0
    %5323 = vset.pattern.permute.xlu0 32
    %5324 = vperm.xlu0 %5323, %v5311
    %v5325 = vpop.permute.xlu0 %5324
    %vm5327 = vcmp.le.f32.partialorder %v5325, %v5311
    %v5328 = vsel %vm5327, 1, 0
    %v5329 = vcvt.s32.f32 %v5328
    %v5330 = vadd.f32 %v5322, %v5329
    %5331 = vset.pattern.permute.xlu0 64
    %5332 = vperm.xlu0 %5331, %v5311
    %v5333 = vpop.permute.xlu0 %5332
    %vm5335 = vcmp.le.f32.partialorder %v5333, %v5311
    %v5336 = vsel %vm5335, 1, 0
    %v5337 = vcvt.s32.f32 %v5336
    %v5338 = vadd.f32 %v5330, %v5337
    %5339 = vset.pattern.permute.xlu0 96
    %5340 = vperm.xlu0 %5339, %v5311
    %v5341 = vpop.permute.xlu0 %5340
    %vm5343 = vcmp.le.f32.partialorder %v5341, %v5311
    %v5344 = vsel %vm5343, 1, 0
    %v5345 = vcvt.s32.f32 %v5344
    %v5346 = vadd.f32 %v5338, %v5345
    %vm5347 = vcmp.ge.f32.partialorder %v5346, 2.0
    %v5348 = vsel %vm5347, %v5311, inf
    %5349 = vmin.xlane.f32.xlu0 %v5348
    %v5350 = vpop.xlane.xlu0 %5349
    %v5351 = vadd.f32 %v5350, 1e-06
    %s5352 = sld [smem:[#allocation3 + $0x1]]
    %v5353 = vstv %s5352
    %v5354 = vmul.f32 %v5351, %v5353
    %vm5355 = vcmp.gt.f32.partialorder %v5311, %v5354
    %v5356 = vsel %vm5355, 1, 0
    %v5357 = vcvt.s32.f32 %v5356
    %s5358 = scalar_lea.vmem [#allocation19], 1
    %v5359 = vld [vmem:[%s5358] sm:$0x1]
    %s5360 = scalar_lea.vmem [#allocation22], 1
    %v5361 = vld [vmem:[%s5360] sm:$0x1]
    %v5363 = vlaneseq
    %v5364 = vshrl.u32 %v5363, 7
    %v5365 = vsub.s32 0, %v5364
    %v5366 = vrot.slane %v5361, %v5365
    %v5368 = vmul.f32 %v5357, %v5366
    %v5370 = vlaneseq
    %v5371 = vshrl.u32 %v5370, 7
    %v5372 = vsub.s32 0, %v5371
    %v5373 = vrot.slane %v5359, %v5372
    %v5375 = vadd.f32 %v5373, %v5368
    %s5376 = scalar_lea.vmem [#allocation21], 1
    %v5377 = vld [vmem:[%s5376] sm:$0x1]
    %s5378 = scalar_lea.vmem [#allocation24], 1
    %v5379 = vld [vmem:[%s5378] sm:$0x1]
    %v5381 = vlaneseq
    %v5382 = vshrl.u32 %v5381, 7
    %v5383 = vsub.s32 0, %v5382
    %v5384 = vrot.slane %v5379, %v5383
    %v5386 = vmul.f32 %v5357, %v5384
    %v5388 = vlaneseq
    %v5389 = vshrl.u32 %v5388, 7
    %v5390 = vsub.s32 0, %v5389
    %v5391 = vrot.slane %v5377, %v5390
    %v5393 = vadd.f32 %v5391, %v5386
    %v5394 = vmul.f32 %v5235, %v5375
    %v5395 = vmul.f32 %v5237, %v5393
    %v5396 = vsub.f32 %v5394, %v5395
    %v5397 = vmul.f32 %v5235, %v5393
    %v5398 = vmul.f32 %v5237, %v5375
    %v5399 = vadd.f32 %v5397, %v5398
    %v5400 = vpack.c.bf16 %v5396, %v5396
    %v5401 = vpack.c.bf16 %v5399, %v5399
    %5402 = vmatprep.subr.bf16.mxu0 %v2621
    %5403 = vmatpush1.bf16.msra.mxu0 %v2620
    %5404 = vmatprep.subr.bf16.mxu0 %v2623
    %5405 = vmatpush1.bf16.msra.mxu0 %v2622
    %5406 = vmatprep.subr.bf16.mxu0 %v2625
    %5407 = vmatpush1.bf16.msra.mxu0 %v2624
    %5408 = vmatprep.subr.bf16.mxu0 %v2627
    %5409 = vmatpush1.bf16.msra.mxu0 %v2626
    %5410 = vmatprep.subr.bf16.mxu0 %v2629
    %5411 = vmatpush1.bf16.msra.mxu0 %v2628
    %5412 = vmatprep.subr.bf16.mxu0 %v2631
    %5413 = vmatpush1.bf16.msra.mxu0 %v2630
    %5414 = vmatprep.subr.bf16.mxu0 %v2633
    %5415 = vmatpush1.bf16.msra.mxu0 %v2632
    %5416 = vmatprep.subr.bf16.mxu0 %v2635
    %5417 = vmatpush1.bf16.msra.mxu0 %v2634
    %5418 = vmatprep.subr.bf16.mxu0 %v2637
    %5419 = vmatpush1.bf16.msra.mxu0 %v2636
    %5420 = vmatprep.subr.bf16.mxu0 %v2639
    %5421 = vmatpush1.bf16.msra.mxu0 %v2638
    %5422 = vmatprep.subr.bf16.mxu0 %v2641
    %5423 = vmatpush1.bf16.msra.mxu0 %v2640
    %5424 = vmatprep.subr.bf16.mxu0 %v2643
    %5425 = vmatpush1.bf16.msra.mxu0 %v2642
    %5426 = vmatprep.subr.bf16.mxu0 %v2645
    %5427 = vmatpush1.bf16.msra.mxu0 %v2644
    %5428 = vmatprep.subr.bf16.mxu0 %v2647
    %5429 = vmatpush1.bf16.msra.mxu0 %v2646
    %5430 = vmatprep.subr.bf16.mxu0 %v2649
    %5431 = vmatpush1.bf16.msra.mxu0 %v2648
    %5432 = vmatprep.subr.bf16.mxu0 %v2651
    %5433 = vmatpush1.bf16.msra.mxu0 %v2650
    %5434 = vmatprep.mubr.bf16.mxu0 %v5401
    %5435 = vmatmul.mubr.bf16.gmra.mrb[0].mxu0 %v5400
    %v5436 = vpop.f32.mrb[0].mxu0
    %v5437 = vadd.f32 0.0, %v5436
    %v5438 = vpop.f32.mrb[0].mxu0
    %v5439 = vadd.f32 0.0, %v5438
    %v5440 = vpop.f32.mrb[0].mxu0
    %v5441 = vpop.f32.mrb[0].mxu0
    %5442 = vdwg.mxu0
    %v5444 = vsel %vm1069, %v5439, 0
    %5446 = vmatprep.subr.mxu0 %v1866
    %5447 = vmatpush1.msra.mxu0 %v1865
    %5448 = vmatprep.subr.mxu0 %v1868
    %5449 = vmatpush1.msra.mxu0 %v1867
    %5450 = vmatprep.subr.mxu0 %v1870
    %5451 = vmatpush1.msra.mxu0 %v1869
    %5452 = vmatprep.subr.mxu0 %v1872
    %5453 = vmatpush1.msra.mxu0 %v1871
    %5454 = vmatprep.subr.mxu0 %v1874
    %5455 = vmatpush1.msra.mxu0 %v1873
    %5456 = vmatprep.subr.mxu0 %v1876
    %5457 = vmatpush1.msra.mxu0 %v1875
    %5458 = vmatprep.subr.mxu0 %v1878
    %5459 = vmatpush1.msra.mxu0 %v1877
    %5460 = vmatprep.subr.mxu0 %v1880
    %5461 = vmatpush1.msra.mxu0 %v1879
    %5462 = vmatprep.subr.mxu0 %v1882
    %5463 = vmatpush1.msra.mxu0 %v1881
    %5464 = vmatprep.subr.mxu0 %v1884
    %5465 = vmatpush1.msra.mxu0 %v1883
    %5466 = vmatprep.subr.mxu0 %v1886
    %5467 = vmatpush1.msra.mxu0 %v1885
    %5468 = vmatprep.subr.mxu0 %v1888
    %5469 = vmatpush1.msra.mxu0 %v1887
    %5470 = vmatprep.subr.mxu0 %v1890
    %5471 = vmatpush1.msra.mxu0 %v1889
    %5472 = vmatprep.subr.mxu0 %v1892
    %5473 = vmatpush1.msra.mxu0 %v1891
    %5474 = vmatprep.subr.mxu0 %v1894
    %5475 = vmatpush1.msra.mxu0 %v1893
    %5476 = vmatprep.subr.mxu0 %v1896
    %5477 = vmatpush1.msra.mxu0 %v1895
    %5478 = vmatprep.subr.mxu0 %v1898
    %5479 = vmatpush1.msra.mxu0 %v1897
    %5480 = vmatprep.subr.mxu0 %v1900
    %5481 = vmatpush1.msra.mxu0 %v1899
    %5482 = vmatprep.subr.mxu0 %v1902
    %5483 = vmatpush1.msra.mxu0 %v1901
    %5484 = vmatprep.subr.mxu0 %v1904
    %5485 = vmatpush1.msra.mxu0 %v1903
    %5486 = vmatprep.subr.mxu0 %v1906
    %5487 = vmatpush1.msra.mxu0 %v1905
    %5488 = vmatprep.subr.mxu0 %v1908
    %5489 = vmatpush1.msra.mxu0 %v1907
    %5490 = vmatprep.subr.mxu0 %v1910
    %5491 = vmatpush1.msra.mxu0 %v1909
    %5492 = vmatprep.subr.mxu0 %v1912
    %5493 = vmatpush1.msra.mxu0 %v1911
    %5494 = vmatprep.subr.mxu0 %v1914
    %5495 = vmatpush1.msra.mxu0 %v1913
    %5496 = vmatprep.subr.mxu0 %v1916
    %5497 = vmatpush1.msra.mxu0 %v1915
    %5498 = vmatprep.subr.mxu0 %v1918
    %5499 = vmatpush1.msra.mxu0 %v1917
    %5500 = vmatprep.subr.mxu0 %v1920
    %5501 = vmatpush1.msra.mxu0 %v1919
    %5502 = vmatprep.subr.mxu0 0.0
    %5503 = vmatpush1.msra.mxu0 0.0
    %5504 = vmatprep.subr.mxu0 0.0
    %5505 = vmatpush1.msra.mxu0 0.0
    %5506 = vmatprep.subr.mxu0 0.0
    %5507 = vmatpush1.msra.mxu0 0.0
    %5508 = vmatprep.subr.mxu0 0.0
    %5509 = vmatpush1.msra.mxu0 0.0
    %5510 = vmatprep.mubr.f32.mxu0 %v5444
    %5511 = vmatmul.mubr.f32.gmra.mrb[0].mxu0 %v5437
    %v5512 = vpop.f32.mrb[0].mxu0
    %v5513 = vadd.f32 0.0, %v5512
    %v5514 = vpop.f32.mrb[0].mxu0
    %v5515 = vadd.f32 0.0, %v5514
    %5516 = vdwg.mxu0
    %v5517 = vsub.f32 %v5437, %v5513
    %v5518 = vsub.f32 %v5439, %v5515
    %v5519 = vmul.f32 %v5517, %v5517
    %v5520 = vmul.f32 %v5518, %v5518
    %v5522 = vsel %vm1069, %v5520, 0
    %5524 = vmatprep.subr.mxu0 %v1866
    %5525 = vmatpush1.msra.mxu0 %v1865
    %5526 = vmatprep.subr.mxu0 %v1868
    %5527 = vmatpush1.msra.mxu0 %v1867
    %5528 = vmatprep.subr.mxu0 %v1870
    %5529 = vmatpush1.msra.mxu0 %v1869
    %5530 = vmatprep.subr.mxu0 %v1872
    %5531 = vmatpush1.msra.mxu0 %v1871
    %5532 = vmatprep.subr.mxu0 %v1874
    %5533 = vmatpush1.msra.mxu0 %v1873
    %5534 = vmatprep.subr.mxu0 %v1876
    %5535 = vmatpush1.msra.mxu0 %v1875
    %5536 = vmatprep.subr.mxu0 %v1878
    %5537 = vmatpush1.msra.mxu0 %v1877
    %5538 = vmatprep.subr.mxu0 %v1880
    %5539 = vmatpush1.msra.mxu0 %v1879
    %5540 = vmatprep.subr.mxu0 %v1882
    %5541 = vmatpush1.msra.mxu0 %v1881
    %5542 = vmatprep.subr.mxu0 %v1884
    %5543 = vmatpush1.msra.mxu0 %v1883
    %5544 = vmatprep.subr.mxu0 %v1886
    %5545 = vmatpush1.msra.mxu0 %v1885
    %5546 = vmatprep.subr.mxu0 %v1888
    %5547 = vmatpush1.msra.mxu0 %v1887
    %5548 = vmatprep.subr.mxu0 %v1890
    %5549 = vmatpush1.msra.mxu0 %v1889
    %5550 = vmatprep.subr.mxu0 %v1892
    %5551 = vmatpush1.msra.mxu0 %v1891
    %5552 = vmatprep.subr.mxu0 %v1894
    %5553 = vmatpush1.msra.mxu0 %v1893
    %5554 = vmatprep.subr.mxu0 %v1896
    %5555 = vmatpush1.msra.mxu0 %v1895
    %5556 = vmatprep.subr.mxu0 %v1898
    %5557 = vmatpush1.msra.mxu0 %v1897
    %5558 = vmatprep.subr.mxu0 %v1900
    %5559 = vmatpush1.msra.mxu0 %v1899
    %5560 = vmatprep.subr.mxu0 %v1902
    %5561 = vmatpush1.msra.mxu0 %v1901
    %5562 = vmatprep.subr.mxu0 %v1904
    %5563 = vmatpush1.msra.mxu0 %v1903
    %5564 = vmatprep.subr.mxu0 %v1906
    %5565 = vmatpush1.msra.mxu0 %v1905
    %5566 = vmatprep.subr.mxu0 %v1908
    %5567 = vmatpush1.msra.mxu0 %v1907
    %5568 = vmatprep.subr.mxu0 %v1910
    %5569 = vmatpush1.msra.mxu0 %v1909
    %5570 = vmatprep.subr.mxu0 %v1912
    %5571 = vmatpush1.msra.mxu0 %v1911
    %5572 = vmatprep.subr.mxu0 %v1914
    %5573 = vmatpush1.msra.mxu0 %v1913
    %5574 = vmatprep.subr.mxu0 %v1916
    %5575 = vmatpush1.msra.mxu0 %v1915
    %5576 = vmatprep.subr.mxu0 %v1918
    %5577 = vmatpush1.msra.mxu0 %v1917
    %5578 = vmatprep.subr.mxu0 %v1920
    %5579 = vmatpush1.msra.mxu0 %v1919
    %5580 = vmatprep.subr.mxu0 0.0
    %5581 = vmatpush1.msra.mxu0 0.0
    %5582 = vmatprep.subr.mxu0 0.0
    %5583 = vmatpush1.msra.mxu0 0.0
    %5584 = vmatprep.subr.mxu0 0.0
    %5585 = vmatpush1.msra.mxu0 0.0
    %5586 = vmatprep.subr.mxu0 0.0
    %5587 = vmatpush1.msra.mxu0 0.0
    %5588 = vmatprep.mubr.f32.mxu0 %v5522
    %5589 = vmatmul.mubr.f32.gmra.mrb[0].mxu0 %v5519
    %v5590 = vpop.f32.mrb[0].mxu0
    %v5591 = vadd.f32 1e-05, %v5590
    %v5592 = vpop.f32.mrb[0].mxu0
    %v5593 = vadd.f32 1e-05, %v5592
    %5594 = vdwg.mxu0
    %v5595 = vrsqrt.pop %v5591
    %v5596 = vrsqrt.pop %v5593
    %v5597 = vmul.f32 %v5517, %v5595
    %v5598 = vmul.f32 %v5518, %v5596
    %s5599 = scalar_lea.vmem [#allocation16], 2
    %v5600 = vld [vmem:[%s5599] sm:$0x3]
    %v5602 = vlaneseq
    %v5603 = vshrl.u32 %v5602, 7
    %v5604 = vsub.s32 0, %v5603
    %v5605 = vrot.slane %v5600, %v5604
    %v5606 = vlaneseq
    %v5607 = vshrl.u32 %v5606, 7
    %v5608 = vsub.s32 1, %v5607
    %v5609 = vrot.slane %v5600, %v5608
    %v5612 = vmul.f32 %v5597, %v5605
    %v5613 = vmul.f32 %v5598, %v5609
    %s5614 = scalar_lea.vmem [#allocation18], 2
    %v5615 = vld [vmem:[%s5614] sm:$0x3]
    %v5617 = vlaneseq
    %v5618 = vshrl.u32 %v5617, 7
    %v5619 = vsub.s32 0, %v5618
    %v5620 = vrot.slane %v5615, %v5619
    %v5621 = vlaneseq
    %v5622 = vshrl.u32 %v5621, 7
    %v5623 = vsub.s32 1, %v5622
    %v5624 = vrot.slane %v5615, %v5623
    %v5627 = vadd.f32 %v5612, %v5620
    %v5628 = vadd.f32 %v5613, %v5624
    %v5629 = vpack.c.bf16 %v5627, %v5627
    %v5630 = vpack.c.bf16 %v5628, %v5628
    %s5631 = scalar_lea.vmem %s33, 672
    %v5632 = vld [vmem:[%s5631] sm:$0xff]
    %v5633 = vld [vmem:[%s5631 + $0x8] sm:$0xff]
    %v5634 = vld [vmem:[%s5631 + $0x10] sm:$0xff]
    %v5635 = vld [vmem:[%s5631 + $0x18] sm:$0xff]
    %v5636 = vld [vmem:[%s5631 + $0x20] sm:$0xff]
    %v5637 = vld [vmem:[%s5631 + $0x28] sm:$0xff]
    %v5638 = vld [vmem:[%s5631 + $0x30] sm:$0xff]
    %v5639 = vld [vmem:[%s5631 + $0x38] sm:$0xff]
    %v5640 = vld [vmem:[%s5631 + $0x40] sm:$0xff]
    %v5641 = vld [vmem:[%s5631 + $0x48] sm:$0xff]
    %v5642 = vld [vmem:[%s5631 + $0x50] sm:$0xff]
    %v5643 = vld [vmem:[%s5631 + $0x58] sm:$0xff]
    %v5644 = vld [vmem:[%s5631 + $0x60] sm:$0xff]
    %v5645 = vld [vmem:[%s5631 + $0x68] sm:$0xff]
    %v5646 = vld [vmem:[%s5631 + $0x70] sm:$0xff]
    %v5647 = vld [vmem:[%s5631 + $0x78] sm:$0xff]
    %v5648 = vld [vmem:[%s5631 + $0x80] sm:$0xff]
    %v5649 = vld [vmem:[%s5631 + $0x88] sm:$0xff]
    %v5650 = vld [vmem:[%s5631 + $0x90] sm:$0xff]
    %v5651 = vld [vmem:[%s5631 + $0x98] sm:$0xff]
    %v5652 = vld [vmem:[%s5631 + $0xa0] sm:$0xff]
    %v5653 = vld [vmem:[%s5631 + $0xa8] sm:$0xff]
    %v5654 = vld [vmem:[%s5631 + $0xb0] sm:$0xff]
    %v5655 = vld [vmem:[%s5631 + $0xb8] sm:$0xff]
    %v5656 = vld [vmem:[%s5631 + $0xc0] sm:$0xff]
    %v5657 = vld [vmem:[%s5631 + $0xc8] sm:$0xff]
    %v5658 = vld [vmem:[%s5631 + $0xd0] sm:$0xff]
    %v5659 = vld [vmem:[%s5631 + $0xd8] sm:$0xff]
    %v5660 = vld [vmem:[%s5631 + $0xe0] sm:$0xff]
    %v5661 = vld [vmem:[%s5631 + $0xe8] sm:$0xff]
    %v5662 = vld [vmem:[%s5631 + $0xf0] sm:$0xff]
    %v5663 = vld [vmem:[%s5631 + $0xf8] sm:$0xff]
    %v5664 = vld [vmem:[%s5631 + $0x100] sm:$0xff]
    %v5665 = vld [vmem:[%s5631 + $0x108] sm:$0xff]
    %v5666 = vld [vmem:[%s5631 + $0x110] sm:$0xff]
    %v5667 = vld [vmem:[%s5631 + $0x118] sm:$0xff]
    %v5668 = vld [vmem:[%s5631 + $0x120] sm:$0xff]
    %v5669 = vld [vmem:[%s5631 + $0x128] sm:$0xff]
    %v5670 = vld [vmem:[%s5631 + $0x130] sm:$0xff]
    %v5671 = vld [vmem:[%s5631 + $0x138] sm:$0xff]
    %v5672 = vld [vmem:[%s5631 + $0x140] sm:$0xff]
    %v5673 = vld [vmem:[%s5631 + $0x148] sm:$0xff]
    %v5674 = vld [vmem:[%s5631 + $0x150] sm:$0xff]
    %v5675 = vld [vmem:[%s5631 + $0x158] sm:$0xff]
    %v5676 = vld [vmem:[%s5631 + $0x160] sm:$0xff]
    %v5677 = vld [vmem:[%s5631 + $0x168] sm:$0xff]
    %v5678 = vld [vmem:[%s5631 + $0x170] sm:$0xff]
    %v5679 = vld [vmem:[%s5631 + $0x178] sm:$0xff]
    %v5680 = vld [vmem:[%s5631 + $0x180] sm:$0xff]
    %v5681 = vld [vmem:[%s5631 + $0x188] sm:$0xff]
    %v5682 = vld [vmem:[%s5631 + $0x190] sm:$0xff]
    %v5683 = vld [vmem:[%s5631 + $0x198] sm:$0xff]
    %v5684 = vld [vmem:[%s5631 + $0x1a0] sm:$0xff]
    %v5685 = vld [vmem:[%s5631 + $0x1a8] sm:$0xff]
    %v5686 = vld [vmem:[%s5631 + $0x1b0] sm:$0xff]
    %v5687 = vld [vmem:[%s5631 + $0x1b8] sm:$0xff]
    %v5688 = vld [vmem:[%s5631 + $0x1c0] sm:$0xff]
    %v5689 = vld [vmem:[%s5631 + $0x1c8] sm:$0xff]
    %v5690 = vld [vmem:[%s5631 + $0x1d0] sm:$0xff]
    %v5691 = vld [vmem:[%s5631 + $0x1d8] sm:$0xff]
    %v5692 = vld [vmem:[%s5631 + $0x1e0] sm:$0xff]
    %v5693 = vld [vmem:[%s5631 + $0x1e8] sm:$0xff]
    %v5694 = vld [vmem:[%s5631 + $0x1f0] sm:$0xff]
    %v5695 = vld [vmem:[%s5631 + $0x1f8] sm:$0xff]
    %v5696 = vld [vmem:[%s5631 + $0x200] sm:$0xff]
    %v5697 = vld [vmem:[%s5631 + $0x208] sm:$0xff]
    %v5698 = vld [vmem:[%s5631 + $0x210] sm:$0xff]
    %v5699 = vld [vmem:[%s5631 + $0x218] sm:$0xff]
    %v5700 = vld [vmem:[%s5631 + $0x220] sm:$0xff]
    %v5701 = vld [vmem:[%s5631 + $0x228] sm:$0xff]
    %v5702 = vld [vmem:[%s5631 + $0x230] sm:$0xff]
    %v5703 = vld [vmem:[%s5631 + $0x238] sm:$0xff]
    %v5704 = vld [vmem:[%s5631 + $0x240] sm:$0xff]
    %v5705 = vld [vmem:[%s5631 + $0x248] sm:$0xff]
    %v5706 = vld [vmem:[%s5631 + $0x250] sm:$0xff]
    %v5707 = vld [vmem:[%s5631 + $0x258] sm:$0xff]
    %v5708 = vld [vmem:[%s5631 + $0x260] sm:$0xff]
    %v5709 = vld [vmem:[%s5631 + $0x268] sm:$0xff]
    %v5710 = vld [vmem:[%s5631 + $0x270] sm:$0xff]
    %v5711 = vld [vmem:[%s5631 + $0x278] sm:$0xff]
    %v5712 = vld [vmem:[%s5631 + $0x280] sm:$0xff]
    %v5713 = vld [vmem:[%s5631 + $0x288] sm:$0xff]
    %v5714 = vld [vmem:[%s5631 + $0x290] sm:$0xff]
    %v5715 = vld [vmem:[%s5631 + $0x298] sm:$0xff]
    %s5716 = scalar_lea.vmem [#allocation25], 6
    %v5717 = vld [vmem:[%s5716] sm:$0x3f]
    %v5719 = vlaneseq
    %v5720 = vshrl.u32 %v5719, 7
    %v5721 = vsub.s32 0, %v5720
    %v5722 = vrot.slane %v5717, %v5721
    %v5723 = vlaneseq
    %v5724 = vshrl.u32 %v5723, 7
    %v5725 = vsub.s32 1, %v5724
    %v5726 = vrot.slane %v5717, %v5725
    %v5727 = vlaneseq
    %v5728 = vshrl.u32 %v5727, 7
    %v5729 = vsub.s32 2, %v5728
    %v5730 = vrot.slane %v5717, %v5729
    %v5731 = vlaneseq
    %v5732 = vshrl.u32 %v5731, 7
    %v5733 = vsub.s32 3, %v5732
    %v5734 = vrot.slane %v5717, %v5733
    %v5735 = vlaneseq
    %v5736 = vshrl.u32 %v5735, 7
    %v5737 = vsub.s32 4, %v5736
    %v5738 = vrot.slane %v5717, %v5737
    %v5739 = vlaneseq
    %v5740 = vshrl.u32 %v5739, 7
    %v5741 = vsub.s32 5, %v5740
    %v5742 = vrot.slane %v5717, %v5741
    %v5833 = vunpack.c.l.b16 %v5632
    %v5834 = vunpack.c.h.b16 %v5632
    %v5835 = vunpack.c.l.b16 %v5633
    %v5836 = vunpack.c.h.b16 %v5633
    %v5837 = vunpack.c.l.b16 %v5634
    %v5838 = vunpack.c.h.b16 %v5634
    %v5839 = vunpack.c.l.b16 %v5635
    %v5840 = vunpack.c.h.b16 %v5635
    %v5841 = vunpack.c.l.b16 %v5636
    %v5842 = vunpack.c.h.b16 %v5636
    %v5843 = vunpack.c.l.b16 %v5637
    %v5844 = vunpack.c.h.b16 %v5637
    %v5845 = vunpack.c.l.b16 %v5638
    %v5846 = vunpack.c.h.b16 %v5638
    %v5847 = vunpack.c.l.b16 %v5639
    %v5848 = vunpack.c.h.b16 %v5639
    %v5849 = vunpack.c.l.b16 %v5640
    %v5850 = vunpack.c.h.b16 %v5640
    %v5851 = vunpack.c.l.b16 %v5641
    %v5852 = vunpack.c.h.b16 %v5641
    %v5853 = vunpack.c.l.b16 %v5642
    %v5854 = vunpack.c.h.b16 %v5642
    %v5855 = vunpack.c.l.b16 %v5643
    %v5856 = vunpack.c.h.b16 %v5643
    %v5857 = vunpack.c.l.b16 %v5644
    %v5858 = vunpack.c.h.b16 %v5644
    %v5859 = vunpack.c.l.b16 %v5645
    %v5860 = vunpack.c.h.b16 %v5645
    %v5861 = vunpack.c.l.b16 %v5646
    %v5862 = vunpack.c.h.b16 %v5646
    %v5863 = vunpack.c.l.b16 %v5647
    %v5864 = vunpack.c.h.b16 %v5647
    %v5865 = vunpack.c.l.b16 %v5648
    %v5866 = vunpack.c.h.b16 %v5648
    %v5867 = vunpack.c.l.b16 %v5649
    %v5868 = vunpack.c.h.b16 %v5649
    %v5869 = vunpack.c.l.b16 %v5650
    %v5870 = vunpack.c.h.b16 %v5650
    %v5871 = vunpack.c.l.b16 %v5651
    %v5872 = vunpack.c.h.b16 %v5651
    %v5873 = vunpack.c.l.b16 %v5652
    %v5874 = vunpack.c.h.b16 %v5652
    %v5875 = vunpack.c.l.b16 %v5653
    %v5876 = vunpack.c.h.b16 %v5653
    %v5877 = vunpack.c.l.b16 %v5654
    %v5878 = vunpack.c.h.b16 %v5654
    %v5879 = vunpack.c.l.b16 %v5655
    %v5880 = vunpack.c.h.b16 %v5655
    %v5881 = vunpack.c.l.b16 %v5656
    %v5882 = vunpack.c.h.b16 %v5656
    %v5883 = vunpack.c.l.b16 %v5657
    %v5884 = vunpack.c.h.b16 %v5657
    %v5885 = vunpack.c.l.b16 %v5658
    %v5886 = vunpack.c.h.b16 %v5658
    %v5887 = vunpack.c.l.b16 %v5659
    %v5888 = vunpack.c.h.b16 %v5659
    %v5889 = vunpack.c.l.b16 %v5660
    %v5890 = vunpack.c.h.b16 %v5660
    %v5891 = vunpack.c.l.b16 %v5661
    %v5892 = vunpack.c.h.b16 %v5661
    %v5893 = vunpack.c.l.b16 %v5662
    %v5894 = vunpack.c.h.b16 %v5662
    %v5895 = vunpack.c.l.b16 %v5663
    %v5896 = vunpack.c.h.b16 %v5663
    %v5897 = vunpack.c.l.b16 %v5664
    %v5898 = vunpack.c.h.b16 %v5664
    %v5899 = vunpack.c.l.b16 %v5665
    %v5900 = vunpack.c.h.b16 %v5665
    %v5901 = vunpack.c.l.b16 %v5666
    %v5902 = vunpack.c.h.b16 %v5666
    %v5903 = vunpack.c.l.b16 %v5667
    %v5904 = vunpack.c.h.b16 %v5667
    %v5905 = vunpack.c.l.b16 %v5668
    %v5906 = vunpack.c.h.b16 %v5668
    %v5907 = vunpack.c.l.b16 %v5669
    %v5908 = vunpack.c.h.b16 %v5669
    %v5909 = vunpack.c.l.b16 %v5670
    %v5910 = vunpack.c.h.b16 %v5670
    %v5911 = vunpack.c.l.b16 %v5671
    %v5912 = vunpack.c.h.b16 %v5671
    %v5913 = vunpack.c.l.b16 %v5672
    %v5914 = vunpack.c.h.b16 %v5672
    %v5915 = vunpack.c.l.b16 %v5673
    %v5916 = vunpack.c.h.b16 %v5673
    %v5917 = vunpack.c.l.b16 %v5674
    %v5918 = vunpack.c.h.b16 %v5674
    %v5919 = vunpack.c.l.b16 %v5675
    %v5920 = vunpack.c.h.b16 %v5675
    %v5921 = vunpack.c.l.b16 %v5676
    %v5922 = vunpack.c.h.b16 %v5676
    %v5923 = vunpack.c.l.b16 %v5677
    %v5924 = vunpack.c.h.b16 %v5677
    %v5925 = vunpack.c.l.b16 %v5678
    %v5926 = vunpack.c.h.b16 %v5678
    %v5927 = vunpack.c.l.b16 %v5679
    %v5928 = vunpack.c.h.b16 %v5679
    %v5929 = vunpack.c.l.b16 %v5680
    %v5930 = vunpack.c.h.b16 %v5680
    %v5931 = vunpack.c.l.b16 %v5681
    %v5932 = vunpack.c.h.b16 %v5681
    %v5933 = vunpack.c.l.b16 %v5682
    %v5934 = vunpack.c.h.b16 %v5682
    %v5935 = vunpack.c.l.b16 %v5683
    %v5936 = vunpack.c.h.b16 %v5683
    %v5937 = vunpack.c.l.b16 %v5684
    %v5938 = vunpack.c.h.b16 %v5684
    %v5939 = vunpack.c.l.b16 %v5685
    %v5940 = vunpack.c.h.b16 %v5685
    %v5941 = vunpack.c.l.b16 %v5686
    %v5942 = vunpack.c.h.b16 %v5686
    %v5943 = vunpack.c.l.b16 %v5687
    %v5944 = vunpack.c.h.b16 %v5687
    %v5945 = vunpack.c.l.b16 %v5688
    %v5946 = vunpack.c.h.b16 %v5688
    %v5947 = vunpack.c.l.b16 %v5689
    %v5948 = vunpack.c.h.b16 %v5689
    %v5949 = vunpack.c.l.b16 %v5690
    %v5950 = vunpack.c.h.b16 %v5690
    %v5951 = vunpack.c.l.b16 %v5691
    %v5952 = vunpack.c.h.b16 %v5691
    %v5953 = vunpack.c.l.b16 %v5692
    %v5954 = vunpack.c.h.b16 %v5692
    %v5955 = vunpack.c.l.b16 %v5693
    %v5956 = vunpack.c.h.b16 %v5693
    %v5957 = vunpack.c.l.b16 %v5694
    %v5958 = vunpack.c.h.b16 %v5694
    %v5959 = vunpack.c.l.b16 %v5695
    %v5960 = vunpack.c.h.b16 %v5695
    %v5961 = vunpack.c.l.b16 %v5696
    %v5962 = vunpack.c.h.b16 %v5696
    %v5963 = vunpack.c.l.b16 %v5697
    %v5964 = vunpack.c.h.b16 %v5697
    %v5965 = vunpack.c.l.b16 %v5698
    %v5966 = vunpack.c.h.b16 %v5698
    %v5967 = vunpack.c.l.b16 %v5699
    %v5968 = vunpack.c.h.b16 %v5699
    %v5969 = vunpack.c.l.b16 %v5700
    %v5970 = vunpack.c.h.b16 %v5700
    %v5971 = vunpack.c.l.b16 %v5701
    %v5972 = vunpack.c.h.b16 %v5701
    %v5973 = vunpack.c.l.b16 %v5702
    %v5974 = vunpack.c.h.b16 %v5702
    %v5975 = vunpack.c.l.b16 %v5703
    %v5976 = vunpack.c.h.b16 %v5703
    %v5977 = vunpack.c.l.b16 %v5704
    %v5978 = vunpack.c.h.b16 %v5704
    %v5979 = vunpack.c.l.b16 %v5705
    %v5980 = vunpack.c.h.b16 %v5705
    %v5981 = vunpack.c.l.b16 %v5706
    %v5982 = vunpack.c.h.b16 %v5706
    %v5983 = vunpack.c.l.b16 %v5707
    %v5984 = vunpack.c.h.b16 %v5707
    %v5985 = vunpack.c.l.b16 %v5708
    %v5986 = vunpack.c.h.b16 %v5708
    %v5987 = vunpack.c.l.b16 %v5709
    %v5988 = vunpack.c.h.b16 %v5709
    %v5989 = vunpack.c.l.b16 %v5710
    %v5990 = vunpack.c.h.b16 %v5710
    %v5991 = vunpack.c.l.b16 %v5711
    %v5992 = vunpack.c.h.b16 %v5711
    %v5993 = vunpack.c.l.b16 %v5712
    %v5994 = vunpack.c.h.b16 %v5712
    %v5995 = vunpack.c.l.b16 %v5713
    %v5996 = vunpack.c.h.b16 %v5713
    %v5997 = vunpack.c.l.b16 %v5714
    %v5998 = vunpack.c.h.b16 %v5714
    %v5999 = vunpack.c.l.b16 %v5715
    %v6000 = vunpack.c.h.b16 %v5715
    %v6001 = vpack.c.b16 %v5839, %v5833
    %v6002 = vpack.c.b16 %v5840, %v5834
    %v6003 = vpack.c.b16 %v5841, %v5835
    %v6004 = vpack.c.b16 %v5842, %v5836
    %v6005 = vpack.c.b16 %v5843, %v5837
    %v6006 = vpack.c.b16 %v5844, %v5838
    %v6007 = vpack.c.b16 %v5851, %v5845
    %v6008 = vpack.c.b16 %v5852, %v5846
    %v6009 = vpack.c.b16 %v5853, %v5847
    %v6010 = vpack.c.b16 %v5854, %v5848
    %v6011 = vpack.c.b16 %v5855, %v5849
    %v6012 = vpack.c.b16 %v5856, %v5850
    %v6013 = vpack.c.b16 %v5863, %v5857
    %v6014 = vpack.c.b16 %v5864, %v5858
    %v6015 = vpack.c.b16 %v5865, %v5859
    %v6016 = vpack.c.b16 %v5866, %v5860
    %v6017 = vpack.c.b16 %v5867, %v5861
    %v6018 = vpack.c.b16 %v5868, %v5862
    %v6019 = vpack.c.b16 %v5875, %v5869
    %v6020 = vpack.c.b16 %v5876, %v5870
    %v6021 = vpack.c.b16 %v5877, %v5871
    %v6022 = vpack.c.b16 %v5878, %v5872
    %v6023 = vpack.c.b16 %v5879, %v5873
    %v6024 = vpack.c.b16 %v5880, %v5874
    %v6025 = vpack.c.b16 %v5887, %v5881
    %v6026 = vpack.c.b16 %v5888, %v5882
    %v6027 = vpack.c.b16 %v5889, %v5883
    %v6028 = vpack.c.b16 %v5890, %v5884
    %v6029 = vpack.c.b16 %v5891, %v5885
    %v6030 = vpack.c.b16 %v5892, %v5886
    %v6031 = vpack.c.b16 %v5899, %v5893
    %v6032 = vpack.c.b16 %v5900, %v5894
    %v6033 = vpack.c.b16 %v5901, %v5895
    %v6034 = vpack.c.b16 %v5902, %v5896
    %v6035 = vpack.c.b16 %v5903, %v5897
    %v6036 = vpack.c.b16 %v5904, %v5898
    %v6037 = vpack.c.b16 %v5911, %v5905
    %v6038 = vpack.c.b16 %v5912, %v5906
    %v6039 = vpack.c.b16 %v5913, %v5907
    %v6040 = vpack.c.b16 %v5914, %v5908
    %v6041 = vpack.c.b16 %v5915, %v5909
    %v6042 = vpack.c.b16 %v5916, %v5910
    %v6043 = vpack.c.b16 %v5923, %v5917
    %v6044 = vpack.c.b16 %v5924, %v5918
    %v6045 = vpack.c.b16 %v5925, %v5919
    %v6046 = vpack.c.b16 %v5926, %v5920
    %v6047 = vpack.c.b16 %v5927, %v5921
    %v6048 = vpack.c.b16 %v5928, %v5922
    %v6049 = vpack.c.b16 %v5935, %v5929
    %v6050 = vpack.c.b16 %v5936, %v5930
    %v6051 = vpack.c.b16 %v5937, %v5931
    %v6052 = vpack.c.b16 %v5938, %v5932
    %v6053 = vpack.c.b16 %v5939, %v5933
    %v6054 = vpack.c.b16 %v5940, %v5934
    %v6055 = vpack.c.b16 %v5947, %v5941
    %v6056 = vpack.c.b16 %v5948, %v5942
    %v6057 = vpack.c.b16 %v5949, %v5943
    %v6058 = vpack.c.b16 %v5950, %v5944
    %v6059 = vpack.c.b16 %v5951, %v5945
    %v6060 = vpack.c.b16 %v5952, %v5946
    %v6061 = vpack.c.b16 %v5959, %v5953
    %v6062 = vpack.c.b16 %v5960, %v5954
    %v6063 = vpack.c.b16 %v5961, %v5955
    %v6064 = vpack.c.b16 %v5962, %v5956
    %v6065 = vpack.c.b16 %v5963, %v5957
    %v6066 = vpack.c.b16 %v5964, %v5958
    %v6067 = vpack.c.b16 %v5971, %v5965
    %v6068 = vpack.c.b16 %v5972, %v5966
    %v6069 = vpack.c.b16 %v5973, %v5967
    %v6070 = vpack.c.b16 %v5974, %v5968
    %v6071 = vpack.c.b16 %v5975, %v5969
    %v6072 = vpack.c.b16 %v5976, %v5970
    %v6073 = vpack.c.b16 %v5983, %v5977
    %v6074 = vpack.c.b16 %v5984, %v5978
    %v6075 = vpack.c.b16 %v5985, %v5979
    %v6076 = vpack.c.b16 %v5986, %v5980
    %v6077 = vpack.c.b16 %v5987, %v5981
    %v6078 = vpack.c.b16 %v5988, %v5982
    %v6079 = vpack.c.b16 %v5995, %v5989
    %v6080 = vpack.c.b16 %v5996, %v5990
    %v6081 = vpack.c.b16 %v5997, %v5991
    %v6082 = vpack.c.b16 %v5998, %v5992
    %v6083 = vpack.c.b16 %v5999, %v5993
    %v6084 = vpack.c.b16 %v6000, %v5994
    %v6170 = vsel %vm1069, %v5630, 0
    %6172 = vmatprep.subr.bf16.mxu0 %v6002
    %6173 = vmatpush1.bf16.msra.mxu0 %v6001
    %6174 = vmatprep.subr.bf16.mxu0 %v6008
    %6175 = vmatpush1.bf16.msra.mxu0 %v6007
    %6176 = vmatprep.subr.bf16.mxu0 %v6014
    %6177 = vmatpush1.bf16.msra.mxu0 %v6013
    %6178 = vmatprep.subr.bf16.mxu0 %v6020
    %6179 = vmatpush1.bf16.msra.mxu0 %v6019
    %6180 = vmatprep.subr.bf16.mxu0 %v6026
    %6181 = vmatpush1.bf16.msra.mxu0 %v6025
    %6182 = vmatprep.subr.bf16.mxu0 %v6032
    %6183 = vmatpush1.bf16.msra.mxu0 %v6031
    %6184 = vmatprep.subr.bf16.mxu0 %v6038
    %6185 = vmatpush1.bf16.msra.mxu0 %v6037
    %6186 = vmatprep.subr.bf16.mxu0 %v6044
    %6187 = vmatpush1.bf16.msra.mxu0 %v6043
    %6188 = vmatprep.subr.bf16.mxu0 %v6050
    %6189 = vmatpush1.bf16.msra.mxu0 %v6049
    %6190 = vmatprep.subr.bf16.mxu0 %v6056
    %6191 = vmatpush1.bf16.msra.mxu0 %v6055
    %6192 = vmatprep.subr.bf16.mxu0 %v6062
    %6193 = vmatpush1.bf16.msra.mxu0 %v6061
    %6194 = vmatprep.subr.bf16.mxu0 %v6068
    %6195 = vmatpush1.bf16.msra.mxu0 %v6067
    %6196 = vmatprep.subr.bf16.mxu0 %v6074
    %6197 = vmatpush1.bf16.msra.mxu0 %v6073
    %6198 = vmatprep.subr.bf16.mxu0 %v6080
    %6199 = vmatpush1.bf16.msra.mxu0 %v6079
    %6200 = vmatprep.subr.bf16.mxu0 0
    %6201 = vmatpush1.bf16.msra.mxu0 0
    %6202 = vmatprep.subr.bf16.mxu0 0
    %6203 = vmatpush1.bf16.msra.mxu0 0
    %6204 = vmatprep.mubr.bf16.mxu0 %v6170
    %6205 = vmatmul.mubr.bf16.gmra.mrb[0].mxu0 %v5629
    %v6206 = vpop.f32.mrb[0].mxu0
    %v6207 = vadd.f32 %v5722, %v6206
    %v6208 = vpop.f32.mrb[0].mxu0
    %v6209 = vadd.f32 %v5726, %v6208
    %v6210 = vpop.f32.mrb[0].mxu0
    %v6211 = vpop.f32.mrb[0].mxu0
    %6212 = vdwg.mxu0
    %6213 = vmatprep.subr.bf16.mxu0 %v6004
    %6214 = vmatpush1.bf16.msra.mxu0 %v6003
    %6215 = vmatprep.subr.bf16.mxu0 %v6010
    %6216 = vmatpush1.bf16.msra.mxu0 %v6009
    %6217 = vmatprep.subr.bf16.mxu0 %v6016
    %6218 = vmatpush1.bf16.msra.mxu0 %v6015
    %6219 = vmatprep.subr.bf16.mxu0 %v6022
    %6220 = vmatpush1.bf16.msra.mxu0 %v6021
    %6221 = vmatprep.subr.bf16.mxu0 %v6028
    %6222 = vmatpush1.bf16.msra.mxu0 %v6027
    %6223 = vmatprep.subr.bf16.mxu0 %v6034
    %6224 = vmatpush1.bf16.msra.mxu0 %v6033
    %6225 = vmatprep.subr.bf16.mxu0 %v6040
    %6226 = vmatpush1.bf16.msra.mxu0 %v6039
    %6227 = vmatprep.subr.bf16.mxu0 %v6046
    %6228 = vmatpush1.bf16.msra.mxu0 %v6045
    %6229 = vmatprep.subr.bf16.mxu0 %v6052
    %6230 = vmatpush1.bf16.msra.mxu0 %v6051
    %6231 = vmatprep.subr.bf16.mxu0 %v6058
    %6232 = vmatpush1.bf16.msra.mxu0 %v6057
    %6233 = vmatprep.subr.bf16.mxu0 %v6064
    %6234 = vmatpush1.bf16.msra.mxu0 %v6063
    %6235 = vmatprep.subr.bf16.mxu0 %v6070
    %6236 = vmatpush1.bf16.msra.mxu0 %v6069
    %6237 = vmatprep.subr.bf16.mxu0 %v6076
    %6238 = vmatpush1.bf16.msra.mxu0 %v6075
    %6239 = vmatprep.subr.bf16.mxu0 %v6082
    %6240 = vmatpush1.bf16.msra.mxu0 %v6081
    %6241 = vmatprep.subr.bf16.mxu0 0
    %6242 = vmatpush1.bf16.msra.mxu0 0
    %6243 = vmatprep.subr.bf16.mxu0 0
    %6244 = vmatpush1.bf16.msra.mxu0 0
    %6245 = vmatprep.mubr.bf16.mxu0 %v6170
    %6246 = vmatmul.mubr.bf16.gmra.mrb[0].mxu0 %v5629
    %v6247 = vpop.f32.mrb[0].mxu0
    %v6248 = vadd.f32 %v5730, %v6247
    %v6249 = vpop.f32.mrb[0].mxu0
    %v6250 = vadd.f32 %v5734, %v6249
    %v6251 = vpop.f32.mrb[0].mxu0
    %v6252 = vpop.f32.mrb[0].mxu0
    %6253 = vdwg.mxu0
    %6254 = vmatprep.subr.bf16.mxu0 %v6006
    %6255 = vmatpush1.bf16.msra.mxu0 %v6005
    %6256 = vmatprep.subr.bf16.mxu0 %v6012
    %6257 = vmatpush1.bf16.msra.mxu0 %v6011
    %6258 = vmatprep.subr.bf16.mxu0 %v6018
    %6259 = vmatpush1.bf16.msra.mxu0 %v6017
    %6260 = vmatprep.subr.bf16.mxu0 %v6024
    %6261 = vmatpush1.bf16.msra.mxu0 %v6023
    %6262 = vmatprep.subr.bf16.mxu0 %v6030
    %6263 = vmatpush1.bf16.msra.mxu0 %v6029
    %6264 = vmatprep.subr.bf16.mxu0 %v6036
    %6265 = vmatpush1.bf16.msra.mxu0 %v6035
    %6266 = vmatprep.subr.bf16.mxu0 %v6042
    %6267 = vmatpush1.bf16.msra.mxu0 %v6041
    %6268 = vmatprep.subr.bf16.mxu0 %v6048
    %6269 = vmatpush1.bf16.msra.mxu0 %v6047
    %6270 = vmatprep.subr.bf16.mxu0 %v6054
    %6271 = vmatpush1.bf16.msra.mxu0 %v6053
    %6272 = vmatprep.subr.bf16.mxu0 %v6060
    %6273 = vmatpush1.bf16.msra.mxu0 %v6059
    %6274 = vmatprep.subr.bf16.mxu0 %v6066
    %6275 = vmatpush1.bf16.msra.mxu0 %v6065
    %6276 = vmatprep.subr.bf16.mxu0 %v6072
    %6277 = vmatpush1.bf16.msra.mxu0 %v6071
    %6278 = vmatprep.subr.bf16.mxu0 %v6078
    %6279 = vmatpush1.bf16.msra.mxu0 %v6077
    %6280 = vmatprep.subr.bf16.mxu0 %v6084
    %6281 = vmatpush1.bf16.msra.mxu0 %v6083
    %6282 = vmatprep.subr.bf16.mxu0 0
    %6283 = vmatpush1.bf16.msra.mxu0 0
    %6284 = vmatprep.subr.bf16.mxu0 0
    %6285 = vmatpush1.bf16.msra.mxu0 0
    %6286 = vmatprep.mubr.bf16.mxu0 %v6170
    %6287 = vmatmul.mubr.bf16.gmra.mrb[0].mxu0 %v5629
    %v6288 = vpop.f32.mrb[0].mxu0
    %v6289 = vadd.f32 %v5738, %v6288
    %v6290 = vpop.f32.mrb[0].mxu0
    %v6291 = vadd.f32 %v5742, %v6290
    %v6292 = vpop.f32.mrb[0].mxu0
    %v6293 = vpop.f32.mrb[0].mxu0
    %6294 = vdwg.mxu0
    %s6295 = scalar_lea.vmem [#allocation27], 672
    %v6296 = vld [vmem:[%s6295] sm:$0xff]
    %v6297 = vld [vmem:[%s6295 + $0x8] sm:$0xff]
    %v6298 = vld [vmem:[%s6295 + $0x10] sm:$0xff]
    %v6299 = vld [vmem:[%s6295 + $0x18] sm:$0xff]
    %v6300 = vld [vmem:[%s6295 + $0x20] sm:$0xff]
    %v6301 = vld [vmem:[%s6295 + $0x28] sm:$0xff]
    %v6302 = vld [vmem:[%s6295 + $0x30] sm:$0xff]
    %v6303 = vld [vmem:[%s6295 + $0x38] sm:$0xff]
    %v6304 = vld [vmem:[%s6295 + $0x40] sm:$0xff]
    %v6305 = vld [vmem:[%s6295 + $0x48] sm:$0xff]
    %v6306 = vld [vmem:[%s6295 + $0x50] sm:$0xff]
    %v6307 = vld [vmem:[%s6295 + $0x58] sm:$0xff]
    %v6308 = vld [vmem:[%s6295 + $0x60] sm:$0xff]
    %v6309 = vld [vmem:[%s6295 + $0x68] sm:$0xff]
    %v6310 = vld [vmem:[%s6295 + $0x70] sm:$0xff]
    %v6311 = vld [vmem:[%s6295 + $0x78] sm:$0xff]
    %v6312 = vld [vmem:[%s6295 + $0x80] sm:$0xff]
    %v6313 = vld [vmem:[%s6295 + $0x88] sm:$0xff]
    %v6314 = vld [vmem:[%s6295 + $0x90] sm:$0xff]
    %v6315 = vld [vmem:[%s6295 + $0x98] sm:$0xff]
    %v6316 = vld [vmem:[%s6295 + $0xa0] sm:$0xff]
    %v6317 = vld [vmem:[%s6295 + $0xa8] sm:$0xff]
    %v6318 = vld [vmem:[%s6295 + $0xb0] sm:$0xff]
    %v6319 = vld [vmem:[%s6295 + $0xb8] sm:$0xff]
    %v6320 = vld [vmem:[%s6295 + $0xc0] sm:$0xff]
    %v6321 = vld [vmem:[%s6295 + $0xc8] sm:$0xff]
    %v6322 = vld [vmem:[%s6295 + $0xd0] sm:$0xff]
    %v6323 = vld [vmem:[%s6295 + $0xd8] sm:$0xff]
    %v6324 = vld [vmem:[%s6295 + $0xe0] sm:$0xff]
    %v6325 = vld [vmem:[%s6295 + $0xe8] sm:$0xff]
    %v6326 = vld [vmem:[%s6295 + $0xf0] sm:$0xff]
    %v6327 = vld [vmem:[%s6295 + $0xf8] sm:$0xff]
    %v6328 = vld [vmem:[%s6295 + $0x100] sm:$0xff]
    %v6329 = vld [vmem:[%s6295 + $0x108] sm:$0xff]
    %v6330 = vld [vmem:[%s6295 + $0x110] sm:$0xff]
    %v6331 = vld [vmem:[%s6295 + $0x118] sm:$0xff]
    %v6332 = vld [vmem:[%s6295 + $0x120] sm:$0xff]
    %v6333 = vld [vmem:[%s6295 + $0x128] sm:$0xff]
    %v6334 = vld [vmem:[%s6295 + $0x130] sm:$0xff]
    %v6335 = vld [vmem:[%s6295 + $0x138] sm:$0xff]
    %v6336 = vld [vmem:[%s6295 + $0x140] sm:$0xff]
    %v6337 = vld [vmem:[%s6295 + $0x148] sm:$0xff]
    %v6338 = vld [vmem:[%s6295 + $0x150] sm:$0xff]
    %v6339 = vld [vmem:[%s6295 + $0x158] sm:$0xff]
    %v6340 = vld [vmem:[%s6295 + $0x160] sm:$0xff]
    %v6341 = vld [vmem:[%s6295 + $0x168] sm:$0xff]
    %v6342 = vld [vmem:[%s6295 + $0x170] sm:$0xff]
    %v6343 = vld [vmem:[%s6295 + $0x178] sm:$0xff]
    %v6344 = vld [vmem:[%s6295 + $0x180] sm:$0xff]
    %v6345 = vld [vmem:[%s6295 + $0x188] sm:$0xff]
    %v6346 = vld [vmem:[%s6295 + $0x190] sm:$0xff]
    %v6347 = vld [vmem:[%s6295 + $0x198] sm:$0xff]
    %v6348 = vld [vmem:[%s6295 + $0x1a0] sm:$0xff]
    %v6349 = vld [vmem:[%s6295 + $0x1a8] sm:$0xff]
    %v6350 = vld [vmem:[%s6295 + $0x1b0] sm:$0xff]
    %v6351 = vld [vmem:[%s6295 + $0x1b8] sm:$0xff]
    %v6352 = vld [vmem:[%s6295 + $0x1c0] sm:$0xff]
    %v6353 = vld [vmem:[%s6295 + $0x1c8] sm:$0xff]
    %v6354 = vld [vmem:[%s6295 + $0x1d0] sm:$0xff]
    %v6355 = vld [vmem:[%s6295 + $0x1d8] sm:$0xff]
    %v6356 = vld [vmem:[%s6295 + $0x1e0] sm:$0xff]
    %v6357 = vld [vmem:[%s6295 + $0x1e8] sm:$0xff]
    %v6358 = vld [vmem:[%s6295 + $0x1f0] sm:$0xff]
    %v6359 = vld [vmem:[%s6295 + $0x1f8] sm:$0xff]
    %v6360 = vld [vmem:[%s6295 + $0x200] sm:$0xff]
    %v6361 = vld [vmem:[%s6295 + $0x208] sm:$0xff]
    %v6362 = vld [vmem:[%s6295 + $0x210] sm:$0xff]
    %v6363 = vld [vmem:[%s6295 + $0x218] sm:$0xff]
    %v6364 = vld [vmem:[%s6295 + $0x220] sm:$0xff]
    %v6365 = vld [vmem:[%s6295 + $0x228] sm:$0xff]
    %v6366 = vld [vmem:[%s6295 + $0x230] sm:$0xff]
    %v6367 = vld [vmem:[%s6295 + $0x238] sm:$0xff]
    %v6368 = vld [vmem:[%s6295 + $0x240] sm:$0xff]
    %v6369 = vld [vmem:[%s6295 + $0x248] sm:$0xff]
    %v6370 = vld [vmem:[%s6295 + $0x250] sm:$0xff]
    %v6371 = vld [vmem:[%s6295 + $0x258] sm:$0xff]
    %v6372 = vld [vmem:[%s6295 + $0x260] sm:$0xff]
    %v6373 = vld [vmem:[%s6295 + $0x268] sm:$0xff]
    %v6374 = vld [vmem:[%s6295 + $0x270] sm:$0xff]
    %v6375 = vld [vmem:[%s6295 + $0x278] sm:$0xff]
    %v6376 = vld [vmem:[%s6295 + $0x280] sm:$0xff]
    %v6377 = vld [vmem:[%s6295 + $0x288] sm:$0xff]
    %v6378 = vld [vmem:[%s6295 + $0x290] sm:$0xff]
    %v6379 = vld [vmem:[%s6295 + $0x298] sm:$0xff]
    %s6380 = scalar_lea.vmem [#allocation28], 6
    %v6381 = vld [vmem:[%s6380] sm:$0x3f]
    %v6383 = vlaneseq
    %v6384 = vshrl.u32 %v6383, 7
    %v6385 = vsub.s32 0, %v6384
    %v6386 = vrot.slane %v6381, %v6385
    %v6387 = vlaneseq
    %v6388 = vshrl.u32 %v6387, 7
    %v6389 = vsub.s32 1, %v6388
    %v6390 = vrot.slane %v6381, %v6389
    %v6391 = vlaneseq
    %v6392 = vshrl.u32 %v6391, 7
    %v6393 = vsub.s32 2, %v6392
    %v6394 = vrot.slane %v6381, %v6393
    %v6395 = vlaneseq
    %v6396 = vshrl.u32 %v6395, 7
    %v6397 = vsub.s32 3, %v6396
    %v6398 = vrot.slane %v6381, %v6397
    %v6399 = vlaneseq
    %v6400 = vshrl.u32 %v6399, 7
    %v6401 = vsub.s32 4, %v6400
    %v6402 = vrot.slane %v6381, %v6401
    %v6403 = vlaneseq
    %v6404 = vshrl.u32 %v6403, 7
    %v6405 = vsub.s32 5, %v6404
    %v6406 = vrot.slane %v6381, %v6405
    %v6497 = vunpack.c.l.b16 %v6296
    %v6498 = vunpack.c.h.b16 %v6296
    %v6499 = vunpack.c.l.b16 %v6297
    %v6500 = vunpack.c.h.b16 %v6297
    %v6501 = vunpack.c.l.b16 %v6298
    %v6502 = vunpack.c.h.b16 %v6298
    %v6503 = vunpack.c.l.b16 %v6299
    %v6504 = vunpack.c.h.b16 %v6299
    %v6505 = vunpack.c.l.b16 %v6300
    %v6506 = vunpack.c.h.b16 %v6300
    %v6507 = vunpack.c.l.b16 %v6301
    %v6508 = vunpack.c.h.b16 %v6301
    %v6509 = vunpack.c.l.b16 %v6302
    %v6510 = vunpack.c.h.b16 %v6302
    %v6511 = vunpack.c.l.b16 %v6303
    %v6512 = vunpack.c.h.b16 %v6303
    %v6513 = vunpack.c.l.b16 %v6304
    %v6514 = vunpack.c.h.b16 %v6304
    %v6515 = vunpack.c.l.b16 %v6305
    %v6516 = vunpack.c.h.b16 %v6305
    %v6517 = vunpack.c.l.b16 %v6306
    %v6518 = vunpack.c.h.b16 %v6306
    %v6519 = vunpack.c.l.b16 %v6307
    %v6520 = vunpack.c.h.b16 %v6307
    %v6521 = vunpack.c.l.b16 %v6308
    %v6522 = vunpack.c.h.b16 %v6308
    %v6523 = vunpack.c.l.b16 %v6309
    %v6524 = vunpack.c.h.b16 %v6309
    %v6525 = vunpack.c.l.b16 %v6310
    %v6526 = vunpack.c.h.b16 %v6310
    %v6527 = vunpack.c.l.b16 %v6311
    %v6528 = vunpack.c.h.b16 %v6311
    %v6529 = vunpack.c.l.b16 %v6312
    %v6530 = vunpack.c.h.b16 %v6312
    %v6531 = vunpack.c.l.b16 %v6313
    %v6532 = vunpack.c.h.b16 %v6313
    %v6533 = vunpack.c.l.b16 %v6314
    %v6534 = vunpack.c.h.b16 %v6314
    %v6535 = vunpack.c.l.b16 %v6315
    %v6536 = vunpack.c.h.b16 %v6315
    %v6537 = vunpack.c.l.b16 %v6316
    %v6538 = vunpack.c.h.b16 %v6316
    %v6539 = vunpack.c.l.b16 %v6317
    %v6540 = vunpack.c.h.b16 %v6317
    %v6541 = vunpack.c.l.b16 %v6318
    %v6542 = vunpack.c.h.b16 %v6318
    %v6543 = vunpack.c.l.b16 %v6319
    %v6544 = vunpack.c.h.b16 %v6319
    %v6545 = vunpack.c.l.b16 %v6320
    %v6546 = vunpack.c.h.b16 %v6320
    %v6547 = vunpack.c.l.b16 %v6321
    %v6548 = vunpack.c.h.b16 %v6321
    %v6549 = vunpack.c.l.b16 %v6322
    %v6550 = vunpack.c.h.b16 %v6322
    %v6551 = vunpack.c.l.b16 %v6323
    %v6552 = vunpack.c.h.b16 %v6323
    %v6553 = vunpack.c.l.b16 %v6324
    %v6554 = vunpack.c.h.b16 %v6324
    %v6555 = vunpack.c.l.b16 %v6325
    %v6556 = vunpack.c.h.b16 %v6325
    %v6557 = vunpack.c.l.b16 %v6326
    %v6558 = vunpack.c.h.b16 %v6326
    %v6559 = vunpack.c.l.b16 %v6327
    %v6560 = vunpack.c.h.b16 %v6327
    %v6561 = vunpack.c.l.b16 %v6328
    %v6562 = vunpack.c.h.b16 %v6328
    %v6563 = vunpack.c.l.b16 %v6329
    %v6564 = vunpack.c.h.b16 %v6329
    %v6565 = vunpack.c.l.b16 %v6330
    %v6566 = vunpack.c.h.b16 %v6330
    %v6567 = vunpack.c.l.b16 %v6331
    %v6568 = vunpack.c.h.b16 %v6331
    %v6569 = vunpack.c.l.b16 %v6332
    %v6570 = vunpack.c.h.b16 %v6332
    %v6571 = vunpack.c.l.b16 %v6333
    %v6572 = vunpack.c.h.b16 %v6333
    %v6573 = vunpack.c.l.b16 %v6334
    %v6574 = vunpack.c.h.b16 %v6334
    %v6575 = vunpack.c.l.b16 %v6335
    %v6576 = vunpack.c.h.b16 %v6335
    %v6577 = vunpack.c.l.b16 %v6336
    %v6578 = vunpack.c.h.b16 %v6336
    %v6579 = vunpack.c.l.b16 %v6337
    %v6580 = vunpack.c.h.b16 %v6337
    %v6581 = vunpack.c.l.b16 %v6338
    %v6582 = vunpack.c.h.b16 %v6338
    %v6583 = vunpack.c.l.b16 %v6339
    %v6584 = vunpack.c.h.b16 %v6339
    %v6585 = vunpack.c.l.b16 %v6340
    %v6586 = vunpack.c.h.b16 %v6340
    %v6587 = vunpack.c.l.b16 %v6341
    %v6588 = vunpack.c.h.b16 %v6341
    %v6589 = vunpack.c.l.b16 %v6342
    %v6590 = vunpack.c.h.b16 %v6342
    %v6591 = vunpack.c.l.b16 %v6343
    %v6592 = vunpack.c.h.b16 %v6343
    %v6593 = vunpack.c.l.b16 %v6344
    %v6594 = vunpack.c.h.b16 %v6344
    %v6595 = vunpack.c.l.b16 %v6345
    %v6596 = vunpack.c.h.b16 %v6345
    %v6597 = vunpack.c.l.b16 %v6346
    %v6598 = vunpack.c.h.b16 %v6346
    %v6599 = vunpack.c.l.b16 %v6347
    %v6600 = vunpack.c.h.b16 %v6347
    %v6601 = vunpack.c.l.b16 %v6348
    %v6602 = vunpack.c.h.b16 %v6348
    %v6603 = vunpack.c.l.b16 %v6349
    %v6604 = vunpack.c.h.b16 %v6349
    %v6605 = vunpack.c.l.b16 %v6350
    %v6606 = vunpack.c.h.b16 %v6350
    %v6607 = vunpack.c.l.b16 %v6351
    %v6608 = vunpack.c.h.b16 %v6351
    %v6609 = vunpack.c.l.b16 %v6352
    %v6610 = vunpack.c.h.b16 %v6352
    %v6611 = vunpack.c.l.b16 %v6353
    %v6612 = vunpack.c.h.b16 %v6353
    %v6613 = vunpack.c.l.b16 %v6354
    %v6614 = vunpack.c.h.b16 %v6354
    %v6615 = vunpack.c.l.b16 %v6355
    %v6616 = vunpack.c.h.b16 %v6355
    %v6617 = vunpack.c.l.b16 %v6356
    %v6618 = vunpack.c.h.b16 %v6356
    %v6619 = vunpack.c.l.b16 %v6357
    %v6620 = vunpack.c.h.b16 %v6357
    %v6621 = vunpack.c.l.b16 %v6358
    %v6622 = vunpack.c.h.b16 %v6358
    %v6623 = vunpack.c.l.b16 %v6359
    %v6624 = vunpack.c.h.b16 %v6359
    %v6625 = vunpack.c.l.b16 %v6360
    %v6626 = vunpack.c.h.b16 %v6360
    %v6627 = vunpack.c.l.b16 %v6361
    %v6628 = vunpack.c.h.b16 %v6361
    %v6629 = vunpack.c.l.b16 %v6362
    %v6630 = vunpack.c.h.b16 %v6362
    %v6631 = vunpack.c.l.b16 %v6363
    %v6632 = vunpack.c.h.b16 %v6363
    %v6633 = vunpack.c.l.b16 %v6364
    %v6634 = vunpack.c.h.b16 %v6364
    %v6635 = vunpack.c.l.b16 %v6365
    %v6636 = vunpack.c.h.b16 %v6365
    %v6637 = vunpack.c.l.b16 %v6366
    %v6638 = vunpack.c.h.b16 %v6366
    %v6639 = vunpack.c.l.b16 %v6367
    %v6640 = vunpack.c.h.b16 %v6367
    %v6641 = vunpack.c.l.b16 %v6368
    %v6642 = vunpack.c.h.b16 %v6368
    %v6643 = vunpack.c.l.b16 %v6369
    %v6644 = vunpack.c.h.b16 %v6369
    %v6645 = vunpack.c.l.b16 %v6370
    %v6646 = vunpack.c.h.b16 %v6370
    %v6647 = vunpack.c.l.b16 %v6371
    %v6648 = vunpack.c.h.b16 %v6371
    %v6649 = vunpack.c.l.b16 %v6372
    %v6650 = vunpack.c.h.b16 %v6372
    %v6651 = vunpack.c.l.b16 %v6373
    %v6652 = vunpack.c.h.b16 %v6373
    %v6653 = vunpack.c.l.b16 %v6374
    %v6654 = vunpack.c.h.b16 %v6374
    %v6655 = vunpack.c.l.b16 %v6375
    %v6656 = vunpack.c.h.b16 %v6375
    %v6657 = vunpack.c.l.b16 %v6376
    %v6658 = vunpack.c.h.b16 %v6376
    %v6659 = vunpack.c.l.b16 %v6377
    %v6660 = vunpack.c.h.b16 %v6377
    %v6661 = vunpack.c.l.b16 %v6378
    %v6662 = vunpack.c.h.b16 %v6378
    %v6663 = vunpack.c.l.b16 %v6379
    %v6664 = vunpack.c.h.b16 %v6379
    %v6665 = vpack.c.b16 %v6503, %v6497
    %v6666 = vpack.c.b16 %v6504, %v6498
    %v6667 = vpack.c.b16 %v6505, %v6499
    %v6668 = vpack.c.b16 %v6506, %v6500
    %v6669 = vpack.c.b16 %v6507, %v6501
    %v6670 = vpack.c.b16 %v6508, %v6502
    %v6671 = vpack.c.b16 %v6515, %v6509
    %v6672 = vpack.c.b16 %v6516, %v6510
    %v6673 = vpack.c.b16 %v6517, %v6511
    %v6674 = vpack.c.b16 %v6518, %v6512
    %v6675 = vpack.c.b16 %v6519, %v6513
    %v6676 = vpack.c.b16 %v6520, %v6514
    %v6677 = vpack.c.b16 %v6527, %v6521
    %v6678 = vpack.c.b16 %v6528, %v6522
    %v6679 = vpack.c.b16 %v6529, %v6523
    %v6680 = vpack.c.b16 %v6530, %v6524
    %v6681 = vpack.c.b16 %v6531, %v6525
    %v6682 = vpack.c.b16 %v6532, %v6526
    %v6683 = vpack.c.b16 %v6539, %v6533
    %v6684 = vpack.c.b16 %v6540, %v6534
    %v6685 = vpack.c.b16 %v6541, %v6535
    %v6686 = vpack.c.b16 %v6542, %v6536
    %v6687 = vpack.c.b16 %v6543, %v6537
    %v6688 = vpack.c.b16 %v6544, %v6538
    %v6689 = vpack.c.b16 %v6551, %v6545
    %v6690 = vpack.c.b16 %v6552, %v6546
    %v6691 = vpack.c.b16 %v6553, %v6547
    %v6692 = vpack.c.b16 %v6554, %v6548
    %v6693 = vpack.c.b16 %v6555, %v6549
    %v6694 = vpack.c.b16 %v6556, %v6550
    %v6695 = vpack.c.b16 %v6563, %v6557
    %v6696 = vpack.c.b16 %v6564, %v6558
    %v6697 = vpack.c.b16 %v6565, %v6559
    %v6698 = vpack.c.b16 %v6566, %v6560
    %v6699 = vpack.c.b16 %v6567, %v6561
    %v6700 = vpack.c.b16 %v6568, %v6562
    %v6701 = vpack.c.b16 %v6575, %v6569
    %v6702 = vpack.c.b16 %v6576, %v6570
    %v6703 = vpack.c.b16 %v6577, %v6571
    %v6704 = vpack.c.b16 %v6578, %v6572
    %v6705 = vpack.c.b16 %v6579, %v6573
    %v6706 = vpack.c.b16 %v6580, %v6574
    %v6707 = vpack.c.b16 %v6587, %v6581
    %v6708 = vpack.c.b16 %v6588, %v6582
    %v6709 = vpack.c.b16 %v6589, %v6583
    %v6710 = vpack.c.b16 %v6590, %v6584
    %v6711 = vpack.c.b16 %v6591, %v6585
    %v6712 = vpack.c.b16 %v6592, %v6586
    %v6713 = vpack.c.b16 %v6599, %v6593
    %v6714 = vpack.c.b16 %v6600, %v6594
    %v6715 = vpack.c.b16 %v6601, %v6595
    %v6716 = vpack.c.b16 %v6602, %v6596
    %v6717 = vpack.c.b16 %v6603, %v6597
    %v6718 = vpack.c.b16 %v6604, %v6598
    %v6719 = vpack.c.b16 %v6611, %v6605
    %v6720 = vpack.c.b16 %v6612, %v6606
    %v6721 = vpack.c.b16 %v6613, %v6607
    %v6722 = vpack.c.b16 %v6614, %v6608
    %v6723 = vpack.c.b16 %v6615, %v6609
    %v6724 = vpack.c.b16 %v6616, %v6610
    %v6725 = vpack.c.b16 %v6623, %v6617
    %v6726 = vpack.c.b16 %v6624, %v6618
    %v6727 = vpack.c.b16 %v6625, %v6619
    %v6728 = vpack.c.b16 %v6626, %v6620
    %v6729 = vpack.c.b16 %v6627, %v6621
    %v6730 = vpack.c.b16 %v6628, %v6622
    %v6731 = vpack.c.b16 %v6635, %v6629
    %v6732 = vpack.c.b16 %v6636, %v6630
    %v6733 = vpack.c.b16 %v6637, %v6631
    %v6734 = vpack.c.b16 %v6638, %v6632
    %v6735 = vpack.c.b16 %v6639, %v6633
    %v6736 = vpack.c.b16 %v6640, %v6634
    %v6737 = vpack.c.b16 %v6647, %v6641
    %v6738 = vpack.c.b16 %v6648, %v6642
    %v6739 = vpack.c.b16 %v6649, %v6643
    %v6740 = vpack.c.b16 %v6650, %v6644
    %v6741 = vpack.c.b16 %v6651, %v6645
    %v6742 = vpack.c.b16 %v6652, %v6646
    %v6743 = vpack.c.b16 %v6659, %v6653
    %v6744 = vpack.c.b16 %v6660, %v6654
    %v6745 = vpack.c.b16 %v6661, %v6655
    %v6746 = vpack.c.b16 %v6662, %v6656
    %v6747 = vpack.c.b16 %v6663, %v6657
    %v6748 = vpack.c.b16 %v6664, %v6658
    %6833 = vmatprep.subr.bf16.mxu0 %v6666
    %6834 = vmatpush1.bf16.msra.mxu0 %v6665
    %6835 = vmatprep.subr.bf16.mxu0 %v6672
    %6836 = vmatpush1.bf16.msra.mxu0 %v6671
    %6837 = vmatprep.subr.bf16.mxu0 %v6678
    %6838 = vmatpush1.bf16.msra.mxu0 %v6677
    %6839 = vmatprep.subr.bf16.mxu0 %v6684
    %6840 = vmatpush1.bf16.msra.mxu0 %v6683
    %6841 = vmatprep.subr.bf16.mxu0 %v6690
    %6842 = vmatpush1.bf16.msra.mxu0 %v6689
    %6843 = vmatprep.subr.bf16.mxu0 %v6696
    %6844 = vmatpush1.bf16.msra.mxu0 %v6695
    %6845 = vmatprep.subr.bf16.mxu0 %v6702
    %6846 = vmatpush1.bf16.msra.mxu0 %v6701
    %6847 = vmatprep.subr.bf16.mxu0 %v6708
    %6848 = vmatpush1.bf16.msra.mxu0 %v6707
    %6849 = vmatprep.subr.bf16.mxu0 %v6714
    %6850 = vmatpush1.bf16.msra.mxu0 %v6713
    %6851 = vmatprep.subr.bf16.mxu0 %v6720
    %6852 = vmatpush1.bf16.msra.mxu0 %v6719
    %6853 = vmatprep.subr.bf16.mxu0 %v6726
    %6854 = vmatpush1.bf16.msra.mxu0 %v6725
    %6855 = vmatprep.subr.bf16.mxu0 %v6732
    %6856 = vmatpush1.bf16.msra.mxu0 %v6731
    %6857 = vmatprep.subr.bf16.mxu0 %v6738
    %6858 = vmatpush1.bf16.msra.mxu0 %v6737
    %6859 = vmatprep.subr.bf16.mxu0 %v6744
    %6860 = vmatpush1.bf16.msra.mxu0 %v6743
    %6861 = vmatprep.subr.bf16.mxu0 0
    %6862 = vmatpush1.bf16.msra.mxu0 0
    %6863 = vmatprep.subr.bf16.mxu0 0
    %6864 = vmatpush1.bf16.msra.mxu0 0
    %6865 = vmatprep.mubr.bf16.mxu0 %v6170
    %6866 = vmatmul.mubr.bf16.gmra.mrb[0].mxu0 %v5629
    %v6867 = vpop.f32.mrb[0].mxu0
    %v6868 = vadd.f32 %v6386, %v6867
    %v6869 = vpop.f32.mrb[0].mxu0
    %v6870 = vadd.f32 %v6390, %v6869
    %v6871 = vpop.f32.mrb[0].mxu0
    %v6872 = vpop.f32.mrb[0].mxu0
    %6873 = vdwg.mxu0
    %6874 = vmatprep.subr.bf16.mxu0 %v6668
    %6875 = vmatpush1.bf16.msra.mxu0 %v6667
    %6876 = vmatprep.subr.bf16.mxu0 %v6674
    %6877 = vmatpush1.bf16.msra.mxu0 %v6673
    %6878 = vmatprep.subr.bf16.mxu0 %v6680
    %6879 = vmatpush1.bf16.msra.mxu0 %v6679
    %6880 = vmatprep.subr.bf16.mxu0 %v6686
    %6881 = vmatpush1.bf16.msra.mxu0 %v6685
    %6882 = vmatprep.subr.bf16.mxu0 %v6692
    %6883 = vmatpush1.bf16.msra.mxu0 %v6691
    %6884 = vmatprep.subr.bf16.mxu0 %v6698
    %6885 = vmatpush1.bf16.msra.mxu0 %v6697
    %6886 = vmatprep.subr.bf16.mxu0 %v6704
    %6887 = vmatpush1.bf16.msra.mxu0 %v6703
    %6888 = vmatprep.subr.bf16.mxu0 %v6710
    %6889 = vmatpush1.bf16.msra.mxu0 %v6709
    %6890 = vmatprep.subr.bf16.mxu0 %v6716
    %6891 = vmatpush1.bf16.msra.mxu0 %v6715
    %6892 = vmatprep.subr.bf16.mxu0 %v6722
    %6893 = vmatpush1.bf16.msra.mxu0 %v6721
    %6894 = vmatprep.subr.bf16.mxu0 %v6728
    %6895 = vmatpush1.bf16.msra.mxu0 %v6727
    %6896 = vmatprep.subr.bf16.mxu0 %v6734
    %6897 = vmatpush1.bf16.msra.mxu0 %v6733
    %6898 = vmatprep.subr.bf16.mxu0 %v6740
    %6899 = vmatpush1.bf16.msra.mxu0 %v6739
    %6900 = vmatprep.subr.bf16.mxu0 %v6746
    %6901 = vmatpush1.bf16.msra.mxu0 %v6745
    %6902 = vmatprep.subr.bf16.mxu0 0
    %6903 = vmatpush1.bf16.msra.mxu0 0
    %6904 = vmatprep.subr.bf16.mxu0 0
    %6905 = vmatpush1.bf16.msra.mxu0 0
    %6906 = vmatprep.mubr.bf16.mxu0 %v6170
    %6907 = vmatmul.mubr.bf16.gmra.mrb[0].mxu0 %v5629
    %v6908 = vpop.f32.mrb[0].mxu0
    %v6909 = vadd.f32 %v6394, %v6908
    %v6910 = vpop.f32.mrb[0].mxu0
    %v6911 = vadd.f32 %v6398, %v6910
    %v6912 = vpop.f32.mrb[0].mxu0
    %v6913 = vpop.f32.mrb[0].mxu0
    %6914 = vdwg.mxu0
    %6915 = vmatprep.subr.bf16.mxu0 %v6670
    %6916 = vmatpush1.bf16.msra.mxu0 %v6669
    %6917 = vmatprep.subr.bf16.mxu0 %v6676
    %6918 = vmatpush1.bf16.msra.mxu0 %v6675
    %6919 = vmatprep.subr.bf16.mxu0 %v6682
    %6920 = vmatpush1.bf16.msra.mxu0 %v6681
    %6921 = vmatprep.subr.bf16.mxu0 %v6688
    %6922 = vmatpush1.bf16.msra.mxu0 %v6687
    %6923 = vmatprep.subr.bf16.mxu0 %v6694
    %6924 = vmatpush1.bf16.msra.mxu0 %v6693
    %6925 = vmatprep.subr.bf16.mxu0 %v6700
    %6926 = vmatpush1.bf16.msra.mxu0 %v6699
    %6927 = vmatprep.subr.bf16.mxu0 %v6706
    %6928 = vmatpush1.bf16.msra.mxu0 %v6705
    %6929 = vmatprep.subr.bf16.mxu0 %v6712
    %6930 = vmatpush1.bf16.msra.mxu0 %v6711
    %6931 = vmatprep.subr.bf16.mxu0 %v6718
    %6932 = vmatpush1.bf16.msra.mxu0 %v6717
    %6933 = vmatprep.subr.bf16.mxu0 %v6724
    %6934 = vmatpush1.bf16.msra.mxu0 %v6723
    %6935 = vmatprep.subr.bf16.mxu0 %v6730
    %6936 = vmatpush1.bf16.msra.mxu0 %v6729
    %6937 = vmatprep.subr.bf16.mxu0 %v6736
    %6938 = vmatpush1.bf16.msra.mxu0 %v6735
    %6939 = vmatprep.subr.bf16.mxu0 %v6742
    %6940 = vmatpush1.bf16.msra.mxu0 %v6741
    %6941 = vmatprep.subr.bf16.mxu0 %v6748
    %6942 = vmatpush1.bf16.msra.mxu0 %v6747
    %6943 = vmatprep.subr.bf16.mxu0 0
    %6944 = vmatpush1.bf16.msra.mxu0 0
    %6945 = vmatprep.subr.bf16.mxu0 0
    %6946 = vmatpush1.bf16.msra.mxu0 0
    %6947 = vmatprep.mubr.bf16.mxu0 %v6170
    %6948 = vmatmul.mubr.bf16.gmra.mrb[0].mxu0 %v5629
    %v6949 = vpop.f32.mrb[0].mxu0
    %v6950 = vadd.f32 %v6402, %v6949
    %v6951 = vpop.f32.mrb[0].mxu0
    %v6952 = vadd.f32 %v6406, %v6951
    %v6953 = vpop.f32.mrb[0].mxu0
    %v6954 = vpop.f32.mrb[0].mxu0
    %6955 = vdwg.mxu0
    %v6956 = vmul.f32 %v6207, 0.5
    %v6957 = vmul.f32 %v6209, 0.5
    %v6958 = vmul.f32 %v6248, 0.5
    %v6959 = vmul.f32 %v6250, 0.5
    %v6960 = vmul.f32 %v6289, 0.5
    %v6961 = vmul.f32 %v6291, 0.5
    %v6962 = vmul.f32 %v6207, 0.044715
    %v6963 = vmul.f32 %v6209, 0.044715
    %v6964 = vmul.f32 %v6248, 0.044715
    %v6965 = vmul.f32 %v6250, 0.044715
    %v6966 = vmul.f32 %v6289, 0.044715
    %v6967 = vmul.f32 %v6291, 0.044715
    %v6968 = vmul.f32 %v6962, %v6207
    %v6969 = vmul.f32 %v6963, %v6209
    %v6970 = vmul.f32 %v6964, %v6248
    %v6971 = vmul.f32 %v6965, %v6250
    %v6972 = vmul.f32 %v6966, %v6289
    %v6973 = vmul.f32 %v6967, %v6291
    %v6974 = vmul.f32 %v6968, %v6207
    %v6975 = vmul.f32 %v6969, %v6209
    %v6976 = vmul.f32 %v6970, %v6248
    %v6977 = vmul.f32 %v6971, %v6250
    %v6978 = vmul.f32 %v6972, %v6289
    %v6979 = vmul.f32 %v6973, %v6291
    %v6980 = vadd.f32 %v6207, %v6974
    %v6981 = vadd.f32 %v6209, %v6975
    %v6982 = vadd.f32 %v6248, %v6976
    %v6983 = vadd.f32 %v6250, %v6977
    %v6984 = vadd.f32 %v6289, %v6978
    %v6985 = vadd.f32 %v6291, %v6979
    %v6986 = vmul.f32 %v6980, 0.7978846
    %v6987 = vmul.f32 %v6981, 0.7978846
    %v6988 = vmul.f32 %v6982, 0.7978846
    %v6989 = vmul.f32 %v6983, 0.7978846
    %v6990 = vmul.f32 %v6984, 0.7978846
    %v6991 = vmul.f32 %v6985, 0.7978846
    %v6992 = vtanh.pop %v6986
    %v6993 = vtanh.pop %v6987
    %v6994 = vtanh.pop %v6988
    %v6995 = vtanh.pop %v6989
    %v6996 = vtanh.pop %v6990
    %v6997 = vtanh.pop %v6991
    %v6998 = vadd.f32 %v6992, 1.0
    %v6999 = vadd.f32 %v6993, 1.0
    %v7000 = vadd.f32 %v6994, 1.0
    %v7001 = vadd.f32 %v6995, 1.0
    %v7002 = vadd.f32 %v6996, 1.0
    %v7003 = vadd.f32 %v6997, 1.0
    %v7004 = vmul.f32 %v6956, %v6998
    %v7005 = vmul.f32 %v6957, %v6999
    %v7006 = vmul.f32 %v6958, %v7000
    %v7007 = vmul.f32 %v6959, %v7001
    %v7008 = vmul.f32 %v6960, %v7002
    %v7009 = vmul.f32 %v6961, %v7003
    %v7010 = vmul.f32 %v6868, 0.5
    %v7011 = vmul.f32 %v6870, 0.5
    %v7012 = vmul.f32 %v6909, 0.5
    %v7013 = vmul.f32 %v6911, 0.5
    %v7014 = vmul.f32 %v6950, 0.5
    %v7015 = vmul.f32 %v6952, 0.5
    %v7016 = vmul.f32 %v6868, 0.044715
    %v7017 = vmul.f32 %v6870, 0.044715
    %v7018 = vmul.f32 %v6909, 0.044715
    %v7019 = vmul.f32 %v6911, 0.044715
    %v7020 = vmul.f32 %v6950, 0.044715
    %v7021 = vmul.f32 %v6952, 0.044715
    %v7022 = vmul.f32 %v7016, %v6868
    %v7023 = vmul.f32 %v7017, %v6870
    %v7024 = vmul.f32 %v7018, %v6909
    %v7025 = vmul.f32 %v7019, %v6911
    %v7026 = vmul.f32 %v7020, %v6950
    %v7027 = vmul.f32 %v7021, %v6952
    %v7028 = vmul.f32 %v7022, %v6868
    %v7029 = vmul.f32 %v7023, %v6870
    %v7030 = vmul.f32 %v7024, %v6909
    %v7031 = vmul.f32 %v7025, %v6911
    %v7032 = vmul.f32 %v7026, %v6950
    %v7033 = vmul.f32 %v7027, %v6952
    %v7034 = vadd.f32 %v6868, %v7028
    %v7035 = vadd.f32 %v6870, %v7029
    %v7036 = vadd.f32 %v6909, %v7030
    %v7037 = vadd.f32 %v6911, %v7031
    %v7038 = vadd.f32 %v6950, %v7032
    %v7039 = vadd.f32 %v6952, %v7033
    %v7040 = vmul.f32 %v7034, 0.7978846
    %v7041 = vmul.f32 %v7035, 0.7978846
    %v7042 = vmul.f32 %v7036, 0.7978846
    %v7043 = vmul.f32 %v7037, 0.7978846
    %v7044 = vmul.f32 %v7038, 0.7978846
    %v7045 = vmul.f32 %v7039, 0.7978846
    %v7046 = vtanh.pop %v7040
    %v7047 = vtanh.pop %v7041
    %v7048 = vtanh.pop %v7042
    %v7049 = vtanh.pop %v7043
    %v7050 = vtanh.pop %v7044
    %v7051 = vtanh.pop %v7045
    %v7052 = vadd.f32 %v7046, 1.0
    %v7053 = vadd.f32 %v7047, 1.0
    %v7054 = vadd.f32 %v7048, 1.0
    %v7055 = vadd.f32 %v7049, 1.0
    %v7056 = vadd.f32 %v7050, 1.0
    %v7057 = vadd.f32 %v7051, 1.0
    %v7058 = vmul.f32 %v7010, %v7052
    %v7059 = vmul.f32 %v7011, %v7053
    %v7060 = vmul.f32 %v7012, %v7054
    %v7061 = vmul.f32 %v7013, %v7055
    %v7062 = vmul.f32 %v7014, %v7056
    %v7063 = vmul.f32 %v7015, %v7057
    %v7064 = vmul.f32 %v6207, %v7058
    %v7065 = vmul.f32 %v6209, %v7059
    %v7066 = vmul.f32 %v6248, %v7060
    %v7067 = vmul.f32 %v6250, %v7061
    %v7068 = vmul.f32 %v6289, %v7062
    %v7069 = vmul.f32 %v6291, %v7063
    %v7070 = vmul.f32 %v6868, %v7004
    %v7071 = vmul.f32 %v6870, %v7005
    %v7072 = vmul.f32 %v6909, %v7006
    %v7073 = vmul.f32 %v6911, %v7007
    %v7074 = vmul.f32 %v6950, %v7008
    %v7075 = vmul.f32 %v6952, %v7009
    %v7076 = vadd.f32 %v7064, %v7070
    %v7077 = vadd.f32 %v7065, %v7071
    %v7078 = vadd.f32 %v7066, %v7072
    %v7079 = vadd.f32 %v7067, %v7073
    %v7080 = vadd.f32 %v7068, %v7074
    %v7081 = vadd.f32 %v7069, %v7075
    %s7082 = scalar_lea.vmem [#allocation30], 672
    %v7083 = vld [vmem:[%s7082] sm:$0xff]
    %v7084 = vld [vmem:[%s7082 + $0x8] sm:$0xff]
    %v7085 = vld [vmem:[%s7082 + $0x10] sm:$0xff]
    %v7086 = vld [vmem:[%s7082 + $0x18] sm:$0xff]
    %v7087 = vld [vmem:[%s7082 + $0x20] sm:$0xff]
    %v7088 = vld [vmem:[%s7082 + $0x28] sm:$0xff]
    %v7089 = vld [vmem:[%s7082 + $0x30] sm:$0xff]
    %v7090 = vld [vmem:[%s7082 + $0x38] sm:$0xff]
    %v7091 = vld [vmem:[%s7082 + $0x40] sm:$0xff]
    %v7092 = vld [vmem:[%s7082 + $0x48] sm:$0xff]
    %v7093 = vld [vmem:[%s7082 + $0x50] sm:$0xff]
    %v7094 = vld [vmem:[%s7082 + $0x58] sm:$0xff]
    %v7095 = vld [vmem:[%s7082 + $0x60] sm:$0xff]
    %v7096 = vld [vmem:[%s7082 + $0x68] sm:$0xff]
    %v7097 = vld [vmem:[%s7082 + $0x70] sm:$0xff]
    %v7098 = vld [vmem:[%s7082 + $0x78] sm:$0xff]
    %v7099 = vld [vmem:[%s7082 + $0x80] sm:$0xff]
    %v7100 = vld [vmem:[%s7082 + $0x88] sm:$0xff]
    %v7101 = vld [vmem:[%s7082 + $0x90] sm:$0xff]
    %v7102 = vld [vmem:[%s7082 + $0x98] sm:$0xff]
    %v7103 = vld [vmem:[%s7082 + $0xa0] sm:$0xff]
    %v7104 = vld [vmem:[%s7082 + $0xa8] sm:$0xff]
    %v7105 = vld [vmem:[%s7082 + $0xb0] sm:$0xff]
    %v7106 = vld [vmem:[%s7082 + $0xb8] sm:$0xff]
    %v7107 = vld [vmem:[%s7082 + $0xc0] sm:$0xff]
    %v7108 = vld [vmem:[%s7082 + $0xc8] sm:$0xff]
    %v7109 = vld [vmem:[%s7082 + $0xd0] sm:$0xff]
    %v7110 = vld [vmem:[%s7082 + $0xd8] sm:$0xff]
    %v7111 = vld [vmem:[%s7082 + $0xe0] sm:$0xff]
    %v7112 = vld [vmem:[%s7082 + $0xe8] sm:$0xff]
    %v7113 = vld [vmem:[%s7082 + $0xf0] sm:$0xff]
    %v7114 = vld [vmem:[%s7082 + $0xf8] sm:$0xff]
    %v7115 = vld [vmem:[%s7082 + $0x100] sm:$0xff]
    %v7116 = vld [vmem:[%s7082 + $0x108] sm:$0xff]
    %v7117 = vld [vmem:[%s7082 + $0x110] sm:$0xff]
    %v7118 = vld [vmem:[%s7082 + $0x118] sm:$0xff]
    %v7119 = vld [vmem:[%s7082 + $0x120] sm:$0xff]
    %v7120 = vld [vmem:[%s7082 + $0x128] sm:$0xff]
    %v7121 = vld [vmem:[%s7082 + $0x130] sm:$0xff]
    %v7122 = vld [vmem:[%s7082 + $0x138] sm:$0xff]
    %v7123 = vld [vmem:[%s7082 + $0x140] sm:$0xff]
    %v7124 = vld [vmem:[%s7082 + $0x148] sm:$0xff]
    %v7125 = vld [vmem:[%s7082 + $0x150] sm:$0xff]
    %v7126 = vld [vmem:[%s7082 + $0x158] sm:$0xff]
    %v7127 = vld [vmem:[%s7082 + $0x160] sm:$0xff]
    %v7128 = vld [vmem:[%s7082 + $0x168] sm:$0xff]
    %v7129 = vld [vmem:[%s7082 + $0x170] sm:$0xff]
    %v7130 = vld [vmem:[%s7082 + $0x178] sm:$0xff]
    %v7131 = vld [vmem:[%s7082 + $0x180] sm:$0xff]
    %v7132 = vld [vmem:[%s7082 + $0x188] sm:$0xff]
    %v7133 = vld [vmem:[%s7082 + $0x190] sm:$0xff]
    %v7134 = vld [vmem:[%s7082 + $0x198] sm:$0xff]
    %v7135 = vld [vmem:[%s7082 + $0x1a0] sm:$0xff]
    %v7136 = vld [vmem:[%s7082 + $0x1a8] sm:$0xff]
    %v7137 = vld [vmem:[%s7082 + $0x1b0] sm:$0xff]
    %v7138 = vld [vmem:[%s7082 + $0x1b8] sm:$0xff]
    %v7139 = vld [vmem:[%s7082 + $0x1c0] sm:$0xff]
    %v7140 = vld [vmem:[%s7082 + $0x1c8] sm:$0xff]
    %v7141 = vld [vmem:[%s7082 + $0x1d0] sm:$0xff]
    %v7142 = vld [vmem:[%s7082 + $0x1d8] sm:$0xff]
    %v7143 = vld [vmem:[%s7082 + $0x1e0] sm:$0xff]
    %v7144 = vld [vmem:[%s7082 + $0x1e8] sm:$0xff]
    %v7145 = vld [vmem:[%s7082 + $0x1f0] sm:$0xff]
    %v7146 = vld [vmem:[%s7082 + $0x1f8] sm:$0xff]
    %v7147 = vld [vmem:[%s7082 + $0x200] sm:$0xff]
    %v7148 = vld [vmem:[%s7082 + $0x208] sm:$0xff]
    %v7149 = vld [vmem:[%s7082 + $0x210] sm:$0xff]
    %v7150 = vld [vmem:[%s7082 + $0x218] sm:$0xff]
    %v7151 = vld [vmem:[%s7082 + $0x220] sm:$0xff]
    %v7152 = vld [vmem:[%s7082 + $0x228] sm:$0xff]
    %v7153 = vld [vmem:[%s7082 + $0x230] sm:$0xff]
    %v7154 = vld [vmem:[%s7082 + $0x238] sm:$0xff]
    %v7155 = vld [vmem:[%s7082 + $0x240] sm:$0xff]
    %v7156 = vld [vmem:[%s7082 + $0x248] sm:$0xff]
    %v7157 = vld [vmem:[%s7082 + $0x250] sm:$0xff]
    %v7158 = vld [vmem:[%s7082 + $0x258] sm:$0xff]
    %v7159 = vld [vmem:[%s7082 + $0x260] sm:$0xff]
    %v7160 = vld [vmem:[%s7082 + $0x268] sm:$0xff]
    %v7161 = vld [vmem:[%s7082 + $0x270] sm:$0xff]
    %v7162 = vld [vmem:[%s7082 + $0x278] sm:$0xff]
    %v7163 = vld [vmem:[%s7082 + $0x280] sm:$0xff]
    %v7164 = vld [vmem:[%s7082 + $0x288] sm:$0xff]
    %v7165 = vld [vmem:[%s7082 + $0x290] sm:$0xff]
    %v7166 = vld [vmem:[%s7082 + $0x298] sm:$0xff]
    %v7167 = vpack.c.bf16 %v7076, %v7076
    %v7168 = vpack.c.bf16 %v7077, %v7077
    %v7169 = vpack.c.bf16 %v7078, %v7078
    %v7170 = vpack.c.bf16 %v7079, %v7079
    %v7171 = vpack.c.bf16 %v7080, %v7080
    %v7172 = vpack.c.bf16 %v7081, %v7081
    %s7173 = scalar_lea.vmem [#allocation31], 2
    %v7174 = vld [vmem:[%s7173] sm:$0x3]
    %v7176 = vlaneseq
    %v7177 = vshrl.u32 %v7176, 7
    %v7178 = vsub.s32 0, %v7177
    %v7179 = vrot.slane %v7174, %v7178
    %v7180 = vlaneseq
    %v7181 = vshrl.u32 %v7180, 7
    %v7182 = vsub.s32 1, %v7181
    %v7183 = vrot.slane %v7174, %v7182
    %v7270 = vunpack.c.l.b16 %v7083
    %v7271 = vunpack.c.h.b16 %v7083
    %v7272 = vunpack.c.l.b16 %v7084
    %v7273 = vunpack.c.h.b16 %v7084
    %v7274 = vunpack.c.l.b16 %v7085
    %v7275 = vunpack.c.h.b16 %v7085
    %v7276 = vunpack.c.l.b16 %v7086
    %v7277 = vunpack.c.h.b16 %v7086
    %v7278 = vunpack.c.l.b16 %v7087
    %v7279 = vunpack.c.h.b16 %v7087
    %v7280 = vunpack.c.l.b16 %v7088
    %v7281 = vunpack.c.h.b16 %v7088
    %v7282 = vunpack.c.l.b16 %v7089
    %v7283 = vunpack.c.h.b16 %v7089
    %v7284 = vunpack.c.l.b16 %v7090
    %v7285 = vunpack.c.h.b16 %v7090
    %v7286 = vunpack.c.l.b16 %v7091
    %v7287 = vunpack.c.h.b16 %v7091
    %v7288 = vunpack.c.l.b16 %v7092
    %v7289 = vunpack.c.h.b16 %v7092
    %v7290 = vunpack.c.l.b16 %v7093
    %v7291 = vunpack.c.h.b16 %v7093
    %v7292 = vunpack.c.l.b16 %v7094
    %v7293 = vunpack.c.h.b16 %v7094
    %v7294 = vunpack.c.l.b16 %v7095
    %v7295 = vunpack.c.h.b16 %v7095
    %v7296 = vunpack.c.l.b16 %v7096
    %v7297 = vunpack.c.h.b16 %v7096
    %v7298 = vunpack.c.l.b16 %v7097
    %v7299 = vunpack.c.h.b16 %v7097
    %v7300 = vunpack.c.l.b16 %v7098
    %v7301 = vunpack.c.h.b16 %v7098
    %v7302 = vunpack.c.l.b16 %v7099
    %v7303 = vunpack.c.h.b16 %v7099
    %v7304 = vunpack.c.l.b16 %v7100
    %v7305 = vunpack.c.h.b16 %v7100
    %v7306 = vunpack.c.l.b16 %v7101
    %v7307 = vunpack.c.h.b16 %v7101
    %v7308 = vunpack.c.l.b16 %v7102
    %v7309 = vunpack.c.h.b16 %v7102
    %v7310 = vunpack.c.l.b16 %v7103
    %v7311 = vunpack.c.h.b16 %v7103
    %v7312 = vunpack.c.l.b16 %v7104
    %v7313 = vunpack.c.h.b16 %v7104
    %v7314 = vunpack.c.l.b16 %v7105
    %v7315 = vunpack.c.h.b16 %v7105
    %v7316 = vunpack.c.l.b16 %v7106
    %v7317 = vunpack.c.h.b16 %v7106
    %v7318 = vunpack.c.l.b16 %v7107
    %v7319 = vunpack.c.h.b16 %v7107
    %v7320 = vunpack.c.l.b16 %v7108
    %v7321 = vunpack.c.h.b16 %v7108
    %v7322 = vunpack.c.l.b16 %v7109
    %v7323 = vunpack.c.h.b16 %v7109
    %v7324 = vunpack.c.l.b16 %v7110
    %v7325 = vunpack.c.h.b16 %v7110
    %v7326 = vunpack.c.l.b16 %v7111
    %v7327 = vunpack.c.h.b16 %v7111
    %v7328 = vunpack.c.l.b16 %v7112
    %v7329 = vunpack.c.h.b16 %v7112
    %v7330 = vunpack.c.l.b16 %v7113
    %v7331 = vunpack.c.h.b16 %v7113
    %v7332 = vunpack.c.l.b16 %v7114
    %v7333 = vunpack.c.h.b16 %v7114
    %v7334 = vunpack.c.l.b16 %v7115
    %v7335 = vunpack.c.h.b16 %v7115
    %v7336 = vunpack.c.l.b16 %v7116
    %v7337 = vunpack.c.h.b16 %v7116
    %v7338 = vunpack.c.l.b16 %v7117
    %v7339 = vunpack.c.h.b16 %v7117
    %v7340 = vunpack.c.l.b16 %v7118
    %v7341 = vunpack.c.h.b16 %v7118
    %v7342 = vunpack.c.l.b16 %v7119
    %v7343 = vunpack.c.h.b16 %v7119
    %v7344 = vunpack.c.l.b16 %v7120
    %v7345 = vunpack.c.h.b16 %v7120
    %v7346 = vunpack.c.l.b16 %v7121
    %v7347 = vunpack.c.h.b16 %v7121
    %v7348 = vunpack.c.l.b16 %v7122
    %v7349 = vunpack.c.h.b16 %v7122
    %v7350 = vunpack.c.l.b16 %v7123
    %v7351 = vunpack.c.h.b16 %v7123
    %v7352 = vunpack.c.l.b16 %v7124
    %v7353 = vunpack.c.h.b16 %v7124
    %v7354 = vunpack.c.l.b16 %v7125
    %v7355 = vunpack.c.h.b16 %v7125
    %v7356 = vunpack.c.l.b16 %v7126
    %v7357 = vunpack.c.h.b16 %v7126
    %v7358 = vunpack.c.l.b16 %v7127
    %v7359 = vunpack.c.h.b16 %v7127
    %v7360 = vunpack.c.l.b16 %v7128
    %v7361 = vunpack.c.h.b16 %v7128
    %v7362 = vunpack.c.l.b16 %v7129
    %v7363 = vunpack.c.h.b16 %v7129
    %v7364 = vunpack.c.l.b16 %v7130
    %v7365 = vunpack.c.h.b16 %v7130
    %v7366 = vunpack.c.l.b16 %v7131
    %v7367 = vunpack.c.h.b16 %v7131
    %v7368 = vunpack.c.l.b16 %v7132
    %v7369 = vunpack.c.h.b16 %v7132
    %v7370 = vunpack.c.l.b16 %v7133
    %v7371 = vunpack.c.h.b16 %v7133
    %v7372 = vunpack.c.l.b16 %v7134
    %v7373 = vunpack.c.h.b16 %v7134
    %v7374 = vunpack.c.l.b16 %v7135
    %v7375 = vunpack.c.h.b16 %v7135
    %v7376 = vunpack.c.l.b16 %v7136
    %v7377 = vunpack.c.h.b16 %v7136
    %v7378 = vunpack.c.l.b16 %v7137
    %v7379 = vunpack.c.h.b16 %v7137
    %v7380 = vunpack.c.l.b16 %v7138
    %v7381 = vunpack.c.h.b16 %v7138
    %v7382 = vunpack.c.l.b16 %v7139
    %v7383 = vunpack.c.h.b16 %v7139
    %v7384 = vunpack.c.l.b16 %v7140
    %v7385 = vunpack.c.h.b16 %v7140
    %v7386 = vunpack.c.l.b16 %v7141
    %v7387 = vunpack.c.h.b16 %v7141
    %v7388 = vunpack.c.l.b16 %v7142
    %v7389 = vunpack.c.h.b16 %v7142
    %v7390 = vunpack.c.l.b16 %v7143
    %v7391 = vunpack.c.h.b16 %v7143
    %v7392 = vunpack.c.l.b16 %v7144
    %v7393 = vunpack.c.h.b16 %v7144
    %v7394 = vunpack.c.l.b16 %v7145
    %v7395 = vunpack.c.h.b16 %v7145
    %v7396 = vunpack.c.l.b16 %v7146
    %v7397 = vunpack.c.h.b16 %v7146
    %v7398 = vunpack.c.l.b16 %v7147
    %v7399 = vunpack.c.h.b16 %v7147
    %v7400 = vunpack.c.l.b16 %v7148
    %v7401 = vunpack.c.h.b16 %v7148
    %v7402 = vunpack.c.l.b16 %v7149
    %v7403 = vunpack.c.h.b16 %v7149
    %v7404 = vunpack.c.l.b16 %v7150
    %v7405 = vunpack.c.h.b16 %v7150
    %v7406 = vunpack.c.l.b16 %v7151
    %v7407 = vunpack.c.h.b16 %v7151
    %v7408 = vunpack.c.l.b16 %v7152
    %v7409 = vunpack.c.h.b16 %v7152
    %v7410 = vunpack.c.l.b16 %v7153
    %v7411 = vunpack.c.h.b16 %v7153
    %v7412 = vunpack.c.l.b16 %v7154
    %v7413 = vunpack.c.h.b16 %v7154
    %v7414 = vunpack.c.l.b16 %v7155
    %v7415 = vunpack.c.h.b16 %v7155
    %v7416 = vunpack.c.l.b16 %v7156
    %v7417 = vunpack.c.h.b16 %v7156
    %v7418 = vunpack.c.l.b16 %v7157
    %v7419 = vunpack.c.h.b16 %v7157
    %v7420 = vunpack.c.l.b16 %v7158
    %v7421 = vunpack.c.h.b16 %v7158
    %v7422 = vunpack.c.l.b16 %v7159
    %v7423 = vunpack.c.h.b16 %v7159
    %v7424 = vunpack.c.l.b16 %v7160
    %v7425 = vunpack.c.h.b16 %v7160
    %v7426 = vunpack.c.l.b16 %v7161
    %v7427 = vunpack.c.h.b16 %v7161
    %v7428 = vunpack.c.l.b16 %v7162
    %v7429 = vunpack.c.h.b16 %v7162
    %v7430 = vunpack.c.l.b16 %v7163
    %v7431 = vunpack.c.h.b16 %v7163
    %v7432 = vunpack.c.l.b16 %v7164
    %v7433 = vunpack.c.h.b16 %v7164
    %v7434 = vunpack.c.l.b16 %v7165
    %v7435 = vunpack.c.h.b16 %v7165
    %v7436 = vunpack.c.l.b16 %v7166
    %v7437 = vunpack.c.h.b16 %v7166
    %v7438 = vpack.c.b16 %v7272, %v7270
    %v7439 = vpack.c.b16 %v7273, %v7271
    %v7440 = vpack.c.b16 %v7276, %v7274
    %v7441 = vpack.c.b16 %v7277, %v7275
    %v7442 = vpack.c.b16 %v7280, %v7278
    %v7443 = vpack.c.b16 %v7281, %v7279
    %v7444 = vpack.c.b16 %v7284, %v7282
    %v7445 = vpack.c.b16 %v7285, %v7283
    %v7446 = vpack.c.b16 %v7288, %v7286
    %v7447 = vpack.c.b16 %v7289, %v7287
    %v7448 = vpack.c.b16 %v7292, %v7290
    %v7449 = vpack.c.b16 %v7293, %v7291
    %v7450 = vpack.c.b16 %v7296, %v7294
    %v7451 = vpack.c.b16 %v7297, %v7295
    %v7452 = vpack.c.b16 %v7300, %v7298
    %v7453 = vpack.c.b16 %v7301, %v7299
    %v7454 = vpack.c.b16 %v7304, %v7302
    %v7455 = vpack.c.b16 %v7305, %v7303
    %v7456 = vpack.c.b16 %v7308, %v7306
    %v7457 = vpack.c.b16 %v7309, %v7307
    %v7458 = vpack.c.b16 %v7312, %v7310
    %v7459 = vpack.c.b16 %v7313, %v7311
    %v7460 = vpack.c.b16 %v7316, %v7314
    %v7461 = vpack.c.b16 %v7317, %v7315
    %v7462 = vpack.c.b16 %v7320, %v7318
    %v7463 = vpack.c.b16 %v7321, %v7319
    %v7464 = vpack.c.b16 %v7324, %v7322
    %v7465 = vpack.c.b16 %v7325, %v7323
    %v7466 = vpack.c.b16 %v7328, %v7326
    %v7467 = vpack.c.b16 %v7329, %v7327
    %v7468 = vpack.c.b16 %v7332, %v7330
    %v7469 = vpack.c.b16 %v7333, %v7331
    %v7470 = vpack.c.b16 %v7336, %v7334
    %v7471 = vpack.c.b16 %v7337, %v7335
    %v7472 = vpack.c.b16 %v7340, %v7338
    %v7473 = vpack.c.b16 %v7341, %v7339
    %v7474 = vpack.c.b16 %v7344, %v7342
    %v7475 = vpack.c.b16 %v7345, %v7343
    %v7476 = vpack.c.b16 %v7348, %v7346
    %v7477 = vpack.c.b16 %v7349, %v7347
    %v7478 = vpack.c.b16 %v7352, %v7350
    %v7479 = vpack.c.b16 %v7353, %v7351
    %v7480 = vpack.c.b16 %v7356, %v7354
    %v7481 = vpack.c.b16 %v7357, %v7355
    %v7482 = vpack.c.b16 %v7360, %v7358
    %v7483 = vpack.c.b16 %v7361, %v7359
    %v7484 = vpack.c.b16 %v7364, %v7362
    %v7485 = vpack.c.b16 %v7365, %v7363
    %v7486 = vpack.c.b16 %v7368, %v7366
    %v7487 = vpack.c.b16 %v7369, %v7367
    %v7488 = vpack.c.b16 %v7372, %v7370
    %v7489 = vpack.c.b16 %v7373, %v7371
    %v7490 = vpack.c.b16 %v7376, %v7374
    %v7491 = vpack.c.b16 %v7377, %v7375
    %v7492 = vpack.c.b16 %v7380, %v7378
    %v7493 = vpack.c.b16 %v7381, %v7379
    %v7494 = vpack.c.b16 %v7384, %v7382
    %v7495 = vpack.c.b16 %v7385, %v7383
    %v7496 = vpack.c.b16 %v7388, %v7386
    %v7497 = vpack.c.b16 %v7389, %v7387
    %v7498 = vpack.c.b16 %v7392, %v7390
    %v7499 = vpack.c.b16 %v7393, %v7391
    %v7500 = vpack.c.b16 %v7396, %v7394
    %v7501 = vpack.c.b16 %v7397, %v7395
    %v7502 = vpack.c.b16 %v7400, %v7398
    %v7503 = vpack.c.b16 %v7401, %v7399
    %v7504 = vpack.c.b16 %v7404, %v7402
    %v7505 = vpack.c.b16 %v7405, %v7403
    %v7506 = vpack.c.b16 %v7408, %v7406
    %v7507 = vpack.c.b16 %v7409, %v7407
    %v7508 = vpack.c.b16 %v7412, %v7410
    %v7509 = vpack.c.b16 %v7413, %v7411
    %v7510 = vpack.c.b16 %v7416, %v7414
    %v7511 = vpack.c.b16 %v7417, %v7415
    %v7512 = vpack.c.b16 %v7420, %v7418
    %v7513 = vpack.c.b16 %v7421, %v7419
    %v7514 = vpack.c.b16 %v7424, %v7422
    %v7515 = vpack.c.b16 %v7425, %v7423
    %v7516 = vpack.c.b16 %v7428, %v7426
    %v7517 = vpack.c.b16 %v7429, %v7427
    %v7518 = vpack.c.b16 %v7432, %v7430
    %v7519 = vpack.c.b16 %v7433, %v7431
    %v7520 = vpack.c.b16 %v7436, %v7434
    %v7521 = vpack.c.b16 %v7437, %v7435
    %v7607 = vsel %vm4880, %v7172, 0
    %7609 = vmatprep.subr.bf16.mxu0 %v7439
    %7610 = vmatpush1.bf16.msra.mxu0 %v7438
    %7611 = vmatprep.subr.bf16.mxu0 %v7441
    %7612 = vmatpush1.bf16.msra.mxu0 %v7440
    %7613 = vmatprep.subr.bf16.mxu0 %v7443
    %7614 = vmatpush1.bf16.msra.mxu0 %v7442
    %7615 = vmatprep.subr.bf16.mxu0 %v7445
    %7616 = vmatpush1.bf16.msra.mxu0 %v7444
    %7617 = vmatprep.subr.bf16.mxu0 %v7447
    %7618 = vmatpush1.bf16.msra.mxu0 %v7446
    %7619 = vmatprep.subr.bf16.mxu0 %v7449
    %7620 = vmatpush1.bf16.msra.mxu0 %v7448
    %7621 = vmatprep.subr.bf16.mxu0 %v7451
    %7622 = vmatpush1.bf16.msra.mxu0 %v7450
    %7623 = vmatprep.subr.bf16.mxu0 %v7453
    %7624 = vmatpush1.bf16.msra.mxu0 %v7452
    %7625 = vmatprep.subr.bf16.mxu0 %v7455
    %7626 = vmatpush1.bf16.msra.mxu0 %v7454
    %7627 = vmatprep.subr.bf16.mxu0 %v7457
    %7628 = vmatpush1.bf16.msra.mxu0 %v7456
    %7629 = vmatprep.subr.bf16.mxu0 %v7459
    %7630 = vmatpush1.bf16.msra.mxu0 %v7458
    %7631 = vmatprep.subr.bf16.mxu0 %v7461
    %7632 = vmatpush1.bf16.msra.mxu0 %v7460
    %7633 = vmatprep.subr.bf16.mxu0 %v7463
    %7634 = vmatpush1.bf16.msra.mxu0 %v7462
    %7635 = vmatprep.subr.bf16.mxu0 %v7465
    %7636 = vmatpush1.bf16.msra.mxu0 %v7464
    %7637 = vmatprep.subr.bf16.mxu0 %v7467
    %7638 = vmatpush1.bf16.msra.mxu0 %v7466
    %7639 = vmatprep.subr.bf16.mxu0 %v7469
    %7640 = vmatpush1.bf16.msra.mxu0 %v7468
    %7641 = vmatprep.mubr.bf16.mxu0 %v7168
    %7642 = vmatmul.mubr.bf16.gmra.mrb[0].mxu0 %v7167
    %v7643 = vpop.f32.mrb[0].mxu0
    %v7644 = vadd.f32 %v7179, %v7643
    %v7645 = vpop.f32.mrb[0].mxu0
    %v7646 = vadd.f32 %v7183, %v7645
    %v7647 = vpop.f32.mrb[0].mxu0
    %v7648 = vpop.f32.mrb[0].mxu0
    %7649 = vdwg.mxu0
    %7650 = vmatprep.subr.bf16.mxu0 %v7471
    %7651 = vmatpush1.bf16.msra.mxu0 %v7470
    %7652 = vmatprep.subr.bf16.mxu0 %v7473
    %7653 = vmatpush1.bf16.msra.mxu0 %v7472
    %7654 = vmatprep.subr.bf16.mxu0 %v7475
    %7655 = vmatpush1.bf16.msra.mxu0 %v7474
    %7656 = vmatprep.subr.bf16.mxu0 %v7477
    %7657 = vmatpush1.bf16.msra.mxu0 %v7476
    %7658 = vmatprep.subr.bf16.mxu0 %v7479
    %7659 = vmatpush1.bf16.msra.mxu0 %v7478
    %7660 = vmatprep.subr.bf16.mxu0 %v7481
    %7661 = vmatpush1.bf16.msra.mxu0 %v7480
    %7662 = vmatprep.subr.bf16.mxu0 %v7483
    %7663 = vmatpush1.bf16.msra.mxu0 %v7482
    %7664 = vmatprep.subr.bf16.mxu0 %v7485
    %7665 = vmatpush1.bf16.msra.mxu0 %v7484
    %7666 = vmatprep.subr.bf16.mxu0 %v7487
    %7667 = vmatpush1.bf16.msra.mxu0 %v7486
    %7668 = vmatprep.subr.bf16.mxu0 %v7489
    %7669 = vmatpush1.bf16.msra.mxu0 %v7488
    %7670 = vmatprep.subr.bf16.mxu0 %v7491
    %7671 = vmatpush1.bf16.msra.mxu0 %v7490
    %7672 = vmatprep.subr.bf16.mxu0 %v7493
    %7673 = vmatpush1.bf16.msra.mxu0 %v7492
    %7674 = vmatprep.subr.bf16.mxu0 %v7495
    %7675 = vmatpush1.bf16.msra.mxu0 %v7494
    %7676 = vmatprep.subr.bf16.mxu0 %v7497
    %7677 = vmatpush1.bf16.msra.mxu0 %v7496
    %7678 = vmatprep.subr.bf16.mxu0 %v7499
    %7679 = vmatpush1.bf16.msra.mxu0 %v7498
    %7680 = vmatprep.subr.bf16.mxu0 %v7501
    %7681 = vmatpush1.bf16.msra.mxu0 %v7500
    %7682 = vmatprep.mubr.bf16.mxu0 %v7170
    %7683 = vmatmul.mubr.bf16.gmra.mrb[0].mxu0 %v7169
    %v7684 = vpop.f32.mrb[0].mxu0
    %v7685 = vadd.f32 %v7644, %v7684
    %v7686 = vpop.f32.mrb[0].mxu0
    %v7687 = vadd.f32 %v7646, %v7686
    %v7688 = vpop.f32.mrb[0].mxu0
    %v7689 = vpop.f32.mrb[0].mxu0
    %7690 = vdwg.mxu0
    %7691 = vmatprep.subr.bf16.mxu0 %v7503
    %7692 = vmatpush1.bf16.msra.mxu0 %v7502
    %7693 = vmatprep.subr.bf16.mxu0 %v7505
    %7694 = vmatpush1.bf16.msra.mxu0 %v7504
    %7695 = vmatprep.subr.bf16.mxu0 %v7507
    %7696 = vmatpush1.bf16.msra.mxu0 %v7506
    %7697 = vmatprep.subr.bf16.mxu0 %v7509
    %7698 = vmatpush1.bf16.msra.mxu0 %v7508
    %7699 = vmatprep.subr.bf16.mxu0 %v7511
    %7700 = vmatpush1.bf16.msra.mxu0 %v7510
    %7701 = vmatprep.subr.bf16.mxu0 %v7513
    %7702 = vmatpush1.bf16.msra.mxu0 %v7512
    %7703 = vmatprep.subr.bf16.mxu0 %v7515
    %7704 = vmatpush1.bf16.msra.mxu0 %v7514
    %7705 = vmatprep.subr.bf16.mxu0 %v7517
    %7706 = vmatpush1.bf16.msra.mxu0 %v7516
    %7707 = vmatprep.subr.bf16.mxu0 %v7519
    %7708 = vmatpush1.bf16.msra.mxu0 %v7518
    %7709 = vmatprep.subr.bf16.mxu0 %v7521
    %7710 = vmatpush1.bf16.msra.mxu0 %v7520
    %7711 = vmatprep.subr.bf16.mxu0 0
    %7712 = vmatpush1.bf16.msra.mxu0 0
    %7713 = vmatprep.subr.bf16.mxu0 0
    %7714 = vmatpush1.bf16.msra.mxu0 0
    %7715 = vmatprep.subr.bf16.mxu0 0
    %7716 = vmatpush1.bf16.msra.mxu0 0
    %7717 = vmatprep.subr.bf16.mxu0 0
    %7718 = vmatpush1.bf16.msra.mxu0 0
    %7719 = vmatprep.subr.bf16.mxu0 0
    %7720 = vmatpush1.bf16.msra.mxu0 0
    %7721 = vmatprep.subr.bf16.mxu0 0
    %7722 = vmatpush1.bf16.msra.mxu0 0
    %7723 = vmatprep.mubr.bf16.mxu0 %v7607
    %7724 = vmatmul.mubr.bf16.gmra.mrb[0].mxu0 %v7171
    %v7725 = vpop.f32.mrb[0].mxu0
    %v7726 = vadd.f32 %v7685, %v7725
    %v7727 = vpop.f32.mrb[0].mxu0
    %v7728 = vadd.f32 %v7687, %v7727
    %v7729 = vpop.f32.mrb[0].mxu0
    %v7730 = vpop.f32.mrb[0].mxu0
    %7731 = vdwg.mxu0
    %v7732 = vadd.f32 %v5007, %v7726
    %v7733 = vadd.f32 %v5008, %v7728
    %v7734 = vld [vmem:[#allocation43] sm:$0xf]
    %v7735 = vld [vmem:[#allocation43 + $0x4] sm:$0xf]
    %v7736 = vld [vmem:[#allocation43 + $0x8] sm:$0xf]
    %v7737 = vld [vmem:[#allocation43 + $0xc] sm:$0xf]
    %v7738 = vld [vmem:[#allocation43 + $0x10] sm:$0xf]
    %v7739 = vld [vmem:[#allocation43 + $0x14] sm:$0xf]
    %v7740 = vld [vmem:[#allocation43 + $0x18] sm:$0xf]
    %v7741 = vld [vmem:[#allocation43 + $0x1c] sm:$0xf]
    %v7742 = vld [vmem:[#allocation43 + $0x20] sm:$0xf]
    %v7743 = vld [vmem:[#allocation43 + $0x24] sm:$0xf]
    %v7744 = vld [vmem:[#allocation43 + $0x28] sm:$0xf]
    %v7745 = vld [vmem:[#allocation43 + $0x2c] sm:$0xf]
    %v7746 = vld [vmem:[#allocation43 + $0x30] sm:$0xf]
    %v7747 = vld [vmem:[#allocation43 + $0x34] sm:$0xf]
    %v7748 = vld [vmem:[#allocation43 + $0x38] sm:$0xf]
    %v7749 = vld [vmem:[#allocation43 + $0x3c] sm:$0xf]
    %v7750 = vld [vmem:[#allocation43 + $0x40] sm:$0xf]
    %v7751 = vld [vmem:[#allocation43 + $0x44] sm:$0xf]
    %v7752 = vld [vmem:[#allocation43 + $0x48] sm:$0xf]
    %v7753 = vld [vmem:[#allocation43 + $0x4c] sm:$0xf]
    %v7754 = vld [vmem:[#allocation43 + $0x50] sm:$0xf]
    %v7755 = vld [vmem:[#allocation43 + $0x54] sm:$0xf]
    %v7756 = vld [vmem:[#allocation43 + $0x58] sm:$0xf]
    %v7757 = vld [vmem:[#allocation43 + $0x5c] sm:$0xf]
    %v7758 = vld [vmem:[#allocation43 + $0x60] sm:$0xf]
    %v7759 = vld [vmem:[#allocation43 + $0x64] sm:$0xf]
    %v7760 = vld [vmem:[#allocation43 + $0x68] sm:$0xf]
    %v7761 = vld [vmem:[#allocation43 + $0x6c] sm:$0xf]
    %v7762 = vpack.c.bf16 %v7732, %v7732
    %v7763 = vpack.c.bf16 %v7733, %v7733
    %v7764 = vld [vmem:[%s75] sm:$0xf]
    %v7765 = vld [vmem:[%s75 + $0x4] sm:$0xf]
    %v7766 = vld [vmem:[%s75 + $0x8] sm:$0xf]
    %v7767 = vld [vmem:[%s75 + $0xc] sm:$0xf]
    %v7768 = vld [vmem:[%s75 + $0x10] sm:$0xf]
    %v7769 = vld [vmem:[%s75 + $0x14] sm:$0xf]
    %v7770 = vld [vmem:[%s75 + $0x18] sm:$0xf]
    %v7771 = vld [vmem:[%s75 + $0x1c] sm:$0xf]
    %v7772 = vld [vmem:[%s75 + $0x20] sm:$0xf]
    %v7773 = vld [vmem:[%s75 + $0x24] sm:$0xf]
    %v7774 = vld [vmem:[%s75 + $0x28] sm:$0xf]
    %v7775 = vld [vmem:[%s75 + $0x2c] sm:$0xf]
    %v7776 = vld [vmem:[%s75 + $0x30] sm:$0xf]
    %v7777 = vld [vmem:[%s75 + $0x34] sm:$0xf]
    %v7778 = vld [vmem:[%s75 + $0x38] sm:$0xf]
    %v7779 = vld [vmem:[%s75 + $0x3c] sm:$0xf]
    %v7780 = vpack.c.bf16 %v1759, %v1759
    %v7797 = vunpack.c.l.b16 %v7764
    %v7798 = vunpack.c.l.b16 %v7765
    %v7799 = vunpack.c.l.b16 %v7766
    %v7800 = vunpack.c.l.b16 %v7767
    %v7801 = vunpack.c.l.b16 %v7768
    %v7802 = vunpack.c.l.b16 %v7769
    %v7803 = vunpack.c.l.b16 %v7770
    %v7804 = vunpack.c.l.b16 %v7771
    %v7805 = vunpack.c.l.b16 %v7772
    %v7806 = vunpack.c.l.b16 %v7773
    %v7807 = vunpack.c.l.b16 %v7774
    %v7808 = vunpack.c.l.b16 %v7775
    %v7809 = vunpack.c.l.b16 %v7776
    %v7810 = vunpack.c.l.b16 %v7777
    %v7811 = vunpack.c.l.b16 %v7778
    %v7812 = vunpack.c.l.b16 %v7779
    %v7813 = vpack.c.b16 %v7798, %v7797
    %v7814 = vpack.c.b16 %v7800, %v7799
    %v7815 = vpack.c.b16 %v7802, %v7801
    %v7816 = vpack.c.b16 %v7804, %v7803
    %v7817 = vpack.c.b16 %v7806, %v7805
    %v7818 = vpack.c.b16 %v7808, %v7807
    %v7819 = vpack.c.b16 %v7810, %v7809
    %v7820 = vpack.c.b16 %v7812, %v7811
    %7829 = vmatprep.subr.bf16.mxu0 0
    %7830 = vmatpush1.bf16.msra.mxu0 %v7813
    %7831 = vmatprep.subr.bf16.mxu0 0
    %7832 = vmatpush1.bf16.msra.mxu0 %v7814
    %7833 = vmatprep.subr.bf16.mxu0 0
    %7834 = vmatpush1.bf16.msra.mxu0 %v7815
    %7835 = vmatprep.subr.bf16.mxu0 0
    %7836 = vmatpush1.bf16.msra.mxu0 %v7816
    %7837 = vmatprep.subr.bf16.mxu0 0
    %7838 = vmatpush1.bf16.msra.mxu0 %v7817
    %7839 = vmatprep.subr.bf16.mxu0 0
    %7840 = vmatpush1.bf16.msra.mxu0 %v7818
    %7841 = vmatprep.subr.bf16.mxu0 0
    %7842 = vmatpush1.bf16.msra.mxu0 %v7819
    %7843 = vmatprep.subr.bf16.mxu0 0
    %7844 = vmatpush1.bf16.msra.mxu0 %v7820
    %7845 = vmatprep.subr.bf16.mxu0 0
    %7846 = vmatpush1.bf16.msra.mxu0 0
    %7847 = vmatprep.subr.bf16.mxu0 0
    %7848 = vmatpush1.bf16.msra.mxu0 0
    %7849 = vmatprep.subr.bf16.mxu0 0
    %7850 = vmatpush1.bf16.msra.mxu0 0
    %7851 = vmatprep.subr.bf16.mxu0 0
    %7852 = vmatpush1.bf16.msra.mxu0 0
    %7853 = vmatprep.subr.bf16.mxu0 0
    %7854 = vmatpush1.bf16.msra.mxu0 0
    %7855 = vmatprep.subr.bf16.mxu0 0
    %7856 = vmatpush1.bf16.msra.mxu0 0
    %7857 = vmatprep.subr.bf16.mxu0 0
    %7858 = vmatpush1.bf16.msra.mxu0 0
    %7859 = vmatprep.subr.bf16.mxu0 0
    %7860 = vmatpush1.bf16.msra.mxu0 0
    %7861 = vmatprep.mubr.bf16.mxu0 0
    %7862 = vmatmul.mubr.bf16.gmra.mrb[0].mxu0 %v7780
    %v7863 = vpop.f32.mrb[0].mxu0
    %v7864 = vadd.f32 0.0, %v7863
    %v7865 = vpop.f32.mrb[0].mxu0
    %v7866 = vpop.f32.mrb[0].mxu0
    %v7867 = vpop.f32.mrb[0].mxu0
    %7868 = vdwg.mxu0
    %v7897 = vunpack.c.l.b16 %v7734
    %v7898 = vunpack.c.l.b16 %v7735
    %v7899 = vunpack.c.l.b16 %v7736
    %v7900 = vunpack.c.l.b16 %v7737
    %v7901 = vunpack.c.l.b16 %v7738
    %v7902 = vunpack.c.l.b16 %v7739
    %v7903 = vunpack.c.l.b16 %v7740
    %v7904 = vunpack.c.l.b16 %v7741
    %v7905 = vunpack.c.l.b16 %v7742
    %v7906 = vunpack.c.l.b16 %v7743
    %v7907 = vunpack.c.l.b16 %v7744
    %v7908 = vunpack.c.l.b16 %v7745
    %v7909 = vunpack.c.l.b16 %v7746
    %v7910 = vunpack.c.l.b16 %v7747
    %v7911 = vunpack.c.l.b16 %v7748
    %v7912 = vunpack.c.l.b16 %v7749
    %v7913 = vunpack.c.l.b16 %v7750
    %v7914 = vunpack.c.l.b16 %v7751
    %v7915 = vunpack.c.l.b16 %v7752
    %v7916 = vunpack.c.l.b16 %v7753
    %v7917 = vunpack.c.l.b16 %v7754
    %v7918 = vunpack.c.l.b16 %v7755
    %v7919 = vunpack.c.l.b16 %v7756
    %v7920 = vunpack.c.l.b16 %v7757
    %v7921 = vunpack.c.l.b16 %v7758
    %v7922 = vunpack.c.l.b16 %v7759
    %v7923 = vunpack.c.l.b16 %v7760
    %v7924 = vunpack.c.l.b16 %v7761
    %v7925 = vpack.c.b16 %v7898, %v7897
    %v7926 = vpack.c.b16 %v7900, %v7899
    %v7927 = vpack.c.b16 %v7902, %v7901
    %v7928 = vpack.c.b16 %v7904, %v7903
    %v7929 = vpack.c.b16 %v7906, %v7905
    %v7930 = vpack.c.b16 %v7908, %v7907
    %v7931 = vpack.c.b16 %v7910, %v7909
    %v7932 = vpack.c.b16 %v7912, %v7911
    %v7933 = vpack.c.b16 %v7914, %v7913
    %v7934 = vpack.c.b16 %v7916, %v7915
    %v7935 = vpack.c.b16 %v7918, %v7917
    %v7936 = vpack.c.b16 %v7920, %v7919
    %v7937 = vpack.c.b16 %v7922, %v7921
    %v7938 = vpack.c.b16 %v7924, %v7923
    %v7954 = vsel %vm1069, %v7763, 0
    %7956 = vmatprep.subr.bf16.mxu0 0
    %7957 = vmatpush1.bf16.msra.mxu0 %v7925
    %7958 = vmatprep.subr.bf16.mxu0 0
    %7959 = vmatpush1.bf16.msra.mxu0 %v7926
    %7960 = vmatprep.subr.bf16.mxu0 0
    %7961 = vmatpush1.bf16.msra.mxu0 %v7927
    %7962 = vmatprep.subr.bf16.mxu0 0
    %7963 = vmatpush1.bf16.msra.mxu0 %v7928
    %7964 = vmatprep.subr.bf16.mxu0 0
    %7965 = vmatpush1.bf16.msra.mxu0 %v7929
    %7966 = vmatprep.subr.bf16.mxu0 0
    %7967 = vmatpush1.bf16.msra.mxu0 %v7930
    %7968 = vmatprep.subr.bf16.mxu0 0
    %7969 = vmatpush1.bf16.msra.mxu0 %v7931
    %7970 = vmatprep.subr.bf16.mxu0 0
    %7971 = vmatpush1.bf16.msra.mxu0 %v7932
    %7972 = vmatprep.subr.bf16.mxu0 0
    %7973 = vmatpush1.bf16.msra.mxu0 %v7933
    %7974 = vmatprep.subr.bf16.mxu0 0
    %7975 = vmatpush1.bf16.msra.mxu0 %v7934
    %7976 = vmatprep.subr.bf16.mxu0 0
    %7977 = vmatpush1.bf16.msra.mxu0 %v7935
    %7978 = vmatprep.subr.bf16.mxu0 0
    %7979 = vmatpush1.bf16.msra.mxu0 %v7936
    %7980 = vmatprep.subr.bf16.mxu0 0
    %7981 = vmatpush1.bf16.msra.mxu0 %v7937
    %7982 = vmatprep.subr.bf16.mxu0 0
    %7983 = vmatpush1.bf16.msra.mxu0 %v7938
    %7984 = vmatprep.subr.bf16.mxu0 0
    %7985 = vmatpush1.bf16.msra.mxu0 0
    %7986 = vmatprep.subr.bf16.mxu0 0
    %7987 = vmatpush1.bf16.msra.mxu0 0
    %7988 = vmatprep.mubr.bf16.mxu0 %v7954
    %7989 = vmatmul.mubr.bf16.gmra.mrb[0].mxu0 %v7762
    %v7990 = vpop.f32.mrb[0].mxu0
    %v7991 = vadd.f32 %v7864, %v7990
    %v7992 = vpop.f32.mrb[0].mxu0
    %v7993 = vpop.f32.mrb[0].mxu0
    %v7994 = vpop.f32.mrb[0].mxu0
    %7995 = vdwg.mxu0
    %v7996 = vld [vmem:[%s77] sm:$0x1]
    %v7998 = vlaneseq
    %v7999 = vshrl.u32 %v7998, 7
    %v8000 = vsub.s32 0, %v7999
    %v8001 = vrot.slane %v7996, %v8000
    %v8003 = vadd.f32 %v7991, %v8001
    %8004 = vst [vmem:[#allocation45] sm:$0xff] %v8003
    // Predicated region
    $region258: #{tpu_custom_call.1} parent=1 // pred_check
      _
    $region259: #{tpu_custom_call.1} parent=1 // pred_check_branch
      %8006 = sbr.rel (0) target = $region261
    $region260: #{tpu_custom_call.1} parent=1 // pred_region
      %s8008 = ssub.s32 128, 128
      %8009 = vsyncadd [#allocation6], %s8008
      %s8011 = sshll.u32 [#allocation45], 4
      %s8012 = int_to_ptr.vmem [resolvable:$true] %s8011
      %8014 = dma.vmem_to_hbm [thread:$0]  %s8012, 128, %s79, [#allocation6]
    $region261: #{tpu_custom_call.1} parent=1 // pred_fallthru
      _
    // Predicated region
    $region262: #{tpu_custom_call.1} parent=1 // pred_check
      _
    $region263: #{tpu_custom_call.1} parent=1 // pred_check_branch
      %8016 = sbr.rel (0) target = $region265
    $region264: #{tpu_custom_call.1} parent=1 // pred_region
      %8017 = dma.done [#allocation6], 128
    $region265: #{tpu_custom_call.1} parent=1 // pred_fallthru
      _
    %8018 = vsyncpa [#allocation5], 1
    %8019 = vsyncpa [#allocation8], 1
    %8020 = vsyncpa [#allocation11], 1
    %8021 = vsyncpa [#allocation14], 1
    %8022 = vsyncpa [#allocation17], 1
    %8023 = vsyncpa [#allocation20], 1
    %8024 = vsyncpa [#allocation23], 1
    %8025 = vsyncpa [#allocation26], 1
    %8026 = vsyncpa [#allocation29], 1
    %8027 = vsyncpa [#allocation32], 1
    %8028 = vsyncpa [#allocation35], 1
    %8029 = vsyncpa [#allocation38], 1
    %8030 = vsyncpa [#allocation41], 1
    %8031 = vsyncpa [#allocation44], 1
    %8032 = vsyncpa [#allocation6], 1

</llo_original>
